<compile_context>
chip_gen: v7x
topology: tpu7x:2x2x1
jax: 0.10.0
libtpu: 0.0.40
codegen_flags: <defaults>
</compile_context>

<pallas_src>
import math

import jax
import jax.numpy as jnp
from jax.experimental import pallas as pl
from jax.experimental.pallas import tpu as pltpu

# ---------------- configuration ----------------
IN_CHANNELS = 4
OUT_CHANNELS = 6
N_HEADS = 2
D_HEAD = 128
INNER_DIM = N_HEADS * D_HEAD          # 256 (must be 256, see header comment)
TIME_EMB_DIM = 256
CTX_CH = 8                            # context_dim argument
N_CLASS = 7
N_CTX = 1 + N_CLASS                   # context sequence length (mask constraint)
DEPTH = 1                             # kernel below is written for depth=1
FF_MULT = 4
FF_INNER = INNER_DIM * FF_MULT        # 1024
LN_EPS = 1e-5
SCALE = D_HEAD ** -0.5
OUT_PAD = 128                         # lane-padded proj_out width (true channels = 6)
TOK_PAD = 8                           # time token replicated to an 8-row aligned slab
ROW_CAP = 512                         # max packed rows per grid step (v7x 64 MiB VMEM)
VMEM_LIMIT = 32 * 1024 * 1024
_NEG_BIG = -float(jnp.finfo(jnp.float32).max)


# ---------------- in-kernel math helpers ----------------
def _bf16(x):
    return x.astype(jnp.bfloat16)


def _erf_approx(x):
    # Abramowitz & Stegun 7.1.26, max abs err ~1.5e-7 -> matches PyTorch's erf-based
    # F.gelu to ~f32 tolerance. exp goes to the EUP; the polynomial hides under MXU slack.
    a1, a2, a3, a4, a5 = (0.254829592, -0.284496736, 1.421413741,
                          -1.453152027, 1.061405429)
    p = 0.3275911
    sign = jnp.where(x >= 0.0, 1.0, -1.0)
    ax = jnp.abs(x)
    t = 1.0 / (1.0 + p * ax)
    poly = ((((a5 * t + a4) * t + a3) * t + a2) * t + a1) * t
    return sign * (1.0 - poly * jnp.exp(-ax * ax))


def _gelu_exact(x):
    return 0.5 * x * (1.0 + _erf_approx(x * 0.7071067811865476))


def _layernorm(x, g_ref, b_ref):
    # f32 statistics (review: keep LN in f32; v5e has no bf16 VPU)
    mu = jnp.mean(x, axis=-1, keepdims=True)
    var = jnp.mean(jnp.square(x - mu), axis=-1, keepdims=True)
    return (x - mu) * jax.lax.rsqrt(var + LN_EPS) * g_ref[...] + b_ref[...]


def _geglu_ff(x, pw_ref, pb_ref, ow_ref, ob_ref):
    # FeedForward(dim, glu=True): GEGLU(dim, 4*dim) -> Dropout(0) -> Linear(4*dim, dim)
    # The two 1024-wide halves are computed with separate dots straight from ref slices
    # so the (rows, 2048) projection is never live at once (vreg-pressure fix).
    inner = pw_ref.shape[1] // 2
    xb = _bf16(x)
    a = jnp.dot(xb, pw_ref[:, :inner],
                preferred_element_type=jnp.float32) + pb_ref[:, :inner]
    g = jnp.dot(xb, pw_ref[:, inner:],
                preferred_element_type=jnp.float32) + pb_ref[:, inner:]
    h = a * _gelu_exact(g)                       # f32 elementwise
    return jnp.dot(_bf16(h), ow_ref[...],
                   preferred_element_type=jnp.float32) + ob_ref[...]


def _cross_attention(x_norm, k_all, v_all, masks, qw_ref, ow_ref, ob_ref,
                     bt, rows_per_b):
    # x_norm: (bt*rows_per_b, 256) f32; k_all/v_all: (bt*N_CTX, 256) f32
    # masks: list of bt (1, N_CTX) f32 tensors (1 = attend)
    # Q projection on the PACKED rows (MXU row fill); scores/softmax/PV per batch.
    q = jnp.dot(_bf16(x_norm), qw_ref[...],
                preferred_element_type=jnp.float32)              # (R, 256) f32
    seg_outs = []
    for b in range(bt):                                          # static loop
        q_b = q[b * rows_per_b:(b + 1) * rows_per_b]             # (rows_per_b, 256)
        k_b = k_all[b * N_CTX:(b + 1) * N_CTX]                   # (N_CTX, 256)
        v_b = v_all[b * N_CTX:(b + 1) * N_CTX]
        m_b = masks[b]                                           # (1, N_CTX)
        heads = []
        for h in range(N_HEADS):                                 # 128-lane aligned slices
            lo, hi = h * D_HEAD, (h + 1) * D_HEAD
            sim = jax.lax.dot_general(
                _bf16(q_b[:, lo:hi]), _bf16(k_b[:, lo:hi]),
                (((1,), (1,)), ((), ())),
                preferred_element_type=jnp.float32) * SCALE      # (rows_per_b, N_CTX)
            sim = jnp.where(m_b > 0.5, sim, _NEG_BIG)            # masked_fill(~mask, -max)
            sim = sim - jnp.max(sim, axis=-1, keepdims=True)
            p = jnp.exp(sim)
            p = p / jnp.sum(p, axis=-1, keepdims=True)           # exact softmax (f32)
            heads.append(jnp.dot(_bf16(p), _bf16(v_b[:, lo:hi]),
                                 preferred_element_type=jnp.float32))
        seg_outs.append(jnp.concatenate(heads, axis=-1))         # (rows_per_b, 256)
    attn = jnp.concatenate(seg_outs, axis=0)                     # (R, 256) f32
    return jnp.dot(_bf16(attn), ow_ref[...],
                   preferred_element_type=jnp.float32) + ob_ref[...]


# ---------------- fused kernel (one batch-tile of bt elements per grid step) ----------------
def _make_kernel(bt, n):
    rows_per_b = TOK_PAD + n

    def kernel(x_ref, tsin_ref, ctx_ref, mask_ref,
               te_pw, te_pb, te_ow, te_ob,
               pin_w, pin_b,
               pre_g, pre_b,
               n1_g, n1_b, a1_qw, a1_ow, a1_ob,
               n2_g, n2_b, a2_qw, a2_ow, a2_ob,
               kv_w,
               n3_g, n3_b,
               ff_pw, ff_pb, ff_ow, ff_ob,
               post_g, post_b,
               pout_w, pout_b,
               out_ref):
        # ---- time-embed GEGLU on one row per batch element (packed) ----
        tsin = jnp.concatenate([tsin_ref[b] for b in range(bt)], axis=0)   # (bt, 256)
        t_emb = _geglu_ff(tsin, te_pw, te_pb, te_ow, te_ob)                # (bt, 256) f32

        # ---- proj_in (pointwise Conv1d) on the packed x rows ----
        x_all = jnp.concatenate([x_ref[b] for b in range(bt)], axis=0)     # (bt*n, 4)
        h_all = jnp.dot(_bf16(x_all), pin_w[...],
                        preferred_element_type=jnp.float32) + pin_b[...]   # (bt*n, 256)

        # ---- build packed token slab: per batch [8-row time slab ; x rows] ----
        # (rows never interact outside the per-batch attention loop, so the replicated
        #  time rows only keep everything (8,128)-tile aligned; they are dropped later)
        segs = []
        for b in range(bt):
            segs.append(jnp.broadcast_to(t_emb[b:b + 1, :], (TOK_PAD, INNER_DIM)))
            segs.append(h_all[b * n:(b + 1) * n])
        tok = jnp.concatenate(segs, axis=0)                                # (bt*rows_per_b, 256)

        tok = _layernorm(tok, pre_g, pre_b)                                # pre_norm

        # ---- fused context K/V for BOTH attentions: one (bt*Nc, 8) @ (8, 1024) dot ----
        ctx_all = jnp.concatenate([ctx_ref[b] for b in range(bt)], axis=0)  # (bt*Nc, 8)
        kv = jnp.dot(_bf16(ctx_all), kv_w[...],
                     preferred_element_type=jnp.float32)                    # (bt*Nc, 1024)
        k1 = kv[:, 0 * INNER_DIM:1 * INNER_DIM]
        v1 = kv[:, 1 * INNER_DIM:2 * INNER_DIM]
        k2 = kv[:, 2 * INNER_DIM:3 * INNER_DIM]
        v2 = kv[:, 3 * INNER_DIM:4 * INNER_DIM]
        masks = [mask_ref[b] for b in range(bt)]                            # bt x (1, Nc)

        # ---- BasicTransformerBlock (depth = 1; both attns are cross-attention) ----
        tok = _cross_attention(_layernorm(tok, n1_g, n1_b), k1, v1, masks,
                               a1_qw, a1_ow, a1_ob, bt, rows_per_b) + tok
        tok = _cross_attention(_layernorm(tok, n2_g, n2_b), k2, v2, masks,
                               a2_qw, a2_ow, a2_ob, bt, rows_per_b) + tok
        tok = _geglu_ff(_layernorm(tok, n3_g, n3_b),
                        ff_pw, ff_pb, ff_ow, ff_ob) + tok

        tok = _layernorm(tok, post_g, post_b)                               # post_norm

        # ---- drop the time rows, proj_out (zero-padded to 128 lanes -> unmasked stores) ----
        y = jnp.concatenate([tok[b * rows_per_b + TOK_PAD:(b + 1) * rows_per_b]
                             for b in range(bt)], axis=0)                   # (bt*n, 256)
        out_ref[...] = jnp.dot(_bf16(y), pout_w[...],
                               preferred_element_type=jnp.float32) + pout_b[...]

    return kernel


# ---------------- wrapper (plain JAX only for tiny layout glue) ----------------
def timestep_embedding(t, dim, max_period=10000):
    half = dim // 2
    freqs = jnp.exp(-math.log(max_period) *
                    jnp.arange(half, dtype=jnp.float32) / half)
    args = t.astype(jnp.float32)[:, None] * freqs[None, :]
    return jnp.concatenate([jnp.cos(args), jnp.sin(args)], axis=-1)


def ldmnet_forward(params, x, t, ctx, valid_id=None):
    # x: (B, C_in, N) NCW;  ctx: (B, C_ctx, N_ctx);  valid_id: (B, n_class) or None
    B, C, N = x.shape
    Nc = ctx.shape[2]
    assert C == IN_CHANNELS and Nc == N_CTX
    # TODO(synk): pad N to a multiple of 8 instead of asserting (keeps slab slices aligned)
    assert N % 8 == 0, "point count must be a multiple of 8 for aligned row packing"

    x_t = jnp.transpose(x, (0, 2, 1)).astype(jnp.float32)          # 'b c n -> b n c'
    ctx_t = jnp.transpose(ctx, (0, 2, 1)).astype(jnp.float32)      # 'b c n -> b n c'
    tsin = timestep_embedding(t, TIME_EMB_DIM).reshape(B, 1, TIME_EMB_DIM)

    if valid_id is None:
        mask = jnp.ones((B, 1, Nc), jnp.float32)
    else:
        # new_mask = ones(B, 1 + n_class); new_mask[:, 1:] = valid_id
        # column 0 (the time-token slot of the context mask) is always 1, so every row
        # keeps at least one unmasked column and the -f32.max masking cannot NaN the softmax.
        mask = jnp.concatenate([jnp.ones((B, 1), jnp.float32),
                                valid_id.astype(jnp.float32)], axis=1).reshape(B, 1, Nc)

    # ---- batch tile: pack batch elements until the row slab approaches ROW_CAP ----
    rows_per_b = TOK_PAD + N
    bt = 1
    for d in range(1, B + 1):
        if B % d == 0 and d * rows_per_b <= ROW_CAP:
            bt = d
    grid = (B // bt,)          # "parallel" -> split across v7x's 2 TCs when >1 step

    p = params
    blk = p['blk']             # depth fixed at 1 for this config
    weights = [
        p['te']['pw'], p['te']['pb'], p['te']['ow'], p['te']['ob'],
        p['proj_in_w'], p['proj_in_b'],
        p['pre_g'], p['pre_b'],
        blk['norm1_g'], blk['norm1_b'], blk['a1_qw'], blk['a1_ow'], blk['a1_ob'],
        blk['norm2_g'], blk['norm2_b'], blk['a2_qw'], blk['a2_ow'], blk['a2_ob'],
        blk['kv_w'],
        blk['norm3_g'], blk['norm3_b'],
        blk['ff']['pw'], blk['ff']['pb'], blk['ff']['ow'], blk['ff']['ob'],
        p['post_g'], p['post_b'],
        p['proj_out_w'], p['proj_out_b'],
    ]

    act_specs = [
        pl.BlockSpec((bt, N, C), lambda g: (g, 0, 0)),             # x_t
        pl.BlockSpec((bt, 1, TIME_EMB_DIM), lambda g: (g, 0, 0)),  # tsin
        pl.BlockSpec((bt, Nc, CTX_CH), lambda g: (g, 0, 0)),       # ctx_t
        pl.BlockSpec((bt, 1, Nc), lambda g: (g, 0, 0)),            # mask
    ]
    # weights: full-array blocks, constant block index, SINGLE-buffered (no wasted
    # second pipeline buffer since the block never changes)
    weight_specs = [pl.BlockSpec(w.shape, lambda g: (0, 0),
                                 pipeline_mode=pl.Buffered(1))
                    for w in weights]

    out_flat = pl.pallas_call(
        _make_kernel(bt, N),
        out_shape=jax.ShapeDtypeStruct((B * N, OUT_PAD), jnp.float32),
        grid=grid,
        in_specs=act_specs + weight_specs,
        out_specs=pl.BlockSpec((bt * N, OUT_PAD), lambda g: (g, 0)),
        compiler_params=pltpu.CompilerParams(
            dimension_semantics=("parallel",),
            vmem_limit_bytes=VMEM_LIMIT),
    )(x_t, tsin, ctx_t, mask, *weights)

    out = out_flat.reshape(B, N, OUT_PAD)[:, :, :OUT_CHANNELS]     # drop lane padding
    return jnp.transpose(out, (0, 2, 1))                           # 'b n c -> b c n'


# ---------------- deterministic synthetic parameter init ----------------
def init_params(key):
    kit = iter(jax.random.split(key, 64))

    def w(din, dout):
        return jax.random.normal(next(kit), (din, dout), jnp.float32) / math.sqrt(din)

    def b(dout):
        return 0.02 * jax.random.normal(next(kit), (1, dout), jnp.float32)

    def ones(d):
        return jnp.ones((1, d), jnp.float32)

    def zeros(d):
        return jnp.zeros((1, d), jnp.float32)

    def bf(a):                      # weight matrices live in bf16 (halved DMA / VMEM)
        return a.astype(jnp.bfloat16)

    def ff_params(dim):
        inner = dim * FF_MULT
        return {'pw': bf(w(dim, inner * 2)), 'pb': b(inner * 2),
                'ow': bf(w(inner, dim)), 'ob': b(dim)}

    te = ff_params(INNER_DIM)                    # time_embed = FeedForward(inner, glu=True)
    proj_in_w, proj_in_b = bf(w(IN_CHANNELS, INNER_DIM)), b(INNER_DIM)

    # attention weights (to_q/k/v bias=False; to_out Linear has bias)
    a1_qw = bf(w(INNER_DIM, INNER_DIM))
    a1_kw, a1_vw = w(CTX_CH, INNER_DIM), w(CTX_CH, INNER_DIM)
    a1_ow, a1_ob = bf(w(INNER_DIM, INNER_DIM)), b(INNER_DIM)
    a2_qw = bf(w(INNER_DIM, INNER_DIM))
    a2_kw, a2_vw = w(CTX_CH, INNER_DIM), w(CTX_CH, INNER_DIM)
    a2_ow, a2_ob = bf(w(INNER_DIM, INNER_DIM)), b(INNER_DIM)
    # fused context projection [k1 | v1 | k2 | v2] -> one (8, 1024) MXU push per step
    kv_w = bf(jnp.concatenate([a1_kw, a1_vw, a2_kw, a2_vw], axis=1))

    blk = {
        'norm1_g': ones(INNER_DIM), 'norm1_b': zeros(INNER_DIM),
        'norm2_g': ones(INNER_DIM), 'norm2_b': zeros(INNER_DIM),
        'norm3_g': ones(INNER_DIM), 'norm3_b': zeros(INNER_DIM),
        'a1_qw': a1_qw, 'a1_ow': a1_ow, 'a1_ob': a1_ob,
        'a2_qw': a2_qw, 'a2_ow': a2_ow, 'a2_ob': a2_ob,
        'kv_w': kv_w,
        'ff': ff_params(INNER_DIM),
    }

    # proj_out: PyTorch applies zero_module() at init; we use small random weights so the
    # datapath is exercised (forward semantics unchanged). Zero-padded to 128 output lanes.
    pw_true, pb_true = w(INNER_DIM, OUT_CHANNELS), b(OUT_CHANNELS)
    proj_out_w = bf(jnp.zeros((INNER_DIM, OUT_PAD), jnp.float32)
                    .at[:, :OUT_CHANNELS].set(pw_true))
    proj_out_b = jnp.zeros((1, OUT_PAD), jnp.float32).at[:, :OUT_CHANNELS].set(pb_true)

    return {
        'te': te,
        'proj_in_w': proj_in_w, 'proj_in_b': proj_in_b,
        'pre_g': ones(INNER_DIM), 'pre_b': zeros(INNER_DIM),
        'post_g': ones(INNER_DIM), 'post_b': zeros(INNER_DIM),
        'blk': blk,
        'proj_out_w': proj_out_w, 'proj_out_b': proj_out_b,
    }


if __name__ == "__main__":
    key = jax.random.PRNGKey(0)
    kp, kx, kc = jax.random.split(key, 3)
    params = init_params(kp)

    B, N = 2, 16
    x = jax.random.normal(kx, (B, IN_CHANNELS, N), jnp.float32)
    ctx = jax.random.normal(kc, (B, CTX_CH, N_CTX), jnp.float32)
    t = jnp.array([3.0, 47.0], jnp.float32)
    # valid_id (B, n_class): 1 = attend, 0 = masked (mask_out_unreferenced_code=True)
    valid_id = (jnp.ones((B, N_CLASS), jnp.float32)
                .at[0, -2:].set(0.0)
                .at[1, -1:].set(0.0))

    out = jax.jit(ldmnet_forward)(params, x, t, ctx, valid_id)
    jax.block_until_ready(out)
    assert out.shape == (B, OUT_CHANNELS, N) and out.dtype == jnp.float32
    assert bool(jnp.all(jnp.isfinite(out)))
    print("KERNEL_OK")
</pallas_src>

<mosaic_0001>
module attributes {stable_mosaic.version = 11 : i64} {
  func.func @kernel(%arg0: i32, %arg1: memref<2x16x4xf32, #tpu.memory_space<vmem>>, %arg2: memref<2x1x256xf32, #tpu.memory_space<vmem>>, %arg3: memref<2x8x8xf32, #tpu.memory_space<vmem>>, %arg4: memref<2x1x8xf32, #tpu.memory_space<vmem>>, %arg5: memref<256x2048xbf16, #tpu.memory_space<vmem>>, %arg6: memref<1x2048xf32, #tpu.memory_space<vmem>>, %arg7: memref<1024x256xbf16, #tpu.memory_space<vmem>>, %arg8: memref<1x256xf32, #tpu.memory_space<vmem>>, %arg9: memref<4x256xbf16, #tpu.memory_space<vmem>>, %arg10: memref<1x256xf32, #tpu.memory_space<vmem>>, %arg11: memref<1x256xf32, #tpu.memory_space<vmem>>, %arg12: memref<1x256xf32, #tpu.memory_space<vmem>>, %arg13: memref<1x256xf32, #tpu.memory_space<vmem>>, %arg14: memref<1x256xf32, #tpu.memory_space<vmem>>, %arg15: memref<256x256xbf16, #tpu.memory_space<vmem>>, %arg16: memref<256x256xbf16, #tpu.memory_space<vmem>>, %arg17: memref<1x256xf32, #tpu.memory_space<vmem>>, %arg18: memref<1x256xf32, #tpu.memory_space<vmem>>, %arg19: memref<1x256xf32, #tpu.memory_space<vmem>>, %arg20: memref<256x256xbf16, #tpu.memory_space<vmem>>, %arg21: memref<256x256xbf16, #tpu.memory_space<vmem>>, %arg22: memref<1x256xf32, #tpu.memory_space<vmem>>, %arg23: memref<8x1024xbf16, #tpu.memory_space<vmem>>, %arg24: memref<1x256xf32, #tpu.memory_space<vmem>>, %arg25: memref<1x256xf32, #tpu.memory_space<vmem>>, %arg26: memref<256x2048xbf16, #tpu.memory_space<vmem>>, %arg27: memref<1x2048xf32, #tpu.memory_space<vmem>>, %arg28: memref<1024x256xbf16, #tpu.memory_space<vmem>>, %arg29: memref<1x256xf32, #tpu.memory_space<vmem>>, %arg30: memref<1x256xf32, #tpu.memory_space<vmem>>, %arg31: memref<1x256xf32, #tpu.memory_space<vmem>>, %arg32: memref<256x128xbf16, #tpu.memory_space<vmem>>, %arg33: memref<1x128xf32, #tpu.memory_space<vmem>>, %arg34: memref<32x128xf32, #tpu.memory_space<vmem>>) attributes {dimension_semantics = [#tpu.dimension_semantics<parallel>], iteration_bounds = array<i64: 1>, scalar_prefetch = 0 : i64, scratch_operands = 0 : i64, tpu.core_type = #tpu.core_type<tc>, window_params = [{transform_indices = @transform_0, window_bounds = array<i64: 2, 16, 4>}, {transform_indices = @transform_1, window_bounds = array<i64: 2, 1, 256>}, {transform_indices = @transform_2, window_bounds = array<i64: 2, 8, 8>}, {transform_indices = @transform_3, window_bounds = array<i64: 2, 1, 8>}, {pipeline_mode = #tpu.pipeline_mode<synchronous>, transform_indices = @transform_4, window_bounds = array<i64: 256, 2048>}, {pipeline_mode = #tpu.pipeline_mode<synchronous>, transform_indices = @transform_5, window_bounds = array<i64: 1, 2048>}, {pipeline_mode = #tpu.pipeline_mode<synchronous>, transform_indices = @transform_6, window_bounds = array<i64: 1024, 256>}, {pipeline_mode = #tpu.pipeline_mode<synchronous>, transform_indices = @transform_7, window_bounds = array<i64: 1, 256>}, {pipeline_mode = #tpu.pipeline_mode<synchronous>, transform_indices = @transform_8, window_bounds = array<i64: 4, 256>}, {pipeline_mode = #tpu.pipeline_mode<synchronous>, transform_indices = @transform_9, window_bounds = array<i64: 1, 256>}, {pipeline_mode = #tpu.pipeline_mode<synchronous>, transform_indices = @transform_10, window_bounds = array<i64: 1, 256>}, {pipeline_mode = #tpu.pipeline_mode<synchronous>, transform_indices = @transform_11, window_bounds = array<i64: 1, 256>}, {pipeline_mode = #tpu.pipeline_mode<synchronous>, transform_indices = @transform_12, window_bounds = array<i64: 1, 256>}, {pipeline_mode = #tpu.pipeline_mode<synchronous>, transform_indices = @transform_13, window_bounds = array<i64: 1, 256>}, {pipeline_mode = #tpu.pipeline_mode<synchronous>, transform_indices = @transform_14, window_bounds = array<i64: 256, 256>}, {pipeline_mode = #tpu.pipeline_mode<synchronous>, transform_indices = @transform_15, window_bounds = array<i64: 256, 256>}, {pipeline_mode = #tpu.pipeline_mode<synchronous>, transform_indices = @transform_16, window_bounds = array<i64: 1, 256>}, {pipeline_mode = #tpu.pipeline_mode<synchronous>, transform_indices = @transform_17, window_bounds = array<i64: 1, 256>}, {pipeline_mode = #tpu.pipeline_mode<synchronous>, transform_indices = @transform_18, window_bounds = array<i64: 1, 256>}, {pipeline_mode = #tpu.pipeline_mode<synchronous>, transform_indices = @transform_19, window_bounds = array<i64: 256, 256>}, {pipeline_mode = #tpu.pipeline_mode<synchronous>, transform_indices = @transform_20, window_bounds = array<i64: 256, 256>}, {pipeline_mode = #tpu.pipeline_mode<synchronous>, transform_indices = @transform_21, window_bounds = array<i64: 1, 256>}, {pipeline_mode = #tpu.pipeline_mode<synchronous>, transform_indices = @transform_22, window_bounds = array<i64: 8, 1024>}, {pipeline_mode = #tpu.pipeline_mode<synchronous>, transform_indices = @transform_23, window_bounds = array<i64: 1, 256>}, {pipeline_mode = #tpu.pipeline_mode<synchronous>, transform_indices = @transform_24, window_bounds = array<i64: 1, 256>}, {pipeline_mode = #tpu.pipeline_mode<synchronous>, transform_indices = @transform_25, window_bounds = array<i64: 256, 2048>}, {pipeline_mode = #tpu.pipeline_mode<synchronous>, transform_indices = @transform_26, window_bounds = array<i64: 1, 2048>}, {pipeline_mode = #tpu.pipeline_mode<synchronous>, transform_indices = @transform_27, window_bounds = array<i64: 1024, 256>}, {pipeline_mode = #tpu.pipeline_mode<synchronous>, transform_indices = @transform_28, window_bounds = array<i64: 1, 256>}, {pipeline_mode = #tpu.pipeline_mode<synchronous>, transform_indices = @transform_29, window_bounds = array<i64: 1, 256>}, {pipeline_mode = #tpu.pipeline_mode<synchronous>, transform_indices = @transform_30, window_bounds = array<i64: 1, 256>}, {pipeline_mode = #tpu.pipeline_mode<synchronous>, transform_indices = @transform_31, window_bounds = array<i64: 256, 128>}, {pipeline_mode = #tpu.pipeline_mode<synchronous>, transform_indices = @transform_32, window_bounds = array<i64: 1, 128>}, {transform_indices = @transform_33, window_bounds = array<i64: 32, 128>}]} {
    %c0 = arith.constant 0 : index
    %c0_0 = arith.constant 0 : index
    %c0_1 = arith.constant 0 : index
    %0 = vector.load %arg2[%c0, %c0_0, %c0_1] : memref<2x1x256xf32, #tpu.memory_space<vmem>>, vector<1x1x256xf32>
    %1 = vector.shape_cast %0 : vector<1x1x256xf32> to vector<1x256xf32>
    %c1 = arith.constant 1 : index
    %c0_2 = arith.constant 0 : index
    %c0_3 = arith.constant 0 : index
    %2 = vector.load %arg2[%c1, %c0_2, %c0_3] : memref<2x1x256xf32, #tpu.memory_space<vmem>>, vector<1x1x256xf32>
    %3 = vector.shape_cast %2 : vector<1x1x256xf32> to vector<1x256xf32>
    %4 = tpu.concatenate %1, %3 in 0 : vector<1x256xf32>, vector<1x256xf32> -> vector<2x256xf32>
    %5 = arith.truncf %4 : vector<2x256xf32> to vector<2x256xbf16>
    %c0_4 = arith.constant 0 : index
    %c0_5 = arith.constant 0 : index
    %6 = vector.load %arg5[%c0_4, %c0_5] : memref<256x2048xbf16, #tpu.memory_space<vmem>>, vector<256x1024xbf16>
    %cst = arith.constant dense<0.000000e+00> : vector<2x1024xf32>
    %7 = tpu.matmul %5, %6, %cst {dimension_numbers = #tpu.dot_dimension_numbers<[1], [0], [0], [1], [0, 0, 1, 1], [], []>} : vector<2x256xbf16>, vector<256x1024xbf16>, vector<2x1024xf32> -> vector<2x1024xf32>
    %c0_6 = arith.constant 0 : index
    %c0_7 = arith.constant 0 : index
    %8 = vector.load %arg6[%c0_6, %c0_7] : memref<1x2048xf32, #tpu.memory_space<vmem>>, vector<1x1024xf32>
    %9 = vector.broadcast %8 : vector<1x1024xf32> to vector<2x1024xf32>
    %10 = arith.addf %7, %9 : vector<2x1024xf32>
    %c0_8 = arith.constant 0 : index
    %c1024 = arith.constant 1024 : index
    %11 = vector.load %arg5[%c0_8, %c1024] : memref<256x2048xbf16, #tpu.memory_space<vmem>>, vector<256x1024xbf16>
    %cst_9 = arith.constant dense<0.000000e+00> : vector<2x1024xf32>
    %12 = tpu.matmul %5, %11, %cst_9 {dimension_numbers = #tpu.dot_dimension_numbers<[1], [0], [0], [1], [0, 0, 1, 1], [], []>} : vector<2x256xbf16>, vector<256x1024xbf16>, vector<2x1024xf32> -> vector<2x1024xf32>
    %c0_10 = arith.constant 0 : index
    %c1024_11 = arith.constant 1024 : index
    %13 = vector.load %arg6[%c0_10, %c1024_11] : memref<1x2048xf32, #tpu.memory_space<vmem>>, vector<1x1024xf32>
    %14 = vector.broadcast %13 : vector<1x1024xf32> to vector<2x1024xf32>
    %15 = arith.addf %12, %14 : vector<2x1024xf32>
    %cst_12 = arith.constant 5.000000e-01 : f32
    %16 = vector.broadcast %cst_12 : f32 to vector<2x1024xf32>
    %17 = arith.mulf %16, %15 : vector<2x1024xf32>
    %cst_13 = arith.constant 0.707106769 : f32
    %18 = vector.broadcast %cst_13 : f32 to vector<2x1024xf32>
    %19 = arith.mulf %15, %18 : vector<2x1024xf32>
    %cst_14 = arith.constant 0.000000e+00 : f32
    %20 = vector.broadcast %cst_14 : f32 to vector<2x1024xf32>
    %21 = arith.cmpf oge, %19, %20 : vector<2x1024xf32>
    %cst_15 = arith.constant 1.000000e+00 : f32
    %cst_16 = arith.constant -1.000000e+00 : f32
    %22 = vector.broadcast %cst_15 : f32 to vector<2x1024xf32>
    %23 = vector.broadcast %cst_16 : f32 to vector<2x1024xf32>
    %24 = arith.select %21, %22, %23 : vector<2x1024xi1>, vector<2x1024xf32>
    %25 = math.absf %19 : vector<2x1024xf32>
    %cst_17 = arith.constant 0.327591091 : f32
    %26 = vector.broadcast %cst_17 : f32 to vector<2x1024xf32>
    %27 = arith.mulf %26, %25 : vector<2x1024xf32>
    %cst_18 = arith.constant 1.000000e+00 : f32
    %28 = vector.broadcast %cst_18 : f32 to vector<2x1024xf32>
    %29 = arith.addf %28, %27 : vector<2x1024xf32>
    %cst_19 = arith.constant 1.000000e+00 : f32
    %30 = vector.broadcast %cst_19 : f32 to vector<2x1024xf32>
    %31 = arith.divf %30, %29 : vector<2x1024xf32>
    %cst_20 = arith.constant 1.06140542 : f32
    %32 = vector.broadcast %cst_20 : f32 to vector<2x1024xf32>
    %33 = arith.mulf %32, %31 : vector<2x1024xf32>
    %cst_21 = arith.constant -1.45315206 : f32
    %34 = vector.broadcast %cst_21 : f32 to vector<2x1024xf32>
    %35 = arith.addf %33, %34 : vector<2x1024xf32>
    %36 = arith.mulf %35, %31 : vector<2x1024xf32>
    %cst_22 = arith.constant 1.42141378 : f32
    %37 = vector.broadcast %cst_22 : f32 to vector<2x1024xf32>
    %38 = arith.addf %36, %37 : vector<2x1024xf32>
    %39 = arith.mulf %38, %31 : vector<2x1024xf32>
    %cst_23 = arith.constant -0.284496725 : f32
    %40 = vector.broadcast %cst_23 : f32 to vector<2x1024xf32>
    %41 = arith.addf %39, %40 : vector<2x1024xf32>
    %42 = arith.mulf %41, %31 : vector<2x1024xf32>
    %cst_24 = arith.constant 0.254829586 : f32
    %43 = vector.broadcast %cst_24 : f32 to vector<2x1024xf32>
    %44 = arith.addf %42, %43 : vector<2x1024xf32>
    %45 = arith.mulf %44, %31 : vector<2x1024xf32>
    %cst_25 = arith.constant 0.000000e+00 : f32
    %46 = vector.broadcast %cst_25 : f32 to vector<2x1024xf32>
    %47 = arith.subf %46, %25 : vector<2x1024xf32>
    %48 = arith.mulf %47, %25 : vector<2x1024xf32>
    %49 = math.exp %48 : vector<2x1024xf32>
    %50 = arith.mulf %45, %49 : vector<2x1024xf32>
    %cst_26 = arith.constant 1.000000e+00 : f32
    %51 = vector.broadcast %cst_26 : f32 to vector<2x1024xf32>
    %52 = arith.subf %51, %50 : vector<2x1024xf32>
    %53 = arith.mulf %24, %52 : vector<2x1024xf32>
    %cst_27 = arith.constant 1.000000e+00 : f32
    %54 = vector.broadcast %cst_27 : f32 to vector<2x1024xf32>
    %55 = arith.addf %54, %53 : vector<2x1024xf32>
    %56 = arith.mulf %17, %55 : vector<2x1024xf32>
    %57 = arith.mulf %10, %56 : vector<2x1024xf32>
    %58 = arith.truncf %57 : vector<2x1024xf32> to vector<2x1024xbf16>
    %c0_28 = arith.constant 0 : index
    %c0_29 = arith.constant 0 : index
    %59 = vector.load %arg7[%c0_28, %c0_29] : memref<1024x256xbf16, #tpu.memory_space<vmem>>, vector<1024x256xbf16>
    %cst_30 = arith.constant dense<0.000000e+00> : vector<2x256xf32>
    %60 = tpu.matmul %58, %59, %cst_30 {dimension_numbers = #tpu.dot_dimension_numbers<[1], [0], [0], [1], [0, 0, 1, 1], [], []>} : vector<2x1024xbf16>, vector<1024x256xbf16>, vector<2x256xf32> -> vector<2x256xf32>
    %c0_31 = arith.constant 0 : index
    %c0_32 = arith.constant 0 : index
    %61 = vector.load %arg8[%c0_31, %c0_32] : memref<1x256xf32, #tpu.memory_space<vmem>>, vector<1x256xf32>
    %62 = vector.broadcast %61 : vector<1x256xf32> to vector<2x256xf32>
    %63 = arith.addf %60, %62 : vector<2x256xf32>
    %c0_33 = arith.constant 0 : index
    %c0_34 = arith.constant 0 : index
    %c0_35 = arith.constant 0 : index
    %64 = vector.load %arg1[%c0_33, %c0_34, %c0_35] : memref<2x16x4xf32, #tpu.memory_space<vmem>>, vector<1x16x4xf32>
    %65 = vector.shape_cast %64 : vector<1x16x4xf32> to vector<16x4xf32>
    %c1_36 = arith.constant 1 : index
    %c0_37 = arith.constant 0 : index
    %c0_38 = arith.constant 0 : index
    %66 = vector.load %arg1[%c1_36, %c0_37, %c0_38] : memref<2x16x4xf32, #tpu.memory_space<vmem>>, vector<1x16x4xf32>
    %67 = vector.shape_cast %66 : vector<1x16x4xf32> to vector<16x4xf32>
    %68 = tpu.concatenate %65, %67 in 0 : vector<16x4xf32>, vector<16x4xf32> -> vector<32x4xf32>
    %69 = arith.truncf %68 : vector<32x4xf32> to vector<32x4xbf16>
    %c0_39 = arith.constant 0 : index
    %c0_40 = arith.constant 0 : index
    %70 = vector.load %arg9[%c0_39, %c0_40] : memref<4x256xbf16, #tpu.memory_space<vmem>>, vector<4x256xbf16>
    %cst_41 = arith.constant dense<0.000000e+00> : vector<32x256xf32>
    %71 = tpu.matmul %69, %70, %cst_41 {dimension_numbers = #tpu.dot_dimension_numbers<[1], [0], [0], [1], [0, 0, 1, 1], [], []>} : vector<32x4xbf16>, vector<4x256xbf16>, vector<32x256xf32> -> vector<32x256xf32>
    %c0_42 = arith.constant 0 : index
    %c0_43 = arith.constant 0 : index
    %72 = vector.load %arg10[%c0_42, %c0_43] : memref<1x256xf32, #tpu.memory_space<vmem>>, vector<1x256xf32>
    %73 = vector.broadcast %72 : vector<1x256xf32> to vector<32x256xf32>
    %74 = arith.addf %71, %73 : vector<32x256xf32>
    %75 = vector.extract_strided_slice %63 {offsets = [0, 0], sizes = [1, 256], strides = [1, 1]} : vector<2x256xf32> to vector<1x256xf32>
    %76 = vector.shape_cast %75 : vector<1x256xf32> to vector<1x256xf32>
    %77 = vector.broadcast %76 : vector<1x256xf32> to vector<8x256xf32>
    %78 = vector.extract_strided_slice %74 {offsets = [0, 0], sizes = [16, 256], strides = [1, 1]} : vector<32x256xf32> to vector<16x256xf32>
    %79 = vector.extract_strided_slice %63 {offsets = [1, 0], sizes = [1, 256], strides = [1, 1]} : vector<2x256xf32> to vector<1x256xf32>
    %80 = vector.shape_cast %79 : vector<1x256xf32> to vector<1x256xf32>
    %81 = vector.broadcast %80 : vector<1x256xf32> to vector<8x256xf32>
    %82 = vector.extract_strided_slice %74 {offsets = [16, 0], sizes = [16, 256], strides = [1, 1]} : vector<32x256xf32> to vector<16x256xf32>
    %83 = tpu.concatenate %77, %78, %81, %82 in 0 : vector<8x256xf32>, vector<16x256xf32>, vector<8x256xf32>, vector<16x256xf32> -> vector<48x256xf32>
    %cst_44 = arith.constant dense<0.000000e+00> : vector<48xf32>
    %84 = vector.multi_reduction <add>, %83, %cst_44 [1] : vector<48x256xf32> to vector<48xf32>
    %85 = vector.shape_cast %84 : vector<48xf32> to vector<48x1xf32>
    %cst_45 = arith.constant 2.560000e+02 : f32
    %86 = vector.broadcast %cst_45 : f32 to vector<48x1xf32>
    %87 = arith.divf %85, %86 : vector<48x1xf32>
    %88 = vector.broadcast %87 : vector<48x1xf32> to vector<48x256xf32>
    %89 = arith.subf %83, %88 : vector<48x256xf32>
    %90 = arith.mulf %89, %89 : vector<48x256xf32>
    %cst_46 = arith.constant dense<0.000000e+00> : vector<48xf32>
    %91 = vector.multi_reduction <add>, %90, %cst_46 [1] : vector<48x256xf32> to vector<48xf32>
    %92 = vector.shape_cast %91 : vector<48xf32> to vector<48x1xf32>
    %cst_47 = arith.constant 2.560000e+02 : f32
    %93 = vector.broadcast %cst_47 : f32 to vector<48x1xf32>
    %94 = arith.divf %92, %93 : vector<48x1xf32>
    %95 = vector.broadcast %87 : vector<48x1xf32> to vector<48x256xf32>
    %96 = arith.subf %83, %95 : vector<48x256xf32>
    %cst_48 = arith.constant 9.99999974E-6 : f32
    %97 = vector.broadcast %cst_48 : f32 to vector<48x1xf32>
    %98 = arith.addf %94, %97 : vector<48x1xf32>
    %99 = math.rsqrt %98 : vector<48x1xf32>
    %100 = vector.broadcast %99 : vector<48x1xf32> to vector<48x256xf32>
    %101 = arith.mulf %96, %100 : vector<48x256xf32>
    %c0_49 = arith.constant 0 : index
    %c0_50 = arith.constant 0 : index
    %102 = vector.load %arg11[%c0_49, %c0_50] : memref<1x256xf32, #tpu.memory_space<vmem>>, vector<1x256xf32>
    %103 = vector.broadcast %102 : vector<1x256xf32> to vector<48x256xf32>
    %104 = arith.mulf %101, %103 : vector<48x256xf32>
    %c0_51 = arith.constant 0 : index
    %c0_52 = arith.constant 0 : index
    %105 = vector.load %arg12[%c0_51, %c0_52] : memref<1x256xf32, #tpu.memory_space<vmem>>, vector<1x256xf32>
    %106 = vector.broadcast %105 : vector<1x256xf32> to vector<48x256xf32>
    %107 = arith.addf %104, %106 : vector<48x256xf32>
    %c0_53 = arith.constant 0 : index
    %c0_54 = arith.constant 0 : index
    %c0_55 = arith.constant 0 : index
    %108 = vector.load %arg3[%c0_53, %c0_54, %c0_55] : memref<2x8x8xf32, #tpu.memory_space<vmem>>, vector<1x8x8xf32>
    %109 = vector.shape_cast %108 : vector<1x8x8xf32> to vector<8x8xf32>
    %c1_56 = arith.constant 1 : index
    %c0_57 = arith.constant 0 : index
    %c0_58 = arith.constant 0 : index
    %110 = vector.load %arg3[%c1_56, %c0_57, %c0_58] : memref<2x8x8xf32, #tpu.memory_space<vmem>>, vector<1x8x8xf32>
    %111 = vector.shape_cast %110 : vector<1x8x8xf32> to vector<8x8xf32>
    %112 = tpu.concatenate %109, %111 in 0 : vector<8x8xf32>, vector<8x8xf32> -> vector<16x8xf32>
    %113 = arith.truncf %112 : vector<16x8xf32> to vector<16x8xbf16>
    %c0_59 = arith.constant 0 : index
    %c0_60 = arith.constant 0 : index
    %114 = vector.load %arg23[%c0_59, %c0_60] : memref<8x1024xbf16, #tpu.memory_space<vmem>>, vector<8x1024xbf16>
    %cst_61 = arith.constant dense<0.000000e+00> : vector<16x1024xf32>
    %115 = tpu.matmul %113, %114, %cst_61 {dimension_numbers = #tpu.dot_dimension_numbers<[1], [0], [0], [1], [0, 0, 1, 1], [], []>} : vector<16x8xbf16>, vector<8x1024xbf16>, vector<16x1024xf32> -> vector<16x1024xf32>
    %116 = vector.extract_strided_slice %115 {offsets = [0, 0], sizes = [16, 256], strides = [1, 1]} : vector<16x1024xf32> to vector<16x256xf32>
    %117 = vector.extract_strided_slice %115 {offsets = [0, 256], sizes = [16, 256], strides = [1, 1]} : vector<16x1024xf32> to vector<16x256xf32>
    %118 = vector.extract_strided_slice %115 {offsets = [0, 512], sizes = [16, 256], strides = [1, 1]} : vector<16x1024xf32> to vector<16x256xf32>
    %119 = vector.extract_strided_slice %115 {offsets = [0, 768], sizes = [16, 256], strides = [1, 1]} : vector<16x1024xf32> to vector<16x256xf32>
    %c0_62 = arith.constant 0 : index
    %c0_63 = arith.constant 0 : index
    %c0_64 = arith.constant 0 : index
    %120 = vector.load %arg4[%c0_62, %c0_63, %c0_64] : memref<2x1x8xf32, #tpu.memory_space<vmem>>, vector<1x1x8xf32>
    %121 = vector.shape_cast %120 : vector<1x1x8xf32> to vector<1x8xf32>
    %c1_65 = arith.constant 1 : index
    %c0_66 = arith.constant 0 : index
    %c0_67 = arith.constant 0 : index
    %122 = vector.load %arg4[%c1_65, %c0_66, %c0_67] : memref<2x1x8xf32, #tpu.memory_space<vmem>>, vector<1x1x8xf32>
    %123 = vector.shape_cast %122 : vector<1x1x8xf32> to vector<1x8xf32>
    %cst_68 = arith.constant dense<0.000000e+00> : vector<48xf32>
    %124 = vector.multi_reduction <add>, %107, %cst_68 [1] : vector<48x256xf32> to vector<48xf32>
    %125 = vector.shape_cast %124 : vector<48xf32> to vector<48x1xf32>
    %cst_69 = arith.constant 2.560000e+02 : f32
    %126 = vector.broadcast %cst_69 : f32 to vector<48x1xf32>
    %127 = arith.divf %125, %126 : vector<48x1xf32>
    %128 = vector.broadcast %127 : vector<48x1xf32> to vector<48x256xf32>
    %129 = arith.subf %107, %128 : vector<48x256xf32>
    %130 = arith.mulf %129, %129 : vector<48x256xf32>
    %cst_70 = arith.constant dense<0.000000e+00> : vector<48xf32>
    %131 = vector.multi_reduction <add>, %130, %cst_70 [1] : vector<48x256xf32> to vector<48xf32>
    %132 = vector.shape_cast %131 : vector<48xf32> to vector<48x1xf32>
    %cst_71 = arith.constant 2.560000e+02 : f32
    %133 = vector.broadcast %cst_71 : f32 to vector<48x1xf32>
    %134 = arith.divf %132, %133 : vector<48x1xf32>
    %135 = vector.broadcast %127 : vector<48x1xf32> to vector<48x256xf32>
    %136 = arith.subf %107, %135 : vector<48x256xf32>
    %cst_72 = arith.constant 9.99999974E-6 : f32
    %137 = vector.broadcast %cst_72 : f32 to vector<48x1xf32>
    %138 = arith.addf %134, %137 : vector<48x1xf32>
    %139 = math.rsqrt %138 : vector<48x1xf32>
    %140 = vector.broadcast %139 : vector<48x1xf32> to vector<48x256xf32>
    %141 = arith.mulf %136, %140 : vector<48x256xf32>
    %c0_73 = arith.constant 0 : index
    %c0_74 = arith.constant 0 : index
    %142 = vector.load %arg13[%c0_73, %c0_74] : memref<1x256xf32, #tpu.memory_space<vmem>>, vector<1x256xf32>
    %143 = vector.broadcast %142 : vector<1x256xf32> to vector<48x256xf32>
    %144 = arith.mulf %141, %143 : vector<48x256xf32>
    %c0_75 = arith.constant 0 : index
    %c0_76 = arith.constant 0 : index
    %145 = vector.load %arg14[%c0_75, %c0_76] : memref<1x256xf32, #tpu.memory_space<vmem>>, vector<1x256xf32>
    %146 = vector.broadcast %145 : vector<1x256xf32> to vector<48x256xf32>
    %147 = arith.addf %144, %146 : vector<48x256xf32>
    %148 = arith.truncf %147 : vector<48x256xf32> to vector<48x256xbf16>
    %c0_77 = arith.constant 0 : index
    %c0_78 = arith.constant 0 : index
    %149 = vector.load %arg15[%c0_77, %c0_78] : memref<256x256xbf16, #tpu.memory_space<vmem>>, vector<256x256xbf16>
    %cst_79 = arith.constant dense<0.000000e+00> : vector<48x256xf32>
    %150 = tpu.matmul %148, %149, %cst_79 {dimension_numbers = #tpu.dot_dimension_numbers<[1], [0], [0], [1], [0, 0, 1, 1], [], []>} : vector<48x256xbf16>, vector<256x256xbf16>, vector<48x256xf32> -> vector<48x256xf32>
    %151 = vector.extract_strided_slice %150 {offsets = [0, 0], sizes = [24, 256], strides = [1, 1]} : vector<48x256xf32> to vector<24x256xf32>
    %152 = vector.extract_strided_slice %116 {offsets = [0, 0], sizes = [8, 256], strides = [1, 1]} : vector<16x256xf32> to vector<8x256xf32>
    %153 = vector.extract_strided_slice %117 {offsets = [0, 0], sizes = [8, 256], strides = [1, 1]} : vector<16x256xf32> to vector<8x256xf32>
    %154 = vector.extract_strided_slice %151 {offsets = [0, 0], sizes = [24, 128], strides = [1, 1]} : vector<24x256xf32> to vector<24x128xf32>
    %155 = arith.truncf %154 : vector<24x128xf32> to vector<24x128xbf16>
    %156 = vector.extract_strided_slice %152 {offsets = [0, 0], sizes = [8, 128], strides = [1, 1]} : vector<8x256xf32> to vector<8x128xf32>
    %157 = arith.truncf %156 : vector<8x128xf32> to vector<8x128xbf16>
    %cst_80 = arith.constant dense<0.000000e+00> : vector<24x8xf32>
    %158 = tpu.matmul %155, %157, %cst_80 {dimension_numbers = #tpu.dot_dimension_numbers<[1], [1], [0], [0], [0, 0, 1, 0], [], []>} : vector<24x128xbf16>, vector<8x128xbf16>, vector<24x8xf32> -> vector<24x8xf32>
    %cst_81 = arith.constant 0.0883883461 : f32
    %159 = vector.broadcast %cst_81 : f32 to vector<24x8xf32>
    %160 = arith.mulf %158, %159 : vector<24x8xf32>
    %cst_82 = arith.constant 5.000000e-01 : f32
    %161 = vector.broadcast %cst_82 : f32 to vector<1x8xf32>
    %162 = arith.cmpf ogt, %121, %161 : vector<1x8xf32>
    %cst_83 = arith.constant -3.40282347E+38 : f32
    %163 = vector.shape_cast %162 : vector<1x8xi1> to vector<1x8xi1>
    %164 = vector.broadcast %163 : vector<1x8xi1> to vector<24x8xi1>
    %165 = vector.broadcast %cst_83 : f32 to vector<24x8xf32>
    %166 = arith.select %164, %160, %165 : vector<24x8xi1>, vector<24x8xf32>
    %cst_84 = arith.constant dense<0xFF800000> : vector<24xf32>
    %167 = vector.multi_reduction <maximumf>, %166, %cst_84 [1] : vector<24x8xf32> to vector<24xf32>
    %168 = vector.shape_cast %167 : vector<24xf32> to vector<24x1xf32>
    %169 = vector.broadcast %168 : vector<24x1xf32> to vector<24x8xf32>
    %170 = arith.subf %166, %169 : vector<24x8xf32>
    %171 = math.exp %170 : vector<24x8xf32>
    %cst_85 = arith.constant dense<0.000000e+00> : vector<24xf32>
    %172 = vector.multi_reduction <add>, %171, %cst_85 [1] : vector<24x8xf32> to vector<24xf32>
    %173 = vector.shape_cast %172 : vector<24xf32> to vector<24x1xf32>
    %174 = vector.broadcast %173 : vector<24x1xf32> to vector<24x8xf32>
    %175 = arith.divf %171, %174 : vector<24x8xf32>
    %176 = arith.truncf %175 : vector<24x8xf32> to vector<24x8xbf16>
    %177 = vector.extract_strided_slice %153 {offsets = [0, 0], sizes = [8, 128], strides = [1, 1]} : vector<8x256xf32> to vector<8x128xf32>
    %178 = arith.truncf %177 : vector<8x128xf32> to vector<8x128xbf16>
    %cst_86 = arith.constant dense<0.000000e+00> : vector<24x128xf32>
    %179 = tpu.matmul %176, %178, %cst_86 {dimension_numbers = #tpu.dot_dimension_numbers<[1], [0], [0], [1], [0, 0, 1, 1], [], []>} : vector<24x8xbf16>, vector<8x128xbf16>, vector<24x128xf32> -> vector<24x128xf32>
    %180 = vector.extract_strided_slice %151 {offsets = [0, 128], sizes = [24, 128], strides = [1, 1]} : vector<24x256xf32> to vector<24x128xf32>
    %181 = arith.truncf %180 : vector<24x128xf32> to vector<24x128xbf16>
    %182 = vector.extract_strided_slice %152 {offsets = [0, 128], sizes = [8, 128], strides = [1, 1]} : vector<8x256xf32> to vector<8x128xf32>
    %183 = arith.truncf %182 : vector<8x128xf32> to vector<8x128xbf16>
    %cst_87 = arith.constant dense<0.000000e+00> : vector<24x8xf32>
    %184 = tpu.matmul %181, %183, %cst_87 {dimension_numbers = #tpu.dot_dimension_numbers<[1], [1], [0], [0], [0, 0, 1, 0], [], []>} : vector<24x128xbf16>, vector<8x128xbf16>, vector<24x8xf32> -> vector<24x8xf32>
    %cst_88 = arith.constant 0.0883883461 : f32
    %185 = vector.broadcast %cst_88 : f32 to vector<24x8xf32>
    %186 = arith.mulf %184, %185 : vector<24x8xf32>
    %cst_89 = arith.constant 5.000000e-01 : f32
    %187 = vector.broadcast %cst_89 : f32 to vector<1x8xf32>
    %188 = arith.cmpf ogt, %121, %187 : vector<1x8xf32>
    %cst_90 = arith.constant -3.40282347E+38 : f32
    %189 = vector.shape_cast %188 : vector<1x8xi1> to vector<1x8xi1>
    %190 = vector.broadcast %189 : vector<1x8xi1> to vector<24x8xi1>
    %191 = vector.broadcast %cst_90 : f32 to vector<24x8xf32>
    %192 = arith.select %190, %186, %191 : vector<24x8xi1>, vector<24x8xf32>
    %cst_91 = arith.constant dense<0xFF800000> : vector<24xf32>
    %193 = vector.multi_reduction <maximumf>, %192, %cst_91 [1] : vector<24x8xf32> to vector<24xf32>
    %194 = vector.shape_cast %193 : vector<24xf32> to vector<24x1xf32>
    %195 = vector.broadcast %194 : vector<24x1xf32> to vector<24x8xf32>
    %196 = arith.subf %192, %195 : vector<24x8xf32>
    %197 = math.exp %196 : vector<24x8xf32>
    %cst_92 = arith.constant dense<0.000000e+00> : vector<24xf32>
    %198 = vector.multi_reduction <add>, %197, %cst_92 [1] : vector<24x8xf32> to vector<24xf32>
    %199 = vector.shape_cast %198 : vector<24xf32> to vector<24x1xf32>
    %200 = vector.broadcast %199 : vector<24x1xf32> to vector<24x8xf32>
    %201 = arith.divf %197, %200 : vector<24x8xf32>
    %202 = arith.truncf %201 : vector<24x8xf32> to vector<24x8xbf16>
    %203 = vector.extract_strided_slice %153 {offsets = [0, 128], sizes = [8, 128], strides = [1, 1]} : vector<8x256xf32> to vector<8x128xf32>
    %204 = arith.truncf %203 : vector<8x128xf32> to vector<8x128xbf16>
    %cst_93 = arith.constant dense<0.000000e+00> : vector<24x128xf32>
    %205 = tpu.matmul %202, %204, %cst_93 {dimension_numbers = #tpu.dot_dimension_numbers<[1], [0], [0], [1], [0, 0, 1, 1], [], []>} : vector<24x8xbf16>, vector<8x128xbf16>, vector<24x128xf32> -> vector<24x128xf32>
    %206 = tpu.concatenate %179, %205 in 1 : vector<24x128xf32>, vector<24x128xf32> -> vector<24x256xf32>
    %207 = vector.extract_strided_slice %150 {offsets = [24, 0], sizes = [24, 256], strides = [1, 1]} : vector<48x256xf32> to vector<24x256xf32>
    %208 = vector.extract_strided_slice %116 {offsets = [8, 0], sizes = [8, 256], strides = [1, 1]} : vector<16x256xf32> to vector<8x256xf32>
    %209 = vector.extract_strided_slice %117 {offsets = [8, 0], sizes = [8, 256], strides = [1, 1]} : vector<16x256xf32> to vector<8x256xf32>
    %210 = vector.extract_strided_slice %207 {offsets = [0, 0], sizes = [24, 128], strides = [1, 1]} : vector<24x256xf32> to vector<24x128xf32>
    %211 = arith.truncf %210 : vector<24x128xf32> to vector<24x128xbf16>
    %212 = vector.extract_strided_slice %208 {offsets = [0, 0], sizes = [8, 128], strides = [1, 1]} : vector<8x256xf32> to vector<8x128xf32>
    %213 = arith.truncf %212 : vector<8x128xf32> to vector<8x128xbf16>
    %cst_94 = arith.constant dense<0.000000e+00> : vector<24x8xf32>
    %214 = tpu.matmul %211, %213, %cst_94 {dimension_numbers = #tpu.dot_dimension_numbers<[1], [1], [0], [0], [0, 0, 1, 0], [], []>} : vector<24x128xbf16>, vector<8x128xbf16>, vector<24x8xf32> -> vector<24x8xf32>
    %cst_95 = arith.constant 0.0883883461 : f32
    %215 = vector.broadcast %cst_95 : f32 to vector<24x8xf32>
    %216 = arith.mulf %214, %215 : vector<24x8xf32>
    %cst_96 = arith.constant 5.000000e-01 : f32
    %217 = vector.broadcast %cst_96 : f32 to vector<1x8xf32>
    %218 = arith.cmpf ogt, %123, %217 : vector<1x8xf32>
    %cst_97 = arith.constant -3.40282347E+38 : f32
    %219 = vector.shape_cast %218 : vector<1x8xi1> to vector<1x8xi1>
    %220 = vector.broadcast %219 : vector<1x8xi1> to vector<24x8xi1>
    %221 = vector.broadcast %cst_97 : f32 to vector<24x8xf32>
    %222 = arith.select %220, %216, %221 : vector<24x8xi1>, vector<24x8xf32>
    %cst_98 = arith.constant dense<0xFF800000> : vector<24xf32>
    %223 = vector.multi_reduction <maximumf>, %222, %cst_98 [1] : vector<24x8xf32> to vector<24xf32>
    %224 = vector.shape_cast %223 : vector<24xf32> to vector<24x1xf32>
    %225 = vector.broadcast %224 : vector<24x1xf32> to vector<24x8xf32>
    %226 = arith.subf %222, %225 : vector<24x8xf32>
    %227 = math.exp %226 : vector<24x8xf32>
    %cst_99 = arith.constant dense<0.000000e+00> : vector<24xf32>
    %228 = vector.multi_reduction <add>, %227, %cst_99 [1] : vector<24x8xf32> to vector<24xf32>
    %229 = vector.shape_cast %228 : vector<24xf32> to vector<24x1xf32>
    %230 = vector.broadcast %229 : vector<24x1xf32> to vector<24x8xf32>
    %231 = arith.divf %227, %230 : vector<24x8xf32>
    %232 = arith.truncf %231 : vector<24x8xf32> to vector<24x8xbf16>
    %233 = vector.extract_strided_slice %209 {offsets = [0, 0], sizes = [8, 128], strides = [1, 1]} : vector<8x256xf32> to vector<8x128xf32>
    %234 = arith.truncf %233 : vector<8x128xf32> to vector<8x128xbf16>
    %cst_100 = arith.constant dense<0.000000e+00> : vector<24x128xf32>
    %235 = tpu.matmul %232, %234, %cst_100 {dimension_numbers = #tpu.dot_dimension_numbers<[1], [0], [0], [1], [0, 0, 1, 1], [], []>} : vector<24x8xbf16>, vector<8x128xbf16>, vector<24x128xf32> -> vector<24x128xf32>
    %236 = vector.extract_strided_slice %207 {offsets = [0, 128], sizes = [24, 128], strides = [1, 1]} : vector<24x256xf32> to vector<24x128xf32>
    %237 = arith.truncf %236 : vector<24x128xf32> to vector<24x128xbf16>
    %238 = vector.extract_strided_slice %208 {offsets = [0, 128], sizes = [8, 128], strides = [1, 1]} : vector<8x256xf32> to vector<8x128xf32>
    %239 = arith.truncf %238 : vector<8x128xf32> to vector<8x128xbf16>
    %cst_101 = arith.constant dense<0.000000e+00> : vector<24x8xf32>
    %240 = tpu.matmul %237, %239, %cst_101 {dimension_numbers = #tpu.dot_dimension_numbers<[1], [1], [0], [0], [0, 0, 1, 0], [], []>} : vector<24x128xbf16>, vector<8x128xbf16>, vector<24x8xf32> -> vector<24x8xf32>
    %cst_102 = arith.constant 0.0883883461 : f32
    %241 = vector.broadcast %cst_102 : f32 to vector<24x8xf32>
    %242 = arith.mulf %240, %241 : vector<24x8xf32>
    %cst_103 = arith.constant 5.000000e-01 : f32
    %243 = vector.broadcast %cst_103 : f32 to vector<1x8xf32>
    %244 = arith.cmpf ogt, %123, %243 : vector<1x8xf32>
    %cst_104 = arith.constant -3.40282347E+38 : f32
    %245 = vector.shape_cast %244 : vector<1x8xi1> to vector<1x8xi1>
    %246 = vector.broadcast %245 : vector<1x8xi1> to vector<24x8xi1>
    %247 = vector.broadcast %cst_104 : f32 to vector<24x8xf32>
    %248 = arith.select %246, %242, %247 : vector<24x8xi1>, vector<24x8xf32>
    %cst_105 = arith.constant dense<0xFF800000> : vector<24xf32>
    %249 = vector.multi_reduction <maximumf>, %248, %cst_105 [1] : vector<24x8xf32> to vector<24xf32>
    %250 = vector.shape_cast %249 : vector<24xf32> to vector<24x1xf32>
    %251 = vector.broadcast %250 : vector<24x1xf32> to vector<24x8xf32>
    %252 = arith.subf %248, %251 : vector<24x8xf32>
    %253 = math.exp %252 : vector<24x8xf32>
    %cst_106 = arith.constant dense<0.000000e+00> : vector<24xf32>
    %254 = vector.multi_reduction <add>, %253, %cst_106 [1] : vector<24x8xf32> to vector<24xf32>
    %255 = vector.shape_cast %254 : vector<24xf32> to vector<24x1xf32>
    %256 = vector.broadcast %255 : vector<24x1xf32> to vector<24x8xf32>
    %257 = arith.divf %253, %256 : vector<24x8xf32>
    %258 = arith.truncf %257 : vector<24x8xf32> to vector<24x8xbf16>
    %259 = vector.extract_strided_slice %209 {offsets = [0, 128], sizes = [8, 128], strides = [1, 1]} : vector<8x256xf32> to vector<8x128xf32>
    %260 = arith.truncf %259 : vector<8x128xf32> to vector<8x128xbf16>
    %cst_107 = arith.constant dense<0.000000e+00> : vector<24x128xf32>
    %261 = tpu.matmul %258, %260, %cst_107 {dimension_numbers = #tpu.dot_dimension_numbers<[1], [0], [0], [1], [0, 0, 1, 1], [], []>} : vector<24x8xbf16>, vector<8x128xbf16>, vector<24x128xf32> -> vector<24x128xf32>
    %262 = tpu.concatenate %235, %261 in 1 : vector<24x128xf32>, vector<24x128xf32> -> vector<24x256xf32>
    %263 = tpu.concatenate %206, %262 in 0 : vector<24x256xf32>, vector<24x256xf32> -> vector<48x256xf32>
    %264 = arith.truncf %263 : vector<48x256xf32> to vector<48x256xbf16>
    %c0_108 = arith.constant 0 : index
    %c0_109 = arith.constant 0 : index
    %265 = vector.load %arg16[%c0_108, %c0_109] : memref<256x256xbf16, #tpu.memory_space<vmem>>, vector<256x256xbf16>
    %cst_110 = arith.constant dense<0.000000e+00> : vector<48x256xf32>
    %266 = tpu.matmul %264, %265, %cst_110 {dimension_numbers = #tpu.dot_dimension_numbers<[1], [0], [0], [1], [0, 0, 1, 1], [], []>} : vector<48x256xbf16>, vector<256x256xbf16>, vector<48x256xf32> -> vector<48x256xf32>
    %c0_111 = arith.constant 0 : index
    %c0_112 = arith.constant 0 : index
    %267 = vector.load %arg17[%c0_111, %c0_112] : memref<1x256xf32, #tpu.memory_space<vmem>>, vector<1x256xf32>
    %268 = vector.broadcast %267 : vector<1x256xf32> to vector<48x256xf32>
    %269 = arith.addf %266, %268 : vector<48x256xf32>
    %270 = arith.addf %269, %107 : vector<48x256xf32>
    %cst_113 = arith.constant dense<0.000000e+00> : vector<48xf32>
    %271 = vector.multi_reduction <add>, %270, %cst_113 [1] : vector<48x256xf32> to vector<48xf32>
    %272 = vector.shape_cast %271 : vector<48xf32> to vector<48x1xf32>
    %cst_114 = arith.constant 2.560000e+02 : f32
    %273 = vector.broadcast %cst_114 : f32 to vector<48x1xf32>
    %274 = arith.divf %272, %273 : vector<48x1xf32>
    %275 = vector.broadcast %274 : vector<48x1xf32> to vector<48x256xf32>
    %276 = arith.subf %270, %275 : vector<48x256xf32>
    %277 = arith.mulf %276, %276 : vector<48x256xf32>
    %cst_115 = arith.constant dense<0.000000e+00> : vector<48xf32>
    %278 = vector.multi_reduction <add>, %277, %cst_115 [1] : vector<48x256xf32> to vector<48xf32>
    %279 = vector.shape_cast %278 : vector<48xf32> to vector<48x1xf32>
    %cst_116 = arith.constant 2.560000e+02 : f32
    %280 = vector.broadcast %cst_116 : f32 to vector<48x1xf32>
    %281 = arith.divf %279, %280 : vector<48x1xf32>
    %282 = vector.broadcast %274 : vector<48x1xf32> to vector<48x256xf32>
    %283 = arith.subf %270, %282 : vector<48x256xf32>
    %cst_117 = arith.constant 9.99999974E-6 : f32
    %284 = vector.broadcast %cst_117 : f32 to vector<48x1xf32>
    %285 = arith.addf %281, %284 : vector<48x1xf32>
    %286 = math.rsqrt %285 : vector<48x1xf32>
    %287 = vector.broadcast %286 : vector<48x1xf32> to vector<48x256xf32>
    %288 = arith.mulf %283, %287 : vector<48x256xf32>
    %c0_118 = arith.constant 0 : index
    %c0_119 = arith.constant 0 : index
    %289 = vector.load %arg18[%c0_118, %c0_119] : memref<1x256xf32, #tpu.memory_space<vmem>>, vector<1x256xf32>
    %290 = vector.broadcast %289 : vector<1x256xf32> to vector<48x256xf32>
    %291 = arith.mulf %288, %290 : vector<48x256xf32>
    %c0_120 = arith.constant 0 : index
    %c0_121 = arith.constant 0 : index
    %292 = vector.load %arg19[%c0_120, %c0_121] : memref<1x256xf32, #tpu.memory_space<vmem>>, vector<1x256xf32>
    %293 = vector.broadcast %292 : vector<1x256xf32> to vector<48x256xf32>
    %294 = arith.addf %291, %293 : vector<48x256xf32>
    %295 = arith.truncf %294 : vector<48x256xf32> to vector<48x256xbf16>
    %c0_122 = arith.constant 0 : index
    %c0_123 = arith.constant 0 : index
    %296 = vector.load %arg20[%c0_122, %c0_123] : memref<256x256xbf16, #tpu.memory_space<vmem>>, vector<256x256xbf16>
    %cst_124 = arith.constant dense<0.000000e+00> : vector<48x256xf32>
    %297 = tpu.matmul %295, %296, %cst_124 {dimension_numbers = #tpu.dot_dimension_numbers<[1], [0], [0], [1], [0, 0, 1, 1], [], []>} : vector<48x256xbf16>, vector<256x256xbf16>, vector<48x256xf32> -> vector<48x256xf32>
    %298 = vector.extract_strided_slice %297 {offsets = [0, 0], sizes = [24, 256], strides = [1, 1]} : vector<48x256xf32> to vector<24x256xf32>
    %299 = vector.extract_strided_slice %118 {offsets = [0, 0], sizes = [8, 256], strides = [1, 1]} : vector<16x256xf32> to vector<8x256xf32>
    %300 = vector.extract_strided_slice %119 {offsets = [0, 0], sizes = [8, 256], strides = [1, 1]} : vector<16x256xf32> to vector<8x256xf32>
    %301 = vector.extract_strided_slice %298 {offsets = [0, 0], sizes = [24, 128], strides = [1, 1]} : vector<24x256xf32> to vector<24x128xf32>
    %302 = arith.truncf %301 : vector<24x128xf32> to vector<24x128xbf16>
    %303 = vector.extract_strided_slice %299 {offsets = [0, 0], sizes = [8, 128], strides = [1, 1]} : vector<8x256xf32> to vector<8x128xf32>
    %304 = arith.truncf %303 : vector<8x128xf32> to vector<8x128xbf16>
    %cst_125 = arith.constant dense<0.000000e+00> : vector<24x8xf32>
    %305 = tpu.matmul %302, %304, %cst_125 {dimension_numbers = #tpu.dot_dimension_numbers<[1], [1], [0], [0], [0, 0, 1, 0], [], []>} : vector<24x128xbf16>, vector<8x128xbf16>, vector<24x8xf32> -> vector<24x8xf32>
    %cst_126 = arith.constant 0.0883883461 : f32
    %306 = vector.broadcast %cst_126 : f32 to vector<24x8xf32>
    %307 = arith.mulf %305, %306 : vector<24x8xf32>
    %cst_127 = arith.constant 5.000000e-01 : f32
    %308 = vector.broadcast %cst_127 : f32 to vector<1x8xf32>
    %309 = arith.cmpf ogt, %121, %308 : vector<1x8xf32>
    %cst_128 = arith.constant -3.40282347E+38 : f32
    %310 = vector.shape_cast %309 : vector<1x8xi1> to vector<1x8xi1>
    %311 = vector.broadcast %310 : vector<1x8xi1> to vector<24x8xi1>
    %312 = vector.broadcast %cst_128 : f32 to vector<24x8xf32>
    %313 = arith.select %311, %307, %312 : vector<24x8xi1>, vector<24x8xf32>
    %cst_129 = arith.constant dense<0xFF800000> : vector<24xf32>
    %314 = vector.multi_reduction <maximumf>, %313, %cst_129 [1] : vector<24x8xf32> to vector<24xf32>
    %315 = vector.shape_cast %314 : vector<24xf32> to vector<24x1xf32>
    %316 = vector.broadcast %315 : vector<24x1xf32> to vector<24x8xf32>
    %317 = arith.subf %313, %316 : vector<24x8xf32>
    %318 = math.exp %317 : vector<24x8xf32>
    %cst_130 = arith.constant dense<0.000000e+00> : vector<24xf32>
    %319 = vector.multi_reduction <add>, %318, %cst_130 [1] : vector<24x8xf32> to vector<24xf32>
    %320 = vector.shape_cast %319 : vector<24xf32> to vector<24x1xf32>
    %321 = vector.broadcast %320 : vector<24x1xf32> to vector<24x8xf32>
    %322 = arith.divf %318, %321 : vector<24x8xf32>
    %323 = arith.truncf %322 : vector<24x8xf32> to vector<24x8xbf16>
    %324 = vector.extract_strided_slice %300 {offsets = [0, 0], sizes = [8, 128], strides = [1, 1]} : vector<8x256xf32> to vector<8x128xf32>
    %325 = arith.truncf %324 : vector<8x128xf32> to vector<8x128xbf16>
    %cst_131 = arith.constant dense<0.000000e+00> : vector<24x128xf32>
    %326 = tpu.matmul %323, %325, %cst_131 {dimension_numbers = #tpu.dot_dimension_numbers<[1], [0], [0], [1], [0, 0, 1, 1], [], []>} : vector<24x8xbf16>, vector<8x128xbf16>, vector<24x128xf32> -> vector<24x128xf32>
    %327 = vector.extract_strided_slice %298 {offsets = [0, 128], sizes = [24, 128], strides = [1, 1]} : vector<24x256xf32> to vector<24x128xf32>
    %328 = arith.truncf %327 : vector<24x128xf32> to vector<24x128xbf16>
    %329 = vector.extract_strided_slice %299 {offsets = [0, 128], sizes = [8, 128], strides = [1, 1]} : vector<8x256xf32> to vector<8x128xf32>
    %330 = arith.truncf %329 : vector<8x128xf32> to vector<8x128xbf16>
    %cst_132 = arith.constant dense<0.000000e+00> : vector<24x8xf32>
    %331 = tpu.matmul %328, %330, %cst_132 {dimension_numbers = #tpu.dot_dimension_numbers<[1], [1], [0], [0], [0, 0, 1, 0], [], []>} : vector<24x128xbf16>, vector<8x128xbf16>, vector<24x8xf32> -> vector<24x8xf32>
    %cst_133 = arith.constant 0.0883883461 : f32
    %332 = vector.broadcast %cst_133 : f32 to vector<24x8xf32>
    %333 = arith.mulf %331, %332 : vector<24x8xf32>
    %cst_134 = arith.constant 5.000000e-01 : f32
    %334 = vector.broadcast %cst_134 : f32 to vector<1x8xf32>
    %335 = arith.cmpf ogt, %121, %334 : vector<1x8xf32>
    %cst_135 = arith.constant -3.40282347E+38 : f32
    %336 = vector.shape_cast %335 : vector<1x8xi1> to vector<1x8xi1>
    %337 = vector.broadcast %336 : vector<1x8xi1> to vector<24x8xi1>
    %338 = vector.broadcast %cst_135 : f32 to vector<24x8xf32>
    %339 = arith.select %337, %333, %338 : vector<24x8xi1>, vector<24x8xf32>
    %cst_136 = arith.constant dense<0xFF800000> : vector<24xf32>
    %340 = vector.multi_reduction <maximumf>, %339, %cst_136 [1] : vector<24x8xf32> to vector<24xf32>
    %341 = vector.shape_cast %340 : vector<24xf32> to vector<24x1xf32>
    %342 = vector.broadcast %341 : vector<24x1xf32> to vector<24x8xf32>
    %343 = arith.subf %339, %342 : vector<24x8xf32>
    %344 = math.exp %343 : vector<24x8xf32>
    %cst_137 = arith.constant dense<0.000000e+00> : vector<24xf32>
    %345 = vector.multi_reduction <add>, %344, %cst_137 [1] : vector<24x8xf32> to vector<24xf32>
    %346 = vector.shape_cast %345 : vector<24xf32> to vector<24x1xf32>
    %347 = vector.broadcast %346 : vector<24x1xf32> to vector<24x8xf32>
    %348 = arith.divf %344, %347 : vector<24x8xf32>
    %349 = arith.truncf %348 : vector<24x8xf32> to vector<24x8xbf16>
    %350 = vector.extract_strided_slice %300 {offsets = [0, 128], sizes = [8, 128], strides = [1, 1]} : vector<8x256xf32> to vector<8x128xf32>
    %351 = arith.truncf %350 : vector<8x128xf32> to vector<8x128xbf16>
    %cst_138 = arith.constant dense<0.000000e+00> : vector<24x128xf32>
    %352 = tpu.matmul %349, %351, %cst_138 {dimension_numbers = #tpu.dot_dimension_numbers<[1], [0], [0], [1], [0, 0, 1, 1], [], []>} : vector<24x8xbf16>, vector<8x128xbf16>, vector<24x128xf32> -> vector<24x128xf32>
    %353 = tpu.concatenate %326, %352 in 1 : vector<24x128xf32>, vector<24x128xf32> -> vector<24x256xf32>
    %354 = vector.extract_strided_slice %297 {offsets = [24, 0], sizes = [24, 256], strides = [1, 1]} : vector<48x256xf32> to vector<24x256xf32>
    %355 = vector.extract_strided_slice %118 {offsets = [8, 0], sizes = [8, 256], strides = [1, 1]} : vector<16x256xf32> to vector<8x256xf32>
    %356 = vector.extract_strided_slice %119 {offsets = [8, 0], sizes = [8, 256], strides = [1, 1]} : vector<16x256xf32> to vector<8x256xf32>
    %357 = vector.extract_strided_slice %354 {offsets = [0, 0], sizes = [24, 128], strides = [1, 1]} : vector<24x256xf32> to vector<24x128xf32>
    %358 = arith.truncf %357 : vector<24x128xf32> to vector<24x128xbf16>
    %359 = vector.extract_strided_slice %355 {offsets = [0, 0], sizes = [8, 128], strides = [1, 1]} : vector<8x256xf32> to vector<8x128xf32>
    %360 = arith.truncf %359 : vector<8x128xf32> to vector<8x128xbf16>
    %cst_139 = arith.constant dense<0.000000e+00> : vector<24x8xf32>
    %361 = tpu.matmul %358, %360, %cst_139 {dimension_numbers = #tpu.dot_dimension_numbers<[1], [1], [0], [0], [0, 0, 1, 0], [], []>} : vector<24x128xbf16>, vector<8x128xbf16>, vector<24x8xf32> -> vector<24x8xf32>
    %cst_140 = arith.constant 0.0883883461 : f32
    %362 = vector.broadcast %cst_140 : f32 to vector<24x8xf32>
    %363 = arith.mulf %361, %362 : vector<24x8xf32>
    %cst_141 = arith.constant 5.000000e-01 : f32
    %364 = vector.broadcast %cst_141 : f32 to vector<1x8xf32>
    %365 = arith.cmpf ogt, %123, %364 : vector<1x8xf32>
    %cst_142 = arith.constant -3.40282347E+38 : f32
    %366 = vector.shape_cast %365 : vector<1x8xi1> to vector<1x8xi1>
    %367 = vector.broadcast %366 : vector<1x8xi1> to vector<24x8xi1>
    %368 = vector.broadcast %cst_142 : f32 to vector<24x8xf32>
    %369 = arith.select %367, %363, %368 : vector<24x8xi1>, vector<24x8xf32>
    %cst_143 = arith.constant dense<0xFF800000> : vector<24xf32>
    %370 = vector.multi_reduction <maximumf>, %369, %cst_143 [1] : vector<24x8xf32> to vector<24xf32>
    %371 = vector.shape_cast %370 : vector<24xf32> to vector<24x1xf32>
    %372 = vector.broadcast %371 : vector<24x1xf32> to vector<24x8xf32>
    %373 = arith.subf %369, %372 : vector<24x8xf32>
    %374 = math.exp %373 : vector<24x8xf32>
    %cst_144 = arith.constant dense<0.000000e+00> : vector<24xf32>
    %375 = vector.multi_reduction <add>, %374, %cst_144 [1] : vector<24x8xf32> to vector<24xf32>
    %376 = vector.shape_cast %375 : vector<24xf32> to vector<24x1xf32>
    %377 = vector.broadcast %376 : vector<24x1xf32> to vector<24x8xf32>
    %378 = arith.divf %374, %377 : vector<24x8xf32>
    %379 = arith.truncf %378 : vector<24x8xf32> to vector<24x8xbf16>
    %380 = vector.extract_strided_slice %356 {offsets = [0, 0], sizes = [8, 128], strides = [1, 1]} : vector<8x256xf32> to vector<8x128xf32>
    %381 = arith.truncf %380 : vector<8x128xf32> to vector<8x128xbf16>
    %cst_145 = arith.constant dense<0.000000e+00> : vector<24x128xf32>
    %382 = tpu.matmul %379, %381, %cst_145 {dimension_numbers = #tpu.dot_dimension_numbers<[1], [0], [0], [1], [0, 0, 1, 1], [], []>} : vector<24x8xbf16>, vector<8x128xbf16>, vector<24x128xf32> -> vector<24x128xf32>
    %383 = vector.extract_strided_slice %354 {offsets = [0, 128], sizes = [24, 128], strides = [1, 1]} : vector<24x256xf32> to vector<24x128xf32>
    %384 = arith.truncf %383 : vector<24x128xf32> to vector<24x128xbf16>
    %385 = vector.extract_strided_slice %355 {offsets = [0, 128], sizes = [8, 128], strides = [1, 1]} : vector<8x256xf32> to vector<8x128xf32>
    %386 = arith.truncf %385 : vector<8x128xf32> to vector<8x128xbf16>
    %cst_146 = arith.constant dense<0.000000e+00> : vector<24x8xf32>
    %387 = tpu.matmul %384, %386, %cst_146 {dimension_numbers = #tpu.dot_dimension_numbers<[1], [1], [0], [0], [0, 0, 1, 0], [], []>} : vector<24x128xbf16>, vector<8x128xbf16>, vector<24x8xf32> -> vector<24x8xf32>
    %cst_147 = arith.constant 0.0883883461 : f32
    %388 = vector.broadcast %cst_147 : f32 to vector<24x8xf32>
    %389 = arith.mulf %387, %388 : vector<24x8xf32>
    %cst_148 = arith.constant 5.000000e-01 : f32
    %390 = vector.broadcast %cst_148 : f32 to vector<1x8xf32>
    %391 = arith.cmpf ogt, %123, %390 : vector<1x8xf32>
    %cst_149 = arith.constant -3.40282347E+38 : f32
    %392 = vector.shape_cast %391 : vector<1x8xi1> to vector<1x8xi1>
    %393 = vector.broadcast %392 : vector<1x8xi1> to vector<24x8xi1>
    %394 = vector.broadcast %cst_149 : f32 to vector<24x8xf32>
    %395 = arith.select %393, %389, %394 : vector<24x8xi1>, vector<24x8xf32>
    %cst_150 = arith.constant dense<0xFF800000> : vector<24xf32>
    %396 = vector.multi_reduction <maximumf>, %395, %cst_150 [1] : vector<24x8xf32> to vector<24xf32>
    %397 = vector.shape_cast %396 : vector<24xf32> to vector<24x1xf32>
    %398 = vector.broadcast %397 : vector<24x1xf32> to vector<24x8xf32>
    %399 = arith.subf %395, %398 : vector<24x8xf32>
    %400 = math.exp %399 : vector<24x8xf32>
    %cst_151 = arith.constant dense<0.000000e+00> : vector<24xf32>
    %401 = vector.multi_reduction <add>, %400, %cst_151 [1] : vector<24x8xf32> to vector<24xf32>
    %402 = vector.shape_cast %401 : vector<24xf32> to vector<24x1xf32>
    %403 = vector.broadcast %402 : vector<24x1xf32> to vector<24x8xf32>
    %404 = arith.divf %400, %403 : vector<24x8xf32>
    %405 = arith.truncf %404 : vector<24x8xf32> to vector<24x8xbf16>
    %406 = vector.extract_strided_slice %356 {offsets = [0, 128], sizes = [8, 128], strides = [1, 1]} : vector<8x256xf32> to vector<8x128xf32>
    %407 = arith.truncf %406 : vector<8x128xf32> to vector<8x128xbf16>
    %cst_152 = arith.constant dense<0.000000e+00> : vector<24x128xf32>
    %408 = tpu.matmul %405, %407, %cst_152 {dimension_numbers = #tpu.dot_dimension_numbers<[1], [0], [0], [1], [0, 0, 1, 1], [], []>} : vector<24x8xbf16>, vector<8x128xbf16>, vector<24x128xf32> -> vector<24x128xf32>
    %409 = tpu.concatenate %382, %408 in 1 : vector<24x128xf32>, vector<24x128xf32> -> vector<24x256xf32>
    %410 = tpu.concatenate %353, %409 in 0 : vector<24x256xf32>, vector<24x256xf32> -> vector<48x256xf32>
    %411 = arith.truncf %410 : vector<48x256xf32> to vector<48x256xbf16>
    %c0_153 = arith.constant 0 : index
    %c0_154 = arith.constant 0 : index
    %412 = vector.load %arg21[%c0_153, %c0_154] : memref<256x256xbf16, #tpu.memory_space<vmem>>, vector<256x256xbf16>
    %cst_155 = arith.constant dense<0.000000e+00> : vector<48x256xf32>
    %413 = tpu.matmul %411, %412, %cst_155 {dimension_numbers = #tpu.dot_dimension_numbers<[1], [0], [0], [1], [0, 0, 1, 1], [], []>} : vector<48x256xbf16>, vector<256x256xbf16>, vector<48x256xf32> -> vector<48x256xf32>
    %c0_156 = arith.constant 0 : index
    %c0_157 = arith.constant 0 : index
    %414 = vector.load %arg22[%c0_156, %c0_157] : memref<1x256xf32, #tpu.memory_space<vmem>>, vector<1x256xf32>
    %415 = vector.broadcast %414 : vector<1x256xf32> to vector<48x256xf32>
    %416 = arith.addf %413, %415 : vector<48x256xf32>
    %417 = arith.addf %416, %270 : vector<48x256xf32>
    %cst_158 = arith.constant dense<0.000000e+00> : vector<48xf32>
    %418 = vector.multi_reduction <add>, %417, %cst_158 [1] : vector<48x256xf32> to vector<48xf32>
    %419 = vector.shape_cast %418 : vector<48xf32> to vector<48x1xf32>
    %cst_159 = arith.constant 2.560000e+02 : f32
    %420 = vector.broadcast %cst_159 : f32 to vector<48x1xf32>
    %421 = arith.divf %419, %420 : vector<48x1xf32>
    %422 = vector.broadcast %421 : vector<48x1xf32> to vector<48x256xf32>
    %423 = arith.subf %417, %422 : vector<48x256xf32>
    %424 = arith.mulf %423, %423 : vector<48x256xf32>
    %cst_160 = arith.constant dense<0.000000e+00> : vector<48xf32>
    %425 = vector.multi_reduction <add>, %424, %cst_160 [1] : vector<48x256xf32> to vector<48xf32>
    %426 = vector.shape_cast %425 : vector<48xf32> to vector<48x1xf32>
    %cst_161 = arith.constant 2.560000e+02 : f32
    %427 = vector.broadcast %cst_161 : f32 to vector<48x1xf32>
    %428 = arith.divf %426, %427 : vector<48x1xf32>
    %429 = vector.broadcast %421 : vector<48x1xf32> to vector<48x256xf32>
    %430 = arith.subf %417, %429 : vector<48x256xf32>
    %cst_162 = arith.constant 9.99999974E-6 : f32
    %431 = vector.broadcast %cst_162 : f32 to vector<48x1xf32>
    %432 = arith.addf %428, %431 : vector<48x1xf32>
    %433 = math.rsqrt %432 : vector<48x1xf32>
    %434 = vector.broadcast %433 : vector<48x1xf32> to vector<48x256xf32>
    %435 = arith.mulf %430, %434 : vector<48x256xf32>
    %c0_163 = arith.constant 0 : index
    %c0_164 = arith.constant 0 : index
    %436 = vector.load %arg24[%c0_163, %c0_164] : memref<1x256xf32, #tpu.memory_space<vmem>>, vector<1x256xf32>
    %437 = vector.broadcast %436 : vector<1x256xf32> to vector<48x256xf32>
    %438 = arith.mulf %435, %437 : vector<48x256xf32>
    %c0_165 = arith.constant 0 : index
    %c0_166 = arith.constant 0 : index
    %439 = vector.load %arg25[%c0_165, %c0_166] : memref<1x256xf32, #tpu.memory_space<vmem>>, vector<1x256xf32>
    %440 = vector.broadcast %439 : vector<1x256xf32> to vector<48x256xf32>
    %441 = arith.addf %438, %440 : vector<48x256xf32>
    %442 = arith.truncf %441 : vector<48x256xf32> to vector<48x256xbf16>
    %c0_167 = arith.constant 0 : index
    %c0_168 = arith.constant 0 : index
    %443 = vector.load %arg26[%c0_167, %c0_168] : memref<256x2048xbf16, #tpu.memory_space<vmem>>, vector<256x1024xbf16>
    %cst_169 = arith.constant dense<0.000000e+00> : vector<48x1024xf32>
    %444 = tpu.matmul %442, %443, %cst_169 {dimension_numbers = #tpu.dot_dimension_numbers<[1], [0], [0], [1], [0, 0, 1, 1], [], []>} : vector<48x256xbf16>, vector<256x1024xbf16>, vector<48x1024xf32> -> vector<48x1024xf32>
    %c0_170 = arith.constant 0 : index
    %c0_171 = arith.constant 0 : index
    %445 = vector.load %arg27[%c0_170, %c0_171] : memref<1x2048xf32, #tpu.memory_space<vmem>>, vector<1x1024xf32>
    %446 = vector.broadcast %445 : vector<1x1024xf32> to vector<48x1024xf32>
    %447 = arith.addf %444, %446 : vector<48x1024xf32>
    %c0_172 = arith.constant 0 : index
    %c1024_173 = arith.constant 1024 : index
    %448 = vector.load %arg26[%c0_172, %c1024_173] : memref<256x2048xbf16, #tpu.memory_space<vmem>>, vector<256x1024xbf16>
    %cst_174 = arith.constant dense<0.000000e+00> : vector<48x1024xf32>
    %449 = tpu.matmul %442, %448, %cst_174 {dimension_numbers = #tpu.dot_dimension_numbers<[1], [0], [0], [1], [0, 0, 1, 1], [], []>} : vector<48x256xbf16>, vector<256x1024xbf16>, vector<48x1024xf32> -> vector<48x1024xf32>
    %c0_175 = arith.constant 0 : index
    %c1024_176 = arith.constant 1024 : index
    %450 = vector.load %arg27[%c0_175, %c1024_176] : memref<1x2048xf32, #tpu.memory_space<vmem>>, vector<1x1024xf32>
    %451 = vector.broadcast %450 : vector<1x1024xf32> to vector<48x1024xf32>
    %452 = arith.addf %449, %451 : vector<48x1024xf32>
    %cst_177 = arith.constant 5.000000e-01 : f32
    %453 = vector.broadcast %cst_177 : f32 to vector<48x1024xf32>
    %454 = arith.mulf %453, %452 : vector<48x1024xf32>
    %cst_178 = arith.constant 0.707106769 : f32
    %455 = vector.broadcast %cst_178 : f32 to vector<48x1024xf32>
    %456 = arith.mulf %452, %455 : vector<48x1024xf32>
    %cst_179 = arith.constant 0.000000e+00 : f32
    %457 = vector.broadcast %cst_179 : f32 to vector<48x1024xf32>
    %458 = arith.cmpf oge, %456, %457 : vector<48x1024xf32>
    %cst_180 = arith.constant 1.000000e+00 : f32
    %cst_181 = arith.constant -1.000000e+00 : f32
    %459 = vector.broadcast %cst_180 : f32 to vector<48x1024xf32>
    %460 = vector.broadcast %cst_181 : f32 to vector<48x1024xf32>
    %461 = arith.select %458, %459, %460 : vector<48x1024xi1>, vector<48x1024xf32>
    %462 = math.absf %456 : vector<48x1024xf32>
    %cst_182 = arith.constant 0.327591091 : f32
    %463 = vector.broadcast %cst_182 : f32 to vector<48x1024xf32>
    %464 = arith.mulf %463, %462 : vector<48x1024xf32>
    %cst_183 = arith.constant 1.000000e+00 : f32
    %465 = vector.broadcast %cst_183 : f32 to vector<48x1024xf32>
    %466 = arith.addf %465, %464 : vector<48x1024xf32>
    %cst_184 = arith.constant 1.000000e+00 : f32
    %467 = vector.broadcast %cst_184 : f32 to vector<48x1024xf32>
    %468 = arith.divf %467, %466 : vector<48x1024xf32>
    %cst_185 = arith.constant 1.06140542 : f32
    %469 = vector.broadcast %cst_185 : f32 to vector<48x1024xf32>
    %470 = arith.mulf %469, %468 : vector<48x1024xf32>
    %cst_186 = arith.constant -1.45315206 : f32
    %471 = vector.broadcast %cst_186 : f32 to vector<48x1024xf32>
    %472 = arith.addf %470, %471 : vector<48x1024xf32>
    %473 = arith.mulf %472, %468 : vector<48x1024xf32>
    %cst_187 = arith.constant 1.42141378 : f32
    %474 = vector.broadcast %cst_187 : f32 to vector<48x1024xf32>
    %475 = arith.addf %473, %474 : vector<48x1024xf32>
    %476 = arith.mulf %475, %468 : vector<48x1024xf32>
    %cst_188 = arith.constant -0.284496725 : f32
    %477 = vector.broadcast %cst_188 : f32 to vector<48x1024xf32>
    %478 = arith.addf %476, %477 : vector<48x1024xf32>
    %479 = arith.mulf %478, %468 : vector<48x1024xf32>
    %cst_189 = arith.constant 0.254829586 : f32
    %480 = vector.broadcast %cst_189 : f32 to vector<48x1024xf32>
    %481 = arith.addf %479, %480 : vector<48x1024xf32>
    %482 = arith.mulf %481, %468 : vector<48x1024xf32>
    %cst_190 = arith.constant 0.000000e+00 : f32
    %483 = vector.broadcast %cst_190 : f32 to vector<48x1024xf32>
    %484 = arith.subf %483, %462 : vector<48x1024xf32>
    %485 = arith.mulf %484, %462 : vector<48x1024xf32>
    %486 = math.exp %485 : vector<48x1024xf32>
    %487 = arith.mulf %482, %486 : vector<48x1024xf32>
    %cst_191 = arith.constant 1.000000e+00 : f32
    %488 = vector.broadcast %cst_191 : f32 to vector<48x1024xf32>
    %489 = arith.subf %488, %487 : vector<48x1024xf32>
    %490 = arith.mulf %461, %489 : vector<48x1024xf32>
    %cst_192 = arith.constant 1.000000e+00 : f32
    %491 = vector.broadcast %cst_192 : f32 to vector<48x1024xf32>
    %492 = arith.addf %491, %490 : vector<48x1024xf32>
    %493 = arith.mulf %454, %492 : vector<48x1024xf32>
    %494 = arith.mulf %447, %493 : vector<48x1024xf32>
    %495 = arith.truncf %494 : vector<48x1024xf32> to vector<48x1024xbf16>
    %c0_193 = arith.constant 0 : index
    %c0_194 = arith.constant 0 : index
    %496 = vector.load %arg28[%c0_193, %c0_194] : memref<1024x256xbf16, #tpu.memory_space<vmem>>, vector<1024x256xbf16>
    %cst_195 = arith.constant dense<0.000000e+00> : vector<48x256xf32>
    %497 = tpu.matmul %495, %496, %cst_195 {dimension_numbers = #tpu.dot_dimension_numbers<[1], [0], [0], [1], [0, 0, 1, 1], [], []>} : vector<48x1024xbf16>, vector<1024x256xbf16>, vector<48x256xf32> -> vector<48x256xf32>
    %c0_196 = arith.constant 0 : index
    %c0_197 = arith.constant 0 : index
    %498 = vector.load %arg29[%c0_196, %c0_197] : memref<1x256xf32, #tpu.memory_space<vmem>>, vector<1x256xf32>
    %499 = vector.broadcast %498 : vector<1x256xf32> to vector<48x256xf32>
    %500 = arith.addf %497, %499 : vector<48x256xf32>
    %501 = arith.addf %500, %417 : vector<48x256xf32>
    %cst_198 = arith.constant dense<0.000000e+00> : vector<48xf32>
    %502 = vector.multi_reduction <add>, %501, %cst_198 [1] : vector<48x256xf32> to vector<48xf32>
    %503 = vector.shape_cast %502 : vector<48xf32> to vector<48x1xf32>
    %cst_199 = arith.constant 2.560000e+02 : f32
    %504 = vector.broadcast %cst_199 : f32 to vector<48x1xf32>
    %505 = arith.divf %503, %504 : vector<48x1xf32>
    %506 = vector.broadcast %505 : vector<48x1xf32> to vector<48x256xf32>
    %507 = arith.subf %501, %506 : vector<48x256xf32>
    %508 = arith.mulf %507, %507 : vector<48x256xf32>
    %cst_200 = arith.constant dense<0.000000e+00> : vector<48xf32>
    %509 = vector.multi_reduction <add>, %508, %cst_200 [1] : vector<48x256xf32> to vector<48xf32>
    %510 = vector.shape_cast %509 : vector<48xf32> to vector<48x1xf32>
    %cst_201 = arith.constant 2.560000e+02 : f32
    %511 = vector.broadcast %cst_201 : f32 to vector<48x1xf32>
    %512 = arith.divf %510, %511 : vector<48x1xf32>
    %513 = vector.broadcast %505 : vector<48x1xf32> to vector<48x256xf32>
    %514 = arith.subf %501, %513 : vector<48x256xf32>
    %cst_202 = arith.constant 9.99999974E-6 : f32
    %515 = vector.broadcast %cst_202 : f32 to vector<48x1xf32>
    %516 = arith.addf %512, %515 : vector<48x1xf32>
    %517 = math.rsqrt %516 : vector<48x1xf32>
    %518 = vector.broadcast %517 : vector<48x1xf32> to vector<48x256xf32>
    %519 = arith.mulf %514, %518 : vector<48x256xf32>
    %c0_203 = arith.constant 0 : index
    %c0_204 = arith.constant 0 : index
    %520 = vector.load %arg30[%c0_203, %c0_204] : memref<1x256xf32, #tpu.memory_space<vmem>>, vector<1x256xf32>
    %521 = vector.broadcast %520 : vector<1x256xf32> to vector<48x256xf32>
    %522 = arith.mulf %519, %521 : vector<48x256xf32>
    %c0_205 = arith.constant 0 : index
    %c0_206 = arith.constant 0 : index
    %523 = vector.load %arg31[%c0_205, %c0_206] : memref<1x256xf32, #tpu.memory_space<vmem>>, vector<1x256xf32>
    %524 = vector.broadcast %523 : vector<1x256xf32> to vector<48x256xf32>
    %525 = arith.addf %522, %524 : vector<48x256xf32>
    %526 = vector.extract_strided_slice %525 {offsets = [8, 0], sizes = [16, 256], strides = [1, 1]} : vector<48x256xf32> to vector<16x256xf32>
    %527 = vector.extract_strided_slice %525 {offsets = [32, 0], sizes = [16, 256], strides = [1, 1]} : vector<48x256xf32> to vector<16x256xf32>
    %528 = tpu.concatenate %526, %527 in 0 : vector<16x256xf32>, vector<16x256xf32> -> vector<32x256xf32>
    %529 = arith.truncf %528 : vector<32x256xf32> to vector<32x256xbf16>
    %c0_207 = arith.constant 0 : index
    %c0_208 = arith.constant 0 : index
    %530 = vector.load %arg32[%c0_207, %c0_208] : memref<256x128xbf16, #tpu.memory_space<vmem>>, vector<256x128xbf16>
    %cst_209 = arith.constant dense<0.000000e+00> : vector<32x128xf32>
    %531 = tpu.matmul %529, %530, %cst_209 {dimension_numbers = #tpu.dot_dimension_numbers<[1], [0], [0], [1], [0, 0, 1, 1], [], []>} : vector<32x256xbf16>, vector<256x128xbf16>, vector<32x128xf32> -> vector<32x128xf32>
    %c0_210 = arith.constant 0 : index
    %c0_211 = arith.constant 0 : index
    %532 = vector.load %arg33[%c0_210, %c0_211] : memref<1x128xf32, #tpu.memory_space<vmem>>, vector<1x128xf32>
    %533 = vector.broadcast %532 : vector<1x128xf32> to vector<32x128xf32>
    %534 = arith.addf %531, %533 : vector<32x128xf32>
    %c0_212 = arith.constant 0 : index
    %c0_213 = arith.constant 0 : index
    %535 = vector.load %arg34[%c0_212, %c0_213] : memref<32x128xf32, #tpu.memory_space<vmem>>, vector<32x128xf32>
    tpu.vector_store %arg34[%c0_212, %c0_213], %534 {strides = array<i32>} : memref<32x128xf32, #tpu.memory_space<vmem>>, vector<32x128xf32>,
    return
  }
  func.func @transform_0(%arg0: i32) -> (i32, i32, i32) {
    %c0_i32 = arith.constant 0 : i32
    %c0_i32_0 = arith.constant 0 : i32
    %c0_i32_1 = arith.constant 0 : i32
    return %arg0, %c0_i32, %c0_i32_0 : i32, i32, i32
  }
  func.func @transform_1(%arg0: i32) -> (i32, i32, i32) {
    %c0_i32 = arith.constant 0 : i32
    %c0_i32_0 = arith.constant 0 : i32
    %c0_i32_1 = arith.constant 0 : i32
    return %arg0, %c0_i32, %c0_i32_0 : i32, i32, i32
  }
  func.func @transform_2(%arg0: i32) -> (i32, i32, i32) {
    %c0_i32 = arith.constant 0 : i32
    %c0_i32_0 = arith.constant 0 : i32
    %c0_i32_1 = arith.constant 0 : i32
    return %arg0, %c0_i32, %c0_i32_0 : i32, i32, i32
  }
  func.func @transform_3(%arg0: i32) -> (i32, i32, i32) {
    %c0_i32 = arith.constant 0 : i32
    %c0_i32_0 = arith.constant 0 : i32
    %c0_i32_1 = arith.constant 0 : i32
    return %arg0, %c0_i32, %c0_i32_0 : i32, i32, i32
  }
  func.func @transform_4(%arg0: i32) -> (i32, i32) {
    %c0_i32 = arith.constant 0 : i32
    %c0_i32_0 = arith.constant 0 : i32
    %c0_i32_1 = arith.constant 0 : i32
    return %c0_i32, %c0_i32_0 : i32, i32
  }
  func.func @transform_5(%arg0: i32) -> (i32, i32) {
    %c0_i32 = arith.constant 0 : i32
    %c0_i32_0 = arith.constant 0 : i32
    %c0_i32_1 = arith.constant 0 : i32
    return %c0_i32, %c0_i32_0 : i32, i32
  }
  func.func @transform_6(%arg0: i32) -> (i32, i32) {
    %c0_i32 = arith.constant 0 : i32
    %c0_i32_0 = arith.constant 0 : i32
    %c0_i32_1 = arith.constant 0 : i32
    return %c0_i32, %c0_i32_0 : i32, i32
  }
  func.func @transform_7(%arg0: i32) -> (i32, i32) {
    %c0_i32 = arith.constant 0 : i32
    %c0_i32_0 = arith.constant 0 : i32
    %c0_i32_1 = arith.constant 0 : i32
    return %c0_i32, %c0_i32_0 : i32, i32
  }
  func.func @transform_8(%arg0: i32) -> (i32, i32) {
    %c0_i32 = arith.constant 0 : i32
    %c0_i32_0 = arith.constant 0 : i32
    %c0_i32_1 = arith.constant 0 : i32
    return %c0_i32, %c0_i32_0 : i32, i32
  }
  func.func @transform_9(%arg0: i32) -> (i32, i32) {
    %c0_i32 = arith.constant 0 : i32
    %c0_i32_0 = arith.constant 0 : i32
    %c0_i32_1 = arith.constant 0 : i32
    return %c0_i32, %c0_i32_0 : i32, i32
  }
  func.func @transform_10(%arg0: i32) -> (i32, i32) {
    %c0_i32 = arith.constant 0 : i32
    %c0_i32_0 = arith.constant 0 : i32
    %c0_i32_1 = arith.constant 0 : i32
    return %c0_i32, %c0_i32_0 : i32, i32
  }
  func.func @transform_11(%arg0: i32) -> (i32, i32) {
    %c0_i32 = arith.constant 0 : i32
    %c0_i32_0 = arith.constant 0 : i32
    %c0_i32_1 = arith.constant 0 : i32
    return %c0_i32, %c0_i32_0 : i32, i32
  }
  func.func @transform_12(%arg0: i32) -> (i32, i32) {
    %c0_i32 = arith.constant 0 : i32
    %c0_i32_0 = arith.constant 0 : i32
    %c0_i32_1 = arith.constant 0 : i32
    return %c0_i32, %c0_i32_0 : i32, i32
  }
  func.func @transform_13(%arg0: i32) -> (i32, i32) {
    %c0_i32 = arith.constant 0 : i32
    %c0_i32_0 = arith.constant 0 : i32
    %c0_i32_1 = arith.constant 0 : i32
    return %c0_i32, %c0_i32_0 : i32, i32
  }
  func.func @transform_14(%arg0: i32) -> (i32, i32) {
    %c0_i32 = arith.constant 0 : i32
    %c0_i32_0 = arith.constant 0 : i32
    %c0_i32_1 = arith.constant 0 : i32
    return %c0_i32, %c0_i32_0 : i32, i32
  }
  func.func @transform_15(%arg0: i32) -> (i32, i32) {
    %c0_i32 = arith.constant 0 : i32
    %c0_i32_0 = arith.constant 0 : i32
    %c0_i32_1 = arith.constant 0 : i32
    return %c0_i32, %c0_i32_0 : i32, i32
  }
  func.func @transform_16(%arg0: i32) -> (i32, i32) {
    %c0_i32 = arith.constant 0 : i32
    %c0_i32_0 = arith.constant 0 : i32
    %c0_i32_1 = arith.constant 0 : i32
    return %c0_i32, %c0_i32_0 : i32, i32
  }
  func.func @transform_17(%arg0: i32) -> (i32, i32) {
    %c0_i32 = arith.constant 0 : i32
    %c0_i32_0 = arith.constant 0 : i32
    %c0_i32_1 = arith.constant 0 : i32
    return %c0_i32, %c0_i32_0 : i32, i32
  }
  func.func @transform_18(%arg0: i32) -> (i32, i32) {
    %c0_i32 = arith.constant 0 : i32
    %c0_i32_0 = arith.constant 0 : i32
    %c0_i32_1 = arith.constant 0 : i32
    return %c0_i32, %c0_i32_0 : i32, i32
  }
  func.func @transform_19(%arg0: i32) -> (i32, i32) {
    %c0_i32 = arith.constant 0 : i32
    %c0_i32_0 = arith.constant 0 : i32
    %c0_i32_1 = arith.constant 0 : i32
    return %c0_i32, %c0_i32_0 : i32, i32
  }
  func.func @transform_20(%arg0: i32) -> (i32, i32) {
    %c0_i32 = arith.constant 0 : i32
    %c0_i32_0 = arith.constant 0 : i32
    %c0_i32_1 = arith.constant 0 : i32
    return %c0_i32, %c0_i32_0 : i32, i32
  }
  func.func @transform_21(%arg0: i32) -> (i32, i32) {
    %c0_i32 = arith.constant 0 : i32
    %c0_i32_0 = arith.constant 0 : i32
    %c0_i32_1 = arith.constant 0 : i32
    return %c0_i32, %c0_i32_0 : i32, i32
  }
  func.func @transform_22(%arg0: i32) -> (i32, i32) {
    %c0_i32 = arith.constant 0 : i32
    %c0_i32_0 = arith.constant 0 : i32
    %c0_i32_1 = arith.constant 0 : i32
    return %c0_i32, %c0_i32_0 : i32, i32
  }
  func.func @transform_23(%arg0: i32) -> (i32, i32) {
    %c0_i32 = arith.constant 0 : i32
    %c0_i32_0 = arith.constant 0 : i32
    %c0_i32_1 = arith.constant 0 : i32
    return %c0_i32, %c0_i32_0 : i32, i32
  }
  func.func @transform_24(%arg0: i32) -> (i32, i32) {
    %c0_i32 = arith.constant 0 : i32
    %c0_i32_0 = arith.constant 0 : i32
    %c0_i32_1 = arith.constant 0 : i32
    return %c0_i32, %c0_i32_0 : i32, i32
  }
  func.func @transform_25(%arg0: i32) -> (i32, i32) {
    %c0_i32 = arith.constant 0 : i32
    %c0_i32_0 = arith.constant 0 : i32
    %c0_i32_1 = arith.constant 0 : i32
    return %c0_i32, %c0_i32_0 : i32, i32
  }
  func.func @transform_26(%arg0: i32) -> (i32, i32) {
    %c0_i32 = arith.constant 0 : i32
    %c0_i32_0 = arith.constant 0 : i32
    %c0_i32_1 = arith.constant 0 : i32
    return %c0_i32, %c0_i32_0 : i32, i32
  }
  func.func @transform_27(%arg0: i32) -> (i32, i32) {
    %c0_i32 = arith.constant 0 : i32
    %c0_i32_0 = arith.constant 0 : i32
    %c0_i32_1 = arith.constant 0 : i32
    return %c0_i32, %c0_i32_0 : i32, i32
  }
  func.func @transform_28(%arg0: i32) -> (i32, i32) {
    %c0_i32 = arith.constant 0 : i32
    %c0_i32_0 = arith.constant 0 : i32
    %c0_i32_1 = arith.constant 0 : i32
    return %c0_i32, %c0_i32_0 : i32, i32
  }
  func.func @transform_29(%arg0: i32) -> (i32, i32) {
    %c0_i32 = arith.constant 0 : i32
    %c0_i32_0 = arith.constant 0 : i32
    %c0_i32_1 = arith.constant 0 : i32
    return %c0_i32, %c0_i32_0 : i32, i32
  }
  func.func @transform_30(%arg0: i32) -> (i32, i32) {
    %c0_i32 = arith.constant 0 : i32
    %c0_i32_0 = arith.constant 0 : i32
    %c0_i32_1 = arith.constant 0 : i32
    return %c0_i32, %c0_i32_0 : i32, i32
  }
  func.func @transform_31(%arg0: i32) -> (i32, i32) {
    %c0_i32 = arith.constant 0 : i32
    %c0_i32_0 = arith.constant 0 : i32
    %c0_i32_1 = arith.constant 0 : i32
    return %c0_i32, %c0_i32_0 : i32, i32
  }
  func.func @transform_32(%arg0: i32) -> (i32, i32) {
    %c0_i32 = arith.constant 0 : i32
    %c0_i32_0 = arith.constant 0 : i32
    %c0_i32_1 = arith.constant 0 : i32
    return %c0_i32, %c0_i32_0 : i32, i32
  }
  func.func @transform_33(%arg0: i32) -> (i32, i32) {
    %c0_i32 = arith.constant 0 : i32
    %c0_i32_0 = arith.constant 0 : i32
    return %arg0, %c0_i32 : i32, i32
  }
}

</mosaic_0001>

<llo_original>
// kernel: ldmnet_forward.1
$region0: #{ldmnet_forward.1}
  #allocation0 [shape = 'u32[]', space=smem, size = 0x4, offset = 0x4, fixed_abs, tag = 'smem constant byte address 0x4 - core index']
  #allocation1 [shape = 'u32[144,128]{1,0:T(1,128)}', space=vmem, size = 0x12000, scoped, tag = 'internal scratch']
  %s0 = inlined_call_operand.smem [shape: u32[34], index: -1, kind: input, shape index: {}]
  %s1 = sld [smem:[%s0]]
  %s2 = scalar_lea.smem %s0, 1
  %s3 = sld [smem:[%s2]]
  %s4 = scalar_lea.smem %s0, 2
  %s5 = sld [smem:[%s4]]
  %s6 = scalar_lea.smem %s0, 3
  %s7 = sld [smem:[%s6]]
  %s8 = scalar_lea.smem %s0, 4
  %s9 = sld [smem:[%s8]]
  %s10 = scalar_lea.smem %s0, 5
  %s11 = sld [smem:[%s10]]
  %s12 = scalar_lea.smem %s0, 6
  %s13 = sld [smem:[%s12]]
  %s14 = scalar_lea.smem %s0, 7
  %s15 = sld [smem:[%s14]]
  %s16 = scalar_lea.smem %s0, 8
  %s17 = sld [smem:[%s16]]
  %s18 = scalar_lea.smem %s0, 9
  %s19 = sld [smem:[%s18]]
  %s20 = scalar_lea.smem %s0, 10
  %s21 = sld [smem:[%s20]]
  %s22 = scalar_lea.smem %s0, 11
  %s23 = sld [smem:[%s22]]
  %s24 = scalar_lea.smem %s0, 12
  %s25 = sld [smem:[%s24]]
  %s26 = scalar_lea.smem %s0, 13
  %s27 = sld [smem:[%s26]]
  %s28 = scalar_lea.smem %s0, 14
  %s29 = sld [smem:[%s28]]
  %s30 = scalar_lea.smem %s0, 15
  %s31 = sld [smem:[%s30]]
  %s32 = scalar_lea.smem %s0, 16
  %s33 = sld [smem:[%s32]]
  %s34 = scalar_lea.smem %s0, 17
  %s35 = sld [smem:[%s34]]
  %s36 = scalar_lea.smem %s0, 18
  %s37 = sld [smem:[%s36]]
  %s38 = scalar_lea.smem %s0, 19
  %s39 = sld [smem:[%s38]]
  %s40 = scalar_lea.smem %s0, 20
  %s41 = sld [smem:[%s40]]
  %s42 = scalar_lea.smem %s0, 21
  %s43 = sld [smem:[%s42]]
  %s44 = scalar_lea.smem %s0, 22
  %s45 = sld [smem:[%s44]]
  %s46 = scalar_lea.smem %s0, 23
  %s47 = sld [smem:[%s46]]
  %s48 = scalar_lea.smem %s0, 24
  %s49 = sld [smem:[%s48]]
  %s50 = scalar_lea.smem %s0, 25
  %s51 = sld [smem:[%s50]]
  %s52 = scalar_lea.smem %s0, 26
  %s53 = sld [smem:[%s52]]
  %s54 = scalar_lea.smem %s0, 27
  %s55 = sld [smem:[%s54]]
  %s56 = scalar_lea.smem %s0, 28
  %s57 = sld [smem:[%s56]]
  %s58 = scalar_lea.smem %s0, 29
  %s59 = sld [smem:[%s58]]
  %s60 = scalar_lea.smem %s0, 30
  %s61 = sld [smem:[%s60]]
  %s62 = scalar_lea.smem %s0, 31
  %s63 = sld [smem:[%s62]]
  %s64 = scalar_lea.smem %s0, 32
  %s65 = sld [smem:[%s64]]
  %s66 = scalar_lea.smem %s0, 33
  %s67 = sld [smem:[%s66]]
  %s68 = sld [smem:[#allocation0]]
  $region242: #{ldmnet_forward.1} parent=0
    _
  %s70 = ssub.s32 1, %s68
  %s71 = scalar_select 0, %s70, %s68
  $region1: #{ldmnet_forward.1} parent=0
    #allocation2 [shape = 'u8[1048576]{0}', space=vmem, size = 0x100000, scoped, tag = 'input window, operand 4, single buffered']
    #allocation3 [shape = 's32[1]{0}', space=sflag, size = 0x4, scoped, tag = 'scoped memory for ldmnet_forward.1']
    #allocation4 [shape = 'u8[524288]{0}', space=vmem, size = 0x80000, scoped, tag = 'input window, operand 6, single buffered']
    #allocation5 [shape = 's32[1]{0}', space=sflag, size = 0x4, scoped, tag = 'scoped memory for ldmnet_forward.1']
    #allocation6 [shape = 'u8[1024]{0}', space=vmem, size = 0x400, scoped, tag = 'input window, operand 7, single buffered']
    #allocation7 [shape = 'u8[2048]{0}', space=vmem, size = 0x800, scoped, tag = 'input window, operand 8, single buffered']
    #allocation8 [shape = 's32[1]{0}', space=sflag, size = 0x4, scoped, tag = 'scoped memory for ldmnet_forward.1']
    #allocation9 [shape = 'u8[1024]{0}', space=vmem, size = 0x400, scoped, tag = 'input window, operand 9, single buffered']
    #allocation10 [shape = 'u8[1024]{0}', space=vmem, size = 0x400, scoped, tag = 'input window, operand 10, single buffered']
    #allocation11 [shape = 's32[1]{0}', space=sflag, size = 0x4, scoped, tag = 'scoped memory for ldmnet_forward.1']
    #allocation12 [shape = 'u8[1024]{0}', space=vmem, size = 0x400, scoped, tag = 'input window, operand 11, single buffered']
    #allocation13 [shape = 'u8[1024]{0}', space=vmem, size = 0x400, scoped, tag = 'input window, operand 12, single buffered']
    #allocation14 [shape = 's32[1]{0}', space=sflag, size = 0x4, scoped, tag = 'scoped memory for ldmnet_forward.1']
    #allocation15 [shape = 'u8[1024]{0}', space=vmem, size = 0x400, scoped, tag = 'input window, operand 13, single buffered']
    #allocation16 [shape = 'u8[131072]{0}', space=vmem, size = 0x20000, scoped, tag = 'input window, operand 14, single buffered']
    #allocation17 [shape = 's32[1]{0}', space=sflag, size = 0x4, scoped, tag = 'scoped memory for ldmnet_forward.1']
    #allocation18 [shape = 'u8[131072]{0}', space=vmem, size = 0x20000, scoped, tag = 'input window, operand 15, single buffered']
    #allocation19 [shape = 'u8[1024]{0}', space=vmem, size = 0x400, scoped, tag = 'input window, operand 16, single buffered']
    #allocation20 [shape = 's32[1]{0}', space=sflag, size = 0x4, scoped, tag = 'scoped memory for ldmnet_forward.1']
    #allocation21 [shape = 'u8[1024]{0}', space=vmem, size = 0x400, scoped, tag = 'input window, operand 17, single buffered']
    #allocation22 [shape = 'u8[1024]{0}', space=vmem, size = 0x400, scoped, tag = 'input window, operand 18, single buffered']
    #allocation23 [shape = 's32[1]{0}', space=sflag, size = 0x4, scoped, tag = 'scoped memory for ldmnet_forward.1']
    #allocation24 [shape = 'u8[131072]{0}', space=vmem, size = 0x20000, scoped, tag = 'input window, operand 19, single buffered']
    #allocation25 [shape = 'u8[131072]{0}', space=vmem, size = 0x20000, scoped, tag = 'input window, operand 20, single buffered']
    #allocation26 [shape = 's32[1]{0}', space=sflag, size = 0x4, scoped, tag = 'scoped memory for ldmnet_forward.1']
    #allocation27 [shape = 'u8[1024]{0}', space=vmem, size = 0x400, scoped, tag = 'input window, operand 21, single buffered']
    #allocation28 [shape = 'u8[1024]{0}', space=vmem, size = 0x400, scoped, tag = 'input window, operand 23, single buffered']
    #allocation29 [shape = 's32[1]{0}', space=sflag, size = 0x4, scoped, tag = 'scoped memory for ldmnet_forward.1']
    #allocation30 [shape = 'u8[1024]{0}', space=vmem, size = 0x400, scoped, tag = 'input window, operand 24, single buffered']
    #allocation31 [shape = 'u8[1048576]{0}', space=vmem, size = 0x100000, scoped, tag = 'input window, operand 25, single buffered']
    #allocation32 [shape = 's32[1]{0}', space=sflag, size = 0x4, scoped, tag = 'scoped memory for ldmnet_forward.1']
    #allocation33 [shape = 'u8[524288]{0}', space=vmem, size = 0x80000, scoped, tag = 'input window, operand 27, single buffered']
    #allocation34 [shape = 'u8[1024]{0}', space=vmem, size = 0x400, scoped, tag = 'input window, operand 28, single buffered']
    #allocation35 [shape = 's32[1]{0}', space=sflag, size = 0x4, scoped, tag = 'scoped memory for ldmnet_forward.1']
    #allocation36 [shape = 'u8[1024]{0}', space=vmem, size = 0x400, scoped, tag = 'input window, operand 29, single buffered']
    #allocation37 [shape = 'u8[1024]{0}', space=vmem, size = 0x400, scoped, tag = 'input window, operand 30, single buffered']
    #allocation38 [shape = 's32[1]{0}', space=sflag, size = 0x4, scoped, tag = 'scoped memory for ldmnet_forward.1']
    #allocation39 [shape = 'u8[512]{0}', space=vmem, size = 0x400, scoped, tag = 'input window, operand 32, single buffered']
    %72 = vsyncpa [#allocation3], 0
    %73 = vsyncpa [#allocation5], 0
    %74 = vsyncpa [#allocation8], 0
    %75 = vsyncpa [#allocation11], 0
    %76 = vsyncpa [#allocation14], 0
    %77 = vsyncpa [#allocation17], 0
    %78 = vsyncpa [#allocation20], 0
    %79 = vsyncpa [#allocation23], 0
    %80 = vsyncpa [#allocation26], 0
    %81 = vsyncpa [#allocation29], 0
    %82 = vsyncpa [#allocation32], 0
    %83 = vsyncpa [#allocation35], 0
    %84 = vsyncpa [#allocation38], 0
    // Predicated region
    $region2: #{ldmnet_forward.1} parent=1 // pred_check
      _
    $region3: #{ldmnet_forward.1} parent=1 // pred_check_branch
      %86 = sbr.rel (0) target = $region5
    $region4: #{ldmnet_forward.1} parent=1 // pred_region
      _
    $region5: #{ldmnet_forward.1} parent=1 // pred_fallthru
      _
    // Predicated region
    $region6: #{ldmnet_forward.1} parent=1 // pred_check
      _
    $region7: #{ldmnet_forward.1} parent=1 // pred_check_branch
      %88 = sbr.rel (0) target = $region9
    $region8: #{ldmnet_forward.1} parent=1 // pred_region
      _
    $region9: #{ldmnet_forward.1} parent=1 // pred_fallthru
      _
    // Predicated region
    $region10: #{ldmnet_forward.1} parent=1 // pred_check
      _
    $region11: #{ldmnet_forward.1} parent=1 // pred_check_branch
      %90 = sbr.rel (0) target = $region13
    $region12: #{ldmnet_forward.1} parent=1 // pred_region
      _
    $region13: #{ldmnet_forward.1} parent=1 // pred_fallthru
      _
    // Predicated region
    $region14: #{ldmnet_forward.1} parent=1 // pred_check
      _
    $region15: #{ldmnet_forward.1} parent=1 // pred_check_branch
      %92 = sbr.rel (0) target = $region17
    $region16: #{ldmnet_forward.1} parent=1 // pred_region
      _
    $region17: #{ldmnet_forward.1} parent=1 // pred_fallthru
      _
    // Predicated region
    $region18: #{ldmnet_forward.1} parent=1 // pred_check
      _
    $region19: #{ldmnet_forward.1} parent=1 // pred_check_branch
      %94 = sbr.rel (0) target = $region21
    $region20: #{ldmnet_forward.1} parent=1 // pred_region
      %s96 = ssub.s32 32768, 32768
      %97 = vsyncadd [#allocation3], %s96
      %s98 = sshll.u32 [#allocation2], 4
      %s99 = int_to_ptr.vmem [resolvable:$true] %s98
      %104 = dma.hbm_to_vmem [thread:$0]  %s9, 32768, %s99, [#allocation3], 1024, 1024, 64
    $region21: #{ldmnet_forward.1} parent=1 // pred_fallthru
      _
    // Predicated region
    $region22: #{ldmnet_forward.1} parent=1 // pred_check
      _
    $region23: #{ldmnet_forward.1} parent=1 // pred_check_branch
      %106 = sbr.rel (0) target = $region25
    $region24: #{ldmnet_forward.1} parent=1 // pred_region
      _
    $region25: #{ldmnet_forward.1} parent=1 // pred_fallthru
      _
    // Predicated region
    $region26: #{ldmnet_forward.1} parent=1 // pred_check
      _
    $region27: #{ldmnet_forward.1} parent=1 // pred_check_branch
      %108 = sbr.rel (0) target = $region29
    $region28: #{ldmnet_forward.1} parent=1 // pred_region
      %s110 = ssub.s32 16384, 16384
      %111 = vsyncadd [#allocation5], %s110
      %s112 = sshll.u32 [#allocation4], 4
      %s113 = int_to_ptr.vmem [resolvable:$true] %s112
      %118 = dma.hbm_to_vmem [thread:$0]  %s13, 16384, %s113, [#allocation5], 128, 128, 8
    $region29: #{ldmnet_forward.1} parent=1 // pred_fallthru
      _
    // Predicated region
    $region30: #{ldmnet_forward.1} parent=1 // pred_check
      _
    $region31: #{ldmnet_forward.1} parent=1 // pred_check_branch
      %120 = sbr.rel (0) target = $region33
    $region32: #{ldmnet_forward.1} parent=1 // pred_region
      %s122 = ssub.s32 32, 32
      %123 = vsyncadd [#allocation5], %s122
      %s125 = sshll.u32 [#allocation6], 4
      %s126 = int_to_ptr.vmem [resolvable:$true] %s125
      %128 = dma.hbm_to_vmem [thread:$0]  %s15, 32, %s126, [#allocation5]
    $region33: #{ldmnet_forward.1} parent=1 // pred_fallthru
      _
    // Predicated region
    $region34: #{ldmnet_forward.1} parent=1 // pred_check
      _
    $region35: #{ldmnet_forward.1} parent=1 // pred_check_branch
      %130 = sbr.rel (0) target = $region37
    $region36: #{ldmnet_forward.1} parent=1 // pred_region
      %s132 = ssub.s32 64, 64
      %133 = vsyncadd [#allocation8], %s132
      %s135 = sshll.u32 [#allocation7], 4
      %s136 = int_to_ptr.vmem [resolvable:$true] %s135
      %138 = dma.hbm_to_vmem [thread:$0]  %s17, 64, %s136, [#allocation8]
    $region37: #{ldmnet_forward.1} parent=1 // pred_fallthru
      _
    // Predicated region
    $region38: #{ldmnet_forward.1} parent=1 // pred_check
      _
    $region39: #{ldmnet_forward.1} parent=1 // pred_check_branch
      %140 = sbr.rel (0) target = $region41
    $region40: #{ldmnet_forward.1} parent=1 // pred_region
      %s142 = ssub.s32 32, 32
      %143 = vsyncadd [#allocation8], %s142
      %s145 = sshll.u32 [#allocation9], 4
      %s146 = int_to_ptr.vmem [resolvable:$true] %s145
      %148 = dma.hbm_to_vmem [thread:$0]  %s19, 32, %s146, [#allocation8]
    $region41: #{ldmnet_forward.1} parent=1 // pred_fallthru
      _
    // Predicated region
    $region42: #{ldmnet_forward.1} parent=1 // pred_check
      _
    $region43: #{ldmnet_forward.1} parent=1 // pred_check_branch
      %150 = sbr.rel (0) target = $region45
    $region44: #{ldmnet_forward.1} parent=1 // pred_region
      %s152 = ssub.s32 32, 32
      %153 = vsyncadd [#allocation11], %s152
      %s155 = sshll.u32 [#allocation10], 4
      %s156 = int_to_ptr.vmem [resolvable:$true] %s155
      %158 = dma.hbm_to_vmem [thread:$0]  %s21, 32, %s156, [#allocation11]
    $region45: #{ldmnet_forward.1} parent=1 // pred_fallthru
      _
    // Predicated region
    $region46: #{ldmnet_forward.1} parent=1 // pred_check
      _
    $region47: #{ldmnet_forward.1} parent=1 // pred_check_branch
      %160 = sbr.rel (0) target = $region49
    $region48: #{ldmnet_forward.1} parent=1 // pred_region
      %s162 = ssub.s32 32, 32
      %163 = vsyncadd [#allocation11], %s162
      %s165 = sshll.u32 [#allocation12], 4
      %s166 = int_to_ptr.vmem [resolvable:$true] %s165
      %168 = dma.hbm_to_vmem [thread:$0]  %s23, 32, %s166, [#allocation11]
    $region49: #{ldmnet_forward.1} parent=1 // pred_fallthru
      _
    // Predicated region
    $region50: #{ldmnet_forward.1} parent=1 // pred_check
      _
    $region51: #{ldmnet_forward.1} parent=1 // pred_check_branch
      %170 = sbr.rel (0) target = $region53
    $region52: #{ldmnet_forward.1} parent=1 // pred_region
      %s172 = ssub.s32 32, 32
      %173 = vsyncadd [#allocation14], %s172
      %s175 = sshll.u32 [#allocation13], 4
      %s176 = int_to_ptr.vmem [resolvable:$true] %s175
      %178 = dma.hbm_to_vmem [thread:$0]  %s25, 32, %s176, [#allocation14]
    $region53: #{ldmnet_forward.1} parent=1 // pred_fallthru
      _
    // Predicated region
    $region54: #{ldmnet_forward.1} parent=1 // pred_check
      _
    $region55: #{ldmnet_forward.1} parent=1 // pred_check_branch
      %180 = sbr.rel (0) target = $region57
    $region56: #{ldmnet_forward.1} parent=1 // pred_region
      %s182 = ssub.s32 32, 32
      %183 = vsyncadd [#allocation14], %s182
      %s185 = sshll.u32 [#allocation15], 4
      %s186 = int_to_ptr.vmem [resolvable:$true] %s185
      %188 = dma.hbm_to_vmem [thread:$0]  %s27, 32, %s186, [#allocation14]
    $region57: #{ldmnet_forward.1} parent=1 // pred_fallthru
      _
    // Predicated region
    $region58: #{ldmnet_forward.1} parent=1 // pred_check
      _
    $region59: #{ldmnet_forward.1} parent=1 // pred_check_branch
      %190 = sbr.rel (0) target = $region61
    $region60: #{ldmnet_forward.1} parent=1 // pred_region
      %s192 = ssub.s32 4096, 4096
      %193 = vsyncadd [#allocation17], %s192
      %s194 = sshll.u32 [#allocation16], 4
      %s195 = int_to_ptr.vmem [resolvable:$true] %s194
      %200 = dma.hbm_to_vmem [thread:$0]  %s29, 4096, %s195, [#allocation17], 128, 128, 8
    $region61: #{ldmnet_forward.1} parent=1 // pred_fallthru
      _
    // Predicated region
    $region62: #{ldmnet_forward.1} parent=1 // pred_check
      _
    $region63: #{ldmnet_forward.1} parent=1 // pred_check_branch
      %202 = sbr.rel (0) target = $region65
    $region64: #{ldmnet_forward.1} parent=1 // pred_region
      %s204 = ssub.s32 4096, 4096
      %205 = vsyncadd [#allocation17], %s204
      %s206 = sshll.u32 [#allocation18], 4
      %s207 = int_to_ptr.vmem [resolvable:$true] %s206
      %212 = dma.hbm_to_vmem [thread:$0]  %s31, 4096, %s207, [#allocation17], 128, 128, 8
    $region65: #{ldmnet_forward.1} parent=1 // pred_fallthru
      _
    // Predicated region
    $region66: #{ldmnet_forward.1} parent=1 // pred_check
      _
    $region67: #{ldmnet_forward.1} parent=1 // pred_check_branch
      %214 = sbr.rel (0) target = $region69
    $region68: #{ldmnet_forward.1} parent=1 // pred_region
      %s216 = ssub.s32 32, 32
      %217 = vsyncadd [#allocation20], %s216
      %s219 = sshll.u32 [#allocation19], 4
      %s220 = int_to_ptr.vmem [resolvable:$true] %s219
      %222 = dma.hbm_to_vmem [thread:$0]  %s33, 32, %s220, [#allocation20]
    $region69: #{ldmnet_forward.1} parent=1 // pred_fallthru
      _
    // Predicated region
    $region70: #{ldmnet_forward.1} parent=1 // pred_check
      _
    $region71: #{ldmnet_forward.1} parent=1 // pred_check_branch
      %224 = sbr.rel (0) target = $region73
    $region72: #{ldmnet_forward.1} parent=1 // pred_region
      %s226 = ssub.s32 32, 32
      %227 = vsyncadd [#allocation20], %s226
      %s229 = sshll.u32 [#allocation21], 4
      %s230 = int_to_ptr.vmem [resolvable:$true] %s229
      %232 = dma.hbm_to_vmem [thread:$0]  %s35, 32, %s230, [#allocation20]
    $region73: #{ldmnet_forward.1} parent=1 // pred_fallthru
      _
    // Predicated region
    $region74: #{ldmnet_forward.1} parent=1 // pred_check
      _
    $region75: #{ldmnet_forward.1} parent=1 // pred_check_branch
      %234 = sbr.rel (0) target = $region77
    $region76: #{ldmnet_forward.1} parent=1 // pred_region
      %s236 = ssub.s32 32, 32
      %237 = vsyncadd [#allocation23], %s236
      %s239 = sshll.u32 [#allocation22], 4
      %s240 = int_to_ptr.vmem [resolvable:$true] %s239
      %242 = dma.hbm_to_vmem [thread:$0]  %s37, 32, %s240, [#allocation23]
    $region77: #{ldmnet_forward.1} parent=1 // pred_fallthru
      _
    // Predicated region
    $region78: #{ldmnet_forward.1} parent=1 // pred_check
      _
    $region79: #{ldmnet_forward.1} parent=1 // pred_check_branch
      %244 = sbr.rel (0) target = $region81
    $region80: #{ldmnet_forward.1} parent=1 // pred_region
      %s246 = ssub.s32 4096, 4096
      %247 = vsyncadd [#allocation23], %s246
      %s248 = sshll.u32 [#allocation24], 4
      %s249 = int_to_ptr.vmem [resolvable:$true] %s248
      %254 = dma.hbm_to_vmem [thread:$0]  %s39, 4096, %s249, [#allocation23], 128, 128, 8
    $region81: #{ldmnet_forward.1} parent=1 // pred_fallthru
      _
    // Predicated region
    $region82: #{ldmnet_forward.1} parent=1 // pred_check
      _
    $region83: #{ldmnet_forward.1} parent=1 // pred_check_branch
      %256 = sbr.rel (0) target = $region85
    $region84: #{ldmnet_forward.1} parent=1 // pred_region
      %s258 = ssub.s32 4096, 4096
      %259 = vsyncadd [#allocation26], %s258
      %s260 = sshll.u32 [#allocation25], 4
      %s261 = int_to_ptr.vmem [resolvable:$true] %s260
      %266 = dma.hbm_to_vmem [thread:$0]  %s41, 4096, %s261, [#allocation26], 128, 128, 8
    $region85: #{ldmnet_forward.1} parent=1 // pred_fallthru
      _
    // Predicated region
    $region86: #{ldmnet_forward.1} parent=1 // pred_check
      _
    $region87: #{ldmnet_forward.1} parent=1 // pred_check_branch
      %268 = sbr.rel (0) target = $region89
    $region88: #{ldmnet_forward.1} parent=1 // pred_region
      %s270 = ssub.s32 32, 32
      %271 = vsyncadd [#allocation26], %s270
      %s273 = sshll.u32 [#allocation27], 4
      %s274 = int_to_ptr.vmem [resolvable:$true] %s273
      %276 = dma.hbm_to_vmem [thread:$0]  %s43, 32, %s274, [#allocation26]
    $region89: #{ldmnet_forward.1} parent=1 // pred_fallthru
      _
    // Predicated region
    $region90: #{ldmnet_forward.1} parent=1 // pred_check
      _
    $region91: #{ldmnet_forward.1} parent=1 // pred_check_branch
      %278 = sbr.rel (0) target = $region93
    $region92: #{ldmnet_forward.1} parent=1 // pred_region
      _
    $region93: #{ldmnet_forward.1} parent=1 // pred_fallthru
      _
    // Predicated region
    $region94: #{ldmnet_forward.1} parent=1 // pred_check
      _
    $region95: #{ldmnet_forward.1} parent=1 // pred_check_branch
      %280 = sbr.rel (0) target = $region97
    $region96: #{ldmnet_forward.1} parent=1 // pred_region
      %s282 = ssub.s32 32, 32
      %283 = vsyncadd [#allocation29], %s282
      %s285 = sshll.u32 [#allocation28], 4
      %s286 = int_to_ptr.vmem [resolvable:$true] %s285
      %288 = dma.hbm_to_vmem [thread:$0]  %s47, 32, %s286, [#allocation29]
    $region97: #{ldmnet_forward.1} parent=1 // pred_fallthru
      _
    // Predicated region
    $region98: #{ldmnet_forward.1} parent=1 // pred_check
      _
    $region99: #{ldmnet_forward.1} parent=1 // pred_check_branch
      %290 = sbr.rel (0) target = $region101
    $region100: #{ldmnet_forward.1} parent=1 // pred_region
      %s292 = ssub.s32 32, 32
      %293 = vsyncadd [#allocation29], %s292
      %s295 = sshll.u32 [#allocation30], 4
      %s296 = int_to_ptr.vmem [resolvable:$true] %s295
      %298 = dma.hbm_to_vmem [thread:$0]  %s49, 32, %s296, [#allocation29]
    $region101: #{ldmnet_forward.1} parent=1 // pred_fallthru
      _
    // Predicated region
    $region102: #{ldmnet_forward.1} parent=1 // pred_check
      _
    $region103: #{ldmnet_forward.1} parent=1 // pred_check_branch
      %300 = sbr.rel (0) target = $region105
    $region104: #{ldmnet_forward.1} parent=1 // pred_region
      %s302 = ssub.s32 32768, 32768
      %303 = vsyncadd [#allocation32], %s302
      %s304 = sshll.u32 [#allocation31], 4
      %s305 = int_to_ptr.vmem [resolvable:$true] %s304
      %310 = dma.hbm_to_vmem [thread:$0]  %s51, 32768, %s305, [#allocation32], 1024, 1024, 64
    $region105: #{ldmnet_forward.1} parent=1 // pred_fallthru
      _
    // Predicated region
    $region106: #{ldmnet_forward.1} parent=1 // pred_check
      _
    $region107: #{ldmnet_forward.1} parent=1 // pred_check_branch
      %312 = sbr.rel (0) target = $region109
    $region108: #{ldmnet_forward.1} parent=1 // pred_region
      _
    $region109: #{ldmnet_forward.1} parent=1 // pred_fallthru
      _
    // Predicated region
    $region110: #{ldmnet_forward.1} parent=1 // pred_check
      _
    $region111: #{ldmnet_forward.1} parent=1 // pred_check_branch
      %314 = sbr.rel (0) target = $region113
    $region112: #{ldmnet_forward.1} parent=1 // pred_region
      %s316 = ssub.s32 16384, 16384
      %317 = vsyncadd [#allocation32], %s316
      %s318 = sshll.u32 [#allocation33], 4
      %s319 = int_to_ptr.vmem [resolvable:$true] %s318
      %324 = dma.hbm_to_vmem [thread:$0]  %s55, 16384, %s319, [#allocation32], 128, 128, 8
    $region113: #{ldmnet_forward.1} parent=1 // pred_fallthru
      _
    // Predicated region
    $region114: #{ldmnet_forward.1} parent=1 // pred_check
      _
    $region115: #{ldmnet_forward.1} parent=1 // pred_check_branch
      %326 = sbr.rel (0) target = $region117
    $region116: #{ldmnet_forward.1} parent=1 // pred_region
      %s328 = ssub.s32 32, 32
      %329 = vsyncadd [#allocation35], %s328
      %s331 = sshll.u32 [#allocation34], 4
      %s332 = int_to_ptr.vmem [resolvable:$true] %s331
      %334 = dma.hbm_to_vmem [thread:$0]  %s57, 32, %s332, [#allocation35]
    $region117: #{ldmnet_forward.1} parent=1 // pred_fallthru
      _
    // Predicated region
    $region118: #{ldmnet_forward.1} parent=1 // pred_check
      _
    $region119: #{ldmnet_forward.1} parent=1 // pred_check_branch
      %336 = sbr.rel (0) target = $region121
    $region120: #{ldmnet_forward.1} parent=1 // pred_region
      %s338 = ssub.s32 32, 32
      %339 = vsyncadd [#allocation35], %s338
      %s341 = sshll.u32 [#allocation36], 4
      %s342 = int_to_ptr.vmem [resolvable:$true] %s341
      %344 = dma.hbm_to_vmem [thread:$0]  %s59, 32, %s342, [#allocation35]
    $region121: #{ldmnet_forward.1} parent=1 // pred_fallthru
      _
    // Predicated region
    $region122: #{ldmnet_forward.1} parent=1 // pred_check
      _
    $region123: #{ldmnet_forward.1} parent=1 // pred_check_branch
      %346 = sbr.rel (0) target = $region125
    $region124: #{ldmnet_forward.1} parent=1 // pred_region
      %s348 = ssub.s32 32, 32
      %349 = vsyncadd [#allocation38], %s348
      %s351 = sshll.u32 [#allocation37], 4
      %s352 = int_to_ptr.vmem [resolvable:$true] %s351
      %354 = dma.hbm_to_vmem [thread:$0]  %s61, 32, %s352, [#allocation38]
    $region125: #{ldmnet_forward.1} parent=1 // pred_fallthru
      _
    // Predicated region
    $region126: #{ldmnet_forward.1} parent=1 // pred_check
      _
    $region127: #{ldmnet_forward.1} parent=1 // pred_check_branch
      %356 = sbr.rel (0) target = $region129
    $region128: #{ldmnet_forward.1} parent=1 // pred_region
      _
    $region129: #{ldmnet_forward.1} parent=1 // pred_fallthru
      _
    // Predicated region
    $region130: #{ldmnet_forward.1} parent=1 // pred_check
      _
    $region131: #{ldmnet_forward.1} parent=1 // pred_check_branch
      %358 = sbr.rel (0) target = $region133
    $region132: #{ldmnet_forward.1} parent=1 // pred_region
      %s360 = ssub.s32 16, 16
      %361 = vsyncadd [#allocation38], %s360
      %s363 = sshll.u32 [#allocation39], 4
      %s364 = int_to_ptr.vmem [resolvable:$true] %s363
      %366 = dma.hbm_to_vmem [thread:$0]  %s65, 16, %s364, [#allocation38]
    $region133: #{ldmnet_forward.1} parent=1 // pred_fallthru
      _
    // Predicated region
    $region134: #{ldmnet_forward.1} parent=1 // pred_check
      _
    $region135: #{ldmnet_forward.1} parent=1 // pred_check_branch
      %368 = sbr.rel (0) target = $region137
    $region136: #{ldmnet_forward.1} parent=1 // pred_region
      %369 = dma.done [#allocation3], 32768
    $region137: #{ldmnet_forward.1} parent=1 // pred_fallthru
      _
    // Predicated region
    $region138: #{ldmnet_forward.1} parent=1 // pred_check
      _
    $region139: #{ldmnet_forward.1} parent=1 // pred_check_branch
      %371 = sbr.rel (0) target = $region141
    $region140: #{ldmnet_forward.1} parent=1 // pred_region
      %372 = dma.done [#allocation5], 16384
    $region141: #{ldmnet_forward.1} parent=1 // pred_fallthru
      _
    // Predicated region
    $region142: #{ldmnet_forward.1} parent=1 // pred_check
      _
    $region143: #{ldmnet_forward.1} parent=1 // pred_check_branch
      %374 = sbr.rel (0) target = $region145
    $region144: #{ldmnet_forward.1} parent=1 // pred_region
      %375 = dma.done [#allocation5], 32
    $region145: #{ldmnet_forward.1} parent=1 // pred_fallthru
      _
    // Predicated region
    $region146: #{ldmnet_forward.1} parent=1 // pred_check
      _
    $region147: #{ldmnet_forward.1} parent=1 // pred_check_branch
      %377 = sbr.rel (0) target = $region149
    $region148: #{ldmnet_forward.1} parent=1 // pred_region
      %378 = dma.done [#allocation8], 64
    $region149: #{ldmnet_forward.1} parent=1 // pred_fallthru
      _
    // Predicated region
    $region150: #{ldmnet_forward.1} parent=1 // pred_check
      _
    $region151: #{ldmnet_forward.1} parent=1 // pred_check_branch
      %380 = sbr.rel (0) target = $region153
    $region152: #{ldmnet_forward.1} parent=1 // pred_region
      %381 = dma.done [#allocation8], 32
    $region153: #{ldmnet_forward.1} parent=1 // pred_fallthru
      _
    // Predicated region
    $region154: #{ldmnet_forward.1} parent=1 // pred_check
      _
    $region155: #{ldmnet_forward.1} parent=1 // pred_check_branch
      %383 = sbr.rel (0) target = $region157
    $region156: #{ldmnet_forward.1} parent=1 // pred_region
      %384 = dma.done [#allocation11], 32
    $region157: #{ldmnet_forward.1} parent=1 // pred_fallthru
      _
    // Predicated region
    $region158: #{ldmnet_forward.1} parent=1 // pred_check
      _
    $region159: #{ldmnet_forward.1} parent=1 // pred_check_branch
      %386 = sbr.rel (0) target = $region161
    $region160: #{ldmnet_forward.1} parent=1 // pred_region
      %387 = dma.done [#allocation11], 32
    $region161: #{ldmnet_forward.1} parent=1 // pred_fallthru
      _
    // Predicated region
    $region162: #{ldmnet_forward.1} parent=1 // pred_check
      _
    $region163: #{ldmnet_forward.1} parent=1 // pred_check_branch
      %389 = sbr.rel (0) target = $region165
    $region164: #{ldmnet_forward.1} parent=1 // pred_region
      %390 = dma.done [#allocation14], 32
    $region165: #{ldmnet_forward.1} parent=1 // pred_fallthru
      _
    // Predicated region
    $region166: #{ldmnet_forward.1} parent=1 // pred_check
      _
    $region167: #{ldmnet_forward.1} parent=1 // pred_check_branch
      %392 = sbr.rel (0) target = $region169
    $region168: #{ldmnet_forward.1} parent=1 // pred_region
      %393 = dma.done [#allocation14], 32
    $region169: #{ldmnet_forward.1} parent=1 // pred_fallthru
      _
    // Predicated region
    $region170: #{ldmnet_forward.1} parent=1 // pred_check
      _
    $region171: #{ldmnet_forward.1} parent=1 // pred_check_branch
      %395 = sbr.rel (0) target = $region173
    $region172: #{ldmnet_forward.1} parent=1 // pred_region
      %396 = dma.done [#allocation17], 4096
    $region173: #{ldmnet_forward.1} parent=1 // pred_fallthru
      _
    // Predicated region
    $region174: #{ldmnet_forward.1} parent=1 // pred_check
      _
    $region175: #{ldmnet_forward.1} parent=1 // pred_check_branch
      %398 = sbr.rel (0) target = $region177
    $region176: #{ldmnet_forward.1} parent=1 // pred_region
      %399 = dma.done [#allocation17], 4096
    $region177: #{ldmnet_forward.1} parent=1 // pred_fallthru
      _
    // Predicated region
    $region178: #{ldmnet_forward.1} parent=1 // pred_check
      _
    $region179: #{ldmnet_forward.1} parent=1 // pred_check_branch
      %401 = sbr.rel (0) target = $region181
    $region180: #{ldmnet_forward.1} parent=1 // pred_region
      %402 = dma.done [#allocation20], 32
    $region181: #{ldmnet_forward.1} parent=1 // pred_fallthru
      _
    // Predicated region
    $region182: #{ldmnet_forward.1} parent=1 // pred_check
      _
    $region183: #{ldmnet_forward.1} parent=1 // pred_check_branch
      %404 = sbr.rel (0) target = $region185
    $region184: #{ldmnet_forward.1} parent=1 // pred_region
      %405 = dma.done [#allocation20], 32
    $region185: #{ldmnet_forward.1} parent=1 // pred_fallthru
      _
    // Predicated region
    $region186: #{ldmnet_forward.1} parent=1 // pred_check
      _
    $region187: #{ldmnet_forward.1} parent=1 // pred_check_branch
      %407 = sbr.rel (0) target = $region189
    $region188: #{ldmnet_forward.1} parent=1 // pred_region
      %408 = dma.done [#allocation23], 32
    $region189: #{ldmnet_forward.1} parent=1 // pred_fallthru
      _
    // Predicated region
    $region190: #{ldmnet_forward.1} parent=1 // pred_check
      _
    $region191: #{ldmnet_forward.1} parent=1 // pred_check_branch
      %410 = sbr.rel (0) target = $region193
    $region192: #{ldmnet_forward.1} parent=1 // pred_region
      %411 = dma.done [#allocation23], 4096
    $region193: #{ldmnet_forward.1} parent=1 // pred_fallthru
      _
    // Predicated region
    $region194: #{ldmnet_forward.1} parent=1 // pred_check
      _
    $region195: #{ldmnet_forward.1} parent=1 // pred_check_branch
      %413 = sbr.rel (0) target = $region197
    $region196: #{ldmnet_forward.1} parent=1 // pred_region
      %414 = dma.done [#allocation26], 4096
    $region197: #{ldmnet_forward.1} parent=1 // pred_fallthru
      _
    // Predicated region
    $region198: #{ldmnet_forward.1} parent=1 // pred_check
      _
    $region199: #{ldmnet_forward.1} parent=1 // pred_check_branch
      %416 = sbr.rel (0) target = $region201
    $region200: #{ldmnet_forward.1} parent=1 // pred_region
      %417 = dma.done [#allocation26], 32
    $region201: #{ldmnet_forward.1} parent=1 // pred_fallthru
      _
    // Predicated region
    $region202: #{ldmnet_forward.1} parent=1 // pred_check
      _
    $region203: #{ldmnet_forward.1} parent=1 // pred_check_branch
      %419 = sbr.rel (0) target = $region205
    $region204: #{ldmnet_forward.1} parent=1 // pred_region
      %420 = dma.done [#allocation29], 32
    $region205: #{ldmnet_forward.1} parent=1 // pred_fallthru
      _
    // Predicated region
    $region206: #{ldmnet_forward.1} parent=1 // pred_check
      _
    $region207: #{ldmnet_forward.1} parent=1 // pred_check_branch
      %422 = sbr.rel (0) target = $region209
    $region208: #{ldmnet_forward.1} parent=1 // pred_region
      %423 = dma.done [#allocation29], 32
    $region209: #{ldmnet_forward.1} parent=1 // pred_fallthru
      _
    // Predicated region
    $region210: #{ldmnet_forward.1} parent=1 // pred_check
      _
    $region211: #{ldmnet_forward.1} parent=1 // pred_check_branch
      %425 = sbr.rel (0) target = $region213
    $region212: #{ldmnet_forward.1} parent=1 // pred_region
      %426 = dma.done [#allocation32], 32768
    $region213: #{ldmnet_forward.1} parent=1 // pred_fallthru
      _
    // Predicated region
    $region214: #{ldmnet_forward.1} parent=1 // pred_check
      _
    $region215: #{ldmnet_forward.1} parent=1 // pred_check_branch
      %428 = sbr.rel (0) target = $region217
    $region216: #{ldmnet_forward.1} parent=1 // pred_region
      %429 = dma.done [#allocation32], 16384
    $region217: #{ldmnet_forward.1} parent=1 // pred_fallthru
      _
    // Predicated region
    $region218: #{ldmnet_forward.1} parent=1 // pred_check
      _
    $region219: #{ldmnet_forward.1} parent=1 // pred_check_branch
      %431 = sbr.rel (0) target = $region221
    $region220: #{ldmnet_forward.1} parent=1 // pred_region
      %432 = dma.done [#allocation35], 32
    $region221: #{ldmnet_forward.1} parent=1 // pred_fallthru
      _
    // Predicated region
    $region222: #{ldmnet_forward.1} parent=1 // pred_check
      _
    $region223: #{ldmnet_forward.1} parent=1 // pred_check_branch
      %434 = sbr.rel (0) target = $region225
    $region224: #{ldmnet_forward.1} parent=1 // pred_region
      %435 = dma.done [#allocation35], 32
    $region225: #{ldmnet_forward.1} parent=1 // pred_fallthru
      _
    // Predicated region
    $region226: #{ldmnet_forward.1} parent=1 // pred_check
      _
    $region227: #{ldmnet_forward.1} parent=1 // pred_check_branch
      %437 = sbr.rel (0) target = $region229
    $region228: #{ldmnet_forward.1} parent=1 // pred_region
      %438 = dma.done [#allocation38], 32
    $region229: #{ldmnet_forward.1} parent=1 // pred_fallthru
      _
    // Predicated region
    $region230: #{ldmnet_forward.1} parent=1 // pred_check
      _
    $region231: #{ldmnet_forward.1} parent=1 // pred_check_branch
      %440 = sbr.rel (0) target = $region233
    $region232: #{ldmnet_forward.1} parent=1 // pred_region
      %441 = dma.done [#allocation38], 16
    $region233: #{ldmnet_forward.1} parent=1 // pred_fallthru
      _
    %v443 = vld [vmem:[%s3] sm:$0x3]
    %s444 = scalar_lea.vmem %s3, 2
    %v445 = vld [vmem:[%s444] sm:$0x3]
    %v447 = vlaneseq
    %v448 = vshrl.u32 %v447, 7
    %v449 = vsub.s32 0, %v448
    %v450 = vrot.slane %v443, %v449
    %v451 = vlaneseq
    %v452 = vshrl.u32 %v451, 7
    %v453 = vsub.s32 1, %v452
    %v454 = vrot.slane %v443, %v453
    %v458 = vlaneseq
    %v459 = vshrl.u32 %v458, 7
    %v460 = vsub.s32 0, %v459
    %v461 = vrot.slane %v445, %v460
    %v462 = vlaneseq
    %v463 = vshrl.u32 %v462, 7
    %v464 = vsub.s32 1, %v463
    %v465 = vrot.slane %v445, %v464
    %vm468 = vcmask 1040384
    %v469 = vsel %vm468, %v450, %v461
    %v470 = vsel %vm468, %v454, %v465
    %v471 = vpack.c.bf16 %v469, %v469
    %v472 = vpack.c.bf16 %v470, %v470
    %v473 = vld [vmem:[#allocation2] sm:$0xff]
    %v474 = vld [vmem:[#allocation2 + $0x8] sm:$0xff]
    %v475 = vld [vmem:[#allocation2 + $0x10] sm:$0xff]
    %v476 = vld [vmem:[#allocation2 + $0x18] sm:$0xff]
    %v477 = vld [vmem:[#allocation2 + $0x40] sm:$0xff]
    %v478 = vld [vmem:[#allocation2 + $0x48] sm:$0xff]
    %v479 = vld [vmem:[#allocation2 + $0x50] sm:$0xff]
    %v480 = vld [vmem:[#allocation2 + $0x58] sm:$0xff]
    %v481 = vld [vmem:[#allocation2 + $0x80] sm:$0xff]
    %v482 = vld [vmem:[#allocation2 + $0x88] sm:$0xff]
    %v483 = vld [vmem:[#allocation2 + $0x90] sm:$0xff]
    %v484 = vld [vmem:[#allocation2 + $0x98] sm:$0xff]
    %v485 = vld [vmem:[#allocation2 + $0xc0] sm:$0xff]
    %v486 = vld [vmem:[#allocation2 + $0xc8] sm:$0xff]
    %v487 = vld [vmem:[#allocation2 + $0xd0] sm:$0xff]
    %v488 = vld [vmem:[#allocation2 + $0xd8] sm:$0xff]
    %v489 = vld [vmem:[#allocation2 + $0x100] sm:$0xff]
    %v490 = vld [vmem:[#allocation2 + $0x108] sm:$0xff]
    %v491 = vld [vmem:[#allocation2 + $0x110] sm:$0xff]
    %v492 = vld [vmem:[#allocation2 + $0x118] sm:$0xff]
    %v493 = vld [vmem:[#allocation2 + $0x140] sm:$0xff]
    %v494 = vld [vmem:[#allocation2 + $0x148] sm:$0xff]
    %v495 = vld [vmem:[#allocation2 + $0x150] sm:$0xff]
    %v496 = vld [vmem:[#allocation2 + $0x158] sm:$0xff]
    %v497 = vld [vmem:[#allocation2 + $0x180] sm:$0xff]
    %v498 = vld [vmem:[#allocation2 + $0x188] sm:$0xff]
    %v499 = vld [vmem:[#allocation2 + $0x190] sm:$0xff]
    %v500 = vld [vmem:[#allocation2 + $0x198] sm:$0xff]
    %v501 = vld [vmem:[#allocation2 + $0x1c0] sm:$0xff]
    %v502 = vld [vmem:[#allocation2 + $0x1c8] sm:$0xff]
    %v503 = vld [vmem:[#allocation2 + $0x1d0] sm:$0xff]
    %v504 = vld [vmem:[#allocation2 + $0x1d8] sm:$0xff]
    %v505 = vld [vmem:[#allocation2 + $0x200] sm:$0xff]
    %v506 = vld [vmem:[#allocation2 + $0x208] sm:$0xff]
    %v507 = vld [vmem:[#allocation2 + $0x210] sm:$0xff]
    %v508 = vld [vmem:[#allocation2 + $0x218] sm:$0xff]
    %v509 = vld [vmem:[#allocation2 + $0x240] sm:$0xff]
    %v510 = vld [vmem:[#allocation2 + $0x248] sm:$0xff]
    %v511 = vld [vmem:[#allocation2 + $0x250] sm:$0xff]
    %v512 = vld [vmem:[#allocation2 + $0x258] sm:$0xff]
    %v513 = vld [vmem:[#allocation2 + $0x280] sm:$0xff]
    %v514 = vld [vmem:[#allocation2 + $0x288] sm:$0xff]
    %v515 = vld [vmem:[#allocation2 + $0x290] sm:$0xff]
    %v516 = vld [vmem:[#allocation2 + $0x298] sm:$0xff]
    %v517 = vld [vmem:[#allocation2 + $0x2c0] sm:$0xff]
    %v518 = vld [vmem:[#allocation2 + $0x2c8] sm:$0xff]
    %v519 = vld [vmem:[#allocation2 + $0x2d0] sm:$0xff]
    %v520 = vld [vmem:[#allocation2 + $0x2d8] sm:$0xff]
    %v521 = vld [vmem:[#allocation2 + $0x300] sm:$0xff]
    %v522 = vld [vmem:[#allocation2 + $0x308] sm:$0xff]
    %v523 = vld [vmem:[#allocation2 + $0x310] sm:$0xff]
    %v524 = vld [vmem:[#allocation2 + $0x318] sm:$0xff]
    %v525 = vld [vmem:[#allocation2 + $0x340] sm:$0xff]
    %v526 = vld [vmem:[#allocation2 + $0x348] sm:$0xff]
    %v527 = vld [vmem:[#allocation2 + $0x350] sm:$0xff]
    %v528 = vld [vmem:[#allocation2 + $0x358] sm:$0xff]
    %v529 = vld [vmem:[#allocation2 + $0x380] sm:$0xff]
    %v530 = vld [vmem:[#allocation2 + $0x388] sm:$0xff]
    %v531 = vld [vmem:[#allocation2 + $0x390] sm:$0xff]
    %v532 = vld [vmem:[#allocation2 + $0x398] sm:$0xff]
    %v533 = vld [vmem:[#allocation2 + $0x3c0] sm:$0xff]
    %v534 = vld [vmem:[#allocation2 + $0x3c8] sm:$0xff]
    %v535 = vld [vmem:[#allocation2 + $0x3d0] sm:$0xff]
    %v536 = vld [vmem:[#allocation2 + $0x3d8] sm:$0xff]
    %v537 = vld [vmem:[#allocation2 + $0x400] sm:$0xff]
    %v538 = vld [vmem:[#allocation2 + $0x408] sm:$0xff]
    %v539 = vld [vmem:[#allocation2 + $0x410] sm:$0xff]
    %v540 = vld [vmem:[#allocation2 + $0x418] sm:$0xff]
    %v541 = vld [vmem:[#allocation2 + $0x440] sm:$0xff]
    %v542 = vld [vmem:[#allocation2 + $0x448] sm:$0xff]
    %v543 = vld [vmem:[#allocation2 + $0x450] sm:$0xff]
    %v544 = vld [vmem:[#allocation2 + $0x458] sm:$0xff]
    %v545 = vld [vmem:[#allocation2 + $0x480] sm:$0xff]
    %v546 = vld [vmem:[#allocation2 + $0x488] sm:$0xff]
    %v547 = vld [vmem:[#allocation2 + $0x490] sm:$0xff]
    %v548 = vld [vmem:[#allocation2 + $0x498] sm:$0xff]
    %v549 = vld [vmem:[#allocation2 + $0x4c0] sm:$0xff]
    %v550 = vld [vmem:[#allocation2 + $0x4c8] sm:$0xff]
    %v551 = vld [vmem:[#allocation2 + $0x4d0] sm:$0xff]
    %v552 = vld [vmem:[#allocation2 + $0x4d8] sm:$0xff]
    %v553 = vld [vmem:[#allocation2 + $0x500] sm:$0xff]
    %v554 = vld [vmem:[#allocation2 + $0x508] sm:$0xff]
    %v555 = vld [vmem:[#allocation2 + $0x510] sm:$0xff]
    %v556 = vld [vmem:[#allocation2 + $0x518] sm:$0xff]
    %v557 = vld [vmem:[#allocation2 + $0x540] sm:$0xff]
    %v558 = vld [vmem:[#allocation2 + $0x548] sm:$0xff]
    %v559 = vld [vmem:[#allocation2 + $0x550] sm:$0xff]
    %v560 = vld [vmem:[#allocation2 + $0x558] sm:$0xff]
    %v561 = vld [vmem:[#allocation2 + $0x580] sm:$0xff]
    %v562 = vld [vmem:[#allocation2 + $0x588] sm:$0xff]
    %v563 = vld [vmem:[#allocation2 + $0x590] sm:$0xff]
    %v564 = vld [vmem:[#allocation2 + $0x598] sm:$0xff]
    %v565 = vld [vmem:[#allocation2 + $0x5c0] sm:$0xff]
    %v566 = vld [vmem:[#allocation2 + $0x5c8] sm:$0xff]
    %v567 = vld [vmem:[#allocation2 + $0x5d0] sm:$0xff]
    %v568 = vld [vmem:[#allocation2 + $0x5d8] sm:$0xff]
    %v569 = vld [vmem:[#allocation2 + $0x600] sm:$0xff]
    %v570 = vld [vmem:[#allocation2 + $0x608] sm:$0xff]
    %v571 = vld [vmem:[#allocation2 + $0x610] sm:$0xff]
    %v572 = vld [vmem:[#allocation2 + $0x618] sm:$0xff]
    %v573 = vld [vmem:[#allocation2 + $0x640] sm:$0xff]
    %v574 = vld [vmem:[#allocation2 + $0x648] sm:$0xff]
    %v575 = vld [vmem:[#allocation2 + $0x650] sm:$0xff]
    %v576 = vld [vmem:[#allocation2 + $0x658] sm:$0xff]
    %v577 = vld [vmem:[#allocation2 + $0x680] sm:$0xff]
    %v578 = vld [vmem:[#allocation2 + $0x688] sm:$0xff]
    %v579 = vld [vmem:[#allocation2 + $0x690] sm:$0xff]
    %v580 = vld [vmem:[#allocation2 + $0x698] sm:$0xff]
    %v581 = vld [vmem:[#allocation2 + $0x6c0] sm:$0xff]
    %v582 = vld [vmem:[#allocation2 + $0x6c8] sm:$0xff]
    %v583 = vld [vmem:[#allocation2 + $0x6d0] sm:$0xff]
    %v584 = vld [vmem:[#allocation2 + $0x6d8] sm:$0xff]
    %v585 = vld [vmem:[#allocation2 + $0x700] sm:$0xff]
    %v586 = vld [vmem:[#allocation2 + $0x708] sm:$0xff]
    %v587 = vld [vmem:[#allocation2 + $0x710] sm:$0xff]
    %v588 = vld [vmem:[#allocation2 + $0x718] sm:$0xff]
    %v589 = vld [vmem:[#allocation2 + $0x740] sm:$0xff]
    %v590 = vld [vmem:[#allocation2 + $0x748] sm:$0xff]
    %v591 = vld [vmem:[#allocation2 + $0x750] sm:$0xff]
    %v592 = vld [vmem:[#allocation2 + $0x758] sm:$0xff]
    %v593 = vld [vmem:[#allocation2 + $0x780] sm:$0xff]
    %v594 = vld [vmem:[#allocation2 + $0x788] sm:$0xff]
    %v595 = vld [vmem:[#allocation2 + $0x790] sm:$0xff]
    %v596 = vld [vmem:[#allocation2 + $0x798] sm:$0xff]
    %v597 = vld [vmem:[#allocation2 + $0x7c0] sm:$0xff]
    %v598 = vld [vmem:[#allocation2 + $0x7c8] sm:$0xff]
    %v599 = vld [vmem:[#allocation2 + $0x7d0] sm:$0xff]
    %v600 = vld [vmem:[#allocation2 + $0x7d8] sm:$0xff]
    %v601 = vld [vmem:[%s11] sm:$0xff]
    %v603 = vlaneseq
    %v604 = vshrl.u32 %v603, 7
    %v605 = vsub.s32 0, %v604
    %v606 = vrot.slane %v601, %v605
    %v607 = vlaneseq
    %v608 = vshrl.u32 %v607, 7
    %v609 = vsub.s32 1, %v608
    %v610 = vrot.slane %v601, %v609
    %v611 = vlaneseq
    %v612 = vshrl.u32 %v611, 7
    %v613 = vsub.s32 2, %v612
    %v614 = vrot.slane %v601, %v613
    %v615 = vlaneseq
    %v616 = vshrl.u32 %v615, 7
    %v617 = vsub.s32 3, %v616
    %v618 = vrot.slane %v601, %v617
    %v619 = vlaneseq
    %v620 = vshrl.u32 %v619, 7
    %v621 = vsub.s32 4, %v620
    %v622 = vrot.slane %v601, %v621
    %v623 = vlaneseq
    %v624 = vshrl.u32 %v623, 7
    %v625 = vsub.s32 5, %v624
    %v626 = vrot.slane %v601, %v625
    %v627 = vlaneseq
    %v628 = vshrl.u32 %v627, 7
    %v629 = vsub.s32 6, %v628
    %v630 = vrot.slane %v601, %v629
    %v631 = vlaneseq
    %v632 = vshrl.u32 %v631, 7
    %v633 = vsub.s32 7, %v632
    %v634 = vrot.slane %v601, %v633
    %v771 = vunpack.c.l.b16 %v473
    %v772 = vunpack.c.h.b16 %v473
    %v773 = vunpack.c.l.b16 %v474
    %v774 = vunpack.c.h.b16 %v474
    %v775 = vunpack.c.l.b16 %v475
    %v776 = vunpack.c.h.b16 %v475
    %v777 = vunpack.c.l.b16 %v476
    %v778 = vunpack.c.h.b16 %v476
    %v779 = vunpack.c.l.b16 %v477
    %v780 = vunpack.c.h.b16 %v477
    %v781 = vunpack.c.l.b16 %v478
    %v782 = vunpack.c.h.b16 %v478
    %v783 = vunpack.c.l.b16 %v479
    %v784 = vunpack.c.h.b16 %v479
    %v785 = vunpack.c.l.b16 %v480
    %v786 = vunpack.c.h.b16 %v480
    %v787 = vunpack.c.l.b16 %v481
    %v788 = vunpack.c.h.b16 %v481
    %v789 = vunpack.c.l.b16 %v482
    %v790 = vunpack.c.h.b16 %v482
    %v791 = vunpack.c.l.b16 %v483
    %v792 = vunpack.c.h.b16 %v483
    %v793 = vunpack.c.l.b16 %v484
    %v794 = vunpack.c.h.b16 %v484
    %v795 = vunpack.c.l.b16 %v485
    %v796 = vunpack.c.h.b16 %v485
    %v797 = vunpack.c.l.b16 %v486
    %v798 = vunpack.c.h.b16 %v486
    %v799 = vunpack.c.l.b16 %v487
    %v800 = vunpack.c.h.b16 %v487
    %v801 = vunpack.c.l.b16 %v488
    %v802 = vunpack.c.h.b16 %v488
    %v803 = vunpack.c.l.b16 %v489
    %v804 = vunpack.c.h.b16 %v489
    %v805 = vunpack.c.l.b16 %v490
    %v806 = vunpack.c.h.b16 %v490
    %v807 = vunpack.c.l.b16 %v491
    %v808 = vunpack.c.h.b16 %v491
    %v809 = vunpack.c.l.b16 %v492
    %v810 = vunpack.c.h.b16 %v492
    %v811 = vunpack.c.l.b16 %v493
    %v812 = vunpack.c.h.b16 %v493
    %v813 = vunpack.c.l.b16 %v494
    %v814 = vunpack.c.h.b16 %v494
    %v815 = vunpack.c.l.b16 %v495
    %v816 = vunpack.c.h.b16 %v495
    %v817 = vunpack.c.l.b16 %v496
    %v818 = vunpack.c.h.b16 %v496
    %v819 = vunpack.c.l.b16 %v497
    %v820 = vunpack.c.h.b16 %v497
    %v821 = vunpack.c.l.b16 %v498
    %v822 = vunpack.c.h.b16 %v498
    %v823 = vunpack.c.l.b16 %v499
    %v824 = vunpack.c.h.b16 %v499
    %v825 = vunpack.c.l.b16 %v500
    %v826 = vunpack.c.h.b16 %v500
    %v827 = vunpack.c.l.b16 %v501
    %v828 = vunpack.c.h.b16 %v501
    %v829 = vunpack.c.l.b16 %v502
    %v830 = vunpack.c.h.b16 %v502
    %v831 = vunpack.c.l.b16 %v503
    %v832 = vunpack.c.h.b16 %v503
    %v833 = vunpack.c.l.b16 %v504
    %v834 = vunpack.c.h.b16 %v504
    %v835 = vunpack.c.l.b16 %v505
    %v836 = vunpack.c.h.b16 %v505
    %v837 = vunpack.c.l.b16 %v506
    %v838 = vunpack.c.h.b16 %v506
    %v839 = vunpack.c.l.b16 %v507
    %v840 = vunpack.c.h.b16 %v507
    %v841 = vunpack.c.l.b16 %v508
    %v842 = vunpack.c.h.b16 %v508
    %v843 = vunpack.c.l.b16 %v509
    %v844 = vunpack.c.h.b16 %v509
    %v845 = vunpack.c.l.b16 %v510
    %v846 = vunpack.c.h.b16 %v510
    %v847 = vunpack.c.l.b16 %v511
    %v848 = vunpack.c.h.b16 %v511
    %v849 = vunpack.c.l.b16 %v512
    %v850 = vunpack.c.h.b16 %v512
    %v851 = vunpack.c.l.b16 %v513
    %v852 = vunpack.c.h.b16 %v513
    %v853 = vunpack.c.l.b16 %v514
    %v854 = vunpack.c.h.b16 %v514
    %v855 = vunpack.c.l.b16 %v515
    %v856 = vunpack.c.h.b16 %v515
    %v857 = vunpack.c.l.b16 %v516
    %v858 = vunpack.c.h.b16 %v516
    %v859 = vunpack.c.l.b16 %v517
    %v860 = vunpack.c.h.b16 %v517
    %v861 = vunpack.c.l.b16 %v518
    %v862 = vunpack.c.h.b16 %v518
    %v863 = vunpack.c.l.b16 %v519
    %v864 = vunpack.c.h.b16 %v519
    %v865 = vunpack.c.l.b16 %v520
    %v866 = vunpack.c.h.b16 %v520
    %v867 = vunpack.c.l.b16 %v521
    %v868 = vunpack.c.h.b16 %v521
    %v869 = vunpack.c.l.b16 %v522
    %v870 = vunpack.c.h.b16 %v522
    %v871 = vunpack.c.l.b16 %v523
    %v872 = vunpack.c.h.b16 %v523
    %v873 = vunpack.c.l.b16 %v524
    %v874 = vunpack.c.h.b16 %v524
    %v875 = vunpack.c.l.b16 %v525
    %v876 = vunpack.c.h.b16 %v525
    %v877 = vunpack.c.l.b16 %v526
    %v878 = vunpack.c.h.b16 %v526
    %v879 = vunpack.c.l.b16 %v527
    %v880 = vunpack.c.h.b16 %v527
    %v881 = vunpack.c.l.b16 %v528
    %v882 = vunpack.c.h.b16 %v528
    %v883 = vunpack.c.l.b16 %v529
    %v884 = vunpack.c.h.b16 %v529
    %v885 = vunpack.c.l.b16 %v530
    %v886 = vunpack.c.h.b16 %v530
    %v887 = vunpack.c.l.b16 %v531
    %v888 = vunpack.c.h.b16 %v531
    %v889 = vunpack.c.l.b16 %v532
    %v890 = vunpack.c.h.b16 %v532
    %v891 = vunpack.c.l.b16 %v533
    %v892 = vunpack.c.h.b16 %v533
    %v893 = vunpack.c.l.b16 %v534
    %v894 = vunpack.c.h.b16 %v534
    %v895 = vunpack.c.l.b16 %v535
    %v896 = vunpack.c.h.b16 %v535
    %v897 = vunpack.c.l.b16 %v536
    %v898 = vunpack.c.h.b16 %v536
    %v899 = vunpack.c.l.b16 %v537
    %v900 = vunpack.c.h.b16 %v537
    %v901 = vunpack.c.l.b16 %v538
    %v902 = vunpack.c.h.b16 %v538
    %v903 = vunpack.c.l.b16 %v539
    %v904 = vunpack.c.h.b16 %v539
    %v905 = vunpack.c.l.b16 %v540
    %v906 = vunpack.c.h.b16 %v540
    %v907 = vunpack.c.l.b16 %v541
    %v908 = vunpack.c.h.b16 %v541
    %v909 = vunpack.c.l.b16 %v542
    %v910 = vunpack.c.h.b16 %v542
    %v911 = vunpack.c.l.b16 %v543
    %v912 = vunpack.c.h.b16 %v543
    %v913 = vunpack.c.l.b16 %v544
    %v914 = vunpack.c.h.b16 %v544
    %v915 = vunpack.c.l.b16 %v545
    %v916 = vunpack.c.h.b16 %v545
    %v917 = vunpack.c.l.b16 %v546
    %v918 = vunpack.c.h.b16 %v546
    %v919 = vunpack.c.l.b16 %v547
    %v920 = vunpack.c.h.b16 %v547
    %v921 = vunpack.c.l.b16 %v548
    %v922 = vunpack.c.h.b16 %v548
    %v923 = vunpack.c.l.b16 %v549
    %v924 = vunpack.c.h.b16 %v549
    %v925 = vunpack.c.l.b16 %v550
    %v926 = vunpack.c.h.b16 %v550
    %v927 = vunpack.c.l.b16 %v551
    %v928 = vunpack.c.h.b16 %v551
    %v929 = vunpack.c.l.b16 %v552
    %v930 = vunpack.c.h.b16 %v552
    %v931 = vunpack.c.l.b16 %v553
    %v932 = vunpack.c.h.b16 %v553
    %v933 = vunpack.c.l.b16 %v554
    %v934 = vunpack.c.h.b16 %v554
    %v935 = vunpack.c.l.b16 %v555
    %v936 = vunpack.c.h.b16 %v555
    %v937 = vunpack.c.l.b16 %v556
    %v938 = vunpack.c.h.b16 %v556
    %v939 = vunpack.c.l.b16 %v557
    %v940 = vunpack.c.h.b16 %v557
    %v941 = vunpack.c.l.b16 %v558
    %v942 = vunpack.c.h.b16 %v558
    %v943 = vunpack.c.l.b16 %v559
    %v944 = vunpack.c.h.b16 %v559
    %v945 = vunpack.c.l.b16 %v560
    %v946 = vunpack.c.h.b16 %v560
    %v947 = vunpack.c.l.b16 %v561
    %v948 = vunpack.c.h.b16 %v561
    %v949 = vunpack.c.l.b16 %v562
    %v950 = vunpack.c.h.b16 %v562
    %v951 = vunpack.c.l.b16 %v563
    %v952 = vunpack.c.h.b16 %v563
    %v953 = vunpack.c.l.b16 %v564
    %v954 = vunpack.c.h.b16 %v564
    %v955 = vunpack.c.l.b16 %v565
    %v956 = vunpack.c.h.b16 %v565
    %v957 = vunpack.c.l.b16 %v566
    %v958 = vunpack.c.h.b16 %v566
    %v959 = vunpack.c.l.b16 %v567
    %v960 = vunpack.c.h.b16 %v567
    %v961 = vunpack.c.l.b16 %v568
    %v962 = vunpack.c.h.b16 %v568
    %v963 = vunpack.c.l.b16 %v569
    %v964 = vunpack.c.h.b16 %v569
    %v965 = vunpack.c.l.b16 %v570
    %v966 = vunpack.c.h.b16 %v570
    %v967 = vunpack.c.l.b16 %v571
    %v968 = vunpack.c.h.b16 %v571
    %v969 = vunpack.c.l.b16 %v572
    %v970 = vunpack.c.h.b16 %v572
    %v971 = vunpack.c.l.b16 %v573
    %v972 = vunpack.c.h.b16 %v573
    %v973 = vunpack.c.l.b16 %v574
    %v974 = vunpack.c.h.b16 %v574
    %v975 = vunpack.c.l.b16 %v575
    %v976 = vunpack.c.h.b16 %v575
    %v977 = vunpack.c.l.b16 %v576
    %v978 = vunpack.c.h.b16 %v576
    %v979 = vunpack.c.l.b16 %v577
    %v980 = vunpack.c.h.b16 %v577
    %v981 = vunpack.c.l.b16 %v578
    %v982 = vunpack.c.h.b16 %v578
    %v983 = vunpack.c.l.b16 %v579
    %v984 = vunpack.c.h.b16 %v579
    %v985 = vunpack.c.l.b16 %v580
    %v986 = vunpack.c.h.b16 %v580
    %v987 = vunpack.c.l.b16 %v581
    %v988 = vunpack.c.h.b16 %v581
    %v989 = vunpack.c.l.b16 %v582
    %v990 = vunpack.c.h.b16 %v582
    %v991 = vunpack.c.l.b16 %v583
    %v992 = vunpack.c.h.b16 %v583
    %v993 = vunpack.c.l.b16 %v584
    %v994 = vunpack.c.h.b16 %v584
    %v995 = vunpack.c.l.b16 %v585
    %v996 = vunpack.c.h.b16 %v585
    %v997 = vunpack.c.l.b16 %v586
    %v998 = vunpack.c.h.b16 %v586
    %v999 = vunpack.c.l.b16 %v587
    %v1000 = vunpack.c.h.b16 %v587
    %v1001 = vunpack.c.l.b16 %v588
    %v1002 = vunpack.c.h.b16 %v588
    %v1003 = vunpack.c.l.b16 %v589
    %v1004 = vunpack.c.h.b16 %v589
    %v1005 = vunpack.c.l.b16 %v590
    %v1006 = vunpack.c.h.b16 %v590
    %v1007 = vunpack.c.l.b16 %v591
    %v1008 = vunpack.c.h.b16 %v591
    %v1009 = vunpack.c.l.b16 %v592
    %v1010 = vunpack.c.h.b16 %v592
    %v1011 = vunpack.c.l.b16 %v593
    %v1012 = vunpack.c.h.b16 %v593
    %v1013 = vunpack.c.l.b16 %v594
    %v1014 = vunpack.c.h.b16 %v594
    %v1015 = vunpack.c.l.b16 %v595
    %v1016 = vunpack.c.h.b16 %v595
    %v1017 = vunpack.c.l.b16 %v596
    %v1018 = vunpack.c.h.b16 %v596
    %v1019 = vunpack.c.l.b16 %v597
    %v1020 = vunpack.c.h.b16 %v597
    %v1021 = vunpack.c.l.b16 %v598
    %v1022 = vunpack.c.h.b16 %v598
    %v1023 = vunpack.c.l.b16 %v599
    %v1024 = vunpack.c.h.b16 %v599
    %v1025 = vunpack.c.l.b16 %v600
    %v1026 = vunpack.c.h.b16 %v600
    %v1027 = vpack.c.b16 %v779, %v771
    %v1028 = vpack.c.b16 %v780, %v772
    %v1029 = vpack.c.b16 %v781, %v773
    %v1030 = vpack.c.b16 %v782, %v774
    %v1031 = vpack.c.b16 %v783, %v775
    %v1032 = vpack.c.b16 %v784, %v776
    %v1033 = vpack.c.b16 %v785, %v777
    %v1034 = vpack.c.b16 %v786, %v778
    %v1035 = vpack.c.b16 %v795, %v787
    %v1036 = vpack.c.b16 %v796, %v788
    %v1037 = vpack.c.b16 %v797, %v789
    %v1038 = vpack.c.b16 %v798, %v790
    %v1039 = vpack.c.b16 %v799, %v791
    %v1040 = vpack.c.b16 %v800, %v792
    %v1041 = vpack.c.b16 %v801, %v793
    %v1042 = vpack.c.b16 %v802, %v794
    %v1043 = vpack.c.b16 %v811, %v803
    %v1044 = vpack.c.b16 %v812, %v804
    %v1045 = vpack.c.b16 %v813, %v805
    %v1046 = vpack.c.b16 %v814, %v806
    %v1047 = vpack.c.b16 %v815, %v807
    %v1048 = vpack.c.b16 %v816, %v808
    %v1049 = vpack.c.b16 %v817, %v809
    %v1050 = vpack.c.b16 %v818, %v810
    %v1051 = vpack.c.b16 %v827, %v819
    %v1052 = vpack.c.b16 %v828, %v820
    %v1053 = vpack.c.b16 %v829, %v821
    %v1054 = vpack.c.b16 %v830, %v822
    %v1055 = vpack.c.b16 %v831, %v823
    %v1056 = vpack.c.b16 %v832, %v824
    %v1057 = vpack.c.b16 %v833, %v825
    %v1058 = vpack.c.b16 %v834, %v826
    %v1059 = vpack.c.b16 %v843, %v835
    %v1060 = vpack.c.b16 %v844, %v836
    %v1061 = vpack.c.b16 %v845, %v837
    %v1062 = vpack.c.b16 %v846, %v838
    %v1063 = vpack.c.b16 %v847, %v839
    %v1064 = vpack.c.b16 %v848, %v840
    %v1065 = vpack.c.b16 %v849, %v841
    %v1066 = vpack.c.b16 %v850, %v842
    %v1067 = vpack.c.b16 %v859, %v851
    %v1068 = vpack.c.b16 %v860, %v852
    %v1069 = vpack.c.b16 %v861, %v853
    %v1070 = vpack.c.b16 %v862, %v854
    %v1071 = vpack.c.b16 %v863, %v855
    %v1072 = vpack.c.b16 %v864, %v856
    %v1073 = vpack.c.b16 %v865, %v857
    %v1074 = vpack.c.b16 %v866, %v858
    %v1075 = vpack.c.b16 %v875, %v867
    %v1076 = vpack.c.b16 %v876, %v868
    %v1077 = vpack.c.b16 %v877, %v869
    %v1078 = vpack.c.b16 %v878, %v870
    %v1079 = vpack.c.b16 %v879, %v871
    %v1080 = vpack.c.b16 %v880, %v872
    %v1081 = vpack.c.b16 %v881, %v873
    %v1082 = vpack.c.b16 %v882, %v874
    %v1083 = vpack.c.b16 %v891, %v883
    %v1084 = vpack.c.b16 %v892, %v884
    %v1085 = vpack.c.b16 %v893, %v885
    %v1086 = vpack.c.b16 %v894, %v886
    %v1087 = vpack.c.b16 %v895, %v887
    %v1088 = vpack.c.b16 %v896, %v888
    %v1089 = vpack.c.b16 %v897, %v889
    %v1090 = vpack.c.b16 %v898, %v890
    %v1091 = vpack.c.b16 %v907, %v899
    %v1092 = vpack.c.b16 %v908, %v900
    %v1093 = vpack.c.b16 %v909, %v901
    %v1094 = vpack.c.b16 %v910, %v902
    %v1095 = vpack.c.b16 %v911, %v903
    %v1096 = vpack.c.b16 %v912, %v904
    %v1097 = vpack.c.b16 %v913, %v905
    %v1098 = vpack.c.b16 %v914, %v906
    %v1099 = vpack.c.b16 %v923, %v915
    %v1100 = vpack.c.b16 %v924, %v916
    %v1101 = vpack.c.b16 %v925, %v917
    %v1102 = vpack.c.b16 %v926, %v918
    %v1103 = vpack.c.b16 %v927, %v919
    %v1104 = vpack.c.b16 %v928, %v920
    %v1105 = vpack.c.b16 %v929, %v921
    %v1106 = vpack.c.b16 %v930, %v922
    %v1107 = vpack.c.b16 %v939, %v931
    %v1108 = vpack.c.b16 %v940, %v932
    %v1109 = vpack.c.b16 %v941, %v933
    %v1110 = vpack.c.b16 %v942, %v934
    %v1111 = vpack.c.b16 %v943, %v935
    %v1112 = vpack.c.b16 %v944, %v936
    %v1113 = vpack.c.b16 %v945, %v937
    %v1114 = vpack.c.b16 %v946, %v938
    %v1115 = vpack.c.b16 %v955, %v947
    %v1116 = vpack.c.b16 %v956, %v948
    %v1117 = vpack.c.b16 %v957, %v949
    %v1118 = vpack.c.b16 %v958, %v950
    %v1119 = vpack.c.b16 %v959, %v951
    %v1120 = vpack.c.b16 %v960, %v952
    %v1121 = vpack.c.b16 %v961, %v953
    %v1122 = vpack.c.b16 %v962, %v954
    %v1123 = vpack.c.b16 %v971, %v963
    %v1124 = vpack.c.b16 %v972, %v964
    %v1125 = vpack.c.b16 %v973, %v965
    %v1126 = vpack.c.b16 %v974, %v966
    %v1127 = vpack.c.b16 %v975, %v967
    %v1128 = vpack.c.b16 %v976, %v968
    %v1129 = vpack.c.b16 %v977, %v969
    %v1130 = vpack.c.b16 %v978, %v970
    %v1131 = vpack.c.b16 %v987, %v979
    %v1132 = vpack.c.b16 %v988, %v980
    %v1133 = vpack.c.b16 %v989, %v981
    %v1134 = vpack.c.b16 %v990, %v982
    %v1135 = vpack.c.b16 %v991, %v983
    %v1136 = vpack.c.b16 %v992, %v984
    %v1137 = vpack.c.b16 %v993, %v985
    %v1138 = vpack.c.b16 %v994, %v986
    %v1139 = vpack.c.b16 %v1003, %v995
    %v1140 = vpack.c.b16 %v1004, %v996
    %v1141 = vpack.c.b16 %v1005, %v997
    %v1142 = vpack.c.b16 %v1006, %v998
    %v1143 = vpack.c.b16 %v1007, %v999
    %v1144 = vpack.c.b16 %v1008, %v1000
    %v1145 = vpack.c.b16 %v1009, %v1001
    %v1146 = vpack.c.b16 %v1010, %v1002
    %v1147 = vpack.c.b16 %v1019, %v1011
    %v1148 = vpack.c.b16 %v1020, %v1012
    %v1149 = vpack.c.b16 %v1021, %v1013
    %v1150 = vpack.c.b16 %v1022, %v1014
    %v1151 = vpack.c.b16 %v1023, %v1015
    %v1152 = vpack.c.b16 %v1024, %v1016
    %v1153 = vpack.c.b16 %v1025, %v1017
    %v1154 = vpack.c.b16 %v1026, %v1018
    %1283 = vmatprep.subr.bf16.mxu0 %v1028
    %1284 = vmatpush1.bf16.msra.mxu0 %v1027
    %1285 = vmatprep.subr.bf16.mxu0 %v1036
    %1286 = vmatpush1.bf16.msra.mxu0 %v1035
    %1287 = vmatprep.subr.bf16.mxu0 %v1044
    %1288 = vmatpush1.bf16.msra.mxu0 %v1043
    %1289 = vmatprep.subr.bf16.mxu0 %v1052
    %1290 = vmatpush1.bf16.msra.mxu0 %v1051
    %1291 = vmatprep.subr.bf16.mxu0 %v1060
    %1292 = vmatpush1.bf16.msra.mxu0 %v1059
    %1293 = vmatprep.subr.bf16.mxu0 %v1068
    %1294 = vmatpush1.bf16.msra.mxu0 %v1067
    %1295 = vmatprep.subr.bf16.mxu0 %v1076
    %1296 = vmatpush1.bf16.msra.mxu0 %v1075
    %1297 = vmatprep.subr.bf16.mxu0 %v1084
    %1298 = vmatpush1.bf16.msra.mxu0 %v1083
    %1299 = vmatprep.subr.bf16.mxu0 %v1092
    %1300 = vmatpush1.bf16.msra.mxu0 %v1091
    %1301 = vmatprep.subr.bf16.mxu0 %v1100
    %1302 = vmatpush1.bf16.msra.mxu0 %v1099
    %1303 = vmatprep.subr.bf16.mxu0 %v1108
    %1304 = vmatpush1.bf16.msra.mxu0 %v1107
    %1305 = vmatprep.subr.bf16.mxu0 %v1116
    %1306 = vmatpush1.bf16.msra.mxu0 %v1115
    %1307 = vmatprep.subr.bf16.mxu0 %v1124
    %1308 = vmatpush1.bf16.msra.mxu0 %v1123
    %1309 = vmatprep.subr.bf16.mxu0 %v1132
    %1310 = vmatpush1.bf16.msra.mxu0 %v1131
    %1311 = vmatprep.subr.bf16.mxu0 %v1140
    %1312 = vmatpush1.bf16.msra.mxu0 %v1139
    %1313 = vmatprep.subr.bf16.mxu0 %v1148
    %1314 = vmatpush1.bf16.msra.mxu0 %v1147
    %1315 = vmatprep.mubr.bf16.mxu0 %v472
    %1316 = vmatmul.mubr.bf16.gmra.mrb[0].mxu0 %v471
    %v1317 = vpop.f32.mrb[0].mxu0
    %v1318 = vadd.f32 %v606, %v1317
    %v1319 = vpop.f32.mrb[0].mxu0
    %v1320 = vadd.f32 %v610, %v1319
    %v1321 = vpop.f32.mrb[0].mxu0
    %v1322 = vpop.f32.mrb[0].mxu0
    %1323 = vdwg.mxu0
    %1324 = vmatprep.subr.bf16.mxu0 %v1030
    %1325 = vmatpush1.bf16.msra.mxu0 %v1029
    %1326 = vmatprep.subr.bf16.mxu0 %v1038
    %1327 = vmatpush1.bf16.msra.mxu0 %v1037
    %1328 = vmatprep.subr.bf16.mxu0 %v1046
    %1329 = vmatpush1.bf16.msra.mxu0 %v1045
    %1330 = vmatprep.subr.bf16.mxu0 %v1054
    %1331 = vmatpush1.bf16.msra.mxu0 %v1053
    %1332 = vmatprep.subr.bf16.mxu0 %v1062
    %1333 = vmatpush1.bf16.msra.mxu0 %v1061
    %1334 = vmatprep.subr.bf16.mxu0 %v1070
    %1335 = vmatpush1.bf16.msra.mxu0 %v1069
    %1336 = vmatprep.subr.bf16.mxu0 %v1078
    %1337 = vmatpush1.bf16.msra.mxu0 %v1077
    %1338 = vmatprep.subr.bf16.mxu0 %v1086
    %1339 = vmatpush1.bf16.msra.mxu0 %v1085
    %1340 = vmatprep.subr.bf16.mxu0 %v1094
    %1341 = vmatpush1.bf16.msra.mxu0 %v1093
    %1342 = vmatprep.subr.bf16.mxu0 %v1102
    %1343 = vmatpush1.bf16.msra.mxu0 %v1101
    %1344 = vmatprep.subr.bf16.mxu0 %v1110
    %1345 = vmatpush1.bf16.msra.mxu0 %v1109
    %1346 = vmatprep.subr.bf16.mxu0 %v1118
    %1347 = vmatpush1.bf16.msra.mxu0 %v1117
    %1348 = vmatprep.subr.bf16.mxu0 %v1126
    %1349 = vmatpush1.bf16.msra.mxu0 %v1125
    %1350 = vmatprep.subr.bf16.mxu0 %v1134
    %1351 = vmatpush1.bf16.msra.mxu0 %v1133
    %1352 = vmatprep.subr.bf16.mxu0 %v1142
    %1353 = vmatpush1.bf16.msra.mxu0 %v1141
    %1354 = vmatprep.subr.bf16.mxu0 %v1150
    %1355 = vmatpush1.bf16.msra.mxu0 %v1149
    %1356 = vmatprep.mubr.bf16.mxu0 %v472
    %1357 = vmatmul.mubr.bf16.gmra.mrb[0].mxu0 %v471
    %v1358 = vpop.f32.mrb[0].mxu0
    %v1359 = vadd.f32 %v614, %v1358
    %v1360 = vpop.f32.mrb[0].mxu0
    %v1361 = vadd.f32 %v618, %v1360
    %v1362 = vpop.f32.mrb[0].mxu0
    %v1363 = vpop.f32.mrb[0].mxu0
    %1364 = vdwg.mxu0
    %1365 = vmatprep.subr.bf16.mxu0 %v1032
    %1366 = vmatpush1.bf16.msra.mxu0 %v1031
    %1367 = vmatprep.subr.bf16.mxu0 %v1040
    %1368 = vmatpush1.bf16.msra.mxu0 %v1039
    %1369 = vmatprep.subr.bf16.mxu0 %v1048
    %1370 = vmatpush1.bf16.msra.mxu0 %v1047
    %1371 = vmatprep.subr.bf16.mxu0 %v1056
    %1372 = vmatpush1.bf16.msra.mxu0 %v1055
    %1373 = vmatprep.subr.bf16.mxu0 %v1064
    %1374 = vmatpush1.bf16.msra.mxu0 %v1063
    %1375 = vmatprep.subr.bf16.mxu0 %v1072
    %1376 = vmatpush1.bf16.msra.mxu0 %v1071
    %1377 = vmatprep.subr.bf16.mxu0 %v1080
    %1378 = vmatpush1.bf16.msra.mxu0 %v1079
    %1379 = vmatprep.subr.bf16.mxu0 %v1088
    %1380 = vmatpush1.bf16.msra.mxu0 %v1087
    %1381 = vmatprep.subr.bf16.mxu0 %v1096
    %1382 = vmatpush1.bf16.msra.mxu0 %v1095
    %1383 = vmatprep.subr.bf16.mxu0 %v1104
    %1384 = vmatpush1.bf16.msra.mxu0 %v1103
    %1385 = vmatprep.subr.bf16.mxu0 %v1112
    %1386 = vmatpush1.bf16.msra.mxu0 %v1111
    %1387 = vmatprep.subr.bf16.mxu0 %v1120
    %1388 = vmatpush1.bf16.msra.mxu0 %v1119
    %1389 = vmatprep.subr.bf16.mxu0 %v1128
    %1390 = vmatpush1.bf16.msra.mxu0 %v1127
    %1391 = vmatprep.subr.bf16.mxu0 %v1136
    %1392 = vmatpush1.bf16.msra.mxu0 %v1135
    %1393 = vmatprep.subr.bf16.mxu0 %v1144
    %1394 = vmatpush1.bf16.msra.mxu0 %v1143
    %1395 = vmatprep.subr.bf16.mxu0 %v1152
    %1396 = vmatpush1.bf16.msra.mxu0 %v1151
    %1397 = vmatprep.mubr.bf16.mxu0 %v472
    %1398 = vmatmul.mubr.bf16.gmra.mrb[0].mxu0 %v471
    %v1399 = vpop.f32.mrb[0].mxu0
    %v1400 = vadd.f32 %v622, %v1399
    %v1401 = vpop.f32.mrb[0].mxu0
    %v1402 = vadd.f32 %v626, %v1401
    %v1403 = vpop.f32.mrb[0].mxu0
    %v1404 = vpop.f32.mrb[0].mxu0
    %1405 = vdwg.mxu0
    %1406 = vmatprep.subr.bf16.mxu0 %v1034
    %1407 = vmatpush1.bf16.msra.mxu0 %v1033
    %1408 = vmatprep.subr.bf16.mxu0 %v1042
    %1409 = vmatpush1.bf16.msra.mxu0 %v1041
    %1410 = vmatprep.subr.bf16.mxu0 %v1050
    %1411 = vmatpush1.bf16.msra.mxu0 %v1049
    %1412 = vmatprep.subr.bf16.mxu0 %v1058
    %1413 = vmatpush1.bf16.msra.mxu0 %v1057
    %1414 = vmatprep.subr.bf16.mxu0 %v1066
    %1415 = vmatpush1.bf16.msra.mxu0 %v1065
    %1416 = vmatprep.subr.bf16.mxu0 %v1074
    %1417 = vmatpush1.bf16.msra.mxu0 %v1073
    %1418 = vmatprep.subr.bf16.mxu0 %v1082
    %1419 = vmatpush1.bf16.msra.mxu0 %v1081
    %1420 = vmatprep.subr.bf16.mxu0 %v1090
    %1421 = vmatpush1.bf16.msra.mxu0 %v1089
    %1422 = vmatprep.subr.bf16.mxu0 %v1098
    %1423 = vmatpush1.bf16.msra.mxu0 %v1097
    %1424 = vmatprep.subr.bf16.mxu0 %v1106
    %1425 = vmatpush1.bf16.msra.mxu0 %v1105
    %1426 = vmatprep.subr.bf16.mxu0 %v1114
    %1427 = vmatpush1.bf16.msra.mxu0 %v1113
    %1428 = vmatprep.subr.bf16.mxu0 %v1122
    %1429 = vmatpush1.bf16.msra.mxu0 %v1121
    %1430 = vmatprep.subr.bf16.mxu0 %v1130
    %1431 = vmatpush1.bf16.msra.mxu0 %v1129
    %1432 = vmatprep.subr.bf16.mxu0 %v1138
    %1433 = vmatpush1.bf16.msra.mxu0 %v1137
    %1434 = vmatprep.subr.bf16.mxu0 %v1146
    %1435 = vmatpush1.bf16.msra.mxu0 %v1145
    %1436 = vmatprep.subr.bf16.mxu0 %v1154
    %1437 = vmatpush1.bf16.msra.mxu0 %v1153
    %1438 = vmatprep.mubr.bf16.mxu0 %v472
    %1439 = vmatmul.mubr.bf16.gmra.mrb[0].mxu0 %v471
    %v1440 = vpop.f32.mrb[0].mxu0
    %v1441 = vadd.f32 %v630, %v1440
    %v1442 = vpop.f32.mrb[0].mxu0
    %v1443 = vadd.f32 %v634, %v1442
    %v1444 = vpop.f32.mrb[0].mxu0
    %v1445 = vpop.f32.mrb[0].mxu0
    %1446 = vdwg.mxu0
    %v1447 = vld [vmem:[#allocation2 + $0x20] sm:$0xff]
    %v1448 = vld [vmem:[#allocation2 + $0x28] sm:$0xff]
    %v1449 = vld [vmem:[#allocation2 + $0x30] sm:$0xff]
    %v1450 = vld [vmem:[#allocation2 + $0x38] sm:$0xff]
    %v1451 = vld [vmem:[#allocation2 + $0x60] sm:$0xff]
    %v1452 = vld [vmem:[#allocation2 + $0x68] sm:$0xff]
    %v1453 = vld [vmem:[#allocation2 + $0x70] sm:$0xff]
    %v1454 = vld [vmem:[#allocation2 + $0x78] sm:$0xff]
    %v1455 = vld [vmem:[#allocation2 + $0xa0] sm:$0xff]
    %v1456 = vld [vmem:[#allocation2 + $0xa8] sm:$0xff]
    %v1457 = vld [vmem:[#allocation2 + $0xb0] sm:$0xff]
    %v1458 = vld [vmem:[#allocation2 + $0xb8] sm:$0xff]
    %v1459 = vld [vmem:[#allocation2 + $0xe0] sm:$0xff]
    %v1460 = vld [vmem:[#allocation2 + $0xe8] sm:$0xff]
    %v1461 = vld [vmem:[#allocation2 + $0xf0] sm:$0xff]
    %v1462 = vld [vmem:[#allocation2 + $0xf8] sm:$0xff]
    %v1463 = vld [vmem:[#allocation2 + $0x120] sm:$0xff]
    %v1464 = vld [vmem:[#allocation2 + $0x128] sm:$0xff]
    %v1465 = vld [vmem:[#allocation2 + $0x130] sm:$0xff]
    %v1466 = vld [vmem:[#allocation2 + $0x138] sm:$0xff]
    %v1467 = vld [vmem:[#allocation2 + $0x160] sm:$0xff]
    %v1468 = vld [vmem:[#allocation2 + $0x168] sm:$0xff]
    %v1469 = vld [vmem:[#allocation2 + $0x170] sm:$0xff]
    %v1470 = vld [vmem:[#allocation2 + $0x178] sm:$0xff]
    %v1471 = vld [vmem:[#allocation2 + $0x1a0] sm:$0xff]
    %v1472 = vld [vmem:[#allocation2 + $0x1a8] sm:$0xff]
    %v1473 = vld [vmem:[#allocation2 + $0x1b0] sm:$0xff]
    %v1474 = vld [vmem:[#allocation2 + $0x1b8] sm:$0xff]
    %v1475 = vld [vmem:[#allocation2 + $0x1e0] sm:$0xff]
    %v1476 = vld [vmem:[#allocation2 + $0x1e8] sm:$0xff]
    %v1477 = vld [vmem:[#allocation2 + $0x1f0] sm:$0xff]
    %v1478 = vld [vmem:[#allocation2 + $0x1f8] sm:$0xff]
    %v1479 = vld [vmem:[#allocation2 + $0x220] sm:$0xff]
    %v1480 = vld [vmem:[#allocation2 + $0x228] sm:$0xff]
    %v1481 = vld [vmem:[#allocation2 + $0x230] sm:$0xff]
    %v1482 = vld [vmem:[#allocation2 + $0x238] sm:$0xff]
    %v1483 = vld [vmem:[#allocation2 + $0x260] sm:$0xff]
    %v1484 = vld [vmem:[#allocation2 + $0x268] sm:$0xff]
    %v1485 = vld [vmem:[#allocation2 + $0x270] sm:$0xff]
    %v1486 = vld [vmem:[#allocation2 + $0x278] sm:$0xff]
    %v1487 = vld [vmem:[#allocation2 + $0x2a0] sm:$0xff]
    %v1488 = vld [vmem:[#allocation2 + $0x2a8] sm:$0xff]
    %v1489 = vld [vmem:[#allocation2 + $0x2b0] sm:$0xff]
    %v1490 = vld [vmem:[#allocation2 + $0x2b8] sm:$0xff]
    %v1491 = vld [vmem:[#allocation2 + $0x2e0] sm:$0xff]
    %v1492 = vld [vmem:[#allocation2 + $0x2e8] sm:$0xff]
    %v1493 = vld [vmem:[#allocation2 + $0x2f0] sm:$0xff]
    %v1494 = vld [vmem:[#allocation2 + $0x2f8] sm:$0xff]
    %v1495 = vld [vmem:[#allocation2 + $0x320] sm:$0xff]
    %v1496 = vld [vmem:[#allocation2 + $0x328] sm:$0xff]
    %v1497 = vld [vmem:[#allocation2 + $0x330] sm:$0xff]
    %v1498 = vld [vmem:[#allocation2 + $0x338] sm:$0xff]
    %v1499 = vld [vmem:[#allocation2 + $0x360] sm:$0xff]
    %v1500 = vld [vmem:[#allocation2 + $0x368] sm:$0xff]
    %v1501 = vld [vmem:[#allocation2 + $0x370] sm:$0xff]
    %v1502 = vld [vmem:[#allocation2 + $0x378] sm:$0xff]
    %v1503 = vld [vmem:[#allocation2 + $0x3a0] sm:$0xff]
    %v1504 = vld [vmem:[#allocation2 + $0x3a8] sm:$0xff]
    %v1505 = vld [vmem:[#allocation2 + $0x3b0] sm:$0xff]
    %v1506 = vld [vmem:[#allocation2 + $0x3b8] sm:$0xff]
    %v1507 = vld [vmem:[#allocation2 + $0x3e0] sm:$0xff]
    %v1508 = vld [vmem:[#allocation2 + $0x3e8] sm:$0xff]
    %v1509 = vld [vmem:[#allocation2 + $0x3f0] sm:$0xff]
    %v1510 = vld [vmem:[#allocation2 + $0x3f8] sm:$0xff]
    %v1511 = vld [vmem:[#allocation2 + $0x420] sm:$0xff]
    %v1512 = vld [vmem:[#allocation2 + $0x428] sm:$0xff]
    %v1513 = vld [vmem:[#allocation2 + $0x430] sm:$0xff]
    %v1514 = vld [vmem:[#allocation2 + $0x438] sm:$0xff]
    %v1515 = vld [vmem:[#allocation2 + $0x460] sm:$0xff]
    %v1516 = vld [vmem:[#allocation2 + $0x468] sm:$0xff]
    %v1517 = vld [vmem:[#allocation2 + $0x470] sm:$0xff]
    %v1518 = vld [vmem:[#allocation2 + $0x478] sm:$0xff]
    %v1519 = vld [vmem:[#allocation2 + $0x4a0] sm:$0xff]
    %v1520 = vld [vmem:[#allocation2 + $0x4a8] sm:$0xff]
    %v1521 = vld [vmem:[#allocation2 + $0x4b0] sm:$0xff]
    %v1522 = vld [vmem:[#allocation2 + $0x4b8] sm:$0xff]
    %v1523 = vld [vmem:[#allocation2 + $0x4e0] sm:$0xff]
    %v1524 = vld [vmem:[#allocation2 + $0x4e8] sm:$0xff]
    %v1525 = vld [vmem:[#allocation2 + $0x4f0] sm:$0xff]
    %v1526 = vld [vmem:[#allocation2 + $0x4f8] sm:$0xff]
    %v1527 = vld [vmem:[#allocation2 + $0x520] sm:$0xff]
    %v1528 = vld [vmem:[#allocation2 + $0x528] sm:$0xff]
    %v1529 = vld [vmem:[#allocation2 + $0x530] sm:$0xff]
    %v1530 = vld [vmem:[#allocation2 + $0x538] sm:$0xff]
    %v1531 = vld [vmem:[#allocation2 + $0x560] sm:$0xff]
    %v1532 = vld [vmem:[#allocation2 + $0x568] sm:$0xff]
    %v1533 = vld [vmem:[#allocation2 + $0x570] sm:$0xff]
    %v1534 = vld [vmem:[#allocation2 + $0x578] sm:$0xff]
    %v1535 = vld [vmem:[#allocation2 + $0x5a0] sm:$0xff]
    %v1536 = vld [vmem:[#allocation2 + $0x5a8] sm:$0xff]
    %v1537 = vld [vmem:[#allocation2 + $0x5b0] sm:$0xff]
    %v1538 = vld [vmem:[#allocation2 + $0x5b8] sm:$0xff]
    %v1539 = vld [vmem:[#allocation2 + $0x5e0] sm:$0xff]
    %v1540 = vld [vmem:[#allocation2 + $0x5e8] sm:$0xff]
    %v1541 = vld [vmem:[#allocation2 + $0x5f0] sm:$0xff]
    %v1542 = vld [vmem:[#allocation2 + $0x5f8] sm:$0xff]
    %v1543 = vld [vmem:[#allocation2 + $0x620] sm:$0xff]
    %v1544 = vld [vmem:[#allocation2 + $0x628] sm:$0xff]
    %v1545 = vld [vmem:[#allocation2 + $0x630] sm:$0xff]
    %v1546 = vld [vmem:[#allocation2 + $0x638] sm:$0xff]
    %v1547 = vld [vmem:[#allocation2 + $0x660] sm:$0xff]
    %v1548 = vld [vmem:[#allocation2 + $0x668] sm:$0xff]
    %v1549 = vld [vmem:[#allocation2 + $0x670] sm:$0xff]
    %v1550 = vld [vmem:[#allocation2 + $0x678] sm:$0xff]
    %v1551 = vld [vmem:[#allocation2 + $0x6a0] sm:$0xff]
    %v1552 = vld [vmem:[#allocation2 + $0x6a8] sm:$0xff]
    %v1553 = vld [vmem:[#allocation2 + $0x6b0] sm:$0xff]
    %v1554 = vld [vmem:[#allocation2 + $0x6b8] sm:$0xff]
    %v1555 = vld [vmem:[#allocation2 + $0x6e0] sm:$0xff]
    %v1556 = vld [vmem:[#allocation2 + $0x6e8] sm:$0xff]
    %v1557 = vld [vmem:[#allocation2 + $0x6f0] sm:$0xff]
    %v1558 = vld [vmem:[#allocation2 + $0x6f8] sm:$0xff]
    %v1559 = vld [vmem:[#allocation2 + $0x720] sm:$0xff]
    %v1560 = vld [vmem:[#allocation2 + $0x728] sm:$0xff]
    %v1561 = vld [vmem:[#allocation2 + $0x730] sm:$0xff]
    %v1562 = vld [vmem:[#allocation2 + $0x738] sm:$0xff]
    %v1563 = vld [vmem:[#allocation2 + $0x760] sm:$0xff]
    %v1564 = vld [vmem:[#allocation2 + $0x768] sm:$0xff]
    %v1565 = vld [vmem:[#allocation2 + $0x770] sm:$0xff]
    %v1566 = vld [vmem:[#allocation2 + $0x778] sm:$0xff]
    %v1567 = vld [vmem:[#allocation2 + $0x7a0] sm:$0xff]
    %v1568 = vld [vmem:[#allocation2 + $0x7a8] sm:$0xff]
    %v1569 = vld [vmem:[#allocation2 + $0x7b0] sm:$0xff]
    %v1570 = vld [vmem:[#allocation2 + $0x7b8] sm:$0xff]
    %v1571 = vld [vmem:[#allocation2 + $0x7e0] sm:$0xff]
    %v1572 = vld [vmem:[#allocation2 + $0x7e8] sm:$0xff]
    %v1573 = vld [vmem:[#allocation2 + $0x7f0] sm:$0xff]
    %v1574 = vld [vmem:[#allocation2 + $0x7f8] sm:$0xff]
    %v1575 = vld [vmem:[%s11 + $0x8] sm:$0xff]
    %v1577 = vlaneseq
    %v1578 = vshrl.u32 %v1577, 7
    %v1579 = vsub.s32 0, %v1578
    %v1580 = vrot.slane %v1575, %v1579
    %v1581 = vlaneseq
    %v1582 = vshrl.u32 %v1581, 7
    %v1583 = vsub.s32 1, %v1582
    %v1584 = vrot.slane %v1575, %v1583
    %v1585 = vlaneseq
    %v1586 = vshrl.u32 %v1585, 7
    %v1587 = vsub.s32 2, %v1586
    %v1588 = vrot.slane %v1575, %v1587
    %v1589 = vlaneseq
    %v1590 = vshrl.u32 %v1589, 7
    %v1591 = vsub.s32 3, %v1590
    %v1592 = vrot.slane %v1575, %v1591
    %v1593 = vlaneseq
    %v1594 = vshrl.u32 %v1593, 7
    %v1595 = vsub.s32 4, %v1594
    %v1596 = vrot.slane %v1575, %v1595
    %v1597 = vlaneseq
    %v1598 = vshrl.u32 %v1597, 7
    %v1599 = vsub.s32 5, %v1598
    %v1600 = vrot.slane %v1575, %v1599
    %v1601 = vlaneseq
    %v1602 = vshrl.u32 %v1601, 7
    %v1603 = vsub.s32 6, %v1602
    %v1604 = vrot.slane %v1575, %v1603
    %v1605 = vlaneseq
    %v1606 = vshrl.u32 %v1605, 7
    %v1607 = vsub.s32 7, %v1606
    %v1608 = vrot.slane %v1575, %v1607
    %v1745 = vunpack.c.l.b16 %v1447
    %v1746 = vunpack.c.h.b16 %v1447
    %v1747 = vunpack.c.l.b16 %v1448
    %v1748 = vunpack.c.h.b16 %v1448
    %v1749 = vunpack.c.l.b16 %v1449
    %v1750 = vunpack.c.h.b16 %v1449
    %v1751 = vunpack.c.l.b16 %v1450
    %v1752 = vunpack.c.h.b16 %v1450
    %v1753 = vunpack.c.l.b16 %v1451
    %v1754 = vunpack.c.h.b16 %v1451
    %v1755 = vunpack.c.l.b16 %v1452
    %v1756 = vunpack.c.h.b16 %v1452
    %v1757 = vunpack.c.l.b16 %v1453
    %v1758 = vunpack.c.h.b16 %v1453
    %v1759 = vunpack.c.l.b16 %v1454
    %v1760 = vunpack.c.h.b16 %v1454
    %v1761 = vunpack.c.l.b16 %v1455
    %v1762 = vunpack.c.h.b16 %v1455
    %v1763 = vunpack.c.l.b16 %v1456
    %v1764 = vunpack.c.h.b16 %v1456
    %v1765 = vunpack.c.l.b16 %v1457
    %v1766 = vunpack.c.h.b16 %v1457
    %v1767 = vunpack.c.l.b16 %v1458
    %v1768 = vunpack.c.h.b16 %v1458
    %v1769 = vunpack.c.l.b16 %v1459
    %v1770 = vunpack.c.h.b16 %v1459
    %v1771 = vunpack.c.l.b16 %v1460
    %v1772 = vunpack.c.h.b16 %v1460
    %v1773 = vunpack.c.l.b16 %v1461
    %v1774 = vunpack.c.h.b16 %v1461
    %v1775 = vunpack.c.l.b16 %v1462
    %v1776 = vunpack.c.h.b16 %v1462
    %v1777 = vunpack.c.l.b16 %v1463
    %v1778 = vunpack.c.h.b16 %v1463
    %v1779 = vunpack.c.l.b16 %v1464
    %v1780 = vunpack.c.h.b16 %v1464
    %v1781 = vunpack.c.l.b16 %v1465
    %v1782 = vunpack.c.h.b16 %v1465
    %v1783 = vunpack.c.l.b16 %v1466
    %v1784 = vunpack.c.h.b16 %v1466
    %v1785 = vunpack.c.l.b16 %v1467
    %v1786 = vunpack.c.h.b16 %v1467
    %v1787 = vunpack.c.l.b16 %v1468
    %v1788 = vunpack.c.h.b16 %v1468
    %v1789 = vunpack.c.l.b16 %v1469
    %v1790 = vunpack.c.h.b16 %v1469
    %v1791 = vunpack.c.l.b16 %v1470
    %v1792 = vunpack.c.h.b16 %v1470
    %v1793 = vunpack.c.l.b16 %v1471
    %v1794 = vunpack.c.h.b16 %v1471
    %v1795 = vunpack.c.l.b16 %v1472
    %v1796 = vunpack.c.h.b16 %v1472
    %v1797 = vunpack.c.l.b16 %v1473
    %v1798 = vunpack.c.h.b16 %v1473
    %v1799 = vunpack.c.l.b16 %v1474
    %v1800 = vunpack.c.h.b16 %v1474
    %v1801 = vunpack.c.l.b16 %v1475
    %v1802 = vunpack.c.h.b16 %v1475
    %v1803 = vunpack.c.l.b16 %v1476
    %v1804 = vunpack.c.h.b16 %v1476
    %v1805 = vunpack.c.l.b16 %v1477
    %v1806 = vunpack.c.h.b16 %v1477
    %v1807 = vunpack.c.l.b16 %v1478
    %v1808 = vunpack.c.h.b16 %v1478
    %v1809 = vunpack.c.l.b16 %v1479
    %v1810 = vunpack.c.h.b16 %v1479
    %v1811 = vunpack.c.l.b16 %v1480
    %v1812 = vunpack.c.h.b16 %v1480
    %v1813 = vunpack.c.l.b16 %v1481
    %v1814 = vunpack.c.h.b16 %v1481
    %v1815 = vunpack.c.l.b16 %v1482
    %v1816 = vunpack.c.h.b16 %v1482
    %v1817 = vunpack.c.l.b16 %v1483
    %v1818 = vunpack.c.h.b16 %v1483
    %v1819 = vunpack.c.l.b16 %v1484
    %v1820 = vunpack.c.h.b16 %v1484
    %v1821 = vunpack.c.l.b16 %v1485
    %v1822 = vunpack.c.h.b16 %v1485
    %v1823 = vunpack.c.l.b16 %v1486
    %v1824 = vunpack.c.h.b16 %v1486
    %v1825 = vunpack.c.l.b16 %v1487
    %v1826 = vunpack.c.h.b16 %v1487
    %v1827 = vunpack.c.l.b16 %v1488
    %v1828 = vunpack.c.h.b16 %v1488
    %v1829 = vunpack.c.l.b16 %v1489
    %v1830 = vunpack.c.h.b16 %v1489
    %v1831 = vunpack.c.l.b16 %v1490
    %v1832 = vunpack.c.h.b16 %v1490
    %v1833 = vunpack.c.l.b16 %v1491
    %v1834 = vunpack.c.h.b16 %v1491
    %v1835 = vunpack.c.l.b16 %v1492
    %v1836 = vunpack.c.h.b16 %v1492
    %v1837 = vunpack.c.l.b16 %v1493
    %v1838 = vunpack.c.h.b16 %v1493
    %v1839 = vunpack.c.l.b16 %v1494
    %v1840 = vunpack.c.h.b16 %v1494
    %v1841 = vunpack.c.l.b16 %v1495
    %v1842 = vunpack.c.h.b16 %v1495
    %v1843 = vunpack.c.l.b16 %v1496
    %v1844 = vunpack.c.h.b16 %v1496
    %v1845 = vunpack.c.l.b16 %v1497
    %v1846 = vunpack.c.h.b16 %v1497
    %v1847 = vunpack.c.l.b16 %v1498
    %v1848 = vunpack.c.h.b16 %v1498
    %v1849 = vunpack.c.l.b16 %v1499
    %v1850 = vunpack.c.h.b16 %v1499
    %v1851 = vunpack.c.l.b16 %v1500
    %v1852 = vunpack.c.h.b16 %v1500
    %v1853 = vunpack.c.l.b16 %v1501
    %v1854 = vunpack.c.h.b16 %v1501
    %v1855 = vunpack.c.l.b16 %v1502
    %v1856 = vunpack.c.h.b16 %v1502
    %v1857 = vunpack.c.l.b16 %v1503
    %v1858 = vunpack.c.h.b16 %v1503
    %v1859 = vunpack.c.l.b16 %v1504
    %v1860 = vunpack.c.h.b16 %v1504
    %v1861 = vunpack.c.l.b16 %v1505
    %v1862 = vunpack.c.h.b16 %v1505
    %v1863 = vunpack.c.l.b16 %v1506
    %v1864 = vunpack.c.h.b16 %v1506
    %v1865 = vunpack.c.l.b16 %v1507
    %v1866 = vunpack.c.h.b16 %v1507
    %v1867 = vunpack.c.l.b16 %v1508
    %v1868 = vunpack.c.h.b16 %v1508
    %v1869 = vunpack.c.l.b16 %v1509
    %v1870 = vunpack.c.h.b16 %v1509
    %v1871 = vunpack.c.l.b16 %v1510
    %v1872 = vunpack.c.h.b16 %v1510
    %v1873 = vunpack.c.l.b16 %v1511
    %v1874 = vunpack.c.h.b16 %v1511
    %v1875 = vunpack.c.l.b16 %v1512
    %v1876 = vunpack.c.h.b16 %v1512
    %v1877 = vunpack.c.l.b16 %v1513
    %v1878 = vunpack.c.h.b16 %v1513
    %v1879 = vunpack.c.l.b16 %v1514
    %v1880 = vunpack.c.h.b16 %v1514
    %v1881 = vunpack.c.l.b16 %v1515
    %v1882 = vunpack.c.h.b16 %v1515
    %v1883 = vunpack.c.l.b16 %v1516
    %v1884 = vunpack.c.h.b16 %v1516
    %v1885 = vunpack.c.l.b16 %v1517
    %v1886 = vunpack.c.h.b16 %v1517
    %v1887 = vunpack.c.l.b16 %v1518
    %v1888 = vunpack.c.h.b16 %v1518
    %v1889 = vunpack.c.l.b16 %v1519
    %v1890 = vunpack.c.h.b16 %v1519
    %v1891 = vunpack.c.l.b16 %v1520
    %v1892 = vunpack.c.h.b16 %v1520
    %v1893 = vunpack.c.l.b16 %v1521
    %v1894 = vunpack.c.h.b16 %v1521
    %v1895 = vunpack.c.l.b16 %v1522
    %v1896 = vunpack.c.h.b16 %v1522
    %v1897 = vunpack.c.l.b16 %v1523
    %v1898 = vunpack.c.h.b16 %v1523
    %v1899 = vunpack.c.l.b16 %v1524
    %v1900 = vunpack.c.h.b16 %v1524
    %v1901 = vunpack.c.l.b16 %v1525
    %v1902 = vunpack.c.h.b16 %v1525
    %v1903 = vunpack.c.l.b16 %v1526
    %v1904 = vunpack.c.h.b16 %v1526
    %v1905 = vunpack.c.l.b16 %v1527
    %v1906 = vunpack.c.h.b16 %v1527
    %v1907 = vunpack.c.l.b16 %v1528
    %v1908 = vunpack.c.h.b16 %v1528
    %v1909 = vunpack.c.l.b16 %v1529
    %v1910 = vunpack.c.h.b16 %v1529
    %v1911 = vunpack.c.l.b16 %v1530
    %v1912 = vunpack.c.h.b16 %v1530
    %v1913 = vunpack.c.l.b16 %v1531
    %v1914 = vunpack.c.h.b16 %v1531
    %v1915 = vunpack.c.l.b16 %v1532
    %v1916 = vunpack.c.h.b16 %v1532
    %v1917 = vunpack.c.l.b16 %v1533
    %v1918 = vunpack.c.h.b16 %v1533
    %v1919 = vunpack.c.l.b16 %v1534
    %v1920 = vunpack.c.h.b16 %v1534
    %v1921 = vunpack.c.l.b16 %v1535
    %v1922 = vunpack.c.h.b16 %v1535
    %v1923 = vunpack.c.l.b16 %v1536
    %v1924 = vunpack.c.h.b16 %v1536
    %v1925 = vunpack.c.l.b16 %v1537
    %v1926 = vunpack.c.h.b16 %v1537
    %v1927 = vunpack.c.l.b16 %v1538
    %v1928 = vunpack.c.h.b16 %v1538
    %v1929 = vunpack.c.l.b16 %v1539
    %v1930 = vunpack.c.h.b16 %v1539
    %v1931 = vunpack.c.l.b16 %v1540
    %v1932 = vunpack.c.h.b16 %v1540
    %v1933 = vunpack.c.l.b16 %v1541
    %v1934 = vunpack.c.h.b16 %v1541
    %v1935 = vunpack.c.l.b16 %v1542
    %v1936 = vunpack.c.h.b16 %v1542
    %v1937 = vunpack.c.l.b16 %v1543
    %v1938 = vunpack.c.h.b16 %v1543
    %v1939 = vunpack.c.l.b16 %v1544
    %v1940 = vunpack.c.h.b16 %v1544
    %v1941 = vunpack.c.l.b16 %v1545
    %v1942 = vunpack.c.h.b16 %v1545
    %v1943 = vunpack.c.l.b16 %v1546
    %v1944 = vunpack.c.h.b16 %v1546
    %v1945 = vunpack.c.l.b16 %v1547
    %v1946 = vunpack.c.h.b16 %v1547
    %v1947 = vunpack.c.l.b16 %v1548
    %v1948 = vunpack.c.h.b16 %v1548
    %v1949 = vunpack.c.l.b16 %v1549
    %v1950 = vunpack.c.h.b16 %v1549
    %v1951 = vunpack.c.l.b16 %v1550
    %v1952 = vunpack.c.h.b16 %v1550
    %v1953 = vunpack.c.l.b16 %v1551
    %v1954 = vunpack.c.h.b16 %v1551
    %v1955 = vunpack.c.l.b16 %v1552
    %v1956 = vunpack.c.h.b16 %v1552
    %v1957 = vunpack.c.l.b16 %v1553
    %v1958 = vunpack.c.h.b16 %v1553
    %v1959 = vunpack.c.l.b16 %v1554
    %v1960 = vunpack.c.h.b16 %v1554
    %v1961 = vunpack.c.l.b16 %v1555
    %v1962 = vunpack.c.h.b16 %v1555
    %v1963 = vunpack.c.l.b16 %v1556
    %v1964 = vunpack.c.h.b16 %v1556
    %v1965 = vunpack.c.l.b16 %v1557
    %v1966 = vunpack.c.h.b16 %v1557
    %v1967 = vunpack.c.l.b16 %v1558
    %v1968 = vunpack.c.h.b16 %v1558
    %v1969 = vunpack.c.l.b16 %v1559
    %v1970 = vunpack.c.h.b16 %v1559
    %v1971 = vunpack.c.l.b16 %v1560
    %v1972 = vunpack.c.h.b16 %v1560
    %v1973 = vunpack.c.l.b16 %v1561
    %v1974 = vunpack.c.h.b16 %v1561
    %v1975 = vunpack.c.l.b16 %v1562
    %v1976 = vunpack.c.h.b16 %v1562
    %v1977 = vunpack.c.l.b16 %v1563
    %v1978 = vunpack.c.h.b16 %v1563
    %v1979 = vunpack.c.l.b16 %v1564
    %v1980 = vunpack.c.h.b16 %v1564
    %v1981 = vunpack.c.l.b16 %v1565
    %v1982 = vunpack.c.h.b16 %v1565
    %v1983 = vunpack.c.l.b16 %v1566
    %v1984 = vunpack.c.h.b16 %v1566
    %v1985 = vunpack.c.l.b16 %v1567
    %v1986 = vunpack.c.h.b16 %v1567
    %v1987 = vunpack.c.l.b16 %v1568
    %v1988 = vunpack.c.h.b16 %v1568
    %v1989 = vunpack.c.l.b16 %v1569
    %v1990 = vunpack.c.h.b16 %v1569
    %v1991 = vunpack.c.l.b16 %v1570
    %v1992 = vunpack.c.h.b16 %v1570
    %v1993 = vunpack.c.l.b16 %v1571
    %v1994 = vunpack.c.h.b16 %v1571
    %v1995 = vunpack.c.l.b16 %v1572
    %v1996 = vunpack.c.h.b16 %v1572
    %v1997 = vunpack.c.l.b16 %v1573
    %v1998 = vunpack.c.h.b16 %v1573
    %v1999 = vunpack.c.l.b16 %v1574
    %v2000 = vunpack.c.h.b16 %v1574
    %v2001 = vpack.c.b16 %v1753, %v1745
    %v2002 = vpack.c.b16 %v1754, %v1746
    %v2003 = vpack.c.b16 %v1755, %v1747
    %v2004 = vpack.c.b16 %v1756, %v1748
    %v2005 = vpack.c.b16 %v1757, %v1749
    %v2006 = vpack.c.b16 %v1758, %v1750
    %v2007 = vpack.c.b16 %v1759, %v1751
    %v2008 = vpack.c.b16 %v1760, %v1752
    %v2009 = vpack.c.b16 %v1769, %v1761
    %v2010 = vpack.c.b16 %v1770, %v1762
    %v2011 = vpack.c.b16 %v1771, %v1763
    %v2012 = vpack.c.b16 %v1772, %v1764
    %v2013 = vpack.c.b16 %v1773, %v1765
    %v2014 = vpack.c.b16 %v1774, %v1766
    %v2015 = vpack.c.b16 %v1775, %v1767
    %v2016 = vpack.c.b16 %v1776, %v1768
    %v2017 = vpack.c.b16 %v1785, %v1777
    %v2018 = vpack.c.b16 %v1786, %v1778
    %v2019 = vpack.c.b16 %v1787, %v1779
    %v2020 = vpack.c.b16 %v1788, %v1780
    %v2021 = vpack.c.b16 %v1789, %v1781
    %v2022 = vpack.c.b16 %v1790, %v1782
    %v2023 = vpack.c.b16 %v1791, %v1783
    %v2024 = vpack.c.b16 %v1792, %v1784
    %v2025 = vpack.c.b16 %v1801, %v1793
    %v2026 = vpack.c.b16 %v1802, %v1794
    %v2027 = vpack.c.b16 %v1803, %v1795
    %v2028 = vpack.c.b16 %v1804, %v1796
    %v2029 = vpack.c.b16 %v1805, %v1797
    %v2030 = vpack.c.b16 %v1806, %v1798
    %v2031 = vpack.c.b16 %v1807, %v1799
    %v2032 = vpack.c.b16 %v1808, %v1800
    %v2033 = vpack.c.b16 %v1817, %v1809
    %v2034 = vpack.c.b16 %v1818, %v1810
    %v2035 = vpack.c.b16 %v1819, %v1811
    %v2036 = vpack.c.b16 %v1820, %v1812
    %v2037 = vpack.c.b16 %v1821, %v1813
    %v2038 = vpack.c.b16 %v1822, %v1814
    %v2039 = vpack.c.b16 %v1823, %v1815
    %v2040 = vpack.c.b16 %v1824, %v1816
    %v2041 = vpack.c.b16 %v1833, %v1825
    %v2042 = vpack.c.b16 %v1834, %v1826
    %v2043 = vpack.c.b16 %v1835, %v1827
    %v2044 = vpack.c.b16 %v1836, %v1828
    %v2045 = vpack.c.b16 %v1837, %v1829
    %v2046 = vpack.c.b16 %v1838, %v1830
    %v2047 = vpack.c.b16 %v1839, %v1831
    %v2048 = vpack.c.b16 %v1840, %v1832
    %v2049 = vpack.c.b16 %v1849, %v1841
    %v2050 = vpack.c.b16 %v1850, %v1842
    %v2051 = vpack.c.b16 %v1851, %v1843
    %v2052 = vpack.c.b16 %v1852, %v1844
    %v2053 = vpack.c.b16 %v1853, %v1845
    %v2054 = vpack.c.b16 %v1854, %v1846
    %v2055 = vpack.c.b16 %v1855, %v1847
    %v2056 = vpack.c.b16 %v1856, %v1848
    %v2057 = vpack.c.b16 %v1865, %v1857
    %v2058 = vpack.c.b16 %v1866, %v1858
    %v2059 = vpack.c.b16 %v1867, %v1859
    %v2060 = vpack.c.b16 %v1868, %v1860
    %v2061 = vpack.c.b16 %v1869, %v1861
    %v2062 = vpack.c.b16 %v1870, %v1862
    %v2063 = vpack.c.b16 %v1871, %v1863
    %v2064 = vpack.c.b16 %v1872, %v1864
    %v2065 = vpack.c.b16 %v1881, %v1873
    %v2066 = vpack.c.b16 %v1882, %v1874
    %v2067 = vpack.c.b16 %v1883, %v1875
    %v2068 = vpack.c.b16 %v1884, %v1876
    %v2069 = vpack.c.b16 %v1885, %v1877
    %v2070 = vpack.c.b16 %v1886, %v1878
    %v2071 = vpack.c.b16 %v1887, %v1879
    %v2072 = vpack.c.b16 %v1888, %v1880
    %v2073 = vpack.c.b16 %v1897, %v1889
    %v2074 = vpack.c.b16 %v1898, %v1890
    %v2075 = vpack.c.b16 %v1899, %v1891
    %v2076 = vpack.c.b16 %v1900, %v1892
    %v2077 = vpack.c.b16 %v1901, %v1893
    %v2078 = vpack.c.b16 %v1902, %v1894
    %v2079 = vpack.c.b16 %v1903, %v1895
    %v2080 = vpack.c.b16 %v1904, %v1896
    %v2081 = vpack.c.b16 %v1913, %v1905
    %v2082 = vpack.c.b16 %v1914, %v1906
    %v2083 = vpack.c.b16 %v1915, %v1907
    %v2084 = vpack.c.b16 %v1916, %v1908
    %v2085 = vpack.c.b16 %v1917, %v1909
    %v2086 = vpack.c.b16 %v1918, %v1910
    %v2087 = vpack.c.b16 %v1919, %v1911
    %v2088 = vpack.c.b16 %v1920, %v1912
    %v2089 = vpack.c.b16 %v1929, %v1921
    %v2090 = vpack.c.b16 %v1930, %v1922
    %v2091 = vpack.c.b16 %v1931, %v1923
    %v2092 = vpack.c.b16 %v1932, %v1924
    %v2093 = vpack.c.b16 %v1933, %v1925
    %v2094 = vpack.c.b16 %v1934, %v1926
    %v2095 = vpack.c.b16 %v1935, %v1927
    %v2096 = vpack.c.b16 %v1936, %v1928
    %v2097 = vpack.c.b16 %v1945, %v1937
    %v2098 = vpack.c.b16 %v1946, %v1938
    %v2099 = vpack.c.b16 %v1947, %v1939
    %v2100 = vpack.c.b16 %v1948, %v1940
    %v2101 = vpack.c.b16 %v1949, %v1941
    %v2102 = vpack.c.b16 %v1950, %v1942
    %v2103 = vpack.c.b16 %v1951, %v1943
    %v2104 = vpack.c.b16 %v1952, %v1944
    %v2105 = vpack.c.b16 %v1961, %v1953
    %v2106 = vpack.c.b16 %v1962, %v1954
    %v2107 = vpack.c.b16 %v1963, %v1955
    %v2108 = vpack.c.b16 %v1964, %v1956
    %v2109 = vpack.c.b16 %v1965, %v1957
    %v2110 = vpack.c.b16 %v1966, %v1958
    %v2111 = vpack.c.b16 %v1967, %v1959
    %v2112 = vpack.c.b16 %v1968, %v1960
    %v2113 = vpack.c.b16 %v1977, %v1969
    %v2114 = vpack.c.b16 %v1978, %v1970
    %v2115 = vpack.c.b16 %v1979, %v1971
    %v2116 = vpack.c.b16 %v1980, %v1972
    %v2117 = vpack.c.b16 %v1981, %v1973
    %v2118 = vpack.c.b16 %v1982, %v1974
    %v2119 = vpack.c.b16 %v1983, %v1975
    %v2120 = vpack.c.b16 %v1984, %v1976
    %v2121 = vpack.c.b16 %v1993, %v1985
    %v2122 = vpack.c.b16 %v1994, %v1986
    %v2123 = vpack.c.b16 %v1995, %v1987
    %v2124 = vpack.c.b16 %v1996, %v1988
    %v2125 = vpack.c.b16 %v1997, %v1989
    %v2126 = vpack.c.b16 %v1998, %v1990
    %v2127 = vpack.c.b16 %v1999, %v1991
    %v2128 = vpack.c.b16 %v2000, %v1992
    %2257 = vmatprep.subr.bf16.mxu0 %v2002
    %2258 = vmatpush1.bf16.msra.mxu0 %v2001
    %2259 = vmatprep.subr.bf16.mxu0 %v2010
    %2260 = vmatpush1.bf16.msra.mxu0 %v2009
    %2261 = vmatprep.subr.bf16.mxu0 %v2018
    %2262 = vmatpush1.bf16.msra.mxu0 %v2017
    %2263 = vmatprep.subr.bf16.mxu0 %v2026
    %2264 = vmatpush1.bf16.msra.mxu0 %v2025
    %2265 = vmatprep.subr.bf16.mxu0 %v2034
    %2266 = vmatpush1.bf16.msra.mxu0 %v2033
    %2267 = vmatprep.subr.bf16.mxu0 %v2042
    %2268 = vmatpush1.bf16.msra.mxu0 %v2041
    %2269 = vmatprep.subr.bf16.mxu0 %v2050
    %2270 = vmatpush1.bf16.msra.mxu0 %v2049
    %2271 = vmatprep.subr.bf16.mxu0 %v2058
    %2272 = vmatpush1.bf16.msra.mxu0 %v2057
    %2273 = vmatprep.subr.bf16.mxu0 %v2066
    %2274 = vmatpush1.bf16.msra.mxu0 %v2065
    %2275 = vmatprep.subr.bf16.mxu0 %v2074
    %2276 = vmatpush1.bf16.msra.mxu0 %v2073
    %2277 = vmatprep.subr.bf16.mxu0 %v2082
    %2278 = vmatpush1.bf16.msra.mxu0 %v2081
    %2279 = vmatprep.subr.bf16.mxu0 %v2090
    %2280 = vmatpush1.bf16.msra.mxu0 %v2089
    %2281 = vmatprep.subr.bf16.mxu0 %v2098
    %2282 = vmatpush1.bf16.msra.mxu0 %v2097
    %2283 = vmatprep.subr.bf16.mxu0 %v2106
    %2284 = vmatpush1.bf16.msra.mxu0 %v2105
    %2285 = vmatprep.subr.bf16.mxu0 %v2114
    %2286 = vmatpush1.bf16.msra.mxu0 %v2113
    %2287 = vmatprep.subr.bf16.mxu0 %v2122
    %2288 = vmatpush1.bf16.msra.mxu0 %v2121
    %2289 = vmatprep.mubr.bf16.mxu0 %v472
    %2290 = vmatmul.mubr.bf16.gmra.mrb[0].mxu0 %v471
    %v2291 = vpop.f32.mrb[0].mxu0
    %v2292 = vadd.f32 %v1580, %v2291
    %v2293 = vpop.f32.mrb[0].mxu0
    %v2294 = vadd.f32 %v1584, %v2293
    %v2295 = vpop.f32.mrb[0].mxu0
    %v2296 = vpop.f32.mrb[0].mxu0
    %2297 = vdwg.mxu0
    %2298 = vmatprep.subr.bf16.mxu0 %v2004
    %2299 = vmatpush1.bf16.msra.mxu0 %v2003
    %2300 = vmatprep.subr.bf16.mxu0 %v2012
    %2301 = vmatpush1.bf16.msra.mxu0 %v2011
    %2302 = vmatprep.subr.bf16.mxu0 %v2020
    %2303 = vmatpush1.bf16.msra.mxu0 %v2019
    %2304 = vmatprep.subr.bf16.mxu0 %v2028
    %2305 = vmatpush1.bf16.msra.mxu0 %v2027
    %2306 = vmatprep.subr.bf16.mxu0 %v2036
    %2307 = vmatpush1.bf16.msra.mxu0 %v2035
    %2308 = vmatprep.subr.bf16.mxu0 %v2044
    %2309 = vmatpush1.bf16.msra.mxu0 %v2043
    %2310 = vmatprep.subr.bf16.mxu0 %v2052
    %2311 = vmatpush1.bf16.msra.mxu0 %v2051
    %2312 = vmatprep.subr.bf16.mxu0 %v2060
    %2313 = vmatpush1.bf16.msra.mxu0 %v2059
    %2314 = vmatprep.subr.bf16.mxu0 %v2068
    %2315 = vmatpush1.bf16.msra.mxu0 %v2067
    %2316 = vmatprep.subr.bf16.mxu0 %v2076
    %2317 = vmatpush1.bf16.msra.mxu0 %v2075
    %2318 = vmatprep.subr.bf16.mxu0 %v2084
    %2319 = vmatpush1.bf16.msra.mxu0 %v2083
    %2320 = vmatprep.subr.bf16.mxu0 %v2092
    %2321 = vmatpush1.bf16.msra.mxu0 %v2091
    %2322 = vmatprep.subr.bf16.mxu0 %v2100
    %2323 = vmatpush1.bf16.msra.mxu0 %v2099
    %2324 = vmatprep.subr.bf16.mxu0 %v2108
    %2325 = vmatpush1.bf16.msra.mxu0 %v2107
    %2326 = vmatprep.subr.bf16.mxu0 %v2116
    %2327 = vmatpush1.bf16.msra.mxu0 %v2115
    %2328 = vmatprep.subr.bf16.mxu0 %v2124
    %2329 = vmatpush1.bf16.msra.mxu0 %v2123
    %2330 = vmatprep.mubr.bf16.mxu0 %v472
    %2331 = vmatmul.mubr.bf16.gmra.mrb[0].mxu0 %v471
    %v2332 = vpop.f32.mrb[0].mxu0
    %v2333 = vadd.f32 %v1588, %v2332
    %v2334 = vpop.f32.mrb[0].mxu0
    %v2335 = vadd.f32 %v1592, %v2334
    %v2336 = vpop.f32.mrb[0].mxu0
    %v2337 = vpop.f32.mrb[0].mxu0
    %2338 = vdwg.mxu0
    %2339 = vmatprep.subr.bf16.mxu0 %v2006
    %2340 = vmatpush1.bf16.msra.mxu0 %v2005
    %2341 = vmatprep.subr.bf16.mxu0 %v2014
    %2342 = vmatpush1.bf16.msra.mxu0 %v2013
    %2343 = vmatprep.subr.bf16.mxu0 %v2022
    %2344 = vmatpush1.bf16.msra.mxu0 %v2021
    %2345 = vmatprep.subr.bf16.mxu0 %v2030
    %2346 = vmatpush1.bf16.msra.mxu0 %v2029
    %2347 = vmatprep.subr.bf16.mxu0 %v2038
    %2348 = vmatpush1.bf16.msra.mxu0 %v2037
    %2349 = vmatprep.subr.bf16.mxu0 %v2046
    %2350 = vmatpush1.bf16.msra.mxu0 %v2045
    %2351 = vmatprep.subr.bf16.mxu0 %v2054
    %2352 = vmatpush1.bf16.msra.mxu0 %v2053
    %2353 = vmatprep.subr.bf16.mxu0 %v2062
    %2354 = vmatpush1.bf16.msra.mxu0 %v2061
    %2355 = vmatprep.subr.bf16.mxu0 %v2070
    %2356 = vmatpush1.bf16.msra.mxu0 %v2069
    %2357 = vmatprep.subr.bf16.mxu0 %v2078
    %2358 = vmatpush1.bf16.msra.mxu0 %v2077
    %2359 = vmatprep.subr.bf16.mxu0 %v2086
    %2360 = vmatpush1.bf16.msra.mxu0 %v2085
    %2361 = vmatprep.subr.bf16.mxu0 %v2094
    %2362 = vmatpush1.bf16.msra.mxu0 %v2093
    %2363 = vmatprep.subr.bf16.mxu0 %v2102
    %2364 = vmatpush1.bf16.msra.mxu0 %v2101
    %2365 = vmatprep.subr.bf16.mxu0 %v2110
    %2366 = vmatpush1.bf16.msra.mxu0 %v2109
    %2367 = vmatprep.subr.bf16.mxu0 %v2118
    %2368 = vmatpush1.bf16.msra.mxu0 %v2117
    %2369 = vmatprep.subr.bf16.mxu0 %v2126
    %2370 = vmatpush1.bf16.msra.mxu0 %v2125
    %2371 = vmatprep.mubr.bf16.mxu0 %v472
    %2372 = vmatmul.mubr.bf16.gmra.mrb[0].mxu0 %v471
    %v2373 = vpop.f32.mrb[0].mxu0
    %v2374 = vadd.f32 %v1596, %v2373
    %v2375 = vpop.f32.mrb[0].mxu0
    %v2376 = vadd.f32 %v1600, %v2375
    %v2377 = vpop.f32.mrb[0].mxu0
    %v2378 = vpop.f32.mrb[0].mxu0
    %2379 = vdwg.mxu0
    %2380 = vmatprep.subr.bf16.mxu0 %v2008
    %2381 = vmatpush1.bf16.msra.mxu0 %v2007
    %2382 = vmatprep.subr.bf16.mxu0 %v2016
    %2383 = vmatpush1.bf16.msra.mxu0 %v2015
    %2384 = vmatprep.subr.bf16.mxu0 %v2024
    %2385 = vmatpush1.bf16.msra.mxu0 %v2023
    %2386 = vmatprep.subr.bf16.mxu0 %v2032
    %2387 = vmatpush1.bf16.msra.mxu0 %v2031
    %2388 = vmatprep.subr.bf16.mxu0 %v2040
    %2389 = vmatpush1.bf16.msra.mxu0 %v2039
    %2390 = vmatprep.subr.bf16.mxu0 %v2048
    %2391 = vmatpush1.bf16.msra.mxu0 %v2047
    %2392 = vmatprep.subr.bf16.mxu0 %v2056
    %2393 = vmatpush1.bf16.msra.mxu0 %v2055
    %2394 = vmatprep.subr.bf16.mxu0 %v2064
    %2395 = vmatpush1.bf16.msra.mxu0 %v2063
    %2396 = vmatprep.subr.bf16.mxu0 %v2072
    %2397 = vmatpush1.bf16.msra.mxu0 %v2071
    %2398 = vmatprep.subr.bf16.mxu0 %v2080
    %2399 = vmatpush1.bf16.msra.mxu0 %v2079
    %2400 = vmatprep.subr.bf16.mxu0 %v2088
    %2401 = vmatpush1.bf16.msra.mxu0 %v2087
    %2402 = vmatprep.subr.bf16.mxu0 %v2096
    %2403 = vmatpush1.bf16.msra.mxu0 %v2095
    %2404 = vmatprep.subr.bf16.mxu0 %v2104
    %2405 = vmatpush1.bf16.msra.mxu0 %v2103
    %2406 = vmatprep.subr.bf16.mxu0 %v2112
    %2407 = vmatpush1.bf16.msra.mxu0 %v2111
    %2408 = vmatprep.subr.bf16.mxu0 %v2120
    %2409 = vmatpush1.bf16.msra.mxu0 %v2119
    %2410 = vmatprep.subr.bf16.mxu0 %v2128
    %2411 = vmatpush1.bf16.msra.mxu0 %v2127
    %2412 = vmatprep.mubr.bf16.mxu0 %v472
    %2413 = vmatmul.mubr.bf16.gmra.mrb[0].mxu0 %v471
    %v2414 = vpop.f32.mrb[0].mxu0
    %v2415 = vadd.f32 %v1604, %v2414
    %v2416 = vpop.f32.mrb[0].mxu0
    %v2417 = vadd.f32 %v1608, %v2416
    %v2418 = vpop.f32.mrb[0].mxu0
    %v2419 = vpop.f32.mrb[0].mxu0
    %2420 = vdwg.mxu0
    %v2421 = vmul.f32 %v2292, 0.5
    %v2422 = vmul.f32 %v2294, 0.5
    %v2423 = vmul.f32 %v2333, 0.5
    %v2424 = vmul.f32 %v2335, 0.5
    %v2425 = vmul.f32 %v2374, 0.5
    %v2426 = vmul.f32 %v2376, 0.5
    %v2427 = vmul.f32 %v2415, 0.5
    %v2428 = vmul.f32 %v2417, 0.5
    %v2429 = vmul.f32 %v2292, 0.70710677
    %v2430 = vmul.f32 %v2294, 0.70710677
    %v2431 = vmul.f32 %v2333, 0.70710677
    %v2432 = vmul.f32 %v2335, 0.70710677
    %v2433 = vmul.f32 %v2374, 0.70710677
    %v2434 = vmul.f32 %v2376, 0.70710677
    %v2435 = vmul.f32 %v2415, 0.70710677
    %v2436 = vmul.f32 %v2417, 0.70710677
    %vm2437 = vcmp.ge.f32.partialorder %v2429, 0.0
    %vm2438 = vcmp.ge.f32.partialorder %v2430, 0.0
    %vm2439 = vcmp.ge.f32.partialorder %v2431, 0.0
    %vm2440 = vcmp.ge.f32.partialorder %v2432, 0.0
    %vm2441 = vcmp.ge.f32.partialorder %v2433, 0.0
    %vm2442 = vcmp.ge.f32.partialorder %v2434, 0.0
    %vm2443 = vcmp.ge.f32.partialorder %v2435, 0.0
    %vm2444 = vcmp.ge.f32.partialorder %v2436, 0.0
    %v2445 = vsel %vm2437, 1.0, -1.0
    %v2446 = vsel %vm2438, 1.0, -1.0
    %v2447 = vsel %vm2439, 1.0, -1.0
    %v2448 = vsel %vm2440, 1.0, -1.0
    %v2449 = vsel %vm2441, 1.0, -1.0
    %v2450 = vsel %vm2442, 1.0, -1.0
    %v2451 = vsel %vm2443, 1.0, -1.0
    %v2452 = vsel %vm2444, 1.0, -1.0
    %v2453 = vand.u32 2147483647, %v2429
    %v2454 = vand.u32 2147483647, %v2430
    %v2455 = vand.u32 2147483647, %v2431
    %v2456 = vand.u32 2147483647, %v2432
    %v2457 = vand.u32 2147483647, %v2433
    %v2458 = vand.u32 2147483647, %v2434
    %v2459 = vand.u32 2147483647, %v2435
    %v2460 = vand.u32 2147483647, %v2436
    %v2461 = vmul.f32 %v2453, 0.3275911
    %v2462 = vmul.f32 %v2454, 0.3275911
    %v2463 = vmul.f32 %v2455, 0.3275911
    %v2464 = vmul.f32 %v2456, 0.3275911
    %v2465 = vmul.f32 %v2457, 0.3275911
    %v2466 = vmul.f32 %v2458, 0.3275911
    %v2467 = vmul.f32 %v2459, 0.3275911
    %v2468 = vmul.f32 %v2460, 0.3275911
    %v2469 = vadd.f32 %v2461, 1.0
    %v2470 = vadd.f32 %v2462, 1.0
    %v2471 = vadd.f32 %v2463, 1.0
    %v2472 = vadd.f32 %v2464, 1.0
    %v2473 = vadd.f32 %v2465, 1.0
    %v2474 = vadd.f32 %v2466, 1.0
    %v2475 = vadd.f32 %v2467, 1.0
    %v2476 = vadd.f32 %v2468, 1.0
    %v2477 = vrcp.pop %v2469
    %v2478 = vmul.f32 1.0, %v2477
    %v2479 = vrcp.pop %v2470
    %v2480 = vmul.f32 1.0, %v2479
    %v2481 = vrcp.pop %v2471
    %v2482 = vmul.f32 1.0, %v2481
    %v2483 = vrcp.pop %v2472
    %v2484 = vmul.f32 1.0, %v2483
    %v2485 = vrcp.pop %v2473
    %v2486 = vmul.f32 1.0, %v2485
    %v2487 = vrcp.pop %v2474
    %v2488 = vmul.f32 1.0, %v2487
    %v2489 = vrcp.pop %v2475
    %v2490 = vmul.f32 1.0, %v2489
    %v2491 = vrcp.pop %v2476
    %v2492 = vmul.f32 1.0, %v2491
    %v2493 = vmul.f32 %v2478, 1.0614054
    %v2494 = vmul.f32 %v2480, 1.0614054
    %v2495 = vmul.f32 %v2482, 1.0614054
    %v2496 = vmul.f32 %v2484, 1.0614054
    %v2497 = vmul.f32 %v2486, 1.0614054
    %v2498 = vmul.f32 %v2488, 1.0614054
    %v2499 = vmul.f32 %v2490, 1.0614054
    %v2500 = vmul.f32 %v2492, 1.0614054
    %v2501 = vadd.f32 %v2493, -1.4531521
    %v2502 = vadd.f32 %v2494, -1.4531521
    %v2503 = vadd.f32 %v2495, -1.4531521
    %v2504 = vadd.f32 %v2496, -1.4531521
    %v2505 = vadd.f32 %v2497, -1.4531521
    %v2506 = vadd.f32 %v2498, -1.4531521
    %v2507 = vadd.f32 %v2499, -1.4531521
    %v2508 = vadd.f32 %v2500, -1.4531521
    %v2509 = vmul.f32 %v2501, %v2478
    %v2510 = vmul.f32 %v2502, %v2480
    %v2511 = vmul.f32 %v2503, %v2482
    %v2512 = vmul.f32 %v2504, %v2484
    %v2513 = vmul.f32 %v2505, %v2486
    %v2514 = vmul.f32 %v2506, %v2488
    %v2515 = vmul.f32 %v2507, %v2490
    %v2516 = vmul.f32 %v2508, %v2492
    %v2517 = vadd.f32 %v2509, 1.4214138
    %v2518 = vadd.f32 %v2510, 1.4214138
    %v2519 = vadd.f32 %v2511, 1.4214138
    %v2520 = vadd.f32 %v2512, 1.4214138
    %v2521 = vadd.f32 %v2513, 1.4214138
    %v2522 = vadd.f32 %v2514, 1.4214138
    %v2523 = vadd.f32 %v2515, 1.4214138
    %v2524 = vadd.f32 %v2516, 1.4214138
    %v2525 = vmul.f32 %v2517, %v2478
    %v2526 = vmul.f32 %v2518, %v2480
    %v2527 = vmul.f32 %v2519, %v2482
    %v2528 = vmul.f32 %v2520, %v2484
    %v2529 = vmul.f32 %v2521, %v2486
    %v2530 = vmul.f32 %v2522, %v2488
    %v2531 = vmul.f32 %v2523, %v2490
    %v2532 = vmul.f32 %v2524, %v2492
    %v2533 = vadd.f32 %v2525, -0.28449672
    %v2534 = vadd.f32 %v2526, -0.28449672
    %v2535 = vadd.f32 %v2527, -0.28449672
    %v2536 = vadd.f32 %v2528, -0.28449672
    %v2537 = vadd.f32 %v2529, -0.28449672
    %v2538 = vadd.f32 %v2530, -0.28449672
    %v2539 = vadd.f32 %v2531, -0.28449672
    %v2540 = vadd.f32 %v2532, -0.28449672
    %v2541 = vmul.f32 %v2533, %v2478
    %v2542 = vmul.f32 %v2534, %v2480
    %v2543 = vmul.f32 %v2535, %v2482
    %v2544 = vmul.f32 %v2536, %v2484
    %v2545 = vmul.f32 %v2537, %v2486
    %v2546 = vmul.f32 %v2538, %v2488
    %v2547 = vmul.f32 %v2539, %v2490
    %v2548 = vmul.f32 %v2540, %v2492
    %v2549 = vadd.f32 %v2541, 0.2548296
    %v2550 = vadd.f32 %v2542, 0.2548296
    %v2551 = vadd.f32 %v2543, 0.2548296
    %v2552 = vadd.f32 %v2544, 0.2548296
    %v2553 = vadd.f32 %v2545, 0.2548296
    %v2554 = vadd.f32 %v2546, 0.2548296
    %v2555 = vadd.f32 %v2547, 0.2548296
    %v2556 = vadd.f32 %v2548, 0.2548296
    %v2557 = vmul.f32 %v2549, %v2478
    %v2558 = vmul.f32 %v2550, %v2480
    %v2559 = vmul.f32 %v2551, %v2482
    %v2560 = vmul.f32 %v2552, %v2484
    %v2561 = vmul.f32 %v2553, %v2486
    %v2562 = vmul.f32 %v2554, %v2488
    %v2563 = vmul.f32 %v2555, %v2490
    %v2564 = vmul.f32 %v2556, %v2492
    %v2565 = vsub.f32 0.0, %v2453
    %v2566 = vsub.f32 0.0, %v2454
    %v2567 = vsub.f32 0.0, %v2455
    %v2568 = vsub.f32 0.0, %v2456
    %v2569 = vsub.f32 0.0, %v2457
    %v2570 = vsub.f32 0.0, %v2458
    %v2571 = vsub.f32 0.0, %v2459
    %v2572 = vsub.f32 0.0, %v2460
    %v2573 = vmul.f32 %v2565, %v2453
    %v2574 = vmul.f32 %v2566, %v2454
    %v2575 = vmul.f32 %v2567, %v2455
    %v2576 = vmul.f32 %v2568, %v2456
    %v2577 = vmul.f32 %v2569, %v2457
    %v2578 = vmul.f32 %v2570, %v2458
    %v2579 = vmul.f32 %v2571, %v2459
    %v2580 = vmul.f32 %v2572, %v2460
    %v2581 = vmul.f32 %v2573, 1.442695
    %v2582 = vpow.pop %v2581
    %v2583 = vmul.f32 %v2574, 1.442695
    %v2584 = vpow.pop %v2583
    %v2585 = vmul.f32 %v2575, 1.442695
    %v2586 = vpow.pop %v2585
    %v2587 = vmul.f32 %v2576, 1.442695
    %v2588 = vpow.pop %v2587
    %v2589 = vmul.f32 %v2577, 1.442695
    %v2590 = vpow.pop %v2589
    %v2591 = vmul.f32 %v2578, 1.442695
    %v2592 = vpow.pop %v2591
    %v2593 = vmul.f32 %v2579, 1.442695
    %v2594 = vpow.pop %v2593
    %v2595 = vmul.f32 %v2580, 1.442695
    %v2596 = vpow.pop %v2595
    %v2597 = vmul.f32 %v2557, %v2582
    %v2598 = vmul.f32 %v2558, %v2584
    %v2599 = vmul.f32 %v2559, %v2586
    %v2600 = vmul.f32 %v2560, %v2588
    %v2601 = vmul.f32 %v2561, %v2590
    %v2602 = vmul.f32 %v2562, %v2592
    %v2603 = vmul.f32 %v2563, %v2594
    %v2604 = vmul.f32 %v2564, %v2596
    %v2605 = vsub.f32 1.0, %v2597
    %v2606 = vsub.f32 1.0, %v2598
    %v2607 = vsub.f32 1.0, %v2599
    %v2608 = vsub.f32 1.0, %v2600
    %v2609 = vsub.f32 1.0, %v2601
    %v2610 = vsub.f32 1.0, %v2602
    %v2611 = vsub.f32 1.0, %v2603
    %v2612 = vsub.f32 1.0, %v2604
    %v2613 = vmul.f32 %v2445, %v2605
    %v2614 = vmul.f32 %v2446, %v2606
    %v2615 = vmul.f32 %v2447, %v2607
    %v2616 = vmul.f32 %v2448, %v2608
    %v2617 = vmul.f32 %v2449, %v2609
    %v2618 = vmul.f32 %v2450, %v2610
    %v2619 = vmul.f32 %v2451, %v2611
    %v2620 = vmul.f32 %v2452, %v2612
    %v2621 = vadd.f32 %v2613, 1.0
    %v2622 = vadd.f32 %v2614, 1.0
    %v2623 = vadd.f32 %v2615, 1.0
    %v2624 = vadd.f32 %v2616, 1.0
    %v2625 = vadd.f32 %v2617, 1.0
    %v2626 = vadd.f32 %v2618, 1.0
    %v2627 = vadd.f32 %v2619, 1.0
    %v2628 = vadd.f32 %v2620, 1.0
    %v2629 = vmul.f32 %v2421, %v2621
    %v2630 = vmul.f32 %v2422, %v2622
    %v2631 = vmul.f32 %v2423, %v2623
    %v2632 = vmul.f32 %v2424, %v2624
    %v2633 = vmul.f32 %v2425, %v2625
    %v2634 = vmul.f32 %v2426, %v2626
    %v2635 = vmul.f32 %v2427, %v2627
    %v2636 = vmul.f32 %v2428, %v2628
    %v2637 = vmul.f32 %v1318, %v2629
    %v2638 = vmul.f32 %v1320, %v2630
    %v2639 = vmul.f32 %v1359, %v2631
    %v2640 = vmul.f32 %v1361, %v2632
    %v2641 = vmul.f32 %v1400, %v2633
    %v2642 = vmul.f32 %v1402, %v2634
    %v2643 = vmul.f32 %v1441, %v2635
    %v2644 = vmul.f32 %v1443, %v2636
    %v2645 = vpack.c.bf16 %v2637, %v2637
    %v2646 = vpack.c.bf16 %v2638, %v2638
    %v2647 = vpack.c.bf16 %v2639, %v2639
    %v2648 = vpack.c.bf16 %v2640, %v2640
    %v2649 = vpack.c.bf16 %v2641, %v2641
    %v2650 = vpack.c.bf16 %v2642, %v2642
    %v2651 = vpack.c.bf16 %v2643, %v2643
    %v2652 = vpack.c.bf16 %v2644, %v2644
    %v2653 = vld [vmem:[#allocation4] sm:$0xff]
    %v2654 = vld [vmem:[#allocation4 + $0x8] sm:$0xff]
    %v2655 = vld [vmem:[#allocation4 + $0x10] sm:$0xff]
    %v2656 = vld [vmem:[#allocation4 + $0x18] sm:$0xff]
    %v2657 = vld [vmem:[#allocation4 + $0x20] sm:$0xff]
    %v2658 = vld [vmem:[#allocation4 + $0x28] sm:$0xff]
    %v2659 = vld [vmem:[#allocation4 + $0x30] sm:$0xff]
    %v2660 = vld [vmem:[#allocation4 + $0x38] sm:$0xff]
    %v2661 = vld [vmem:[#allocation4 + $0x40] sm:$0xff]
    %v2662 = vld [vmem:[#allocation4 + $0x48] sm:$0xff]
    %v2663 = vld [vmem:[#allocation4 + $0x50] sm:$0xff]
    %v2664 = vld [vmem:[#allocation4 + $0x58] sm:$0xff]
    %v2665 = vld [vmem:[#allocation4 + $0x60] sm:$0xff]
    %v2666 = vld [vmem:[#allocation4 + $0x68] sm:$0xff]
    %v2667 = vld [vmem:[#allocation4 + $0x70] sm:$0xff]
    %v2668 = vld [vmem:[#allocation4 + $0x78] sm:$0xff]
    %v2669 = vld [vmem:[#allocation4 + $0x80] sm:$0xff]
    %v2670 = vld [vmem:[#allocation4 + $0x88] sm:$0xff]
    %v2671 = vld [vmem:[#allocation4 + $0x90] sm:$0xff]
    %v2672 = vld [vmem:[#allocation4 + $0x98] sm:$0xff]
    %v2673 = vld [vmem:[#allocation4 + $0xa0] sm:$0xff]
    %v2674 = vld [vmem:[#allocation4 + $0xa8] sm:$0xff]
    %v2675 = vld [vmem:[#allocation4 + $0xb0] sm:$0xff]
    %v2676 = vld [vmem:[#allocation4 + $0xb8] sm:$0xff]
    %v2677 = vld [vmem:[#allocation4 + $0xc0] sm:$0xff]
    %v2678 = vld [vmem:[#allocation4 + $0xc8] sm:$0xff]
    %v2679 = vld [vmem:[#allocation4 + $0xd0] sm:$0xff]
    %v2680 = vld [vmem:[#allocation4 + $0xd8] sm:$0xff]
    %v2681 = vld [vmem:[#allocation4 + $0xe0] sm:$0xff]
    %v2682 = vld [vmem:[#allocation4 + $0xe8] sm:$0xff]
    %v2683 = vld [vmem:[#allocation4 + $0xf0] sm:$0xff]
    %v2684 = vld [vmem:[#allocation4 + $0xf8] sm:$0xff]
    %v2685 = vld [vmem:[#allocation4 + $0x100] sm:$0xff]
    %v2686 = vld [vmem:[#allocation4 + $0x108] sm:$0xff]
    %v2687 = vld [vmem:[#allocation4 + $0x110] sm:$0xff]
    %v2688 = vld [vmem:[#allocation4 + $0x118] sm:$0xff]
    %v2689 = vld [vmem:[#allocation4 + $0x120] sm:$0xff]
    %v2690 = vld [vmem:[#allocation4 + $0x128] sm:$0xff]
    %v2691 = vld [vmem:[#allocation4 + $0x130] sm:$0xff]
    %v2692 = vld [vmem:[#allocation4 + $0x138] sm:$0xff]
    %v2693 = vld [vmem:[#allocation4 + $0x140] sm:$0xff]
    %v2694 = vld [vmem:[#allocation4 + $0x148] sm:$0xff]
    %v2695 = vld [vmem:[#allocation4 + $0x150] sm:$0xff]
    %v2696 = vld [vmem:[#allocation4 + $0x158] sm:$0xff]
    %v2697 = vld [vmem:[#allocation4 + $0x160] sm:$0xff]
    %v2698 = vld [vmem:[#allocation4 + $0x168] sm:$0xff]
    %v2699 = vld [vmem:[#allocation4 + $0x170] sm:$0xff]
    %v2700 = vld [vmem:[#allocation4 + $0x178] sm:$0xff]
    %v2701 = vld [vmem:[#allocation4 + $0x180] sm:$0xff]
    %v2702 = vld [vmem:[#allocation4 + $0x188] sm:$0xff]
    %v2703 = vld [vmem:[#allocation4 + $0x190] sm:$0xff]
    %v2704 = vld [vmem:[#allocation4 + $0x198] sm:$0xff]
    %v2705 = vld [vmem:[#allocation4 + $0x1a0] sm:$0xff]
    %v2706 = vld [vmem:[#allocation4 + $0x1a8] sm:$0xff]
    %v2707 = vld [vmem:[#allocation4 + $0x1b0] sm:$0xff]
    %v2708 = vld [vmem:[#allocation4 + $0x1b8] sm:$0xff]
    %v2709 = vld [vmem:[#allocation4 + $0x1c0] sm:$0xff]
    %v2710 = vld [vmem:[#allocation4 + $0x1c8] sm:$0xff]
    %v2711 = vld [vmem:[#allocation4 + $0x1d0] sm:$0xff]
    %v2712 = vld [vmem:[#allocation4 + $0x1d8] sm:$0xff]
    %v2713 = vld [vmem:[#allocation4 + $0x1e0] sm:$0xff]
    %v2714 = vld [vmem:[#allocation4 + $0x1e8] sm:$0xff]
    %v2715 = vld [vmem:[#allocation4 + $0x1f0] sm:$0xff]
    %v2716 = vld [vmem:[#allocation4 + $0x1f8] sm:$0xff]
    %v2717 = vld [vmem:[#allocation4 + $0x200] sm:$0xff]
    %v2718 = vld [vmem:[#allocation4 + $0x208] sm:$0xff]
    %v2719 = vld [vmem:[#allocation4 + $0x210] sm:$0xff]
    %v2720 = vld [vmem:[#allocation4 + $0x218] sm:$0xff]
    %v2721 = vld [vmem:[#allocation4 + $0x220] sm:$0xff]
    %v2722 = vld [vmem:[#allocation4 + $0x228] sm:$0xff]
    %v2723 = vld [vmem:[#allocation4 + $0x230] sm:$0xff]
    %v2724 = vld [vmem:[#allocation4 + $0x238] sm:$0xff]
    %v2725 = vld [vmem:[#allocation4 + $0x240] sm:$0xff]
    %v2726 = vld [vmem:[#allocation4 + $0x248] sm:$0xff]
    %v2727 = vld [vmem:[#allocation4 + $0x250] sm:$0xff]
    %v2728 = vld [vmem:[#allocation4 + $0x258] sm:$0xff]
    %v2729 = vld [vmem:[#allocation4 + $0x260] sm:$0xff]
    %v2730 = vld [vmem:[#allocation4 + $0x268] sm:$0xff]
    %v2731 = vld [vmem:[#allocation4 + $0x270] sm:$0xff]
    %v2732 = vld [vmem:[#allocation4 + $0x278] sm:$0xff]
    %v2733 = vld [vmem:[#allocation4 + $0x280] sm:$0xff]
    %v2734 = vld [vmem:[#allocation4 + $0x288] sm:$0xff]
    %v2735 = vld [vmem:[#allocation4 + $0x290] sm:$0xff]
    %v2736 = vld [vmem:[#allocation4 + $0x298] sm:$0xff]
    %v2737 = vld [vmem:[#allocation4 + $0x2a0] sm:$0xff]
    %v2738 = vld [vmem:[#allocation4 + $0x2a8] sm:$0xff]
    %v2739 = vld [vmem:[#allocation4 + $0x2b0] sm:$0xff]
    %v2740 = vld [vmem:[#allocation4 + $0x2b8] sm:$0xff]
    %v2741 = vld [vmem:[#allocation4 + $0x2c0] sm:$0xff]
    %v2742 = vld [vmem:[#allocation4 + $0x2c8] sm:$0xff]
    %v2743 = vld [vmem:[#allocation4 + $0x2d0] sm:$0xff]
    %v2744 = vld [vmem:[#allocation4 + $0x2d8] sm:$0xff]
    %v2745 = vld [vmem:[#allocation4 + $0x2e0] sm:$0xff]
    %v2746 = vld [vmem:[#allocation4 + $0x2e8] sm:$0xff]
    %v2747 = vld [vmem:[#allocation4 + $0x2f0] sm:$0xff]
    %v2748 = vld [vmem:[#allocation4 + $0x2f8] sm:$0xff]
    %v2749 = vld [vmem:[#allocation4 + $0x300] sm:$0xff]
    %v2750 = vld [vmem:[#allocation4 + $0x308] sm:$0xff]
    %v2751 = vld [vmem:[#allocation4 + $0x310] sm:$0xff]
    %v2752 = vld [vmem:[#allocation4 + $0x318] sm:$0xff]
    %v2753 = vld [vmem:[#allocation4 + $0x320] sm:$0xff]
    %v2754 = vld [vmem:[#allocation4 + $0x328] sm:$0xff]
    %v2755 = vld [vmem:[#allocation4 + $0x330] sm:$0xff]
    %v2756 = vld [vmem:[#allocation4 + $0x338] sm:$0xff]
    %v2757 = vld [vmem:[#allocation4 + $0x340] sm:$0xff]
    %v2758 = vld [vmem:[#allocation4 + $0x348] sm:$0xff]
    %v2759 = vld [vmem:[#allocation4 + $0x350] sm:$0xff]
    %v2760 = vld [vmem:[#allocation4 + $0x358] sm:$0xff]
    %v2761 = vld [vmem:[#allocation4 + $0x360] sm:$0xff]
    %v2762 = vld [vmem:[#allocation4 + $0x368] sm:$0xff]
    %v2763 = vld [vmem:[#allocation4 + $0x370] sm:$0xff]
    %v2764 = vld [vmem:[#allocation4 + $0x378] sm:$0xff]
    %v2765 = vld [vmem:[#allocation4 + $0x380] sm:$0xff]
    %v2766 = vld [vmem:[#allocation4 + $0x388] sm:$0xff]
    %v2767 = vld [vmem:[#allocation4 + $0x390] sm:$0xff]
    %v2768 = vld [vmem:[#allocation4 + $0x398] sm:$0xff]
    %v2769 = vld [vmem:[#allocation4 + $0x3a0] sm:$0xff]
    %v2770 = vld [vmem:[#allocation4 + $0x3a8] sm:$0xff]
    %v2771 = vld [vmem:[#allocation4 + $0x3b0] sm:$0xff]
    %v2772 = vld [vmem:[#allocation4 + $0x3b8] sm:$0xff]
    %v2773 = vld [vmem:[#allocation4 + $0x3c0] sm:$0xff]
    %v2774 = vld [vmem:[#allocation4 + $0x3c8] sm:$0xff]
    %v2775 = vld [vmem:[#allocation4 + $0x3d0] sm:$0xff]
    %v2776 = vld [vmem:[#allocation4 + $0x3d8] sm:$0xff]
    %v2777 = vld [vmem:[#allocation4 + $0x3e0] sm:$0xff]
    %v2778 = vld [vmem:[#allocation4 + $0x3e8] sm:$0xff]
    %v2779 = vld [vmem:[#allocation4 + $0x3f0] sm:$0xff]
    %v2780 = vld [vmem:[#allocation4 + $0x3f8] sm:$0xff]
    %v2781 = vld [vmem:[#allocation6] sm:$0x3]
    %v2783 = vlaneseq
    %v2784 = vshrl.u32 %v2783, 7
    %v2785 = vsub.s32 0, %v2784
    %v2786 = vrot.slane %v2781, %v2785
    %v2787 = vlaneseq
    %v2788 = vshrl.u32 %v2787, 7
    %v2789 = vsub.s32 1, %v2788
    %v2790 = vrot.slane %v2781, %v2789
    %v2921 = vunpack.c.l.b16 %v2653
    %v2922 = vunpack.c.h.b16 %v2653
    %v2923 = vunpack.c.l.b16 %v2654
    %v2924 = vunpack.c.h.b16 %v2654
    %v2925 = vunpack.c.l.b16 %v2655
    %v2926 = vunpack.c.h.b16 %v2655
    %v2927 = vunpack.c.l.b16 %v2656
    %v2928 = vunpack.c.h.b16 %v2656
    %v2929 = vunpack.c.l.b16 %v2657
    %v2930 = vunpack.c.h.b16 %v2657
    %v2931 = vunpack.c.l.b16 %v2658
    %v2932 = vunpack.c.h.b16 %v2658
    %v2933 = vunpack.c.l.b16 %v2659
    %v2934 = vunpack.c.h.b16 %v2659
    %v2935 = vunpack.c.l.b16 %v2660
    %v2936 = vunpack.c.h.b16 %v2660
    %v2937 = vunpack.c.l.b16 %v2661
    %v2938 = vunpack.c.h.b16 %v2661
    %v2939 = vunpack.c.l.b16 %v2662
    %v2940 = vunpack.c.h.b16 %v2662
    %v2941 = vunpack.c.l.b16 %v2663
    %v2942 = vunpack.c.h.b16 %v2663
    %v2943 = vunpack.c.l.b16 %v2664
    %v2944 = vunpack.c.h.b16 %v2664
    %v2945 = vunpack.c.l.b16 %v2665
    %v2946 = vunpack.c.h.b16 %v2665
    %v2947 = vunpack.c.l.b16 %v2666
    %v2948 = vunpack.c.h.b16 %v2666
    %v2949 = vunpack.c.l.b16 %v2667
    %v2950 = vunpack.c.h.b16 %v2667
    %v2951 = vunpack.c.l.b16 %v2668
    %v2952 = vunpack.c.h.b16 %v2668
    %v2953 = vunpack.c.l.b16 %v2669
    %v2954 = vunpack.c.h.b16 %v2669
    %v2955 = vunpack.c.l.b16 %v2670
    %v2956 = vunpack.c.h.b16 %v2670
    %v2957 = vunpack.c.l.b16 %v2671
    %v2958 = vunpack.c.h.b16 %v2671
    %v2959 = vunpack.c.l.b16 %v2672
    %v2960 = vunpack.c.h.b16 %v2672
    %v2961 = vunpack.c.l.b16 %v2673
    %v2962 = vunpack.c.h.b16 %v2673
    %v2963 = vunpack.c.l.b16 %v2674
    %v2964 = vunpack.c.h.b16 %v2674
    %v2965 = vunpack.c.l.b16 %v2675
    %v2966 = vunpack.c.h.b16 %v2675
    %v2967 = vunpack.c.l.b16 %v2676
    %v2968 = vunpack.c.h.b16 %v2676
    %v2969 = vunpack.c.l.b16 %v2677
    %v2970 = vunpack.c.h.b16 %v2677
    %v2971 = vunpack.c.l.b16 %v2678
    %v2972 = vunpack.c.h.b16 %v2678
    %v2973 = vunpack.c.l.b16 %v2679
    %v2974 = vunpack.c.h.b16 %v2679
    %v2975 = vunpack.c.l.b16 %v2680
    %v2976 = vunpack.c.h.b16 %v2680
    %v2977 = vunpack.c.l.b16 %v2681
    %v2978 = vunpack.c.h.b16 %v2681
    %v2979 = vunpack.c.l.b16 %v2682
    %v2980 = vunpack.c.h.b16 %v2682
    %v2981 = vunpack.c.l.b16 %v2683
    %v2982 = vunpack.c.h.b16 %v2683
    %v2983 = vunpack.c.l.b16 %v2684
    %v2984 = vunpack.c.h.b16 %v2684
    %v2985 = vunpack.c.l.b16 %v2685
    %v2986 = vunpack.c.h.b16 %v2685
    %v2987 = vunpack.c.l.b16 %v2686
    %v2988 = vunpack.c.h.b16 %v2686
    %v2989 = vunpack.c.l.b16 %v2687
    %v2990 = vunpack.c.h.b16 %v2687
    %v2991 = vunpack.c.l.b16 %v2688
    %v2992 = vunpack.c.h.b16 %v2688
    %v2993 = vunpack.c.l.b16 %v2689
    %v2994 = vunpack.c.h.b16 %v2689
    %v2995 = vunpack.c.l.b16 %v2690
    %v2996 = vunpack.c.h.b16 %v2690
    %v2997 = vunpack.c.l.b16 %v2691
    %v2998 = vunpack.c.h.b16 %v2691
    %v2999 = vunpack.c.l.b16 %v2692
    %v3000 = vunpack.c.h.b16 %v2692
    %v3001 = vunpack.c.l.b16 %v2693
    %v3002 = vunpack.c.h.b16 %v2693
    %v3003 = vunpack.c.l.b16 %v2694
    %v3004 = vunpack.c.h.b16 %v2694
    %v3005 = vunpack.c.l.b16 %v2695
    %v3006 = vunpack.c.h.b16 %v2695
    %v3007 = vunpack.c.l.b16 %v2696
    %v3008 = vunpack.c.h.b16 %v2696
    %v3009 = vunpack.c.l.b16 %v2697
    %v3010 = vunpack.c.h.b16 %v2697
    %v3011 = vunpack.c.l.b16 %v2698
    %v3012 = vunpack.c.h.b16 %v2698
    %v3013 = vunpack.c.l.b16 %v2699
    %v3014 = vunpack.c.h.b16 %v2699
    %v3015 = vunpack.c.l.b16 %v2700
    %v3016 = vunpack.c.h.b16 %v2700
    %v3017 = vunpack.c.l.b16 %v2701
    %v3018 = vunpack.c.h.b16 %v2701
    %v3019 = vunpack.c.l.b16 %v2702
    %v3020 = vunpack.c.h.b16 %v2702
    %v3021 = vunpack.c.l.b16 %v2703
    %v3022 = vunpack.c.h.b16 %v2703
    %v3023 = vunpack.c.l.b16 %v2704
    %v3024 = vunpack.c.h.b16 %v2704
    %v3025 = vunpack.c.l.b16 %v2705
    %v3026 = vunpack.c.h.b16 %v2705
    %v3027 = vunpack.c.l.b16 %v2706
    %v3028 = vunpack.c.h.b16 %v2706
    %v3029 = vunpack.c.l.b16 %v2707
    %v3030 = vunpack.c.h.b16 %v2707
    %v3031 = vunpack.c.l.b16 %v2708
    %v3032 = vunpack.c.h.b16 %v2708
    %v3033 = vunpack.c.l.b16 %v2709
    %v3034 = vunpack.c.h.b16 %v2709
    %v3035 = vunpack.c.l.b16 %v2710
    %v3036 = vunpack.c.h.b16 %v2710
    %v3037 = vunpack.c.l.b16 %v2711
    %v3038 = vunpack.c.h.b16 %v2711
    %v3039 = vunpack.c.l.b16 %v2712
    %v3040 = vunpack.c.h.b16 %v2712
    %v3041 = vunpack.c.l.b16 %v2713
    %v3042 = vunpack.c.h.b16 %v2713
    %v3043 = vunpack.c.l.b16 %v2714
    %v3044 = vunpack.c.h.b16 %v2714
    %v3045 = vunpack.c.l.b16 %v2715
    %v3046 = vunpack.c.h.b16 %v2715
    %v3047 = vunpack.c.l.b16 %v2716
    %v3048 = vunpack.c.h.b16 %v2716
    %v3049 = vunpack.c.l.b16 %v2717
    %v3050 = vunpack.c.h.b16 %v2717
    %v3051 = vunpack.c.l.b16 %v2718
    %v3052 = vunpack.c.h.b16 %v2718
    %v3053 = vunpack.c.l.b16 %v2719
    %v3054 = vunpack.c.h.b16 %v2719
    %v3055 = vunpack.c.l.b16 %v2720
    %v3056 = vunpack.c.h.b16 %v2720
    %v3057 = vunpack.c.l.b16 %v2721
    %v3058 = vunpack.c.h.b16 %v2721
    %v3059 = vunpack.c.l.b16 %v2722
    %v3060 = vunpack.c.h.b16 %v2722
    %v3061 = vunpack.c.l.b16 %v2723
    %v3062 = vunpack.c.h.b16 %v2723
    %v3063 = vunpack.c.l.b16 %v2724
    %v3064 = vunpack.c.h.b16 %v2724
    %v3065 = vunpack.c.l.b16 %v2725
    %v3066 = vunpack.c.h.b16 %v2725
    %v3067 = vunpack.c.l.b16 %v2726
    %v3068 = vunpack.c.h.b16 %v2726
    %v3069 = vunpack.c.l.b16 %v2727
    %v3070 = vunpack.c.h.b16 %v2727
    %v3071 = vunpack.c.l.b16 %v2728
    %v3072 = vunpack.c.h.b16 %v2728
    %v3073 = vunpack.c.l.b16 %v2729
    %v3074 = vunpack.c.h.b16 %v2729
    %v3075 = vunpack.c.l.b16 %v2730
    %v3076 = vunpack.c.h.b16 %v2730
    %v3077 = vunpack.c.l.b16 %v2731
    %v3078 = vunpack.c.h.b16 %v2731
    %v3079 = vunpack.c.l.b16 %v2732
    %v3080 = vunpack.c.h.b16 %v2732
    %v3081 = vunpack.c.l.b16 %v2733
    %v3082 = vunpack.c.h.b16 %v2733
    %v3083 = vunpack.c.l.b16 %v2734
    %v3084 = vunpack.c.h.b16 %v2734
    %v3085 = vunpack.c.l.b16 %v2735
    %v3086 = vunpack.c.h.b16 %v2735
    %v3087 = vunpack.c.l.b16 %v2736
    %v3088 = vunpack.c.h.b16 %v2736
    %v3089 = vunpack.c.l.b16 %v2737
    %v3090 = vunpack.c.h.b16 %v2737
    %v3091 = vunpack.c.l.b16 %v2738
    %v3092 = vunpack.c.h.b16 %v2738
    %v3093 = vunpack.c.l.b16 %v2739
    %v3094 = vunpack.c.h.b16 %v2739
    %v3095 = vunpack.c.l.b16 %v2740
    %v3096 = vunpack.c.h.b16 %v2740
    %v3097 = vunpack.c.l.b16 %v2741
    %v3098 = vunpack.c.h.b16 %v2741
    %v3099 = vunpack.c.l.b16 %v2742
    %v3100 = vunpack.c.h.b16 %v2742
    %v3101 = vunpack.c.l.b16 %v2743
    %v3102 = vunpack.c.h.b16 %v2743
    %v3103 = vunpack.c.l.b16 %v2744
    %v3104 = vunpack.c.h.b16 %v2744
    %v3105 = vunpack.c.l.b16 %v2745
    %v3106 = vunpack.c.h.b16 %v2745
    %v3107 = vunpack.c.l.b16 %v2746
    %v3108 = vunpack.c.h.b16 %v2746
    %v3109 = vunpack.c.l.b16 %v2747
    %v3110 = vunpack.c.h.b16 %v2747
    %v3111 = vunpack.c.l.b16 %v2748
    %v3112 = vunpack.c.h.b16 %v2748
    %v3113 = vunpack.c.l.b16 %v2749
    %v3114 = vunpack.c.h.b16 %v2749
    %v3115 = vunpack.c.l.b16 %v2750
    %v3116 = vunpack.c.h.b16 %v2750
    %v3117 = vunpack.c.l.b16 %v2751
    %v3118 = vunpack.c.h.b16 %v2751
    %v3119 = vunpack.c.l.b16 %v2752
    %v3120 = vunpack.c.h.b16 %v2752
    %v3121 = vunpack.c.l.b16 %v2753
    %v3122 = vunpack.c.h.b16 %v2753
    %v3123 = vunpack.c.l.b16 %v2754
    %v3124 = vunpack.c.h.b16 %v2754
    %v3125 = vunpack.c.l.b16 %v2755
    %v3126 = vunpack.c.h.b16 %v2755
    %v3127 = vunpack.c.l.b16 %v2756
    %v3128 = vunpack.c.h.b16 %v2756
    %v3129 = vunpack.c.l.b16 %v2757
    %v3130 = vunpack.c.h.b16 %v2757
    %v3131 = vunpack.c.l.b16 %v2758
    %v3132 = vunpack.c.h.b16 %v2758
    %v3133 = vunpack.c.l.b16 %v2759
    %v3134 = vunpack.c.h.b16 %v2759
    %v3135 = vunpack.c.l.b16 %v2760
    %v3136 = vunpack.c.h.b16 %v2760
    %v3137 = vunpack.c.l.b16 %v2761
    %v3138 = vunpack.c.h.b16 %v2761
    %v3139 = vunpack.c.l.b16 %v2762
    %v3140 = vunpack.c.h.b16 %v2762
    %v3141 = vunpack.c.l.b16 %v2763
    %v3142 = vunpack.c.h.b16 %v2763
    %v3143 = vunpack.c.l.b16 %v2764
    %v3144 = vunpack.c.h.b16 %v2764
    %v3145 = vunpack.c.l.b16 %v2765
    %v3146 = vunpack.c.h.b16 %v2765
    %v3147 = vunpack.c.l.b16 %v2766
    %v3148 = vunpack.c.h.b16 %v2766
    %v3149 = vunpack.c.l.b16 %v2767
    %v3150 = vunpack.c.h.b16 %v2767
    %v3151 = vunpack.c.l.b16 %v2768
    %v3152 = vunpack.c.h.b16 %v2768
    %v3153 = vunpack.c.l.b16 %v2769
    %v3154 = vunpack.c.h.b16 %v2769
    %v3155 = vunpack.c.l.b16 %v2770
    %v3156 = vunpack.c.h.b16 %v2770
    %v3157 = vunpack.c.l.b16 %v2771
    %v3158 = vunpack.c.h.b16 %v2771
    %v3159 = vunpack.c.l.b16 %v2772
    %v3160 = vunpack.c.h.b16 %v2772
    %v3161 = vunpack.c.l.b16 %v2773
    %v3162 = vunpack.c.h.b16 %v2773
    %v3163 = vunpack.c.l.b16 %v2774
    %v3164 = vunpack.c.h.b16 %v2774
    %v3165 = vunpack.c.l.b16 %v2775
    %v3166 = vunpack.c.h.b16 %v2775
    %v3167 = vunpack.c.l.b16 %v2776
    %v3168 = vunpack.c.h.b16 %v2776
    %v3169 = vunpack.c.l.b16 %v2777
    %v3170 = vunpack.c.h.b16 %v2777
    %v3171 = vunpack.c.l.b16 %v2778
    %v3172 = vunpack.c.h.b16 %v2778
    %v3173 = vunpack.c.l.b16 %v2779
    %v3174 = vunpack.c.h.b16 %v2779
    %v3175 = vunpack.c.l.b16 %v2780
    %v3176 = vunpack.c.h.b16 %v2780
    %v3177 = vpack.c.b16 %v2923, %v2921
    %v3178 = vpack.c.b16 %v2924, %v2922
    %v3179 = vpack.c.b16 %v2927, %v2925
    %v3180 = vpack.c.b16 %v2928, %v2926
    %v3181 = vpack.c.b16 %v2931, %v2929
    %v3182 = vpack.c.b16 %v2932, %v2930
    %v3183 = vpack.c.b16 %v2935, %v2933
    %v3184 = vpack.c.b16 %v2936, %v2934
    %v3185 = vpack.c.b16 %v2939, %v2937
    %v3186 = vpack.c.b16 %v2940, %v2938
    %v3187 = vpack.c.b16 %v2943, %v2941
    %v3188 = vpack.c.b16 %v2944, %v2942
    %v3189 = vpack.c.b16 %v2947, %v2945
    %v3190 = vpack.c.b16 %v2948, %v2946
    %v3191 = vpack.c.b16 %v2951, %v2949
    %v3192 = vpack.c.b16 %v2952, %v2950
    %v3193 = vpack.c.b16 %v2955, %v2953
    %v3194 = vpack.c.b16 %v2956, %v2954
    %v3195 = vpack.c.b16 %v2959, %v2957
    %v3196 = vpack.c.b16 %v2960, %v2958
    %v3197 = vpack.c.b16 %v2963, %v2961
    %v3198 = vpack.c.b16 %v2964, %v2962
    %v3199 = vpack.c.b16 %v2967, %v2965
    %v3200 = vpack.c.b16 %v2968, %v2966
    %v3201 = vpack.c.b16 %v2971, %v2969
    %v3202 = vpack.c.b16 %v2972, %v2970
    %v3203 = vpack.c.b16 %v2975, %v2973
    %v3204 = vpack.c.b16 %v2976, %v2974
    %v3205 = vpack.c.b16 %v2979, %v2977
    %v3206 = vpack.c.b16 %v2980, %v2978
    %v3207 = vpack.c.b16 %v2983, %v2981
    %v3208 = vpack.c.b16 %v2984, %v2982
    %v3209 = vpack.c.b16 %v2987, %v2985
    %v3210 = vpack.c.b16 %v2988, %v2986
    %v3211 = vpack.c.b16 %v2991, %v2989
    %v3212 = vpack.c.b16 %v2992, %v2990
    %v3213 = vpack.c.b16 %v2995, %v2993
    %v3214 = vpack.c.b16 %v2996, %v2994
    %v3215 = vpack.c.b16 %v2999, %v2997
    %v3216 = vpack.c.b16 %v3000, %v2998
    %v3217 = vpack.c.b16 %v3003, %v3001
    %v3218 = vpack.c.b16 %v3004, %v3002
    %v3219 = vpack.c.b16 %v3007, %v3005
    %v3220 = vpack.c.b16 %v3008, %v3006
    %v3221 = vpack.c.b16 %v3011, %v3009
    %v3222 = vpack.c.b16 %v3012, %v3010
    %v3223 = vpack.c.b16 %v3015, %v3013
    %v3224 = vpack.c.b16 %v3016, %v3014
    %v3225 = vpack.c.b16 %v3019, %v3017
    %v3226 = vpack.c.b16 %v3020, %v3018
    %v3227 = vpack.c.b16 %v3023, %v3021
    %v3228 = vpack.c.b16 %v3024, %v3022
    %v3229 = vpack.c.b16 %v3027, %v3025
    %v3230 = vpack.c.b16 %v3028, %v3026
    %v3231 = vpack.c.b16 %v3031, %v3029
    %v3232 = vpack.c.b16 %v3032, %v3030
    %v3233 = vpack.c.b16 %v3035, %v3033
    %v3234 = vpack.c.b16 %v3036, %v3034
    %v3235 = vpack.c.b16 %v3039, %v3037
    %v3236 = vpack.c.b16 %v3040, %v3038
    %v3237 = vpack.c.b16 %v3043, %v3041
    %v3238 = vpack.c.b16 %v3044, %v3042
    %v3239 = vpack.c.b16 %v3047, %v3045
    %v3240 = vpack.c.b16 %v3048, %v3046
    %v3241 = vpack.c.b16 %v3051, %v3049
    %v3242 = vpack.c.b16 %v3052, %v3050
    %v3243 = vpack.c.b16 %v3055, %v3053
    %v3244 = vpack.c.b16 %v3056, %v3054
    %v3245 = vpack.c.b16 %v3059, %v3057
    %v3246 = vpack.c.b16 %v3060, %v3058
    %v3247 = vpack.c.b16 %v3063, %v3061
    %v3248 = vpack.c.b16 %v3064, %v3062
    %v3249 = vpack.c.b16 %v3067, %v3065
    %v3250 = vpack.c.b16 %v3068, %v3066
    %v3251 = vpack.c.b16 %v3071, %v3069
    %v3252 = vpack.c.b16 %v3072, %v3070
    %v3253 = vpack.c.b16 %v3075, %v3073
    %v3254 = vpack.c.b16 %v3076, %v3074
    %v3255 = vpack.c.b16 %v3079, %v3077
    %v3256 = vpack.c.b16 %v3080, %v3078
    %v3257 = vpack.c.b16 %v3083, %v3081
    %v3258 = vpack.c.b16 %v3084, %v3082
    %v3259 = vpack.c.b16 %v3087, %v3085
    %v3260 = vpack.c.b16 %v3088, %v3086
    %v3261 = vpack.c.b16 %v3091, %v3089
    %v3262 = vpack.c.b16 %v3092, %v3090
    %v3263 = vpack.c.b16 %v3095, %v3093
    %v3264 = vpack.c.b16 %v3096, %v3094
    %v3265 = vpack.c.b16 %v3099, %v3097
    %v3266 = vpack.c.b16 %v3100, %v3098
    %v3267 = vpack.c.b16 %v3103, %v3101
    %v3268 = vpack.c.b16 %v3104, %v3102
    %v3269 = vpack.c.b16 %v3107, %v3105
    %v3270 = vpack.c.b16 %v3108, %v3106
    %v3271 = vpack.c.b16 %v3111, %v3109
    %v3272 = vpack.c.b16 %v3112, %v3110
    %v3273 = vpack.c.b16 %v3115, %v3113
    %v3274 = vpack.c.b16 %v3116, %v3114
    %v3275 = vpack.c.b16 %v3119, %v3117
    %v3276 = vpack.c.b16 %v3120, %v3118
    %v3277 = vpack.c.b16 %v3123, %v3121
    %v3278 = vpack.c.b16 %v3124, %v3122
    %v3279 = vpack.c.b16 %v3127, %v3125
    %v3280 = vpack.c.b16 %v3128, %v3126
    %v3281 = vpack.c.b16 %v3131, %v3129
    %v3282 = vpack.c.b16 %v3132, %v3130
    %v3283 = vpack.c.b16 %v3135, %v3133
    %v3284 = vpack.c.b16 %v3136, %v3134
    %v3285 = vpack.c.b16 %v3139, %v3137
    %v3286 = vpack.c.b16 %v3140, %v3138
    %v3287 = vpack.c.b16 %v3143, %v3141
    %v3288 = vpack.c.b16 %v3144, %v3142
    %v3289 = vpack.c.b16 %v3147, %v3145
    %v3290 = vpack.c.b16 %v3148, %v3146
    %v3291 = vpack.c.b16 %v3151, %v3149
    %v3292 = vpack.c.b16 %v3152, %v3150
    %v3293 = vpack.c.b16 %v3155, %v3153
    %v3294 = vpack.c.b16 %v3156, %v3154
    %v3295 = vpack.c.b16 %v3159, %v3157
    %v3296 = vpack.c.b16 %v3160, %v3158
    %v3297 = vpack.c.b16 %v3163, %v3161
    %v3298 = vpack.c.b16 %v3164, %v3162
    %v3299 = vpack.c.b16 %v3167, %v3165
    %v3300 = vpack.c.b16 %v3168, %v3166
    %v3301 = vpack.c.b16 %v3171, %v3169
    %v3302 = vpack.c.b16 %v3172, %v3170
    %v3303 = vpack.c.b16 %v3175, %v3173
    %v3304 = vpack.c.b16 %v3176, %v3174
    %3433 = vmatprep.subr.bf16.mxu0 %v3178
    %3434 = vmatpush1.bf16.msra.mxu0 %v3177
    %3435 = vmatprep.subr.bf16.mxu0 %v3180
    %3436 = vmatpush1.bf16.msra.mxu0 %v3179
    %3437 = vmatprep.subr.bf16.mxu0 %v3182
    %3438 = vmatpush1.bf16.msra.mxu0 %v3181
    %3439 = vmatprep.subr.bf16.mxu0 %v3184
    %3440 = vmatpush1.bf16.msra.mxu0 %v3183
    %3441 = vmatprep.subr.bf16.mxu0 %v3186
    %3442 = vmatpush1.bf16.msra.mxu0 %v3185
    %3443 = vmatprep.subr.bf16.mxu0 %v3188
    %3444 = vmatpush1.bf16.msra.mxu0 %v3187
    %3445 = vmatprep.subr.bf16.mxu0 %v3190
    %3446 = vmatpush1.bf16.msra.mxu0 %v3189
    %3447 = vmatprep.subr.bf16.mxu0 %v3192
    %3448 = vmatpush1.bf16.msra.mxu0 %v3191
    %3449 = vmatprep.subr.bf16.mxu0 %v3194
    %3450 = vmatpush1.bf16.msra.mxu0 %v3193
    %3451 = vmatprep.subr.bf16.mxu0 %v3196
    %3452 = vmatpush1.bf16.msra.mxu0 %v3195
    %3453 = vmatprep.subr.bf16.mxu0 %v3198
    %3454 = vmatpush1.bf16.msra.mxu0 %v3197
    %3455 = vmatprep.subr.bf16.mxu0 %v3200
    %3456 = vmatpush1.bf16.msra.mxu0 %v3199
    %3457 = vmatprep.subr.bf16.mxu0 %v3202
    %3458 = vmatpush1.bf16.msra.mxu0 %v3201
    %3459 = vmatprep.subr.bf16.mxu0 %v3204
    %3460 = vmatpush1.bf16.msra.mxu0 %v3203
    %3461 = vmatprep.subr.bf16.mxu0 %v3206
    %3462 = vmatpush1.bf16.msra.mxu0 %v3205
    %3463 = vmatprep.subr.bf16.mxu0 %v3208
    %3464 = vmatpush1.bf16.msra.mxu0 %v3207
    %3465 = vmatprep.mubr.bf16.mxu0 %v2646
    %3466 = vmatmul.mubr.bf16.gmra.mrb[0].mxu0 %v2645
    %v3467 = vpop.f32.mrb[0].mxu0
    %v3468 = vadd.f32 %v2786, %v3467
    %v3469 = vpop.f32.mrb[0].mxu0
    %v3470 = vadd.f32 %v2790, %v3469
    %v3471 = vpop.f32.mrb[0].mxu0
    %v3472 = vpop.f32.mrb[0].mxu0
    %3473 = vdwg.mxu0
    %3474 = vmatprep.subr.bf16.mxu0 %v3210
    %3475 = vmatpush1.bf16.msra.mxu0 %v3209
    %3476 = vmatprep.subr.bf16.mxu0 %v3212
    %3477 = vmatpush1.bf16.msra.mxu0 %v3211
    %3478 = vmatprep.subr.bf16.mxu0 %v3214
    %3479 = vmatpush1.bf16.msra.mxu0 %v3213
    %3480 = vmatprep.subr.bf16.mxu0 %v3216
    %3481 = vmatpush1.bf16.msra.mxu0 %v3215
    %3482 = vmatprep.subr.bf16.mxu0 %v3218
    %3483 = vmatpush1.bf16.msra.mxu0 %v3217
    %3484 = vmatprep.subr.bf16.mxu0 %v3220
    %3485 = vmatpush1.bf16.msra.mxu0 %v3219
    %3486 = vmatprep.subr.bf16.mxu0 %v3222
    %3487 = vmatpush1.bf16.msra.mxu0 %v3221
    %3488 = vmatprep.subr.bf16.mxu0 %v3224
    %3489 = vmatpush1.bf16.msra.mxu0 %v3223
    %3490 = vmatprep.subr.bf16.mxu0 %v3226
    %3491 = vmatpush1.bf16.msra.mxu0 %v3225
    %3492 = vmatprep.subr.bf16.mxu0 %v3228
    %3493 = vmatpush1.bf16.msra.mxu0 %v3227
    %3494 = vmatprep.subr.bf16.mxu0 %v3230
    %3495 = vmatpush1.bf16.msra.mxu0 %v3229
    %3496 = vmatprep.subr.bf16.mxu0 %v3232
    %3497 = vmatpush1.bf16.msra.mxu0 %v3231
    %3498 = vmatprep.subr.bf16.mxu0 %v3234
    %3499 = vmatpush1.bf16.msra.mxu0 %v3233
    %3500 = vmatprep.subr.bf16.mxu0 %v3236
    %3501 = vmatpush1.bf16.msra.mxu0 %v3235
    %3502 = vmatprep.subr.bf16.mxu0 %v3238
    %3503 = vmatpush1.bf16.msra.mxu0 %v3237
    %3504 = vmatprep.subr.bf16.mxu0 %v3240
    %3505 = vmatpush1.bf16.msra.mxu0 %v3239
    %3506 = vmatprep.mubr.bf16.mxu0 %v2648
    %3507 = vmatmul.mubr.bf16.gmra.mrb[0].mxu0 %v2647
    %v3508 = vpop.f32.mrb[0].mxu0
    %v3509 = vadd.f32 %v3468, %v3508
    %v3510 = vpop.f32.mrb[0].mxu0
    %v3511 = vadd.f32 %v3470, %v3510
    %v3512 = vpop.f32.mrb[0].mxu0
    %v3513 = vpop.f32.mrb[0].mxu0
    %3514 = vdwg.mxu0
    %3515 = vmatprep.subr.bf16.mxu0 %v3242
    %3516 = vmatpush1.bf16.msra.mxu0 %v3241
    %3517 = vmatprep.subr.bf16.mxu0 %v3244
    %3518 = vmatpush1.bf16.msra.mxu0 %v3243
    %3519 = vmatprep.subr.bf16.mxu0 %v3246
    %3520 = vmatpush1.bf16.msra.mxu0 %v3245
    %3521 = vmatprep.subr.bf16.mxu0 %v3248
    %3522 = vmatpush1.bf16.msra.mxu0 %v3247
    %3523 = vmatprep.subr.bf16.mxu0 %v3250
    %3524 = vmatpush1.bf16.msra.mxu0 %v3249
    %3525 = vmatprep.subr.bf16.mxu0 %v3252
    %3526 = vmatpush1.bf16.msra.mxu0 %v3251
    %3527 = vmatprep.subr.bf16.mxu0 %v3254
    %3528 = vmatpush1.bf16.msra.mxu0 %v3253
    %3529 = vmatprep.subr.bf16.mxu0 %v3256
    %3530 = vmatpush1.bf16.msra.mxu0 %v3255
    %3531 = vmatprep.subr.bf16.mxu0 %v3258
    %3532 = vmatpush1.bf16.msra.mxu0 %v3257
    %3533 = vmatprep.subr.bf16.mxu0 %v3260
    %3534 = vmatpush1.bf16.msra.mxu0 %v3259
    %3535 = vmatprep.subr.bf16.mxu0 %v3262
    %3536 = vmatpush1.bf16.msra.mxu0 %v3261
    %3537 = vmatprep.subr.bf16.mxu0 %v3264
    %3538 = vmatpush1.bf16.msra.mxu0 %v3263
    %3539 = vmatprep.subr.bf16.mxu0 %v3266
    %3540 = vmatpush1.bf16.msra.mxu0 %v3265
    %3541 = vmatprep.subr.bf16.mxu0 %v3268
    %3542 = vmatpush1.bf16.msra.mxu0 %v3267
    %3543 = vmatprep.subr.bf16.mxu0 %v3270
    %3544 = vmatpush1.bf16.msra.mxu0 %v3269
    %3545 = vmatprep.subr.bf16.mxu0 %v3272
    %3546 = vmatpush1.bf16.msra.mxu0 %v3271
    %3547 = vmatprep.mubr.bf16.mxu0 %v2650
    %3548 = vmatmul.mubr.bf16.gmra.mrb[0].mxu0 %v2649
    %v3549 = vpop.f32.mrb[0].mxu0
    %v3550 = vadd.f32 %v3509, %v3549
    %v3551 = vpop.f32.mrb[0].mxu0
    %v3552 = vadd.f32 %v3511, %v3551
    %v3553 = vpop.f32.mrb[0].mxu0
    %v3554 = vpop.f32.mrb[0].mxu0
    %3555 = vdwg.mxu0
    %3556 = vmatprep.subr.bf16.mxu0 %v3274
    %3557 = vmatpush1.bf16.msra.mxu0 %v3273
    %3558 = vmatprep.subr.bf16.mxu0 %v3276
    %3559 = vmatpush1.bf16.msra.mxu0 %v3275
    %3560 = vmatprep.subr.bf16.mxu0 %v3278
    %3561 = vmatpush1.bf16.msra.mxu0 %v3277
    %3562 = vmatprep.subr.bf16.mxu0 %v3280
    %3563 = vmatpush1.bf16.msra.mxu0 %v3279
    %3564 = vmatprep.subr.bf16.mxu0 %v3282
    %3565 = vmatpush1.bf16.msra.mxu0 %v3281
    %3566 = vmatprep.subr.bf16.mxu0 %v3284
    %3567 = vmatpush1.bf16.msra.mxu0 %v3283
    %3568 = vmatprep.subr.bf16.mxu0 %v3286
    %3569 = vmatpush1.bf16.msra.mxu0 %v3285
    %3570 = vmatprep.subr.bf16.mxu0 %v3288
    %3571 = vmatpush1.bf16.msra.mxu0 %v3287
    %3572 = vmatprep.subr.bf16.mxu0 %v3290
    %3573 = vmatpush1.bf16.msra.mxu0 %v3289
    %3574 = vmatprep.subr.bf16.mxu0 %v3292
    %3575 = vmatpush1.bf16.msra.mxu0 %v3291
    %3576 = vmatprep.subr.bf16.mxu0 %v3294
    %3577 = vmatpush1.bf16.msra.mxu0 %v3293
    %3578 = vmatprep.subr.bf16.mxu0 %v3296
    %3579 = vmatpush1.bf16.msra.mxu0 %v3295
    %3580 = vmatprep.subr.bf16.mxu0 %v3298
    %3581 = vmatpush1.bf16.msra.mxu0 %v3297
    %3582 = vmatprep.subr.bf16.mxu0 %v3300
    %3583 = vmatpush1.bf16.msra.mxu0 %v3299
    %3584 = vmatprep.subr.bf16.mxu0 %v3302
    %3585 = vmatpush1.bf16.msra.mxu0 %v3301
    %3586 = vmatprep.subr.bf16.mxu0 %v3304
    %3587 = vmatpush1.bf16.msra.mxu0 %v3303
    %3588 = vmatprep.mubr.bf16.mxu0 %v2652
    %3589 = vmatmul.mubr.bf16.gmra.mrb[0].mxu0 %v2651
    %v3590 = vpop.f32.mrb[0].mxu0
    %v3591 = vadd.f32 %v3550, %v3590
    %v3592 = vpop.f32.mrb[0].mxu0
    %v3593 = vadd.f32 %v3552, %v3592
    %v3594 = vpop.f32.mrb[0].mxu0
    %v3595 = vpop.f32.mrb[0].mxu0
    %3596 = vdwg.mxu0
    %v3597 = vld [vmem:[%s1] sm:$0xff]
    %v3598 = vld [vmem:[%s1 + $0x8] sm:$0xff]
    %s3599 = scalar_lea.vmem %s1, 16
    %v3600 = vld [vmem:[%s3599] sm:$0xff]
    %v3601 = vld [vmem:[%s3599 + $0x8] sm:$0xff]
    %v3602 = vpack.c.bf16 %v3598, %v3597
    %v3603 = vpack.c.bf16 %v3601, %v3600
    %v3604 = vld [vmem:[#allocation7] sm:$0xf]
    %v3605 = vld [vmem:[#allocation9] sm:$0x3]
    %v3607 = vlaneseq
    %v3608 = vshrl.u32 %v3607, 7
    %v3609 = vsub.s32 0, %v3608
    %v3610 = vrot.slane %v3605, %v3609
    %v3611 = vlaneseq
    %v3612 = vshrl.u32 %v3611, 7
    %v3613 = vsub.s32 1, %v3612
    %v3614 = vrot.slane %v3605, %v3613
    %v3619 = vunpack.c.l.s4 1983009808
    %v3620 = vunpack.c.0.s8 %v3619
    %v3621 = vlaneseq
    %v3622 = vshrl.u32 %v3621, 7
    %v3623 = vsub.s32 %v3620, %v3622
    %v3624 = vrot.slane %v3604, %v3623
    %v3625 = vcombine.high %v3624, %v3624
    %vm3626 = vcmask 31744
    %v3628 = vsel %vm3626, %v3602, 0
    %v3631 = vsel %vm3626, %v3603, 0
    %vm3633 = vcmask 1041408
    %v3635 = vsel %vm3633, %v3624, 0
    %v3638 = vsel %vm3633, %v3625, 0
    %3640 = vmatprep.subr.bf16.mxu0 %v3638
    %3641 = vmatpush1.bf16.msra.mxu0 %v3635
    %3642 = vmatprep.subr.bf16.mxu0 0
    %3643 = vmatpush1.bf16.msra.mxu0 0
    %3644 = vmatprep.subr.bf16.mxu0 0
    %3645 = vmatpush1.bf16.msra.mxu0 0
    %3646 = vmatprep.subr.bf16.mxu0 0
    %3647 = vmatpush1.bf16.msra.mxu0 0
    %3648 = vmatprep.subr.bf16.mxu0 0
    %3649 = vmatpush1.bf16.msra.mxu0 0
    %3650 = vmatprep.subr.bf16.mxu0 0
    %3651 = vmatpush1.bf16.msra.mxu0 0
    %3652 = vmatprep.subr.bf16.mxu0 0
    %3653 = vmatpush1.bf16.msra.mxu0 0
    %3654 = vmatprep.subr.bf16.mxu0 0
    %3655 = vmatpush1.bf16.msra.mxu0 0
    %3656 = vmatprep.subr.bf16.mxu0 0
    %3657 = vmatpush1.bf16.msra.mxu0 0
    %3658 = vmatprep.subr.bf16.mxu0 0
    %3659 = vmatpush1.bf16.msra.mxu0 0
    %3660 = vmatprep.subr.bf16.mxu0 0
    %3661 = vmatpush1.bf16.msra.mxu0 0
    %3662 = vmatprep.subr.bf16.mxu0 0
    %3663 = vmatpush1.bf16.msra.mxu0 0
    %3664 = vmatprep.subr.bf16.mxu0 0
    %3665 = vmatpush1.bf16.msra.mxu0 0
    %3666 = vmatprep.subr.bf16.mxu0 0
    %3667 = vmatpush1.bf16.msra.mxu0 0
    %3668 = vmatprep.subr.bf16.mxu0 0
    %3669 = vmatpush1.bf16.msra.mxu0 0
    %3670 = vmatprep.subr.bf16.mxu0 0
    %3671 = vmatpush1.bf16.msra.mxu0 0
    %3672 = vmatprep.mubr.bf16.mxu0 0
    %3673 = vmatmul.mubr.bf16.gmra.mrb[0].mxu0 %v3628
    %v3674 = vpop.f32.mrb[0].mxu0
    %v3675 = vadd.f32 %v3610, %v3674
    %v3676 = vpop.f32.mrb[0].mxu0
    %v3677 = vadd.f32 %v3614, %v3676
    %v3678 = vpop.f32.mrb[0].mxu0
    %v3679 = vadd.f32 %v3610, %v3678
    %v3680 = vpop.f32.mrb[0].mxu0
    %v3681 = vadd.f32 %v3614, %v3680
    %3682 = vmatprep.mubr.bf16.mxu0 0
    %3683 = vmatmul.mubr.bf16.gmra.mrb[0].mxu0 %v3631
    %v3684 = vpop.f32.mrb[0].mxu0
    %v3685 = vadd.f32 %v3610, %v3684
    %v3686 = vpop.f32.mrb[0].mxu0
    %v3687 = vadd.f32 %v3614, %v3686
    %v3688 = vpop.f32.mrb[0].mxu0
    %v3689 = vadd.f32 %v3610, %v3688
    %v3690 = vpop.f32.mrb[0].mxu0
    %v3691 = vadd.f32 %v3614, %v3690
    %3692 = vdwg.mxu0
    %v3693 = vlaneseq
    %v3694 = vshrl.u32 %v3693, 7
    %v3695 = vsub.s32 0, %v3694
    %v3696 = vrot.slane %v3591, %v3695
    %v3697 = vlaneseq
    %v3698 = vshrl.u32 %v3697, 7
    %v3699 = vsub.s32 0, %v3698
    %v3700 = vrot.slane %v3593, %v3699
    %v3701 = vlaneseq
    %v3702 = vshrl.u32 %v3701, 7
    %v3703 = vsub.s32 1, %v3702
    %v3704 = vrot.slane %v3591, %v3703
    %v3705 = vlaneseq
    %v3706 = vshrl.u32 %v3705, 7
    %v3707 = vsub.s32 1, %v3706
    %v3708 = vrot.slane %v3593, %v3707
    %v3709 = vadd.f32 %v3696, %v3700
    %3710 = vadd.xlane.f32.xlu0 %v3709
    %v3711 = vpop.xlane.xlu0 %3710
    %v3712 = vadd.f32 %v3675, %v3677
    %3713 = vadd.xlane.f32.xlu0 %v3712
    %v3714 = vpop.xlane.xlu0 %3713
    %v3715 = vadd.f32 %v3679, %v3681
    %3716 = vadd.xlane.f32.xlu0 %v3715
    %v3717 = vpop.xlane.xlu0 %3716
    %v3718 = vadd.f32 %v3704, %v3708
    %3719 = vadd.xlane.f32.xlu0 %v3718
    %v3720 = vpop.xlane.xlu0 %3719
    %v3721 = vadd.f32 %v3685, %v3687
    %3722 = vadd.xlane.f32.xlu0 %v3721
    %v3723 = vpop.xlane.xlu0 %3722
    %v3724 = vadd.f32 %v3689, %v3691
    %3725 = vadd.xlane.f32.xlu0 %v3724
    %v3726 = vpop.xlane.xlu0 %3725
    %v3727 = vrcp.pop 256.0
    %v3728 = vmul.f32 %v3711, %v3727
    %v3729 = vmul.f32 %v3714, %v3727
    %v3730 = vmul.f32 %v3717, %v3727
    %v3731 = vmul.f32 %v3720, %v3727
    %v3732 = vmul.f32 %v3723, %v3727
    %v3733 = vmul.f32 %v3726, %v3727
    %v3734 = vsub.f32 %v3696, %v3728
    %v3735 = vsub.f32 %v3700, %v3728
    %v3736 = vsub.f32 %v3675, %v3729
    %v3737 = vsub.f32 %v3677, %v3729
    %v3738 = vsub.f32 %v3679, %v3730
    %v3739 = vsub.f32 %v3681, %v3730
    %v3740 = vsub.f32 %v3704, %v3731
    %v3741 = vsub.f32 %v3708, %v3731
    %v3742 = vsub.f32 %v3685, %v3732
    %v3743 = vsub.f32 %v3687, %v3732
    %v3744 = vsub.f32 %v3689, %v3733
    %v3745 = vsub.f32 %v3691, %v3733
    %v3746 = vmul.f32 %v3734, %v3734
    %v3747 = vmul.f32 %v3735, %v3735
    %v3748 = vmul.f32 %v3736, %v3736
    %v3749 = vmul.f32 %v3737, %v3737
    %v3750 = vmul.f32 %v3738, %v3738
    %v3751 = vmul.f32 %v3739, %v3739
    %v3752 = vmul.f32 %v3740, %v3740
    %v3753 = vmul.f32 %v3741, %v3741
    %v3754 = vmul.f32 %v3742, %v3742
    %v3755 = vmul.f32 %v3743, %v3743
    %v3756 = vmul.f32 %v3744, %v3744
    %v3757 = vmul.f32 %v3745, %v3745
    %v3758 = vadd.f32 %v3746, %v3747
    %3759 = vadd.xlane.f32.xlu0 %v3758
    %v3760 = vpop.xlane.xlu0 %3759
    %v3761 = vadd.f32 %v3748, %v3749
    %3762 = vadd.xlane.f32.xlu0 %v3761
    %v3763 = vpop.xlane.xlu0 %3762
    %v3764 = vadd.f32 %v3750, %v3751
    %3765 = vadd.xlane.f32.xlu0 %v3764
    %v3766 = vpop.xlane.xlu0 %3765
    %v3767 = vadd.f32 %v3752, %v3753
    %3768 = vadd.xlane.f32.xlu0 %v3767
    %v3769 = vpop.xlane.xlu0 %3768
    %v3770 = vadd.f32 %v3754, %v3755
    %3771 = vadd.xlane.f32.xlu0 %v3770
    %v3772 = vpop.xlane.xlu0 %3771
    %v3773 = vadd.f32 %v3756, %v3757
    %3774 = vadd.xlane.f32.xlu0 %v3773
    %v3775 = vpop.xlane.xlu0 %3774
    %v3776 = vmul.f32 %v3760, %v3727
    %v3777 = vmul.f32 %v3763, %v3727
    %v3778 = vmul.f32 %v3766, %v3727
    %v3779 = vmul.f32 %v3769, %v3727
    %v3780 = vmul.f32 %v3772, %v3727
    %v3781 = vmul.f32 %v3775, %v3727
    %v3782 = vadd.f32 %v3776, 1e-05
    %v3783 = vadd.f32 %v3777, 1e-05
    %v3784 = vadd.f32 %v3778, 1e-05
    %v3785 = vadd.f32 %v3779, 1e-05
    %v3786 = vadd.f32 %v3780, 1e-05
    %v3787 = vadd.f32 %v3781, 1e-05
    %v3788 = vrsqrt.pop %v3782
    %v3789 = vrsqrt.pop %v3783
    %v3790 = vrsqrt.pop %v3784
    %v3791 = vrsqrt.pop %v3785
    %v3792 = vrsqrt.pop %v3786
    %v3793 = vrsqrt.pop %v3787
    %v3794 = vmul.f32 %v3734, %v3788
    %v3795 = vmul.f32 %v3735, %v3788
    %v3796 = vmul.f32 %v3736, %v3789
    %v3797 = vmul.f32 %v3737, %v3789
    %v3798 = vmul.f32 %v3738, %v3790
    %v3799 = vmul.f32 %v3739, %v3790
    %v3800 = vmul.f32 %v3740, %v3791
    %v3801 = vmul.f32 %v3741, %v3791
    %v3802 = vmul.f32 %v3742, %v3792
    %v3803 = vmul.f32 %v3743, %v3792
    %v3804 = vmul.f32 %v3744, %v3793
    %v3805 = vmul.f32 %v3745, %v3793
    %v3806 = vld [vmem:[#allocation10] sm:$0x3]
    %v3808 = vlaneseq
    %v3809 = vshrl.u32 %v3808, 7
    %v3810 = vsub.s32 0, %v3809
    %v3811 = vrot.slane %v3806, %v3810
    %v3812 = vlaneseq
    %v3813 = vshrl.u32 %v3812, 7
    %v3814 = vsub.s32 1, %v3813
    %v3815 = vrot.slane %v3806, %v3814
    %v3818 = vmul.f32 %v3794, %v3811
    %v3819 = vmul.f32 %v3795, %v3815
    %v3820 = vmul.f32 %v3796, %v3811
    %v3821 = vmul.f32 %v3797, %v3815
    %v3822 = vmul.f32 %v3798, %v3811
    %v3823 = vmul.f32 %v3799, %v3815
    %v3824 = vmul.f32 %v3800, %v3811
    %v3825 = vmul.f32 %v3801, %v3815
    %v3826 = vmul.f32 %v3802, %v3811
    %v3827 = vmul.f32 %v3803, %v3815
    %v3828 = vmul.f32 %v3804, %v3811
    %v3829 = vmul.f32 %v3805, %v3815
    %v3830 = vld [vmem:[#allocation12] sm:$0x3]
    %v3832 = vlaneseq
    %v3833 = vshrl.u32 %v3832, 7
    %v3834 = vsub.s32 0, %v3833
    %v3835 = vrot.slane %v3830, %v3834
    %v3836 = vlaneseq
    %v3837 = vshrl.u32 %v3836, 7
    %v3838 = vsub.s32 1, %v3837
    %v3839 = vrot.slane %v3830, %v3838
    %v3842 = vadd.f32 %v3818, %v3835
    %v3843 = vadd.f32 %v3819, %v3839
    %v3844 = vadd.f32 %v3820, %v3835
    %v3845 = vadd.f32 %v3821, %v3839
    %v3846 = vadd.f32 %v3822, %v3835
    %v3847 = vadd.f32 %v3823, %v3839
    %v3848 = vadd.f32 %v3824, %v3835
    %v3849 = vadd.f32 %v3825, %v3839
    %v3850 = vadd.f32 %v3826, %v3835
    %v3851 = vadd.f32 %v3827, %v3839
    %v3852 = vadd.f32 %v3828, %v3835
    %v3853 = vadd.f32 %v3829, %v3839
    %v3854 = vld [vmem:[%s5] sm:$0xff]
    %s3855 = scalar_lea.vmem %s5, 8
    %v3856 = vld [vmem:[%s3855] sm:$0xff]
    %v3857 = vpack.c.bf16 %v3856, %v3854
    %v3858 = vld [vmem:[%s45] sm:$0xff]
    %v3859 = vld [vmem:[%s45 + $0x8] sm:$0xff]
    %v3860 = vld [vmem:[%s45 + $0x10] sm:$0xff]
    %v3861 = vld [vmem:[%s45 + $0x18] sm:$0xff]
    %v3866 = vunpack.c.l.b16 %v3858
    %v3867 = vunpack.c.h.b16 %v3858
    %v3868 = vunpack.c.l.b16 %v3859
    %v3869 = vunpack.c.h.b16 %v3859
    %v3870 = vunpack.c.l.b16 %v3860
    %v3871 = vunpack.c.h.b16 %v3860
    %v3872 = vunpack.c.l.b16 %v3861
    %v3873 = vunpack.c.h.b16 %v3861
    %v3874 = vpack.c.b16 %v3866, %v3866
    %v3875 = vpack.c.b16 %v3867, %v3867
    %v3876 = vpack.c.b16 %v3868, %v3868
    %v3877 = vpack.c.b16 %v3869, %v3869
    %v3878 = vpack.c.b16 %v3870, %v3870
    %v3879 = vpack.c.b16 %v3871, %v3871
    %v3880 = vpack.c.b16 %v3872, %v3872
    %v3881 = vpack.c.b16 %v3873, %v3873
    %vm3882 = vcmask 64512
    %v3884 = vsel %vm3882, %v3857, 0
    %vm3886 = vcmask 1043456
    %v3888 = vsel %vm3886, %v3874, 0
    %v3891 = vsel %vm3886, %v3875, 0
    %v3894 = vsel %vm3886, %v3876, 0
    %v3897 = vsel %vm3886, %v3877, 0
    %v3900 = vsel %vm3886, %v3878, 0
    %v3903 = vsel %vm3886, %v3879, 0
    %v3906 = vsel %vm3886, %v3880, 0
    %v3909 = vsel %vm3886, %v3881, 0
    %3911 = vmatprep.subr.bf16.mxu0 %v3891
    %3912 = vmatpush1.bf16.msra.mxu0 %v3888
    %3913 = vmatprep.subr.bf16.mxu0 0
    %3914 = vmatpush1.bf16.msra.mxu0 0
    %3915 = vmatprep.subr.bf16.mxu0 0
    %3916 = vmatpush1.bf16.msra.mxu0 0
    %3917 = vmatprep.subr.bf16.mxu0 0
    %3918 = vmatpush1.bf16.msra.mxu0 0
    %3919 = vmatprep.subr.bf16.mxu0 0
    %3920 = vmatpush1.bf16.msra.mxu0 0
    %3921 = vmatprep.subr.bf16.mxu0 0
    %3922 = vmatpush1.bf16.msra.mxu0 0
    %3923 = vmatprep.subr.bf16.mxu0 0
    %3924 = vmatpush1.bf16.msra.mxu0 0
    %3925 = vmatprep.subr.bf16.mxu0 0
    %3926 = vmatpush1.bf16.msra.mxu0 0
    %3927 = vmatprep.subr.bf16.mxu0 0
    %3928 = vmatpush1.bf16.msra.mxu0 0
    %3929 = vmatprep.subr.bf16.mxu0 0
    %3930 = vmatpush1.bf16.msra.mxu0 0
    %3931 = vmatprep.subr.bf16.mxu0 0
    %3932 = vmatpush1.bf16.msra.mxu0 0
    %3933 = vmatprep.subr.bf16.mxu0 0
    %3934 = vmatpush1.bf16.msra.mxu0 0
    %3935 = vmatprep.subr.bf16.mxu0 0
    %3936 = vmatpush1.bf16.msra.mxu0 0
    %3937 = vmatprep.subr.bf16.mxu0 0
    %3938 = vmatpush1.bf16.msra.mxu0 0
    %3939 = vmatprep.subr.bf16.mxu0 0
    %3940 = vmatpush1.bf16.msra.mxu0 0
    %3941 = vmatprep.subr.bf16.mxu0 0
    %3942 = vmatpush1.bf16.msra.mxu0 0
    %3943 = vmatprep.mubr.bf16.mxu0 0
    %3944 = vmatmul.mubr.bf16.gmra.mrb[0].mxu0 %v3884
    %v3945 = vpop.f32.mrb[0].mxu0
    %v3946 = vadd.f32 0.0, %v3945
    %v3947 = vpop.f32.mrb[0].mxu0
    %v3948 = vadd.f32 0.0, %v3947
    %v3949 = vpop.f32.mrb[0].mxu0
    %v3950 = vadd.f32 0.0, %v3949
    %v3951 = vpop.f32.mrb[0].mxu0
    %v3952 = vadd.f32 0.0, %v3951
    %3953 = vdwg.mxu0
    %3954 = vmatprep.subr.bf16.mxu0 %v3897
    %3955 = vmatpush1.bf16.msra.mxu0 %v3894
    %3956 = vmatprep.subr.bf16.mxu0 0
    %3957 = vmatpush1.bf16.msra.mxu0 0
    %3958 = vmatprep.subr.bf16.mxu0 0
    %3959 = vmatpush1.bf16.msra.mxu0 0
    %3960 = vmatprep.subr.bf16.mxu0 0
    %3961 = vmatpush1.bf16.msra.mxu0 0
    %3962 = vmatprep.subr.bf16.mxu0 0
    %3963 = vmatpush1.bf16.msra.mxu0 0
    %3964 = vmatprep.subr.bf16.mxu0 0
    %3965 = vmatpush1.bf16.msra.mxu0 0
    %3966 = vmatprep.subr.bf16.mxu0 0
    %3967 = vmatpush1.bf16.msra.mxu0 0
    %3968 = vmatprep.subr.bf16.mxu0 0
    %3969 = vmatpush1.bf16.msra.mxu0 0
    %3970 = vmatprep.subr.bf16.mxu0 0
    %3971 = vmatpush1.bf16.msra.mxu0 0
    %3972 = vmatprep.subr.bf16.mxu0 0
    %3973 = vmatpush1.bf16.msra.mxu0 0
    %3974 = vmatprep.subr.bf16.mxu0 0
    %3975 = vmatpush1.bf16.msra.mxu0 0
    %3976 = vmatprep.subr.bf16.mxu0 0
    %3977 = vmatpush1.bf16.msra.mxu0 0
    %3978 = vmatprep.subr.bf16.mxu0 0
    %3979 = vmatpush1.bf16.msra.mxu0 0
    %3980 = vmatprep.subr.bf16.mxu0 0
    %3981 = vmatpush1.bf16.msra.mxu0 0
    %3982 = vmatprep.subr.bf16.mxu0 0
    %3983 = vmatpush1.bf16.msra.mxu0 0
    %3984 = vmatprep.subr.bf16.mxu0 0
    %3985 = vmatpush1.bf16.msra.mxu0 0
    %3986 = vmatprep.mubr.bf16.mxu0 0
    %3987 = vmatmul.mubr.bf16.gmra.mrb[0].mxu0 %v3884
    %v3988 = vpop.f32.mrb[0].mxu0
    %v3989 = vadd.f32 0.0, %v3988
    %v3990 = vpop.f32.mrb[0].mxu0
    %v3991 = vadd.f32 0.0, %v3990
    %v3992 = vpop.f32.mrb[0].mxu0
    %v3993 = vadd.f32 0.0, %v3992
    %v3994 = vpop.f32.mrb[0].mxu0
    %v3995 = vadd.f32 0.0, %v3994
    %3996 = vdwg.mxu0
    %3997 = vmatprep.subr.bf16.mxu0 %v3903
    %3998 = vmatpush1.bf16.msra.mxu0 %v3900
    %3999 = vmatprep.subr.bf16.mxu0 0
    %4000 = vmatpush1.bf16.msra.mxu0 0
    %4001 = vmatprep.subr.bf16.mxu0 0
    %4002 = vmatpush1.bf16.msra.mxu0 0
    %4003 = vmatprep.subr.bf16.mxu0 0
    %4004 = vmatpush1.bf16.msra.mxu0 0
    %4005 = vmatprep.subr.bf16.mxu0 0
    %4006 = vmatpush1.bf16.msra.mxu0 0
    %4007 = vmatprep.subr.bf16.mxu0 0
    %4008 = vmatpush1.bf16.msra.mxu0 0
    %4009 = vmatprep.subr.bf16.mxu0 0
    %4010 = vmatpush1.bf16.msra.mxu0 0
    %4011 = vmatprep.subr.bf16.mxu0 0
    %4012 = vmatpush1.bf16.msra.mxu0 0
    %4013 = vmatprep.subr.bf16.mxu0 0
    %4014 = vmatpush1.bf16.msra.mxu0 0
    %4015 = vmatprep.subr.bf16.mxu0 0
    %4016 = vmatpush1.bf16.msra.mxu0 0
    %4017 = vmatprep.subr.bf16.mxu0 0
    %4018 = vmatpush1.bf16.msra.mxu0 0
    %4019 = vmatprep.subr.bf16.mxu0 0
    %4020 = vmatpush1.bf16.msra.mxu0 0
    %4021 = vmatprep.subr.bf16.mxu0 0
    %4022 = vmatpush1.bf16.msra.mxu0 0
    %4023 = vmatprep.subr.bf16.mxu0 0
    %4024 = vmatpush1.bf16.msra.mxu0 0
    %4025 = vmatprep.subr.bf16.mxu0 0
    %4026 = vmatpush1.bf16.msra.mxu0 0
    %4027 = vmatprep.subr.bf16.mxu0 0
    %4028 = vmatpush1.bf16.msra.mxu0 0
    %4029 = vmatprep.mubr.bf16.mxu0 0
    %4030 = vmatmul.mubr.bf16.gmra.mrb[0].mxu0 %v3884
    %v4031 = vpop.f32.mrb[0].mxu0
    %v4032 = vadd.f32 0.0, %v4031
    %v4033 = vpop.f32.mrb[0].mxu0
    %v4034 = vadd.f32 0.0, %v4033
    %v4035 = vpop.f32.mrb[0].mxu0
    %v4036 = vadd.f32 0.0, %v4035
    %v4037 = vpop.f32.mrb[0].mxu0
    %v4038 = vadd.f32 0.0, %v4037
    %4039 = vdwg.mxu0
    %4040 = vmatprep.subr.bf16.mxu0 %v3909
    %4041 = vmatpush1.bf16.msra.mxu0 %v3906
    %4042 = vmatprep.subr.bf16.mxu0 0
    %4043 = vmatpush1.bf16.msra.mxu0 0
    %4044 = vmatprep.subr.bf16.mxu0 0
    %4045 = vmatpush1.bf16.msra.mxu0 0
    %4046 = vmatprep.subr.bf16.mxu0 0
    %4047 = vmatpush1.bf16.msra.mxu0 0
    %4048 = vmatprep.subr.bf16.mxu0 0
    %4049 = vmatpush1.bf16.msra.mxu0 0
    %4050 = vmatprep.subr.bf16.mxu0 0
    %4051 = vmatpush1.bf16.msra.mxu0 0
    %4052 = vmatprep.subr.bf16.mxu0 0
    %4053 = vmatpush1.bf16.msra.mxu0 0
    %4054 = vmatprep.subr.bf16.mxu0 0
    %4055 = vmatpush1.bf16.msra.mxu0 0
    %4056 = vmatprep.subr.bf16.mxu0 0
    %4057 = vmatpush1.bf16.msra.mxu0 0
    %4058 = vmatprep.subr.bf16.mxu0 0
    %4059 = vmatpush1.bf16.msra.mxu0 0
    %4060 = vmatprep.subr.bf16.mxu0 0
    %4061 = vmatpush1.bf16.msra.mxu0 0
    %4062 = vmatprep.subr.bf16.mxu0 0
    %4063 = vmatpush1.bf16.msra.mxu0 0
    %4064 = vmatprep.subr.bf16.mxu0 0
    %4065 = vmatpush1.bf16.msra.mxu0 0
    %4066 = vmatprep.subr.bf16.mxu0 0
    %4067 = vmatpush1.bf16.msra.mxu0 0
    %4068 = vmatprep.subr.bf16.mxu0 0
    %4069 = vmatpush1.bf16.msra.mxu0 0
    %4070 = vmatprep.subr.bf16.mxu0 0
    %4071 = vmatpush1.bf16.msra.mxu0 0
    %4072 = vmatprep.mubr.bf16.mxu0 0
    %4073 = vmatmul.mubr.bf16.gmra.mrb[0].mxu0 %v3884
    %v4074 = vpop.f32.mrb[0].mxu0
    %v4075 = vadd.f32 0.0, %v4074
    %v4076 = vpop.f32.mrb[0].mxu0
    %v4077 = vadd.f32 0.0, %v4076
    %v4078 = vpop.f32.mrb[0].mxu0
    %v4079 = vadd.f32 0.0, %v4078
    %v4080 = vpop.f32.mrb[0].mxu0
    %v4081 = vadd.f32 0.0, %v4080
    %4082 = vdwg.mxu0
    %v4083 = vld [vmem:[%s7] sm:$0x1]
    %s4084 = scalar_lea.vmem %s7, 1
    %v4085 = vld [vmem:[%s4084] sm:$0x1]
    %v4086 = vadd.f32 %v3842, %v3843
    %4087 = vadd.xlane.f32.xlu0 %v4086
    %v4088 = vpop.xlane.xlu0 %4087
    %v4089 = vadd.f32 %v3844, %v3845
    %4090 = vadd.xlane.f32.xlu0 %v4089
    %v4091 = vpop.xlane.xlu0 %4090
    %v4092 = vadd.f32 %v3846, %v3847
    %4093 = vadd.xlane.f32.xlu0 %v4092
    %v4094 = vpop.xlane.xlu0 %4093
    %v4095 = vadd.f32 %v3848, %v3849
    %4096 = vadd.xlane.f32.xlu0 %v4095
    %v4097 = vpop.xlane.xlu0 %4096
    %v4098 = vadd.f32 %v3850, %v3851
    %4099 = vadd.xlane.f32.xlu0 %v4098
    %v4100 = vpop.xlane.xlu0 %4099
    %v4101 = vadd.f32 %v3852, %v3853
    %4102 = vadd.xlane.f32.xlu0 %v4101
    %v4103 = vpop.xlane.xlu0 %4102
    %v4104 = vmul.f32 %v4088, %v3727
    %v4105 = vmul.f32 %v4091, %v3727
    %v4106 = vmul.f32 %v4094, %v3727
    %v4107 = vmul.f32 %v4097, %v3727
    %v4108 = vmul.f32 %v4100, %v3727
    %v4109 = vmul.f32 %v4103, %v3727
    %v4110 = vsub.f32 %v3842, %v4104
    %v4111 = vsub.f32 %v3843, %v4104
    %v4112 = vsub.f32 %v3844, %v4105
    %v4113 = vsub.f32 %v3845, %v4105
    %v4114 = vsub.f32 %v3846, %v4106
    %v4115 = vsub.f32 %v3847, %v4106
    %v4116 = vsub.f32 %v3848, %v4107
    %v4117 = vsub.f32 %v3849, %v4107
    %v4118 = vsub.f32 %v3850, %v4108
    %v4119 = vsub.f32 %v3851, %v4108
    %v4120 = vsub.f32 %v3852, %v4109
    %v4121 = vsub.f32 %v3853, %v4109
    %v4122 = vmul.f32 %v4110, %v4110
    %v4123 = vmul.f32 %v4111, %v4111
    %v4124 = vmul.f32 %v4112, %v4112
    %v4125 = vmul.f32 %v4113, %v4113
    %v4126 = vmul.f32 %v4114, %v4114
    %v4127 = vmul.f32 %v4115, %v4115
    %v4128 = vmul.f32 %v4116, %v4116
    %v4129 = vmul.f32 %v4117, %v4117
    %v4130 = vmul.f32 %v4118, %v4118
    %v4131 = vmul.f32 %v4119, %v4119
    %v4132 = vmul.f32 %v4120, %v4120
    %v4133 = vmul.f32 %v4121, %v4121
    %v4134 = vadd.f32 %v4122, %v4123
    %4135 = vadd.xlane.f32.xlu0 %v4134
    %v4136 = vpop.xlane.xlu0 %4135
    %v4137 = vadd.f32 %v4124, %v4125
    %4138 = vadd.xlane.f32.xlu0 %v4137
    %v4139 = vpop.xlane.xlu0 %4138
    %v4140 = vadd.f32 %v4126, %v4127
    %4141 = vadd.xlane.f32.xlu0 %v4140
    %v4142 = vpop.xlane.xlu0 %4141
    %v4143 = vadd.f32 %v4128, %v4129
    %4144 = vadd.xlane.f32.xlu0 %v4143
    %v4145 = vpop.xlane.xlu0 %4144
    %v4146 = vadd.f32 %v4130, %v4131
    %4147 = vadd.xlane.f32.xlu0 %v4146
    %v4148 = vpop.xlane.xlu0 %4147
    %v4149 = vadd.f32 %v4132, %v4133
    %4150 = vadd.xlane.f32.xlu0 %v4149
    %v4151 = vpop.xlane.xlu0 %4150
    %v4152 = vmul.f32 %v4136, %v3727
    %v4153 = vmul.f32 %v4139, %v3727
    %v4154 = vmul.f32 %v4142, %v3727
    %v4155 = vmul.f32 %v4145, %v3727
    %v4156 = vmul.f32 %v4148, %v3727
    %v4157 = vmul.f32 %v4151, %v3727
    %v4158 = vadd.f32 %v4152, 1e-05
    %v4159 = vadd.f32 %v4153, 1e-05
    %v4160 = vadd.f32 %v4154, 1e-05
    %v4161 = vadd.f32 %v4155, 1e-05
    %v4162 = vadd.f32 %v4156, 1e-05
    %v4163 = vadd.f32 %v4157, 1e-05
    %v4164 = vrsqrt.pop %v4158
    %v4165 = vrsqrt.pop %v4159
    %v4166 = vrsqrt.pop %v4160
    %v4167 = vrsqrt.pop %v4161
    %v4168 = vrsqrt.pop %v4162
    %v4169 = vrsqrt.pop %v4163
    %v4170 = vmul.f32 %v4110, %v4164
    %v4171 = vmul.f32 %v4111, %v4164
    %v4172 = vmul.f32 %v4112, %v4165
    %v4173 = vmul.f32 %v4113, %v4165
    %v4174 = vmul.f32 %v4114, %v4166
    %v4175 = vmul.f32 %v4115, %v4166
    %v4176 = vmul.f32 %v4116, %v4167
    %v4177 = vmul.f32 %v4117, %v4167
    %v4178 = vmul.f32 %v4118, %v4168
    %v4179 = vmul.f32 %v4119, %v4168
    %v4180 = vmul.f32 %v4120, %v4169
    %v4181 = vmul.f32 %v4121, %v4169
    %v4182 = vld [vmem:[#allocation13] sm:$0x3]
    %v4184 = vlaneseq
    %v4185 = vshrl.u32 %v4184, 7
    %v4186 = vsub.s32 0, %v4185
    %v4187 = vrot.slane %v4182, %v4186
    %v4188 = vlaneseq
    %v4189 = vshrl.u32 %v4188, 7
    %v4190 = vsub.s32 1, %v4189
    %v4191 = vrot.slane %v4182, %v4190
    %v4194 = vmul.f32 %v4170, %v4187
    %v4195 = vmul.f32 %v4171, %v4191
    %v4196 = vmul.f32 %v4172, %v4187
    %v4197 = vmul.f32 %v4173, %v4191
    %v4198 = vmul.f32 %v4174, %v4187
    %v4199 = vmul.f32 %v4175, %v4191
    %v4200 = vmul.f32 %v4176, %v4187
    %v4201 = vmul.f32 %v4177, %v4191
    %v4202 = vmul.f32 %v4178, %v4187
    %v4203 = vmul.f32 %v4179, %v4191
    %v4204 = vmul.f32 %v4180, %v4187
    %v4205 = vmul.f32 %v4181, %v4191
    %v4206 = vld [vmem:[#allocation15] sm:$0x3]
    %v4208 = vlaneseq
    %v4209 = vshrl.u32 %v4208, 7
    %v4210 = vsub.s32 0, %v4209
    %v4211 = vrot.slane %v4206, %v4210
    %v4212 = vlaneseq
    %v4213 = vshrl.u32 %v4212, 7
    %v4214 = vsub.s32 1, %v4213
    %v4215 = vrot.slane %v4206, %v4214
    %v4218 = vadd.f32 %v4194, %v4211
    %v4219 = vadd.f32 %v4195, %v4215
    %v4220 = vadd.f32 %v4196, %v4211
    %v4221 = vadd.f32 %v4197, %v4215
    %v4222 = vadd.f32 %v4198, %v4211
    %v4223 = vadd.f32 %v4199, %v4215
    %v4224 = vadd.f32 %v4200, %v4211
    %v4225 = vadd.f32 %v4201, %v4215
    %v4226 = vadd.f32 %v4202, %v4211
    %v4227 = vadd.f32 %v4203, %v4215
    %v4228 = vadd.f32 %v4204, %v4211
    %v4229 = vadd.f32 %v4205, %v4215
    %v4230 = vpack.c.bf16 %v4220, %v4218
    %v4231 = vpack.c.bf16 %v4221, %v4219
    %v4232 = vpack.c.bf16 %v4224, %v4222
    %v4233 = vpack.c.bf16 %v4225, %v4223
    %v4234 = vpack.c.bf16 %v4228, %v4226
    %v4235 = vpack.c.bf16 %v4229, %v4227
    %v4236 = vld [vmem:[#allocation16] sm:$0xff]
    %v4237 = vld [vmem:[#allocation16 + $0x8] sm:$0xff]
    %v4238 = vld [vmem:[#allocation16 + $0x10] sm:$0xff]
    %v4239 = vld [vmem:[#allocation16 + $0x18] sm:$0xff]
    %v4240 = vld [vmem:[#allocation16 + $0x20] sm:$0xff]
    %v4241 = vld [vmem:[#allocation16 + $0x28] sm:$0xff]
    %v4242 = vld [vmem:[#allocation16 + $0x30] sm:$0xff]
    %v4243 = vld [vmem:[#allocation16 + $0x38] sm:$0xff]
    %v4244 = vld [vmem:[#allocation16 + $0x40] sm:$0xff]
    %v4245 = vld [vmem:[#allocation16 + $0x48] sm:$0xff]
    %v4246 = vld [vmem:[#allocation16 + $0x50] sm:$0xff]
    %v4247 = vld [vmem:[#allocation16 + $0x58] sm:$0xff]
    %v4248 = vld [vmem:[#allocation16 + $0x60] sm:$0xff]
    %v4249 = vld [vmem:[#allocation16 + $0x68] sm:$0xff]
    %v4250 = vld [vmem:[#allocation16 + $0x70] sm:$0xff]
    %v4251 = vld [vmem:[#allocation16 + $0x78] sm:$0xff]
    %v4252 = vld [vmem:[#allocation16 + $0x80] sm:$0xff]
    %v4253 = vld [vmem:[#allocation16 + $0x88] sm:$0xff]
    %v4254 = vld [vmem:[#allocation16 + $0x90] sm:$0xff]
    %v4255 = vld [vmem:[#allocation16 + $0x98] sm:$0xff]
    %v4256 = vld [vmem:[#allocation16 + $0xa0] sm:$0xff]
    %v4257 = vld [vmem:[#allocation16 + $0xa8] sm:$0xff]
    %v4258 = vld [vmem:[#allocation16 + $0xb0] sm:$0xff]
    %v4259 = vld [vmem:[#allocation16 + $0xb8] sm:$0xff]
    %v4260 = vld [vmem:[#allocation16 + $0xc0] sm:$0xff]
    %v4261 = vld [vmem:[#allocation16 + $0xc8] sm:$0xff]
    %v4262 = vld [vmem:[#allocation16 + $0xd0] sm:$0xff]
    %v4263 = vld [vmem:[#allocation16 + $0xd8] sm:$0xff]
    %v4264 = vld [vmem:[#allocation16 + $0xe0] sm:$0xff]
    %v4265 = vld [vmem:[#allocation16 + $0xe8] sm:$0xff]
    %v4266 = vld [vmem:[#allocation16 + $0xf0] sm:$0xff]
    %v4267 = vld [vmem:[#allocation16 + $0xf8] sm:$0xff]
    %v4300 = vunpack.c.l.b16 %v4236
    %v4301 = vunpack.c.h.b16 %v4236
    %v4302 = vunpack.c.l.b16 %v4237
    %v4303 = vunpack.c.h.b16 %v4237
    %v4304 = vunpack.c.l.b16 %v4238
    %v4305 = vunpack.c.h.b16 %v4238
    %v4306 = vunpack.c.l.b16 %v4239
    %v4307 = vunpack.c.h.b16 %v4239
    %v4308 = vunpack.c.l.b16 %v4240
    %v4309 = vunpack.c.h.b16 %v4240
    %v4310 = vunpack.c.l.b16 %v4241
    %v4311 = vunpack.c.h.b16 %v4241
    %v4312 = vunpack.c.l.b16 %v4242
    %v4313 = vunpack.c.h.b16 %v4242
    %v4314 = vunpack.c.l.b16 %v4243
    %v4315 = vunpack.c.h.b16 %v4243
    %v4316 = vunpack.c.l.b16 %v4244
    %v4317 = vunpack.c.h.b16 %v4244
    %v4318 = vunpack.c.l.b16 %v4245
    %v4319 = vunpack.c.h.b16 %v4245
    %v4320 = vunpack.c.l.b16 %v4246
    %v4321 = vunpack.c.h.b16 %v4246
    %v4322 = vunpack.c.l.b16 %v4247
    %v4323 = vunpack.c.h.b16 %v4247
    %v4324 = vunpack.c.l.b16 %v4248
    %v4325 = vunpack.c.h.b16 %v4248
    %v4326 = vunpack.c.l.b16 %v4249
    %v4327 = vunpack.c.h.b16 %v4249
    %v4328 = vunpack.c.l.b16 %v4250
    %v4329 = vunpack.c.h.b16 %v4250
    %v4330 = vunpack.c.l.b16 %v4251
    %v4331 = vunpack.c.h.b16 %v4251
    %v4332 = vunpack.c.l.b16 %v4252
    %v4333 = vunpack.c.h.b16 %v4252
    %v4334 = vunpack.c.l.b16 %v4253
    %v4335 = vunpack.c.h.b16 %v4253
    %v4336 = vunpack.c.l.b16 %v4254
    %v4337 = vunpack.c.h.b16 %v4254
    %v4338 = vunpack.c.l.b16 %v4255
    %v4339 = vunpack.c.h.b16 %v4255
    %v4340 = vunpack.c.l.b16 %v4256
    %v4341 = vunpack.c.h.b16 %v4256
    %v4342 = vunpack.c.l.b16 %v4257
    %v4343 = vunpack.c.h.b16 %v4257
    %v4344 = vunpack.c.l.b16 %v4258
    %v4345 = vunpack.c.h.b16 %v4258
    %v4346 = vunpack.c.l.b16 %v4259
    %v4347 = vunpack.c.h.b16 %v4259
    %v4348 = vunpack.c.l.b16 %v4260
    %v4349 = vunpack.c.h.b16 %v4260
    %v4350 = vunpack.c.l.b16 %v4261
    %v4351 = vunpack.c.h.b16 %v4261
    %v4352 = vunpack.c.l.b16 %v4262
    %v4353 = vunpack.c.h.b16 %v4262
    %v4354 = vunpack.c.l.b16 %v4263
    %v4355 = vunpack.c.h.b16 %v4263
    %v4356 = vunpack.c.l.b16 %v4264
    %v4357 = vunpack.c.h.b16 %v4264
    %v4358 = vunpack.c.l.b16 %v4265
    %v4359 = vunpack.c.h.b16 %v4265
    %v4360 = vunpack.c.l.b16 %v4266
    %v4361 = vunpack.c.h.b16 %v4266
    %v4362 = vunpack.c.l.b16 %v4267
    %v4363 = vunpack.c.h.b16 %v4267
    %v4364 = vpack.c.b16 %v4302, %v4300
    %v4365 = vpack.c.b16 %v4303, %v4301
    %v4366 = vpack.c.b16 %v4306, %v4304
    %v4367 = vpack.c.b16 %v4307, %v4305
    %v4368 = vpack.c.b16 %v4310, %v4308
    %v4369 = vpack.c.b16 %v4311, %v4309
    %v4370 = vpack.c.b16 %v4314, %v4312
    %v4371 = vpack.c.b16 %v4315, %v4313
    %v4372 = vpack.c.b16 %v4318, %v4316
    %v4373 = vpack.c.b16 %v4319, %v4317
    %v4374 = vpack.c.b16 %v4322, %v4320
    %v4375 = vpack.c.b16 %v4323, %v4321
    %v4376 = vpack.c.b16 %v4326, %v4324
    %v4377 = vpack.c.b16 %v4327, %v4325
    %v4378 = vpack.c.b16 %v4330, %v4328
    %v4379 = vpack.c.b16 %v4331, %v4329
    %v4380 = vpack.c.b16 %v4334, %v4332
    %v4381 = vpack.c.b16 %v4335, %v4333
    %v4382 = vpack.c.b16 %v4338, %v4336
    %v4383 = vpack.c.b16 %v4339, %v4337
    %v4384 = vpack.c.b16 %v4342, %v4340
    %v4385 = vpack.c.b16 %v4343, %v4341
    %v4386 = vpack.c.b16 %v4346, %v4344
    %v4387 = vpack.c.b16 %v4347, %v4345
    %v4388 = vpack.c.b16 %v4350, %v4348
    %v4389 = vpack.c.b16 %v4351, %v4349
    %v4390 = vpack.c.b16 %v4354, %v4352
    %v4391 = vpack.c.b16 %v4355, %v4353
    %v4392 = vpack.c.b16 %v4358, %v4356
    %v4393 = vpack.c.b16 %v4359, %v4357
    %v4394 = vpack.c.b16 %v4362, %v4360
    %v4395 = vpack.c.b16 %v4363, %v4361
    %4428 = vmatprep.subr.bf16.mxu0 %v4365
    %4429 = vmatpush1.bf16.msra.mxu0 %v4364
    %4430 = vmatprep.subr.bf16.mxu0 %v4367
    %4431 = vmatpush1.bf16.msra.mxu0 %v4366
    %4432 = vmatprep.subr.bf16.mxu0 %v4369
    %4433 = vmatpush1.bf16.msra.mxu0 %v4368
    %4434 = vmatprep.subr.bf16.mxu0 %v4371
    %4435 = vmatpush1.bf16.msra.mxu0 %v4370
    %4436 = vmatprep.subr.bf16.mxu0 %v4373
    %4437 = vmatpush1.bf16.msra.mxu0 %v4372
    %4438 = vmatprep.subr.bf16.mxu0 %v4375
    %4439 = vmatpush1.bf16.msra.mxu0 %v4374
    %4440 = vmatprep.subr.bf16.mxu0 %v4377
    %4441 = vmatpush1.bf16.msra.mxu0 %v4376
    %4442 = vmatprep.subr.bf16.mxu0 %v4379
    %4443 = vmatpush1.bf16.msra.mxu0 %v4378
    %4444 = vmatprep.subr.bf16.mxu0 %v4381
    %4445 = vmatpush1.bf16.msra.mxu0 %v4380
    %4446 = vmatprep.subr.bf16.mxu0 %v4383
    %4447 = vmatpush1.bf16.msra.mxu0 %v4382
    %4448 = vmatprep.subr.bf16.mxu0 %v4385
    %4449 = vmatpush1.bf16.msra.mxu0 %v4384
    %4450 = vmatprep.subr.bf16.mxu0 %v4387
    %4451 = vmatpush1.bf16.msra.mxu0 %v4386
    %4452 = vmatprep.subr.bf16.mxu0 %v4389
    %4453 = vmatpush1.bf16.msra.mxu0 %v4388
    %4454 = vmatprep.subr.bf16.mxu0 %v4391
    %4455 = vmatpush1.bf16.msra.mxu0 %v4390
    %4456 = vmatprep.subr.bf16.mxu0 %v4393
    %4457 = vmatpush1.bf16.msra.mxu0 %v4392
    %4458 = vmatprep.subr.bf16.mxu0 %v4395
    %4459 = vmatpush1.bf16.msra.mxu0 %v4394
    %4460 = vmatprep.mubr.bf16.mxu0 %v4231
    %4461 = vmatmul.mubr.bf16.gmra.mrb[0].mxu0 %v4230
    %v4462 = vpop.f32.mrb[0].mxu0
    %v4463 = vadd.f32 0.0, %v4462
    %v4464 = vpop.f32.mrb[0].mxu0
    %v4465 = vadd.f32 0.0, %v4464
    %v4466 = vpop.f32.mrb[0].mxu0
    %v4467 = vadd.f32 0.0, %v4466
    %v4468 = vpop.f32.mrb[0].mxu0
    %v4469 = vadd.f32 0.0, %v4468
    %4470 = vmatprep.mubr.bf16.mxu0 %v4233
    %4471 = vmatmul.mubr.bf16.gmra.mrb[0].mxu0 %v4232
    %v4472 = vpop.f32.mrb[0].mxu0
    %v4473 = vadd.f32 0.0, %v4472
    %v4474 = vpop.f32.mrb[0].mxu0
    %v4475 = vadd.f32 0.0, %v4474
    %v4476 = vpop.f32.mrb[0].mxu0
    %v4477 = vadd.f32 0.0, %v4476
    %v4478 = vpop.f32.mrb[0].mxu0
    %v4479 = vadd.f32 0.0, %v4478
    %4480 = vmatprep.mubr.bf16.mxu0 %v4235
    %4481 = vmatmul.mubr.bf16.gmra.mrb[0].mxu0 %v4234
    %v4482 = vpop.f32.mrb[0].mxu0
    %v4483 = vadd.f32 0.0, %v4482
    %v4484 = vpop.f32.mrb[0].mxu0
    %v4485 = vadd.f32 0.0, %v4484
    %v4486 = vpop.f32.mrb[0].mxu0
    %v4487 = vadd.f32 0.0, %v4486
    %v4488 = vpop.f32.mrb[0].mxu0
    %v4489 = vadd.f32 0.0, %v4488
    %4490 = vdwg.mxu0
    %v4491 = vpack.c.bf16 %v4467, %v4463
    %v4492 = vpack.c.bf16 %v4473, %v4473
    %v4493 = vpack.c.bf16 %v3946, %v3946
    %4494 = vmatprep.subr.bf16.mxu0 0
    %4495 = vmatpush1.bf16.xpose.msra.mxu0 %v4493
    %4496 = vmatprep.subr.bf16.mxu0 0
    %4497 = vmatpush1.bf16.xpose.msra.mxu0 0
    %4498 = vmatprep.subr.bf16.mxu0 0
    %4499 = vmatpush1.bf16.xpose.msra.mxu0 0
    %4500 = vmatprep.subr.bf16.mxu0 0
    %4501 = vmatpush1.bf16.xpose.msra.mxu0 0
    %4502 = vmatprep.subr.bf16.mxu0 0
    %4503 = vmatpush1.bf16.xpose.msra.mxu0 0
    %4504 = vmatprep.subr.bf16.mxu0 0
    %4505 = vmatpush1.bf16.xpose.msra.mxu0 0
    %4506 = vmatprep.subr.bf16.mxu0 0
    %4507 = vmatpush1.bf16.xpose.msra.mxu0 0
    %4508 = vmatprep.subr.bf16.mxu0 0
    %4509 = vmatpush1.bf16.xpose.msra.mxu0 0
    %4510 = vmatprep.subr.bf16.mxu0 0
    %4511 = vmatpush1.bf16.xpose.msra.mxu0 0
    %4512 = vmatprep.subr.bf16.mxu0 0
    %4513 = vmatpush1.bf16.xpose.msra.mxu0 0
    %4514 = vmatprep.subr.bf16.mxu0 0
    %4515 = vmatpush1.bf16.xpose.msra.mxu0 0
    %4516 = vmatprep.subr.bf16.mxu0 0
    %4517 = vmatpush1.bf16.xpose.msra.mxu0 0
    %4518 = vmatprep.subr.bf16.mxu0 0
    %4519 = vmatpush1.bf16.xpose.msra.mxu0 0
    %4520 = vmatprep.subr.bf16.mxu0 0
    %4521 = vmatpush1.bf16.xpose.msra.mxu0 0
    %4522 = vmatprep.subr.bf16.mxu0 0
    %4523 = vmatpush1.bf16.xpose.msra.mxu0 0
    %4524 = vmatprep.subr.bf16.mxu0 0
    %4525 = vmatpush1.bf16.xpose.msra.mxu0 0
    %4526 = vmatprep.mubr.bf16.mxu0 0
    %4527 = vmatmul.mubr.bf16.gmra.mrb[0].mxu0 %v4491
    %v4528 = vpop.f32.mrb[0].mxu0
    %v4529 = vadd.f32 0.0, %v4528
    %v4530 = vpop.f32.mrb[0].mxu0
    %v4531 = vpop.f32.mrb[0].mxu0
    %v4532 = vadd.f32 0.0, %v4531
    %v4533 = vpop.f32.mrb[0].mxu0
    %4534 = vmatprep.mubr.bf16.mxu0 0
    %4535 = vmatmul.mubr.bf16.gmra.mrb[0].mxu0 %v4492
    %v4536 = vpop.f32.mrb[0].mxu0
    %v4537 = vadd.f32 0.0, %v4536
    %v4538 = vpop.f32.mrb[0].mxu0
    %v4539 = vpop.f32.mrb[0].mxu0
    %v4540 = vpop.f32.mrb[0].mxu0
    %4541 = vdwg.mxu0
    %v4542 = vmul.f32 %v4529, 0.088388346
    %v4543 = vmul.f32 %v4532, 0.088388346
    %v4544 = vmul.f32 %v4537, 0.088388346
    %vm4545 = vcmp.gt.f32.partialorder %v4083, 0.5
    %v4546 = vsel %vm4545, 1, 0
    %v4547 = vlaneseq
    %v4548 = vshrl.u32 %v4547, 7
    %v4549 = vsub.s32 0, %v4548
    %v4550 = vrot.slane %v4546, %v4549
    %vm4551 = vcmp.eq.s32.totalorder %v4550, 1
    %v4552 = vsel %vm4551, %v4542, -3.4028235e+38
    %v4553 = vsel %vm4551, %v4543, -3.4028235e+38
    %v4554 = vsel %vm4551, %v4544, -3.4028235e+38
    %v4555 = vsel %vm3882, %v4552, -inf
    %4556 = vmax.xlane.f32.xlu0 %v4555
    %v4557 = vpop.xlane.xlu0 %4556
    %v4558 = vsel %vm3882, %v4553, -inf
    %4559 = vmax.xlane.f32.xlu0 %v4558
    %v4560 = vpop.xlane.xlu0 %4559
    %v4561 = vsel %vm3882, %v4554, -inf
    %4562 = vmax.xlane.f32.xlu0 %v4561
    %v4563 = vpop.xlane.xlu0 %4562
    %v4564 = vsub.f32 %v4552, %v4557
    %v4565 = vsub.f32 %v4553, %v4560
    %v4566 = vsub.f32 %v4554, %v4563
    %v4567 = vmul.f32 %v4564, 1.442695
    %v4568 = vpow.pop %v4567
    %v4569 = vmul.f32 %v4565, 1.442695
    %v4570 = vpow.pop %v4569
    %v4571 = vmul.f32 %v4566, 1.442695
    %v4572 = vpow.pop %v4571
    %v4573 = vsel %vm3882, %v4568, 0.0
    %4574 = vadd.xlane.f32.xlu0 %v4573
    %v4575 = vpop.xlane.xlu0 %4574
    %v4576 = vsel %vm3882, %v4570, 0.0
    %4577 = vadd.xlane.f32.xlu0 %v4576
    %v4578 = vpop.xlane.xlu0 %4577
    %v4579 = vsel %vm3882, %v4572, 0.0
    %4580 = vadd.xlane.f32.xlu0 %v4579
    %v4581 = vpop.xlane.xlu0 %4580
    %v4582 = vrcp.pop %v4575
    %v4583 = vmul.f32 %v4568, %v4582
    %v4584 = vrcp.pop %v4578
    %v4585 = vmul.f32 %v4570, %v4584
    %v4586 = vrcp.pop %v4581
    %v4587 = vmul.f32 %v4572, %v4586
    %v4588 = vpack.c.bf16 %v4585, %v4583
    %v4589 = vpack.c.bf16 %v4587, %v4587
    %v4590 = vpack.c.bf16 %v3989, %v3989
    %v4592 = vsel %vm3882, %v4588, 0
    %v4595 = vsel %vm3882, %v4589, 0
    %v4598 = vsel %vm3886, %v4590, 0
    %4600 = vmatprep.subr.bf16.mxu0 0
    %4601 = vmatpush1.bf16.msra.mxu0 %v4598
    %4602 = vmatprep.subr.bf16.mxu0 0
    %4603 = vmatpush1.bf16.msra.mxu0 0
    %4604 = vmatprep.subr.bf16.mxu0 0
    %4605 = vmatpush1.bf16.msra.mxu0 0
    %4606 = vmatprep.subr.bf16.mxu0 0
    %4607 = vmatpush1.bf16.msra.mxu0 0
    %4608 = vmatprep.subr.bf16.mxu0 0
    %4609 = vmatpush1.bf16.msra.mxu0 0
    %4610 = vmatprep.subr.bf16.mxu0 0
    %4611 = vmatpush1.bf16.msra.mxu0 0
    %4612 = vmatprep.subr.bf16.mxu0 0
    %4613 = vmatpush1.bf16.msra.mxu0 0
    %4614 = vmatprep.subr.bf16.mxu0 0
    %4615 = vmatpush1.bf16.msra.mxu0 0
    %4616 = vmatprep.subr.bf16.mxu0 0
    %4617 = vmatpush1.bf16.msra.mxu0 0
    %4618 = vmatprep.subr.bf16.mxu0 0
    %4619 = vmatpush1.bf16.msra.mxu0 0
    %4620 = vmatprep.subr.bf16.mxu0 0
    %4621 = vmatpush1.bf16.msra.mxu0 0
    %4622 = vmatprep.subr.bf16.mxu0 0
    %4623 = vmatpush1.bf16.msra.mxu0 0
    %4624 = vmatprep.subr.bf16.mxu0 0
    %4625 = vmatpush1.bf16.msra.mxu0 0
    %4626 = vmatprep.subr.bf16.mxu0 0
    %4627 = vmatpush1.bf16.msra.mxu0 0
    %4628 = vmatprep.subr.bf16.mxu0 0
    %4629 = vmatpush1.bf16.msra.mxu0 0
    %4630 = vmatprep.subr.bf16.mxu0 0
    %4631 = vmatpush1.bf16.msra.mxu0 0
    %4632 = vmatprep.mubr.bf16.mxu0 0
    %4633 = vmatmul.mubr.bf16.gmra.mrb[0].mxu0 %v4592
    %v4634 = vpop.f32.mrb[0].mxu0
    %v4635 = vadd.f32 0.0, %v4634
    %v4636 = vpop.f32.mrb[0].mxu0
    %v4637 = vpop.f32.mrb[0].mxu0
    %v4638 = vadd.f32 0.0, %v4637
    %v4639 = vpop.f32.mrb[0].mxu0
    %4640 = vmatprep.mubr.bf16.mxu0 0
    %4641 = vmatmul.mubr.bf16.gmra.mrb[0].mxu0 %v4595
    %v4642 = vpop.f32.mrb[0].mxu0
    %v4643 = vadd.f32 0.0, %v4642
    %v4644 = vpop.f32.mrb[0].mxu0
    %v4645 = vpop.f32.mrb[0].mxu0
    %v4646 = vpop.f32.mrb[0].mxu0
    %4647 = vdwg.mxu0
    %v4648 = vpack.c.bf16 %v4469, %v4465
    %v4649 = vpack.c.bf16 %v4475, %v4475
    %v4650 = vpack.c.bf16 %v3948, %v3948
    %4651 = vmatprep.subr.bf16.mxu0 0
    %4652 = vmatpush1.bf16.xpose.msra.mxu0 %v4650
    %4653 = vmatprep.subr.bf16.mxu0 0
    %4654 = vmatpush1.bf16.xpose.msra.mxu0 0
    %4655 = vmatprep.subr.bf16.mxu0 0
    %4656 = vmatpush1.bf16.xpose.msra.mxu0 0
    %4657 = vmatprep.subr.bf16.mxu0 0
    %4658 = vmatpush1.bf16.xpose.msra.mxu0 0
    %4659 = vmatprep.subr.bf16.mxu0 0
    %4660 = vmatpush1.bf16.xpose.msra.mxu0 0
    %4661 = vmatprep.subr.bf16.mxu0 0
    %4662 = vmatpush1.bf16.xpose.msra.mxu0 0
    %4663 = vmatprep.subr.bf16.mxu0 0
    %4664 = vmatpush1.bf16.xpose.msra.mxu0 0
    %4665 = vmatprep.subr.bf16.mxu0 0
    %4666 = vmatpush1.bf16.xpose.msra.mxu0 0
    %4667 = vmatprep.subr.bf16.mxu0 0
    %4668 = vmatpush1.bf16.xpose.msra.mxu0 0
    %4669 = vmatprep.subr.bf16.mxu0 0
    %4670 = vmatpush1.bf16.xpose.msra.mxu0 0
    %4671 = vmatprep.subr.bf16.mxu0 0
    %4672 = vmatpush1.bf16.xpose.msra.mxu0 0
    %4673 = vmatprep.subr.bf16.mxu0 0
    %4674 = vmatpush1.bf16.xpose.msra.mxu0 0
    %4675 = vmatprep.subr.bf16.mxu0 0
    %4676 = vmatpush1.bf16.xpose.msra.mxu0 0
    %4677 = vmatprep.subr.bf16.mxu0 0
    %4678 = vmatpush1.bf16.xpose.msra.mxu0 0
    %4679 = vmatprep.subr.bf16.mxu0 0
    %4680 = vmatpush1.bf16.xpose.msra.mxu0 0
    %4681 = vmatprep.subr.bf16.mxu0 0
    %4682 = vmatpush1.bf16.xpose.msra.mxu0 0
    %4683 = vmatprep.mubr.bf16.mxu0 0
    %4684 = vmatmul.mubr.bf16.gmra.mrb[0].mxu0 %v4648
    %v4685 = vpop.f32.mrb[0].mxu0
    %v4686 = vadd.f32 0.0, %v4685
    %v4687 = vpop.f32.mrb[0].mxu0
    %v4688 = vpop.f32.mrb[0].mxu0
    %v4689 = vadd.f32 0.0, %v4688
    %v4690 = vpop.f32.mrb[0].mxu0
    %4691 = vmatprep.mubr.bf16.mxu0 0
    %4692 = vmatmul.mubr.bf16.gmra.mrb[0].mxu0 %v4649
    %v4693 = vpop.f32.mrb[0].mxu0
    %v4694 = vadd.f32 0.0, %v4693
    %v4695 = vpop.f32.mrb[0].mxu0
    %v4696 = vpop.f32.mrb[0].mxu0
    %v4697 = vpop.f32.mrb[0].mxu0
    %4698 = vdwg.mxu0
    %v4699 = vmul.f32 %v4686, 0.088388346
    %v4700 = vmul.f32 %v4689, 0.088388346
    %v4701 = vmul.f32 %v4694, 0.088388346
    %v4702 = vsel %vm4551, %v4699, -3.4028235e+38
    %v4703 = vsel %vm4551, %v4700, -3.4028235e+38
    %v4704 = vsel %vm4551, %v4701, -3.4028235e+38
    %v4705 = vsel %vm3882, %v4702, -inf
    %4706 = vmax.xlane.f32.xlu0 %v4705
    %v4707 = vpop.xlane.xlu0 %4706
    %v4708 = vsel %vm3882, %v4703, -inf
    %4709 = vmax.xlane.f32.xlu0 %v4708
    %v4710 = vpop.xlane.xlu0 %4709
    %v4711 = vsel %vm3882, %v4704, -inf
    %4712 = vmax.xlane.f32.xlu0 %v4711
    %v4713 = vpop.xlane.xlu0 %4712
    %v4714 = vsub.f32 %v4702, %v4707
    %v4715 = vsub.f32 %v4703, %v4710
    %v4716 = vsub.f32 %v4704, %v4713
    %v4717 = vmul.f32 %v4714, 1.442695
    %v4718 = vpow.pop %v4717
    %v4719 = vmul.f32 %v4715, 1.442695
    %v4720 = vpow.pop %v4719
    %v4721 = vmul.f32 %v4716, 1.442695
    %v4722 = vpow.pop %v4721
    %v4723 = vsel %vm3882, %v4718, 0.0
    %4724 = vadd.xlane.f32.xlu0 %v4723
    %v4725 = vpop.xlane.xlu0 %4724
    %v4726 = vsel %vm3882, %v4720, 0.0
    %4727 = vadd.xlane.f32.xlu0 %v4726
    %v4728 = vpop.xlane.xlu0 %4727
    %v4729 = vsel %vm3882, %v4722, 0.0
    %4730 = vadd.xlane.f32.xlu0 %v4729
    %v4731 = vpop.xlane.xlu0 %4730
    %v4732 = vrcp.pop %v4725
    %v4733 = vmul.f32 %v4718, %v4732
    %v4734 = vrcp.pop %v4728
    %v4735 = vmul.f32 %v4720, %v4734
    %v4736 = vrcp.pop %v4731
    %v4737 = vmul.f32 %v4722, %v4736
    %v4738 = vpack.c.bf16 %v4735, %v4733
    %v4739 = vpack.c.bf16 %v4737, %v4737
    %v4740 = vpack.c.bf16 %v3991, %v3991
    %v4742 = vsel %vm3882, %v4738, 0
    %v4745 = vsel %vm3882, %v4739, 0
    %v4748 = vsel %vm3886, %v4740, 0
    %4750 = vmatprep.subr.bf16.mxu0 0
    %4751 = vmatpush1.bf16.msra.mxu0 %v4748
    %4752 = vmatprep.subr.bf16.mxu0 0
    %4753 = vmatpush1.bf16.msra.mxu0 0
    %4754 = vmatprep.subr.bf16.mxu0 0
    %4755 = vmatpush1.bf16.msra.mxu0 0
    %4756 = vmatprep.subr.bf16.mxu0 0
    %4757 = vmatpush1.bf16.msra.mxu0 0
    %4758 = vmatprep.subr.bf16.mxu0 0
    %4759 = vmatpush1.bf16.msra.mxu0 0
    %4760 = vmatprep.subr.bf16.mxu0 0
    %4761 = vmatpush1.bf16.msra.mxu0 0
    %4762 = vmatprep.subr.bf16.mxu0 0
    %4763 = vmatpush1.bf16.msra.mxu0 0
    %4764 = vmatprep.subr.bf16.mxu0 0
    %4765 = vmatpush1.bf16.msra.mxu0 0
    %4766 = vmatprep.subr.bf16.mxu0 0
    %4767 = vmatpush1.bf16.msra.mxu0 0
    %4768 = vmatprep.subr.bf16.mxu0 0
    %4769 = vmatpush1.bf16.msra.mxu0 0
    %4770 = vmatprep.subr.bf16.mxu0 0
    %4771 = vmatpush1.bf16.msra.mxu0 0
    %4772 = vmatprep.subr.bf16.mxu0 0
    %4773 = vmatpush1.bf16.msra.mxu0 0
    %4774 = vmatprep.subr.bf16.mxu0 0
    %4775 = vmatpush1.bf16.msra.mxu0 0
    %4776 = vmatprep.subr.bf16.mxu0 0
    %4777 = vmatpush1.bf16.msra.mxu0 0
    %4778 = vmatprep.subr.bf16.mxu0 0
    %4779 = vmatpush1.bf16.msra.mxu0 0
    %4780 = vmatprep.subr.bf16.mxu0 0
    %4781 = vmatpush1.bf16.msra.mxu0 0
    %4782 = vmatprep.mubr.bf16.mxu0 0
    %4783 = vmatmul.mubr.bf16.gmra.mrb[0].mxu0 %v4742
    %v4784 = vpop.f32.mrb[0].mxu0
    %v4785 = vadd.f32 0.0, %v4784
    %v4786 = vpop.f32.mrb[0].mxu0
    %v4787 = vpop.f32.mrb[0].mxu0
    %v4788 = vadd.f32 0.0, %v4787
    %v4789 = vpop.f32.mrb[0].mxu0
    %4790 = vmatprep.mubr.bf16.mxu0 0
    %4791 = vmatmul.mubr.bf16.gmra.mrb[0].mxu0 %v4745
    %v4792 = vpop.f32.mrb[0].mxu0
    %v4793 = vadd.f32 0.0, %v4792
    %v4794 = vpop.f32.mrb[0].mxu0
    %v4795 = vpop.f32.mrb[0].mxu0
    %v4796 = vpop.f32.mrb[0].mxu0
    %4797 = vdwg.mxu0
    %v4798 = vpack.c.bf16 %v4483, %v4477
    %v4799 = vpack.c.bf16 %v4487, %v4487
    %v4800 = vpack.c.bf16 %v3950, %v3950
    %4801 = vmatprep.subr.bf16.mxu0 0
    %4802 = vmatpush1.bf16.xpose.msra.mxu0 %v4800
    %4803 = vmatprep.subr.bf16.mxu0 0
    %4804 = vmatpush1.bf16.xpose.msra.mxu0 0
    %4805 = vmatprep.subr.bf16.mxu0 0
    %4806 = vmatpush1.bf16.xpose.msra.mxu0 0
    %4807 = vmatprep.subr.bf16.mxu0 0
    %4808 = vmatpush1.bf16.xpose.msra.mxu0 0
    %4809 = vmatprep.subr.bf16.mxu0 0
    %4810 = vmatpush1.bf16.xpose.msra.mxu0 0
    %4811 = vmatprep.subr.bf16.mxu0 0
    %4812 = vmatpush1.bf16.xpose.msra.mxu0 0
    %4813 = vmatprep.subr.bf16.mxu0 0
    %4814 = vmatpush1.bf16.xpose.msra.mxu0 0
    %4815 = vmatprep.subr.bf16.mxu0 0
    %4816 = vmatpush1.bf16.xpose.msra.mxu0 0
    %4817 = vmatprep.subr.bf16.mxu0 0
    %4818 = vmatpush1.bf16.xpose.msra.mxu0 0
    %4819 = vmatprep.subr.bf16.mxu0 0
    %4820 = vmatpush1.bf16.xpose.msra.mxu0 0
    %4821 = vmatprep.subr.bf16.mxu0 0
    %4822 = vmatpush1.bf16.xpose.msra.mxu0 0
    %4823 = vmatprep.subr.bf16.mxu0 0
    %4824 = vmatpush1.bf16.xpose.msra.mxu0 0
    %4825 = vmatprep.subr.bf16.mxu0 0
    %4826 = vmatpush1.bf16.xpose.msra.mxu0 0
    %4827 = vmatprep.subr.bf16.mxu0 0
    %4828 = vmatpush1.bf16.xpose.msra.mxu0 0
    %4829 = vmatprep.subr.bf16.mxu0 0
    %4830 = vmatpush1.bf16.xpose.msra.mxu0 0
    %4831 = vmatprep.subr.bf16.mxu0 0
    %4832 = vmatpush1.bf16.xpose.msra.mxu0 0
    %4833 = vmatprep.mubr.bf16.mxu0 0
    %4834 = vmatmul.mubr.bf16.gmra.mrb[0].mxu0 %v4798
    %v4835 = vpop.f32.mrb[0].mxu0
    %v4836 = vadd.f32 0.0, %v4835
    %v4837 = vpop.f32.mrb[0].mxu0
    %v4838 = vpop.f32.mrb[0].mxu0
    %v4839 = vadd.f32 0.0, %v4838
    %v4840 = vpop.f32.mrb[0].mxu0
    %4841 = vmatprep.mubr.bf16.mxu0 0
    %4842 = vmatmul.mubr.bf16.gmra.mrb[0].mxu0 %v4799
    %v4843 = vpop.f32.mrb[0].mxu0
    %v4844 = vadd.f32 0.0, %v4843
    %v4845 = vpop.f32.mrb[0].mxu0
    %v4846 = vpop.f32.mrb[0].mxu0
    %v4847 = vpop.f32.mrb[0].mxu0
    %4848 = vdwg.mxu0
    %v4849 = vmul.f32 %v4836, 0.088388346
    %v4850 = vmul.f32 %v4839, 0.088388346
    %v4851 = vmul.f32 %v4844, 0.088388346
    %vm4852 = vcmp.gt.f32.partialorder %v4085, 0.5
    %v4853 = vsel %vm4852, 1, 0
    %v4854 = vlaneseq
    %v4855 = vshrl.u32 %v4854, 7
    %v4856 = vsub.s32 0, %v4855
    %v4857 = vrot.slane %v4853, %v4856
    %vm4858 = vcmp.eq.s32.totalorder %v4857, 1
    %v4859 = vsel %vm4858, %v4849, -3.4028235e+38
    %v4860 = vsel %vm4858, %v4850, -3.4028235e+38
    %v4861 = vsel %vm4858, %v4851, -3.4028235e+38
    %v4862 = vsel %vm3882, %v4859, -inf
    %4863 = vmax.xlane.f32.xlu0 %v4862
    %v4864 = vpop.xlane.xlu0 %4863
    %v4865 = vsel %vm3882, %v4860, -inf
    %4866 = vmax.xlane.f32.xlu0 %v4865
    %v4867 = vpop.xlane.xlu0 %4866
    %v4868 = vsel %vm3882, %v4861, -inf
    %4869 = vmax.xlane.f32.xlu0 %v4868
    %v4870 = vpop.xlane.xlu0 %4869
    %v4871 = vsub.f32 %v4859, %v4864
    %v4872 = vsub.f32 %v4860, %v4867
    %v4873 = vsub.f32 %v4861, %v4870
    %v4874 = vmul.f32 %v4871, 1.442695
    %v4875 = vpow.pop %v4874
    %v4876 = vmul.f32 %v4872, 1.442695
    %v4877 = vpow.pop %v4876
    %v4878 = vmul.f32 %v4873, 1.442695
    %v4879 = vpow.pop %v4878
    %v4880 = vsel %vm3882, %v4875, 0.0
    %4881 = vadd.xlane.f32.xlu0 %v4880
    %v4882 = vpop.xlane.xlu0 %4881
    %v4883 = vsel %vm3882, %v4877, 0.0
    %4884 = vadd.xlane.f32.xlu0 %v4883
    %v4885 = vpop.xlane.xlu0 %4884
    %v4886 = vsel %vm3882, %v4879, 0.0
    %4887 = vadd.xlane.f32.xlu0 %v4886
    %v4888 = vpop.xlane.xlu0 %4887
    %v4889 = vrcp.pop %v4882
    %v4890 = vmul.f32 %v4875, %v4889
    %v4891 = vrcp.pop %v4885
    %v4892 = vmul.f32 %v4877, %v4891
    %v4893 = vrcp.pop %v4888
    %v4894 = vmul.f32 %v4879, %v4893
    %v4895 = vpack.c.bf16 %v4892, %v4890
    %v4896 = vpack.c.bf16 %v4894, %v4894
    %v4897 = vpack.c.bf16 %v3993, %v3993
    %v4899 = vsel %vm3882, %v4895, 0
    %v4902 = vsel %vm3882, %v4896, 0
    %v4905 = vsel %vm3886, %v4897, 0
    %4907 = vmatprep.subr.bf16.mxu0 0
    %4908 = vmatpush1.bf16.msra.mxu0 %v4905
    %4909 = vmatprep.subr.bf16.mxu0 0
    %4910 = vmatpush1.bf16.msra.mxu0 0
    %4911 = vmatprep.subr.bf16.mxu0 0
    %4912 = vmatpush1.bf16.msra.mxu0 0
    %4913 = vmatprep.subr.bf16.mxu0 0
    %4914 = vmatpush1.bf16.msra.mxu0 0
    %4915 = vmatprep.subr.bf16.mxu0 0
    %4916 = vmatpush1.bf16.msra.mxu0 0
    %4917 = vmatprep.subr.bf16.mxu0 0
    %4918 = vmatpush1.bf16.msra.mxu0 0
    %4919 = vmatprep.subr.bf16.mxu0 0
    %4920 = vmatpush1.bf16.msra.mxu0 0
    %4921 = vmatprep.subr.bf16.mxu0 0
    %4922 = vmatpush1.bf16.msra.mxu0 0
    %4923 = vmatprep.subr.bf16.mxu0 0
    %4924 = vmatpush1.bf16.msra.mxu0 0
    %4925 = vmatprep.subr.bf16.mxu0 0
    %4926 = vmatpush1.bf16.msra.mxu0 0
    %4927 = vmatprep.subr.bf16.mxu0 0
    %4928 = vmatpush1.bf16.msra.mxu0 0
    %4929 = vmatprep.subr.bf16.mxu0 0
    %4930 = vmatpush1.bf16.msra.mxu0 0
    %4931 = vmatprep.subr.bf16.mxu0 0
    %4932 = vmatpush1.bf16.msra.mxu0 0
    %4933 = vmatprep.subr.bf16.mxu0 0
    %4934 = vmatpush1.bf16.msra.mxu0 0
    %4935 = vmatprep.subr.bf16.mxu0 0
    %4936 = vmatpush1.bf16.msra.mxu0 0
    %4937 = vmatprep.subr.bf16.mxu0 0
    %4938 = vmatpush1.bf16.msra.mxu0 0
    %4939 = vmatprep.mubr.bf16.mxu0 0
    %4940 = vmatmul.mubr.bf16.gmra.mrb[0].mxu0 %v4899
    %v4941 = vpop.f32.mrb[0].mxu0
    %v4942 = vadd.f32 0.0, %v4941
    %v4943 = vpop.f32.mrb[0].mxu0
    %v4944 = vpop.f32.mrb[0].mxu0
    %v4945 = vadd.f32 0.0, %v4944
    %v4946 = vpop.f32.mrb[0].mxu0
    %4947 = vmatprep.mubr.bf16.mxu0 0
    %4948 = vmatmul.mubr.bf16.gmra.mrb[0].mxu0 %v4902
    %v4949 = vpop.f32.mrb[0].mxu0
    %v4950 = vadd.f32 0.0, %v4949
    %v4951 = vpop.f32.mrb[0].mxu0
    %v4952 = vpop.f32.mrb[0].mxu0
    %v4953 = vpop.f32.mrb[0].mxu0
    %4954 = vdwg.mxu0
    %v4955 = vpack.c.bf16 %v4485, %v4479
    %v4956 = vpack.c.bf16 %v4489, %v4489
    %v4957 = vpack.c.bf16 %v3952, %v3952
    %4958 = vmatprep.subr.bf16.mxu0 0
    %4959 = vmatpush1.bf16.xpose.msra.mxu0 %v4957
    %4960 = vmatprep.subr.bf16.mxu0 0
    %4961 = vmatpush1.bf16.xpose.msra.mxu0 0
    %4962 = vmatprep.subr.bf16.mxu0 0
    %4963 = vmatpush1.bf16.xpose.msra.mxu0 0
    %4964 = vmatprep.subr.bf16.mxu0 0
    %4965 = vmatpush1.bf16.xpose.msra.mxu0 0
    %4966 = vmatprep.subr.bf16.mxu0 0
    %4967 = vmatpush1.bf16.xpose.msra.mxu0 0
    %4968 = vmatprep.subr.bf16.mxu0 0
    %4969 = vmatpush1.bf16.xpose.msra.mxu0 0
    %4970 = vmatprep.subr.bf16.mxu0 0
    %4971 = vmatpush1.bf16.xpose.msra.mxu0 0
    %4972 = vmatprep.subr.bf16.mxu0 0
    %4973 = vmatpush1.bf16.xpose.msra.mxu0 0
    %4974 = vmatprep.subr.bf16.mxu0 0
    %4975 = vmatpush1.bf16.xpose.msra.mxu0 0
    %4976 = vmatprep.subr.bf16.mxu0 0
    %4977 = vmatpush1.bf16.xpose.msra.mxu0 0
    %4978 = vmatprep.subr.bf16.mxu0 0
    %4979 = vmatpush1.bf16.xpose.msra.mxu0 0
    %4980 = vmatprep.subr.bf16.mxu0 0
    %4981 = vmatpush1.bf16.xpose.msra.mxu0 0
    %4982 = vmatprep.subr.bf16.mxu0 0
    %4983 = vmatpush1.bf16.xpose.msra.mxu0 0
    %4984 = vmatprep.subr.bf16.mxu0 0
    %4985 = vmatpush1.bf16.xpose.msra.mxu0 0
    %4986 = vmatprep.subr.bf16.mxu0 0
    %4987 = vmatpush1.bf16.xpose.msra.mxu0 0
    %4988 = vmatprep.subr.bf16.mxu0 0
    %4989 = vmatpush1.bf16.xpose.msra.mxu0 0
    %4990 = vmatprep.mubr.bf16.mxu0 0
    %4991 = vmatmul.mubr.bf16.gmra.mrb[0].mxu0 %v4955
    %v4992 = vpop.f32.mrb[0].mxu0
    %v4993 = vadd.f32 0.0, %v4992
    %v4994 = vpop.f32.mrb[0].mxu0
    %v4995 = vpop.f32.mrb[0].mxu0
    %v4996 = vadd.f32 0.0, %v4995
    %v4997 = vpop.f32.mrb[0].mxu0
    %4998 = vmatprep.mubr.bf16.mxu0 0
    %4999 = vmatmul.mubr.bf16.gmra.mrb[0].mxu0 %v4956
    %v5000 = vpop.f32.mrb[0].mxu0
    %v5001 = vadd.f32 0.0, %v5000
    %v5002 = vpop.f32.mrb[0].mxu0
    %v5003 = vpop.f32.mrb[0].mxu0
    %v5004 = vpop.f32.mrb[0].mxu0
    %5005 = vdwg.mxu0
    %v5006 = vmul.f32 %v4993, 0.088388346
    %v5007 = vmul.f32 %v4996, 0.088388346
    %v5008 = vmul.f32 %v5001, 0.088388346
    %v5009 = vsel %vm4858, %v5006, -3.4028235e+38
    %v5010 = vsel %vm4858, %v5007, -3.4028235e+38
    %v5011 = vsel %vm4858, %v5008, -3.4028235e+38
    %v5012 = vsel %vm3882, %v5009, -inf
    %5013 = vmax.xlane.f32.xlu0 %v5012
    %v5014 = vpop.xlane.xlu0 %5013
    %v5015 = vsel %vm3882, %v5010, -inf
    %5016 = vmax.xlane.f32.xlu0 %v5015
    %v5017 = vpop.xlane.xlu0 %5016
    %v5018 = vsel %vm3882, %v5011, -inf
    %5019 = vmax.xlane.f32.xlu0 %v5018
    %v5020 = vpop.xlane.xlu0 %5019
    %v5021 = vsub.f32 %v5009, %v5014
    %v5022 = vsub.f32 %v5010, %v5017
    %v5023 = vsub.f32 %v5011, %v5020
    %v5024 = vmul.f32 %v5021, 1.442695
    %v5025 = vpow.pop %v5024
    %v5026 = vmul.f32 %v5022, 1.442695
    %v5027 = vpow.pop %v5026
    %v5028 = vmul.f32 %v5023, 1.442695
    %v5029 = vpow.pop %v5028
    %v5030 = vsel %vm3882, %v5025, 0.0
    %5031 = vadd.xlane.f32.xlu0 %v5030
    %v5032 = vpop.xlane.xlu0 %5031
    %v5033 = vsel %vm3882, %v5027, 0.0
    %5034 = vadd.xlane.f32.xlu0 %v5033
    %v5035 = vpop.xlane.xlu0 %5034
    %v5036 = vsel %vm3882, %v5029, 0.0
    %5037 = vadd.xlane.f32.xlu0 %v5036
    %v5038 = vpop.xlane.xlu0 %5037
    %v5039 = vrcp.pop %v5032
    %v5040 = vmul.f32 %v5025, %v5039
    %v5041 = vrcp.pop %v5035
    %v5042 = vmul.f32 %v5027, %v5041
    %v5043 = vrcp.pop %v5038
    %v5044 = vmul.f32 %v5029, %v5043
    %v5045 = vpack.c.bf16 %v5042, %v5040
    %v5046 = vpack.c.bf16 %v5044, %v5044
    %v5047 = vpack.c.bf16 %v3995, %v3995
    %v5049 = vsel %vm3882, %v5045, 0
    %v5052 = vsel %vm3882, %v5046, 0
    %v5055 = vsel %vm3886, %v5047, 0
    %5057 = vmatprep.subr.bf16.mxu0 0
    %5058 = vmatpush1.bf16.msra.mxu0 %v5055
    %5059 = vmatprep.subr.bf16.mxu0 0
    %5060 = vmatpush1.bf16.msra.mxu0 0
    %5061 = vmatprep.subr.bf16.mxu0 0
    %5062 = vmatpush1.bf16.msra.mxu0 0
    %5063 = vmatprep.subr.bf16.mxu0 0
    %5064 = vmatpush1.bf16.msra.mxu0 0
    %5065 = vmatprep.subr.bf16.mxu0 0
    %5066 = vmatpush1.bf16.msra.mxu0 0
    %5067 = vmatprep.subr.bf16.mxu0 0
    %5068 = vmatpush1.bf16.msra.mxu0 0
    %5069 = vmatprep.subr.bf16.mxu0 0
    %5070 = vmatpush1.bf16.msra.mxu0 0
    %5071 = vmatprep.subr.bf16.mxu0 0
    %5072 = vmatpush1.bf16.msra.mxu0 0
    %5073 = vmatprep.subr.bf16.mxu0 0
    %5074 = vmatpush1.bf16.msra.mxu0 0
    %5075 = vmatprep.subr.bf16.mxu0 0
    %5076 = vmatpush1.bf16.msra.mxu0 0
    %5077 = vmatprep.subr.bf16.mxu0 0
    %5078 = vmatpush1.bf16.msra.mxu0 0
    %5079 = vmatprep.subr.bf16.mxu0 0
    %5080 = vmatpush1.bf16.msra.mxu0 0
    %5081 = vmatprep.subr.bf16.mxu0 0
    %5082 = vmatpush1.bf16.msra.mxu0 0
    %5083 = vmatprep.subr.bf16.mxu0 0
    %5084 = vmatpush1.bf16.msra.mxu0 0
    %5085 = vmatprep.subr.bf16.mxu0 0
    %5086 = vmatpush1.bf16.msra.mxu0 0
    %5087 = vmatprep.subr.bf16.mxu0 0
    %5088 = vmatpush1.bf16.msra.mxu0 0
    %5089 = vmatprep.mubr.bf16.mxu0 0
    %5090 = vmatmul.mubr.bf16.gmra.mrb[0].mxu0 %v5049
    %v5091 = vpop.f32.mrb[0].mxu0
    %v5092 = vadd.f32 0.0, %v5091
    %v5093 = vpop.f32.mrb[0].mxu0
    %v5094 = vpop.f32.mrb[0].mxu0
    %v5095 = vadd.f32 0.0, %v5094
    %v5096 = vpop.f32.mrb[0].mxu0
    %5097 = vmatprep.mubr.bf16.mxu0 0
    %5098 = vmatmul.mubr.bf16.gmra.mrb[0].mxu0 %v5052
    %v5099 = vpop.f32.mrb[0].mxu0
    %v5100 = vadd.f32 0.0, %v5099
    %v5101 = vpop.f32.mrb[0].mxu0
    %v5102 = vpop.f32.mrb[0].mxu0
    %v5103 = vpop.f32.mrb[0].mxu0
    %5104 = vdwg.mxu0
    %v5105 = vpack.c.bf16 %v4638, %v4635
    %v5106 = vpack.c.bf16 %v4788, %v4785
    %v5107 = vpack.c.bf16 %v4942, %v4643
    %v5108 = vpack.c.bf16 %v5092, %v4793
    %v5109 = vpack.c.bf16 %v4950, %v4945
    %v5110 = vpack.c.bf16 %v5100, %v5095
    %v5111 = vld [vmem:[#allocation18] sm:$0xff]
    %v5112 = vld [vmem:[#allocation18 + $0x8] sm:$0xff]
    %v5113 = vld [vmem:[#allocation18 + $0x10] sm:$0xff]
    %v5114 = vld [vmem:[#allocation18 + $0x18] sm:$0xff]
    %v5115 = vld [vmem:[#allocation18 + $0x20] sm:$0xff]
    %v5116 = vld [vmem:[#allocation18 + $0x28] sm:$0xff]
    %v5117 = vld [vmem:[#allocation18 + $0x30] sm:$0xff]
    %v5118 = vld [vmem:[#allocation18 + $0x38] sm:$0xff]
    %v5119 = vld [vmem:[#allocation18 + $0x40] sm:$0xff]
    %v5120 = vld [vmem:[#allocation18 + $0x48] sm:$0xff]
    %v5121 = vld [vmem:[#allocation18 + $0x50] sm:$0xff]
    %v5122 = vld [vmem:[#allocation18 + $0x58] sm:$0xff]
    %v5123 = vld [vmem:[#allocation18 + $0x60] sm:$0xff]
    %v5124 = vld [vmem:[#allocation18 + $0x68] sm:$0xff]
    %v5125 = vld [vmem:[#allocation18 + $0x70] sm:$0xff]
    %v5126 = vld [vmem:[#allocation18 + $0x78] sm:$0xff]
    %v5127 = vld [vmem:[#allocation18 + $0x80] sm:$0xff]
    %v5128 = vld [vmem:[#allocation18 + $0x88] sm:$0xff]
    %v5129 = vld [vmem:[#allocation18 + $0x90] sm:$0xff]
    %v5130 = vld [vmem:[#allocation18 + $0x98] sm:$0xff]
    %v5131 = vld [vmem:[#allocation18 + $0xa0] sm:$0xff]
    %v5132 = vld [vmem:[#allocation18 + $0xa8] sm:$0xff]
    %v5133 = vld [vmem:[#allocation18 + $0xb0] sm:$0xff]
    %v5134 = vld [vmem:[#allocation18 + $0xb8] sm:$0xff]
    %v5135 = vld [vmem:[#allocation18 + $0xc0] sm:$0xff]
    %v5136 = vld [vmem:[#allocation18 + $0xc8] sm:$0xff]
    %v5137 = vld [vmem:[#allocation18 + $0xd0] sm:$0xff]
    %v5138 = vld [vmem:[#allocation18 + $0xd8] sm:$0xff]
    %v5139 = vld [vmem:[#allocation18 + $0xe0] sm:$0xff]
    %v5140 = vld [vmem:[#allocation18 + $0xe8] sm:$0xff]
    %v5141 = vld [vmem:[#allocation18 + $0xf0] sm:$0xff]
    %v5142 = vld [vmem:[#allocation18 + $0xf8] sm:$0xff]
    %v5143 = vld [vmem:[#allocation19] sm:$0x3]
    %v5145 = vlaneseq
    %v5146 = vshrl.u32 %v5145, 7
    %v5147 = vsub.s32 0, %v5146
    %v5148 = vrot.slane %v5143, %v5147
    %v5149 = vlaneseq
    %v5150 = vshrl.u32 %v5149, 7
    %v5151 = vsub.s32 1, %v5150
    %v5152 = vrot.slane %v5143, %v5151
    %v5187 = vunpack.c.l.b16 %v5111
    %v5188 = vunpack.c.h.b16 %v5111
    %v5189 = vunpack.c.l.b16 %v5112
    %v5190 = vunpack.c.h.b16 %v5112
    %v5191 = vunpack.c.l.b16 %v5113
    %v5192 = vunpack.c.h.b16 %v5113
    %v5193 = vunpack.c.l.b16 %v5114
    %v5194 = vunpack.c.h.b16 %v5114
    %v5195 = vunpack.c.l.b16 %v5115
    %v5196 = vunpack.c.h.b16 %v5115
    %v5197 = vunpack.c.l.b16 %v5116
    %v5198 = vunpack.c.h.b16 %v5116
    %v5199 = vunpack.c.l.b16 %v5117
    %v5200 = vunpack.c.h.b16 %v5117
    %v5201 = vunpack.c.l.b16 %v5118
    %v5202 = vunpack.c.h.b16 %v5118
    %v5203 = vunpack.c.l.b16 %v5119
    %v5204 = vunpack.c.h.b16 %v5119
    %v5205 = vunpack.c.l.b16 %v5120
    %v5206 = vunpack.c.h.b16 %v5120
    %v5207 = vunpack.c.l.b16 %v5121
    %v5208 = vunpack.c.h.b16 %v5121
    %v5209 = vunpack.c.l.b16 %v5122
    %v5210 = vunpack.c.h.b16 %v5122
    %v5211 = vunpack.c.l.b16 %v5123
    %v5212 = vunpack.c.h.b16 %v5123
    %v5213 = vunpack.c.l.b16 %v5124
    %v5214 = vunpack.c.h.b16 %v5124
    %v5215 = vunpack.c.l.b16 %v5125
    %v5216 = vunpack.c.h.b16 %v5125
    %v5217 = vunpack.c.l.b16 %v5126
    %v5218 = vunpack.c.h.b16 %v5126
    %v5219 = vunpack.c.l.b16 %v5127
    %v5220 = vunpack.c.h.b16 %v5127
    %v5221 = vunpack.c.l.b16 %v5128
    %v5222 = vunpack.c.h.b16 %v5128
    %v5223 = vunpack.c.l.b16 %v5129
    %v5224 = vunpack.c.h.b16 %v5129
    %v5225 = vunpack.c.l.b16 %v5130
    %v5226 = vunpack.c.h.b16 %v5130
    %v5227 = vunpack.c.l.b16 %v5131
    %v5228 = vunpack.c.h.b16 %v5131
    %v5229 = vunpack.c.l.b16 %v5132
    %v5230 = vunpack.c.h.b16 %v5132
    %v5231 = vunpack.c.l.b16 %v5133
    %v5232 = vunpack.c.h.b16 %v5133
    %v5233 = vunpack.c.l.b16 %v5134
    %v5234 = vunpack.c.h.b16 %v5134
    %v5235 = vunpack.c.l.b16 %v5135
    %v5236 = vunpack.c.h.b16 %v5135
    %v5237 = vunpack.c.l.b16 %v5136
    %v5238 = vunpack.c.h.b16 %v5136
    %v5239 = vunpack.c.l.b16 %v5137
    %v5240 = vunpack.c.h.b16 %v5137
    %v5241 = vunpack.c.l.b16 %v5138
    %v5242 = vunpack.c.h.b16 %v5138
    %v5243 = vunpack.c.l.b16 %v5139
    %v5244 = vunpack.c.h.b16 %v5139
    %v5245 = vunpack.c.l.b16 %v5140
    %v5246 = vunpack.c.h.b16 %v5140
    %v5247 = vunpack.c.l.b16 %v5141
    %v5248 = vunpack.c.h.b16 %v5141
    %v5249 = vunpack.c.l.b16 %v5142
    %v5250 = vunpack.c.h.b16 %v5142
    %v5251 = vpack.c.b16 %v5189, %v5187
    %v5252 = vpack.c.b16 %v5190, %v5188
    %v5253 = vpack.c.b16 %v5193, %v5191
    %v5254 = vpack.c.b16 %v5194, %v5192
    %v5255 = vpack.c.b16 %v5197, %v5195
    %v5256 = vpack.c.b16 %v5198, %v5196
    %v5257 = vpack.c.b16 %v5201, %v5199
    %v5258 = vpack.c.b16 %v5202, %v5200
    %v5259 = vpack.c.b16 %v5205, %v5203
    %v5260 = vpack.c.b16 %v5206, %v5204
    %v5261 = vpack.c.b16 %v5209, %v5207
    %v5262 = vpack.c.b16 %v5210, %v5208
    %v5263 = vpack.c.b16 %v5213, %v5211
    %v5264 = vpack.c.b16 %v5214, %v5212
    %v5265 = vpack.c.b16 %v5217, %v5215
    %v5266 = vpack.c.b16 %v5218, %v5216
    %v5267 = vpack.c.b16 %v5221, %v5219
    %v5268 = vpack.c.b16 %v5222, %v5220
    %v5269 = vpack.c.b16 %v5225, %v5223
    %v5270 = vpack.c.b16 %v5226, %v5224
    %v5271 = vpack.c.b16 %v5229, %v5227
    %v5272 = vpack.c.b16 %v5230, %v5228
    %v5273 = vpack.c.b16 %v5233, %v5231
    %v5274 = vpack.c.b16 %v5234, %v5232
    %v5275 = vpack.c.b16 %v5237, %v5235
    %v5276 = vpack.c.b16 %v5238, %v5236
    %v5277 = vpack.c.b16 %v5241, %v5239
    %v5278 = vpack.c.b16 %v5242, %v5240
    %v5279 = vpack.c.b16 %v5245, %v5243
    %v5280 = vpack.c.b16 %v5246, %v5244
    %v5281 = vpack.c.b16 %v5249, %v5247
    %v5282 = vpack.c.b16 %v5250, %v5248
    %5315 = vmatprep.subr.bf16.mxu0 %v5252
    %5316 = vmatpush1.bf16.msra.mxu0 %v5251
    %5317 = vmatprep.subr.bf16.mxu0 %v5254
    %5318 = vmatpush1.bf16.msra.mxu0 %v5253
    %5319 = vmatprep.subr.bf16.mxu0 %v5256
    %5320 = vmatpush1.bf16.msra.mxu0 %v5255
    %5321 = vmatprep.subr.bf16.mxu0 %v5258
    %5322 = vmatpush1.bf16.msra.mxu0 %v5257
    %5323 = vmatprep.subr.bf16.mxu0 %v5260
    %5324 = vmatpush1.bf16.msra.mxu0 %v5259
    %5325 = vmatprep.subr.bf16.mxu0 %v5262
    %5326 = vmatpush1.bf16.msra.mxu0 %v5261
    %5327 = vmatprep.subr.bf16.mxu0 %v5264
    %5328 = vmatpush1.bf16.msra.mxu0 %v5263
    %5329 = vmatprep.subr.bf16.mxu0 %v5266
    %5330 = vmatpush1.bf16.msra.mxu0 %v5265
    %5331 = vmatprep.subr.bf16.mxu0 %v5268
    %5332 = vmatpush1.bf16.msra.mxu0 %v5267
    %5333 = vmatprep.subr.bf16.mxu0 %v5270
    %5334 = vmatpush1.bf16.msra.mxu0 %v5269
    %5335 = vmatprep.subr.bf16.mxu0 %v5272
    %5336 = vmatpush1.bf16.msra.mxu0 %v5271
    %5337 = vmatprep.subr.bf16.mxu0 %v5274
    %5338 = vmatpush1.bf16.msra.mxu0 %v5273
    %5339 = vmatprep.subr.bf16.mxu0 %v5276
    %5340 = vmatpush1.bf16.msra.mxu0 %v5275
    %5341 = vmatprep.subr.bf16.mxu0 %v5278
    %5342 = vmatpush1.bf16.msra.mxu0 %v5277
    %5343 = vmatprep.subr.bf16.mxu0 %v5280
    %5344 = vmatpush1.bf16.msra.mxu0 %v5279
    %5345 = vmatprep.subr.bf16.mxu0 %v5282
    %5346 = vmatpush1.bf16.msra.mxu0 %v5281
    %5347 = vmatprep.mubr.bf16.mxu0 %v5106
    %5348 = vmatmul.mubr.bf16.gmra.mrb[0].mxu0 %v5105
    %v5349 = vpop.f32.mrb[0].mxu0
    %v5350 = vadd.f32 %v5148, %v5349
    %v5351 = vpop.f32.mrb[0].mxu0
    %v5352 = vadd.f32 %v5152, %v5351
    %v5353 = vpop.f32.mrb[0].mxu0
    %v5354 = vadd.f32 %v5148, %v5353
    %v5355 = vpop.f32.mrb[0].mxu0
    %v5356 = vadd.f32 %v5152, %v5355
    %5357 = vmatprep.mubr.bf16.mxu0 %v5108
    %5358 = vmatmul.mubr.bf16.gmra.mrb[0].mxu0 %v5107
    %v5359 = vpop.f32.mrb[0].mxu0
    %v5360 = vadd.f32 %v5148, %v5359
    %v5361 = vpop.f32.mrb[0].mxu0
    %v5362 = vadd.f32 %v5152, %v5361
    %v5363 = vpop.f32.mrb[0].mxu0
    %v5364 = vadd.f32 %v5148, %v5363
    %v5365 = vpop.f32.mrb[0].mxu0
    %v5366 = vadd.f32 %v5152, %v5365
    %5367 = vmatprep.mubr.bf16.mxu0 %v5110
    %5368 = vmatmul.mubr.bf16.gmra.mrb[0].mxu0 %v5109
    %v5369 = vpop.f32.mrb[0].mxu0
    %v5370 = vadd.f32 %v5148, %v5369
    %v5371 = vpop.f32.mrb[0].mxu0
    %v5372 = vadd.f32 %v5152, %v5371
    %v5373 = vpop.f32.mrb[0].mxu0
    %v5374 = vadd.f32 %v5148, %v5373
    %v5375 = vpop.f32.mrb[0].mxu0
    %v5376 = vadd.f32 %v5152, %v5375
    %5377 = vdwg.mxu0
    %v5378 = vadd.f32 %v5350, %v3842
    %v5379 = vadd.f32 %v5352, %v3843
    %v5380 = vadd.f32 %v5354, %v3844
    %v5381 = vadd.f32 %v5356, %v3845
    %v5382 = vadd.f32 %v5360, %v3846
    %v5383 = vadd.f32 %v5362, %v3847
    %v5384 = vadd.f32 %v5364, %v3848
    %v5385 = vadd.f32 %v5366, %v3849
    %v5386 = vadd.f32 %v5370, %v3850
    %v5387 = vadd.f32 %v5372, %v3851
    %v5388 = vadd.f32 %v5374, %v3852
    %v5389 = vadd.f32 %v5376, %v3853
    %v5390 = vadd.f32 %v5378, %v5379
    %5391 = vadd.xlane.f32.xlu0 %v5390
    %v5392 = vpop.xlane.xlu0 %5391
    %v5393 = vadd.f32 %v5380, %v5381
    %5394 = vadd.xlane.f32.xlu0 %v5393
    %v5395 = vpop.xlane.xlu0 %5394
    %v5396 = vadd.f32 %v5382, %v5383
    %5397 = vadd.xlane.f32.xlu0 %v5396
    %v5398 = vpop.xlane.xlu0 %5397
    %v5399 = vadd.f32 %v5384, %v5385
    %5400 = vadd.xlane.f32.xlu0 %v5399
    %v5401 = vpop.xlane.xlu0 %5400
    %v5402 = vadd.f32 %v5386, %v5387
    %5403 = vadd.xlane.f32.xlu0 %v5402
    %v5404 = vpop.xlane.xlu0 %5403
    %v5405 = vadd.f32 %v5388, %v5389
    %5406 = vadd.xlane.f32.xlu0 %v5405
    %v5407 = vpop.xlane.xlu0 %5406
    %v5408 = vmul.f32 %v5392, %v3727
    %v5409 = vmul.f32 %v5395, %v3727
    %v5410 = vmul.f32 %v5398, %v3727
    %v5411 = vmul.f32 %v5401, %v3727
    %v5412 = vmul.f32 %v5404, %v3727
    %v5413 = vmul.f32 %v5407, %v3727
    %v5414 = vsub.f32 %v5378, %v5408
    %v5415 = vsub.f32 %v5379, %v5408
    %v5416 = vsub.f32 %v5380, %v5409
    %v5417 = vsub.f32 %v5381, %v5409
    %v5418 = vsub.f32 %v5382, %v5410
    %v5419 = vsub.f32 %v5383, %v5410
    %v5420 = vsub.f32 %v5384, %v5411
    %v5421 = vsub.f32 %v5385, %v5411
    %v5422 = vsub.f32 %v5386, %v5412
    %v5423 = vsub.f32 %v5387, %v5412
    %v5424 = vsub.f32 %v5388, %v5413
    %v5425 = vsub.f32 %v5389, %v5413
    %v5426 = vmul.f32 %v5414, %v5414
    %v5427 = vmul.f32 %v5415, %v5415
    %v5428 = vmul.f32 %v5416, %v5416
    %v5429 = vmul.f32 %v5417, %v5417
    %v5430 = vmul.f32 %v5418, %v5418
    %v5431 = vmul.f32 %v5419, %v5419
    %v5432 = vmul.f32 %v5420, %v5420
    %v5433 = vmul.f32 %v5421, %v5421
    %v5434 = vmul.f32 %v5422, %v5422
    %v5435 = vmul.f32 %v5423, %v5423
    %v5436 = vmul.f32 %v5424, %v5424
    %v5437 = vmul.f32 %v5425, %v5425
    %v5438 = vadd.f32 %v5426, %v5427
    %5439 = vadd.xlane.f32.xlu0 %v5438
    %v5440 = vpop.xlane.xlu0 %5439
    %v5441 = vadd.f32 %v5428, %v5429
    %5442 = vadd.xlane.f32.xlu0 %v5441
    %v5443 = vpop.xlane.xlu0 %5442
    %v5444 = vadd.f32 %v5430, %v5431
    %5445 = vadd.xlane.f32.xlu0 %v5444
    %v5446 = vpop.xlane.xlu0 %5445
    %v5447 = vadd.f32 %v5432, %v5433
    %5448 = vadd.xlane.f32.xlu0 %v5447
    %v5449 = vpop.xlane.xlu0 %5448
    %v5450 = vadd.f32 %v5434, %v5435
    %5451 = vadd.xlane.f32.xlu0 %v5450
    %v5452 = vpop.xlane.xlu0 %5451
    %v5453 = vadd.f32 %v5436, %v5437
    %5454 = vadd.xlane.f32.xlu0 %v5453
    %v5455 = vpop.xlane.xlu0 %5454
    %v5456 = vmul.f32 %v5440, %v3727
    %v5457 = vmul.f32 %v5443, %v3727
    %v5458 = vmul.f32 %v5446, %v3727
    %v5459 = vmul.f32 %v5449, %v3727
    %v5460 = vmul.f32 %v5452, %v3727
    %v5461 = vmul.f32 %v5455, %v3727
    %v5462 = vadd.f32 %v5456, 1e-05
    %v5463 = vadd.f32 %v5457, 1e-05
    %v5464 = vadd.f32 %v5458, 1e-05
    %v5465 = vadd.f32 %v5459, 1e-05
    %v5466 = vadd.f32 %v5460, 1e-05
    %v5467 = vadd.f32 %v5461, 1e-05
    %v5468 = vrsqrt.pop %v5462
    %v5469 = vrsqrt.pop %v5463
    %v5470 = vrsqrt.pop %v5464
    %v5471 = vrsqrt.pop %v5465
    %v5472 = vrsqrt.pop %v5466
    %v5473 = vrsqrt.pop %v5467
    %v5474 = vmul.f32 %v5414, %v5468
    %v5475 = vmul.f32 %v5415, %v5468
    %v5476 = vmul.f32 %v5416, %v5469
    %v5477 = vmul.f32 %v5417, %v5469
    %v5478 = vmul.f32 %v5418, %v5470
    %v5479 = vmul.f32 %v5419, %v5470
    %v5480 = vmul.f32 %v5420, %v5471
    %v5481 = vmul.f32 %v5421, %v5471
    %v5482 = vmul.f32 %v5422, %v5472
    %v5483 = vmul.f32 %v5423, %v5472
    %v5484 = vmul.f32 %v5424, %v5473
    %v5485 = vmul.f32 %v5425, %v5473
    %v5486 = vld [vmem:[#allocation21] sm:$0x3]
    %v5488 = vlaneseq
    %v5489 = vshrl.u32 %v5488, 7
    %v5490 = vsub.s32 0, %v5489
    %v5491 = vrot.slane %v5486, %v5490
    %v5492 = vlaneseq
    %v5493 = vshrl.u32 %v5492, 7
    %v5494 = vsub.s32 1, %v5493
    %v5495 = vrot.slane %v5486, %v5494
    %v5498 = vmul.f32 %v5474, %v5491
    %v5499 = vmul.f32 %v5475, %v5495
    %v5500 = vmul.f32 %v5476, %v5491
    %v5501 = vmul.f32 %v5477, %v5495
    %v5502 = vmul.f32 %v5478, %v5491
    %v5503 = vmul.f32 %v5479, %v5495
    %v5504 = vmul.f32 %v5480, %v5491
    %v5505 = vmul.f32 %v5481, %v5495
    %v5506 = vmul.f32 %v5482, %v5491
    %v5507 = vmul.f32 %v5483, %v5495
    %v5508 = vmul.f32 %v5484, %v5491
    %v5509 = vmul.f32 %v5485, %v5495
    %v5510 = vld [vmem:[#allocation22] sm:$0x3]
    %v5512 = vlaneseq
    %v5513 = vshrl.u32 %v5512, 7
    %v5514 = vsub.s32 0, %v5513
    %v5515 = vrot.slane %v5510, %v5514
    %v5516 = vlaneseq
    %v5517 = vshrl.u32 %v5516, 7
    %v5518 = vsub.s32 1, %v5517
    %v5519 = vrot.slane %v5510, %v5518
    %v5522 = vadd.f32 %v5498, %v5515
    %v5523 = vadd.f32 %v5499, %v5519
    %v5524 = vadd.f32 %v5500, %v5515
    %v5525 = vadd.f32 %v5501, %v5519
    %v5526 = vadd.f32 %v5502, %v5515
    %v5527 = vadd.f32 %v5503, %v5519
    %v5528 = vadd.f32 %v5504, %v5515
    %v5529 = vadd.f32 %v5505, %v5519
    %v5530 = vadd.f32 %v5506, %v5515
    %v5531 = vadd.f32 %v5507, %v5519
    %v5532 = vadd.f32 %v5508, %v5515
    %v5533 = vadd.f32 %v5509, %v5519
    %v5534 = vpack.c.bf16 %v5524, %v5522
    %v5535 = vpack.c.bf16 %v5525, %v5523
    %v5536 = vpack.c.bf16 %v5528, %v5526
    %v5537 = vpack.c.bf16 %v5529, %v5527
    %v5538 = vpack.c.bf16 %v5532, %v5530
    %v5539 = vpack.c.bf16 %v5533, %v5531
    %v5540 = vld [vmem:[#allocation24] sm:$0xff]
    %v5541 = vld [vmem:[#allocation24 + $0x8] sm:$0xff]
    %v5542 = vld [vmem:[#allocation24 + $0x10] sm:$0xff]
    %v5543 = vld [vmem:[#allocation24 + $0x18] sm:$0xff]
    %v5544 = vld [vmem:[#allocation24 + $0x20] sm:$0xff]
    %v5545 = vld [vmem:[#allocation24 + $0x28] sm:$0xff]
    %v5546 = vld [vmem:[#allocation24 + $0x30] sm:$0xff]
    %v5547 = vld [vmem:[#allocation24 + $0x38] sm:$0xff]
    %v5548 = vld [vmem:[#allocation24 + $0x40] sm:$0xff]
    %v5549 = vld [vmem:[#allocation24 + $0x48] sm:$0xff]
    %v5550 = vld [vmem:[#allocation24 + $0x50] sm:$0xff]
    %v5551 = vld [vmem:[#allocation24 + $0x58] sm:$0xff]
    %v5552 = vld [vmem:[#allocation24 + $0x60] sm:$0xff]
    %v5553 = vld [vmem:[#allocation24 + $0x68] sm:$0xff]
    %v5554 = vld [vmem:[#allocation24 + $0x70] sm:$0xff]
    %v5555 = vld [vmem:[#allocation24 + $0x78] sm:$0xff]
    %v5556 = vld [vmem:[#allocation24 + $0x80] sm:$0xff]
    %v5557 = vld [vmem:[#allocation24 + $0x88] sm:$0xff]
    %v5558 = vld [vmem:[#allocation24 + $0x90] sm:$0xff]
    %v5559 = vld [vmem:[#allocation24 + $0x98] sm:$0xff]
    %v5560 = vld [vmem:[#allocation24 + $0xa0] sm:$0xff]
    %v5561 = vld [vmem:[#allocation24 + $0xa8] sm:$0xff]
    %v5562 = vld [vmem:[#allocation24 + $0xb0] sm:$0xff]
    %v5563 = vld [vmem:[#allocation24 + $0xb8] sm:$0xff]
    %v5564 = vld [vmem:[#allocation24 + $0xc0] sm:$0xff]
    %v5565 = vld [vmem:[#allocation24 + $0xc8] sm:$0xff]
    %v5566 = vld [vmem:[#allocation24 + $0xd0] sm:$0xff]
    %v5567 = vld [vmem:[#allocation24 + $0xd8] sm:$0xff]
    %v5568 = vld [vmem:[#allocation24 + $0xe0] sm:$0xff]
    %v5569 = vld [vmem:[#allocation24 + $0xe8] sm:$0xff]
    %v5570 = vld [vmem:[#allocation24 + $0xf0] sm:$0xff]
    %v5571 = vld [vmem:[#allocation24 + $0xf8] sm:$0xff]
    %v5604 = vunpack.c.l.b16 %v5540
    %v5605 = vunpack.c.h.b16 %v5540
    %v5606 = vunpack.c.l.b16 %v5541
    %v5607 = vunpack.c.h.b16 %v5541
    %v5608 = vunpack.c.l.b16 %v5542
    %v5609 = vunpack.c.h.b16 %v5542
    %v5610 = vunpack.c.l.b16 %v5543
    %v5611 = vunpack.c.h.b16 %v5543
    %v5612 = vunpack.c.l.b16 %v5544
    %v5613 = vunpack.c.h.b16 %v5544
    %v5614 = vunpack.c.l.b16 %v5545
    %v5615 = vunpack.c.h.b16 %v5545
    %v5616 = vunpack.c.l.b16 %v5546
    %v5617 = vunpack.c.h.b16 %v5546
    %v5618 = vunpack.c.l.b16 %v5547
    %v5619 = vunpack.c.h.b16 %v5547
    %v5620 = vunpack.c.l.b16 %v5548
    %v5621 = vunpack.c.h.b16 %v5548
    %v5622 = vunpack.c.l.b16 %v5549
    %v5623 = vunpack.c.h.b16 %v5549
    %v5624 = vunpack.c.l.b16 %v5550
    %v5625 = vunpack.c.h.b16 %v5550
    %v5626 = vunpack.c.l.b16 %v5551
    %v5627 = vunpack.c.h.b16 %v5551
    %v5628 = vunpack.c.l.b16 %v5552
    %v5629 = vunpack.c.h.b16 %v5552
    %v5630 = vunpack.c.l.b16 %v5553
    %v5631 = vunpack.c.h.b16 %v5553
    %v5632 = vunpack.c.l.b16 %v5554
    %v5633 = vunpack.c.h.b16 %v5554
    %v5634 = vunpack.c.l.b16 %v5555
    %v5635 = vunpack.c.h.b16 %v5555
    %v5636 = vunpack.c.l.b16 %v5556
    %v5637 = vunpack.c.h.b16 %v5556
    %v5638 = vunpack.c.l.b16 %v5557
    %v5639 = vunpack.c.h.b16 %v5557
    %v5640 = vunpack.c.l.b16 %v5558
    %v5641 = vunpack.c.h.b16 %v5558
    %v5642 = vunpack.c.l.b16 %v5559
    %v5643 = vunpack.c.h.b16 %v5559
    %v5644 = vunpack.c.l.b16 %v5560
    %v5645 = vunpack.c.h.b16 %v5560
    %v5646 = vunpack.c.l.b16 %v5561
    %v5647 = vunpack.c.h.b16 %v5561
    %v5648 = vunpack.c.l.b16 %v5562
    %v5649 = vunpack.c.h.b16 %v5562
    %v5650 = vunpack.c.l.b16 %v5563
    %v5651 = vunpack.c.h.b16 %v5563
    %v5652 = vunpack.c.l.b16 %v5564
    %v5653 = vunpack.c.h.b16 %v5564
    %v5654 = vunpack.c.l.b16 %v5565
    %v5655 = vunpack.c.h.b16 %v5565
    %v5656 = vunpack.c.l.b16 %v5566
    %v5657 = vunpack.c.h.b16 %v5566
    %v5658 = vunpack.c.l.b16 %v5567
    %v5659 = vunpack.c.h.b16 %v5567
    %v5660 = vunpack.c.l.b16 %v5568
    %v5661 = vunpack.c.h.b16 %v5568
    %v5662 = vunpack.c.l.b16 %v5569
    %v5663 = vunpack.c.h.b16 %v5569
    %v5664 = vunpack.c.l.b16 %v5570
    %v5665 = vunpack.c.h.b16 %v5570
    %v5666 = vunpack.c.l.b16 %v5571
    %v5667 = vunpack.c.h.b16 %v5571
    %v5668 = vpack.c.b16 %v5606, %v5604
    %v5669 = vpack.c.b16 %v5607, %v5605
    %v5670 = vpack.c.b16 %v5610, %v5608
    %v5671 = vpack.c.b16 %v5611, %v5609
    %v5672 = vpack.c.b16 %v5614, %v5612
    %v5673 = vpack.c.b16 %v5615, %v5613
    %v5674 = vpack.c.b16 %v5618, %v5616
    %v5675 = vpack.c.b16 %v5619, %v5617
    %v5676 = vpack.c.b16 %v5622, %v5620
    %v5677 = vpack.c.b16 %v5623, %v5621
    %v5678 = vpack.c.b16 %v5626, %v5624
    %v5679 = vpack.c.b16 %v5627, %v5625
    %v5680 = vpack.c.b16 %v5630, %v5628
    %v5681 = vpack.c.b16 %v5631, %v5629
    %v5682 = vpack.c.b16 %v5634, %v5632
    %v5683 = vpack.c.b16 %v5635, %v5633
    %v5684 = vpack.c.b16 %v5638, %v5636
    %v5685 = vpack.c.b16 %v5639, %v5637
    %v5686 = vpack.c.b16 %v5642, %v5640
    %v5687 = vpack.c.b16 %v5643, %v5641
    %v5688 = vpack.c.b16 %v5646, %v5644
    %v5689 = vpack.c.b16 %v5647, %v5645
    %v5690 = vpack.c.b16 %v5650, %v5648
    %v5691 = vpack.c.b16 %v5651, %v5649
    %v5692 = vpack.c.b16 %v5654, %v5652
    %v5693 = vpack.c.b16 %v5655, %v5653
    %v5694 = vpack.c.b16 %v5658, %v5656
    %v5695 = vpack.c.b16 %v5659, %v5657
    %v5696 = vpack.c.b16 %v5662, %v5660
    %v5697 = vpack.c.b16 %v5663, %v5661
    %v5698 = vpack.c.b16 %v5666, %v5664
    %v5699 = vpack.c.b16 %v5667, %v5665
    %5732 = vmatprep.subr.bf16.mxu0 %v5669
    %5733 = vmatpush1.bf16.msra.mxu0 %v5668
    %5734 = vmatprep.subr.bf16.mxu0 %v5671
    %5735 = vmatpush1.bf16.msra.mxu0 %v5670
    %5736 = vmatprep.subr.bf16.mxu0 %v5673
    %5737 = vmatpush1.bf16.msra.mxu0 %v5672
    %5738 = vmatprep.subr.bf16.mxu0 %v5675
    %5739 = vmatpush1.bf16.msra.mxu0 %v5674
    %5740 = vmatprep.subr.bf16.mxu0 %v5677
    %5741 = vmatpush1.bf16.msra.mxu0 %v5676
    %5742 = vmatprep.subr.bf16.mxu0 %v5679
    %5743 = vmatpush1.bf16.msra.mxu0 %v5678
    %5744 = vmatprep.subr.bf16.mxu0 %v5681
    %5745 = vmatpush1.bf16.msra.mxu0 %v5680
    %5746 = vmatprep.subr.bf16.mxu0 %v5683
    %5747 = vmatpush1.bf16.msra.mxu0 %v5682
    %5748 = vmatprep.subr.bf16.mxu0 %v5685
    %5749 = vmatpush1.bf16.msra.mxu0 %v5684
    %5750 = vmatprep.subr.bf16.mxu0 %v5687
    %5751 = vmatpush1.bf16.msra.mxu0 %v5686
    %5752 = vmatprep.subr.bf16.mxu0 %v5689
    %5753 = vmatpush1.bf16.msra.mxu0 %v5688
    %5754 = vmatprep.subr.bf16.mxu0 %v5691
    %5755 = vmatpush1.bf16.msra.mxu0 %v5690
    %5756 = vmatprep.subr.bf16.mxu0 %v5693
    %5757 = vmatpush1.bf16.msra.mxu0 %v5692
    %5758 = vmatprep.subr.bf16.mxu0 %v5695
    %5759 = vmatpush1.bf16.msra.mxu0 %v5694
    %5760 = vmatprep.subr.bf16.mxu0 %v5697
    %5761 = vmatpush1.bf16.msra.mxu0 %v5696
    %5762 = vmatprep.subr.bf16.mxu0 %v5699
    %5763 = vmatpush1.bf16.msra.mxu0 %v5698
    %5764 = vmatprep.mubr.bf16.mxu0 %v5535
    %5765 = vmatmul.mubr.bf16.gmra.mrb[0].mxu0 %v5534
    %v5766 = vpop.f32.mrb[0].mxu0
    %v5767 = vadd.f32 0.0, %v5766
    %v5768 = vpop.f32.mrb[0].mxu0
    %v5769 = vadd.f32 0.0, %v5768
    %v5770 = vpop.f32.mrb[0].mxu0
    %v5771 = vadd.f32 0.0, %v5770
    %v5772 = vpop.f32.mrb[0].mxu0
    %v5773 = vadd.f32 0.0, %v5772
    %5774 = vmatprep.mubr.bf16.mxu0 %v5537
    %5775 = vmatmul.mubr.bf16.gmra.mrb[0].mxu0 %v5536
    %v5776 = vpop.f32.mrb[0].mxu0
    %v5777 = vadd.f32 0.0, %v5776
    %v5778 = vpop.f32.mrb[0].mxu0
    %v5779 = vadd.f32 0.0, %v5778
    %v5780 = vpop.f32.mrb[0].mxu0
    %v5781 = vadd.f32 0.0, %v5780
    %v5782 = vpop.f32.mrb[0].mxu0
    %v5783 = vadd.f32 0.0, %v5782
    %5784 = vmatprep.mubr.bf16.mxu0 %v5539
    %5785 = vmatmul.mubr.bf16.gmra.mrb[0].mxu0 %v5538
    %v5786 = vpop.f32.mrb[0].mxu0
    %v5787 = vadd.f32 0.0, %v5786
    %v5788 = vpop.f32.mrb[0].mxu0
    %v5789 = vadd.f32 0.0, %v5788
    %v5790 = vpop.f32.mrb[0].mxu0
    %v5791 = vadd.f32 0.0, %v5790
    %v5792 = vpop.f32.mrb[0].mxu0
    %v5793 = vadd.f32 0.0, %v5792
    %5794 = vdwg.mxu0
    %v5795 = vpack.c.bf16 %v5771, %v5767
    %v5796 = vpack.c.bf16 %v5777, %v5777
    %v5797 = vpack.c.bf16 %v4032, %v4032
    %5798 = vmatprep.subr.bf16.mxu0 0
    %5799 = vmatpush1.bf16.xpose.msra.mxu0 %v5797
    %5800 = vmatprep.subr.bf16.mxu0 0
    %5801 = vmatpush1.bf16.xpose.msra.mxu0 0
    %5802 = vmatprep.subr.bf16.mxu0 0
    %5803 = vmatpush1.bf16.xpose.msra.mxu0 0
    %5804 = vmatprep.subr.bf16.mxu0 0
    %5805 = vmatpush1.bf16.xpose.msra.mxu0 0
    %5806 = vmatprep.subr.bf16.mxu0 0
    %5807 = vmatpush1.bf16.xpose.msra.mxu0 0
    %5808 = vmatprep.subr.bf16.mxu0 0
    %5809 = vmatpush1.bf16.xpose.msra.mxu0 0
    %5810 = vmatprep.subr.bf16.mxu0 0
    %5811 = vmatpush1.bf16.xpose.msra.mxu0 0
    %5812 = vmatprep.subr.bf16.mxu0 0
    %5813 = vmatpush1.bf16.xpose.msra.mxu0 0
    %5814 = vmatprep.subr.bf16.mxu0 0
    %5815 = vmatpush1.bf16.xpose.msra.mxu0 0
    %5816 = vmatprep.subr.bf16.mxu0 0
    %5817 = vmatpush1.bf16.xpose.msra.mxu0 0
    %5818 = vmatprep.subr.bf16.mxu0 0
    %5819 = vmatpush1.bf16.xpose.msra.mxu0 0
    %5820 = vmatprep.subr.bf16.mxu0 0
    %5821 = vmatpush1.bf16.xpose.msra.mxu0 0
    %5822 = vmatprep.subr.bf16.mxu0 0
    %5823 = vmatpush1.bf16.xpose.msra.mxu0 0
    %5824 = vmatprep.subr.bf16.mxu0 0
    %5825 = vmatpush1.bf16.xpose.msra.mxu0 0
    %5826 = vmatprep.subr.bf16.mxu0 0
    %5827 = vmatpush1.bf16.xpose.msra.mxu0 0
    %5828 = vmatprep.subr.bf16.mxu0 0
    %5829 = vmatpush1.bf16.xpose.msra.mxu0 0
    %5830 = vmatprep.mubr.bf16.mxu0 0
    %5831 = vmatmul.mubr.bf16.gmra.mrb[0].mxu0 %v5795
    %v5832 = vpop.f32.mrb[0].mxu0
    %v5833 = vadd.f32 0.0, %v5832
    %v5834 = vpop.f32.mrb[0].mxu0
    %v5835 = vpop.f32.mrb[0].mxu0
    %v5836 = vadd.f32 0.0, %v5835
    %v5837 = vpop.f32.mrb[0].mxu0
    %5838 = vmatprep.mubr.bf16.mxu0 0
    %5839 = vmatmul.mubr.bf16.gmra.mrb[0].mxu0 %v5796
    %v5840 = vpop.f32.mrb[0].mxu0
    %v5841 = vadd.f32 0.0, %v5840
    %v5842 = vpop.f32.mrb[0].mxu0
    %v5843 = vpop.f32.mrb[0].mxu0
    %v5844 = vpop.f32.mrb[0].mxu0
    %5845 = vdwg.mxu0
    %v5846 = vmul.f32 %v5833, 0.088388346
    %v5847 = vmul.f32 %v5836, 0.088388346
    %v5848 = vmul.f32 %v5841, 0.088388346
    %v5849 = vsel %vm4551, %v5846, -3.4028235e+38
    %v5850 = vsel %vm4551, %v5847, -3.4028235e+38
    %v5851 = vsel %vm4551, %v5848, -3.4028235e+38
    %v5852 = vsel %vm3882, %v5849, -inf
    %5853 = vmax.xlane.f32.xlu0 %v5852
    %v5854 = vpop.xlane.xlu0 %5853
    %v5855 = vsel %vm3882, %v5850, -inf
    %5856 = vmax.xlane.f32.xlu0 %v5855
    %v5857 = vpop.xlane.xlu0 %5856
    %v5858 = vsel %vm3882, %v5851, -inf
    %5859 = vmax.xlane.f32.xlu0 %v5858
    %v5860 = vpop.xlane.xlu0 %5859
    %v5861 = vsub.f32 %v5849, %v5854
    %v5862 = vsub.f32 %v5850, %v5857
    %v5863 = vsub.f32 %v5851, %v5860
    %v5864 = vmul.f32 %v5861, 1.442695
    %v5865 = vpow.pop %v5864
    %v5866 = vmul.f32 %v5862, 1.442695
    %v5867 = vpow.pop %v5866
    %v5868 = vmul.f32 %v5863, 1.442695
    %v5869 = vpow.pop %v5868
    %v5870 = vsel %vm3882, %v5865, 0.0
    %5871 = vadd.xlane.f32.xlu0 %v5870
    %v5872 = vpop.xlane.xlu0 %5871
    %v5873 = vsel %vm3882, %v5867, 0.0
    %5874 = vadd.xlane.f32.xlu0 %v5873
    %v5875 = vpop.xlane.xlu0 %5874
    %v5876 = vsel %vm3882, %v5869, 0.0
    %5877 = vadd.xlane.f32.xlu0 %v5876
    %v5878 = vpop.xlane.xlu0 %5877
    %v5879 = vrcp.pop %v5872
    %v5880 = vmul.f32 %v5865, %v5879
    %v5881 = vrcp.pop %v5875
    %v5882 = vmul.f32 %v5867, %v5881
    %v5883 = vrcp.pop %v5878
    %v5884 = vmul.f32 %v5869, %v5883
    %v5885 = vpack.c.bf16 %v5882, %v5880
    %v5886 = vpack.c.bf16 %v5884, %v5884
    %v5887 = vpack.c.bf16 %v4075, %v4075
    %v5889 = vsel %vm3882, %v5885, 0
    %v5892 = vsel %vm3882, %v5886, 0
    %v5895 = vsel %vm3886, %v5887, 0
    %5897 = vmatprep.subr.bf16.mxu0 0
    %5898 = vmatpush1.bf16.msra.mxu0 %v5895
    %5899 = vmatprep.subr.bf16.mxu0 0
    %5900 = vmatpush1.bf16.msra.mxu0 0
    %5901 = vmatprep.subr.bf16.mxu0 0
    %5902 = vmatpush1.bf16.msra.mxu0 0
    %5903 = vmatprep.subr.bf16.mxu0 0
    %5904 = vmatpush1.bf16.msra.mxu0 0
    %5905 = vmatprep.subr.bf16.mxu0 0
    %5906 = vmatpush1.bf16.msra.mxu0 0
    %5907 = vmatprep.subr.bf16.mxu0 0
    %5908 = vmatpush1.bf16.msra.mxu0 0
    %5909 = vmatprep.subr.bf16.mxu0 0
    %5910 = vmatpush1.bf16.msra.mxu0 0
    %5911 = vmatprep.subr.bf16.mxu0 0
    %5912 = vmatpush1.bf16.msra.mxu0 0
    %5913 = vmatprep.subr.bf16.mxu0 0
    %5914 = vmatpush1.bf16.msra.mxu0 0
    %5915 = vmatprep.subr.bf16.mxu0 0
    %5916 = vmatpush1.bf16.msra.mxu0 0
    %5917 = vmatprep.subr.bf16.mxu0 0
    %5918 = vmatpush1.bf16.msra.mxu0 0
    %5919 = vmatprep.subr.bf16.mxu0 0
    %5920 = vmatpush1.bf16.msra.mxu0 0
    %5921 = vmatprep.subr.bf16.mxu0 0
    %5922 = vmatpush1.bf16.msra.mxu0 0
    %5923 = vmatprep.subr.bf16.mxu0 0
    %5924 = vmatpush1.bf16.msra.mxu0 0
    %5925 = vmatprep.subr.bf16.mxu0 0
    %5926 = vmatpush1.bf16.msra.mxu0 0
    %5927 = vmatprep.subr.bf16.mxu0 0
    %5928 = vmatpush1.bf16.msra.mxu0 0
    %5929 = vmatprep.mubr.bf16.mxu0 0
    %5930 = vmatmul.mubr.bf16.gmra.mrb[0].mxu0 %v5889
    %v5931 = vpop.f32.mrb[0].mxu0
    %v5932 = vadd.f32 0.0, %v5931
    %v5933 = vpop.f32.mrb[0].mxu0
    %v5934 = vpop.f32.mrb[0].mxu0
    %v5935 = vadd.f32 0.0, %v5934
    %v5936 = vpop.f32.mrb[0].mxu0
    %5937 = vmatprep.mubr.bf16.mxu0 0
    %5938 = vmatmul.mubr.bf16.gmra.mrb[0].mxu0 %v5892
    %v5939 = vpop.f32.mrb[0].mxu0
    %v5940 = vadd.f32 0.0, %v5939
    %v5941 = vpop.f32.mrb[0].mxu0
    %v5942 = vpop.f32.mrb[0].mxu0
    %v5943 = vpop.f32.mrb[0].mxu0
    %5944 = vdwg.mxu0
    %v5945 = vpack.c.bf16 %v5773, %v5769
    %v5946 = vpack.c.bf16 %v5779, %v5779
    %v5947 = vpack.c.bf16 %v4034, %v4034
    %5948 = vmatprep.subr.bf16.mxu0 0
    %5949 = vmatpush1.bf16.xpose.msra.mxu0 %v5947
    %5950 = vmatprep.subr.bf16.mxu0 0
    %5951 = vmatpush1.bf16.xpose.msra.mxu0 0
    %5952 = vmatprep.subr.bf16.mxu0 0
    %5953 = vmatpush1.bf16.xpose.msra.mxu0 0
    %5954 = vmatprep.subr.bf16.mxu0 0
    %5955 = vmatpush1.bf16.xpose.msra.mxu0 0
    %5956 = vmatprep.subr.bf16.mxu0 0
    %5957 = vmatpush1.bf16.xpose.msra.mxu0 0
    %5958 = vmatprep.subr.bf16.mxu0 0
    %5959 = vmatpush1.bf16.xpose.msra.mxu0 0
    %5960 = vmatprep.subr.bf16.mxu0 0
    %5961 = vmatpush1.bf16.xpose.msra.mxu0 0
    %5962 = vmatprep.subr.bf16.mxu0 0
    %5963 = vmatpush1.bf16.xpose.msra.mxu0 0
    %5964 = vmatprep.subr.bf16.mxu0 0
    %5965 = vmatpush1.bf16.xpose.msra.mxu0 0
    %5966 = vmatprep.subr.bf16.mxu0 0
    %5967 = vmatpush1.bf16.xpose.msra.mxu0 0
    %5968 = vmatprep.subr.bf16.mxu0 0
    %5969 = vmatpush1.bf16.xpose.msra.mxu0 0
    %5970 = vmatprep.subr.bf16.mxu0 0
    %5971 = vmatpush1.bf16.xpose.msra.mxu0 0
    %5972 = vmatprep.subr.bf16.mxu0 0
    %5973 = vmatpush1.bf16.xpose.msra.mxu0 0
    %5974 = vmatprep.subr.bf16.mxu0 0
    %5975 = vmatpush1.bf16.xpose.msra.mxu0 0
    %5976 = vmatprep.subr.bf16.mxu0 0
    %5977 = vmatpush1.bf16.xpose.msra.mxu0 0
    %5978 = vmatprep.subr.bf16.mxu0 0
    %5979 = vmatpush1.bf16.xpose.msra.mxu0 0
    %5980 = vmatprep.mubr.bf16.mxu0 0
    %5981 = vmatmul.mubr.bf16.gmra.mrb[0].mxu0 %v5945
    %v5982 = vpop.f32.mrb[0].mxu0
    %v5983 = vadd.f32 0.0, %v5982
    %v5984 = vpop.f32.mrb[0].mxu0
    %v5985 = vpop.f32.mrb[0].mxu0
    %v5986 = vadd.f32 0.0, %v5985
    %v5987 = vpop.f32.mrb[0].mxu0
    %5988 = vmatprep.mubr.bf16.mxu0 0
    %5989 = vmatmul.mubr.bf16.gmra.mrb[0].mxu0 %v5946
    %v5990 = vpop.f32.mrb[0].mxu0
    %v5991 = vadd.f32 0.0, %v5990
    %v5992 = vpop.f32.mrb[0].mxu0
    %v5993 = vpop.f32.mrb[0].mxu0
    %v5994 = vpop.f32.mrb[0].mxu0
    %5995 = vdwg.mxu0
    %v5996 = vmul.f32 %v5983, 0.088388346
    %v5997 = vmul.f32 %v5986, 0.088388346
    %v5998 = vmul.f32 %v5991, 0.088388346
    %v5999 = vsel %vm4551, %v5996, -3.4028235e+38
    %v6000 = vsel %vm4551, %v5997, -3.4028235e+38
    %v6001 = vsel %vm4551, %v5998, -3.4028235e+38
    %v6002 = vsel %vm3882, %v5999, -inf
    %6003 = vmax.xlane.f32.xlu0 %v6002
    %v6004 = vpop.xlane.xlu0 %6003
    %v6005 = vsel %vm3882, %v6000, -inf
    %6006 = vmax.xlane.f32.xlu0 %v6005
    %v6007 = vpop.xlane.xlu0 %6006
    %v6008 = vsel %vm3882, %v6001, -inf
    %6009 = vmax.xlane.f32.xlu0 %v6008
    %v6010 = vpop.xlane.xlu0 %6009
    %v6011 = vsub.f32 %v5999, %v6004
    %v6012 = vsub.f32 %v6000, %v6007
    %v6013 = vsub.f32 %v6001, %v6010
    %v6014 = vmul.f32 %v6011, 1.442695
    %v6015 = vpow.pop %v6014
    %v6016 = vmul.f32 %v6012, 1.442695
    %v6017 = vpow.pop %v6016
    %v6018 = vmul.f32 %v6013, 1.442695
    %v6019 = vpow.pop %v6018
    %v6020 = vsel %vm3882, %v6015, 0.0
    %6021 = vadd.xlane.f32.xlu0 %v6020
    %v6022 = vpop.xlane.xlu0 %6021
    %v6023 = vsel %vm3882, %v6017, 0.0
    %6024 = vadd.xlane.f32.xlu0 %v6023
    %v6025 = vpop.xlane.xlu0 %6024
    %v6026 = vsel %vm3882, %v6019, 0.0
    %6027 = vadd.xlane.f32.xlu0 %v6026
    %v6028 = vpop.xlane.xlu0 %6027
    %v6029 = vrcp.pop %v6022
    %v6030 = vmul.f32 %v6015, %v6029
    %v6031 = vrcp.pop %v6025
    %v6032 = vmul.f32 %v6017, %v6031
    %v6033 = vrcp.pop %v6028
    %v6034 = vmul.f32 %v6019, %v6033
    %v6035 = vpack.c.bf16 %v6032, %v6030
    %v6036 = vpack.c.bf16 %v6034, %v6034
    %v6037 = vpack.c.bf16 %v4077, %v4077
    %v6039 = vsel %vm3882, %v6035, 0
    %v6042 = vsel %vm3882, %v6036, 0
    %v6045 = vsel %vm3886, %v6037, 0
    %6047 = vmatprep.subr.bf16.mxu0 0
    %6048 = vmatpush1.bf16.msra.mxu0 %v6045
    %6049 = vmatprep.subr.bf16.mxu0 0
    %6050 = vmatpush1.bf16.msra.mxu0 0
    %6051 = vmatprep.subr.bf16.mxu0 0
    %6052 = vmatpush1.bf16.msra.mxu0 0
    %6053 = vmatprep.subr.bf16.mxu0 0
    %6054 = vmatpush1.bf16.msra.mxu0 0
    %6055 = vmatprep.subr.bf16.mxu0 0
    %6056 = vmatpush1.bf16.msra.mxu0 0
    %6057 = vmatprep.subr.bf16.mxu0 0
    %6058 = vmatpush1.bf16.msra.mxu0 0
    %6059 = vmatprep.subr.bf16.mxu0 0
    %6060 = vmatpush1.bf16.msra.mxu0 0
    %6061 = vmatprep.subr.bf16.mxu0 0
    %6062 = vmatpush1.bf16.msra.mxu0 0
    %6063 = vmatprep.subr.bf16.mxu0 0
    %6064 = vmatpush1.bf16.msra.mxu0 0
    %6065 = vmatprep.subr.bf16.mxu0 0
    %6066 = vmatpush1.bf16.msra.mxu0 0
    %6067 = vmatprep.subr.bf16.mxu0 0
    %6068 = vmatpush1.bf16.msra.mxu0 0
    %6069 = vmatprep.subr.bf16.mxu0 0
    %6070 = vmatpush1.bf16.msra.mxu0 0
    %6071 = vmatprep.subr.bf16.mxu0 0
    %6072 = vmatpush1.bf16.msra.mxu0 0
    %6073 = vmatprep.subr.bf16.mxu0 0
    %6074 = vmatpush1.bf16.msra.mxu0 0
    %6075 = vmatprep.subr.bf16.mxu0 0
    %6076 = vmatpush1.bf16.msra.mxu0 0
    %6077 = vmatprep.subr.bf16.mxu0 0
    %6078 = vmatpush1.bf16.msra.mxu0 0
    %6079 = vmatprep.mubr.bf16.mxu0 0
    %6080 = vmatmul.mubr.bf16.gmra.mrb[0].mxu0 %v6039
    %v6081 = vpop.f32.mrb[0].mxu0
    %v6082 = vadd.f32 0.0, %v6081
    %v6083 = vpop.f32.mrb[0].mxu0
    %v6084 = vpop.f32.mrb[0].mxu0
    %v6085 = vadd.f32 0.0, %v6084
    %v6086 = vpop.f32.mrb[0].mxu0
    %6087 = vmatprep.mubr.bf16.mxu0 0
    %6088 = vmatmul.mubr.bf16.gmra.mrb[0].mxu0 %v6042
    %v6089 = vpop.f32.mrb[0].mxu0
    %v6090 = vadd.f32 0.0, %v6089
    %v6091 = vpop.f32.mrb[0].mxu0
    %v6092 = vpop.f32.mrb[0].mxu0
    %v6093 = vpop.f32.mrb[0].mxu0
    %6094 = vdwg.mxu0
    %v6095 = vpack.c.bf16 %v5787, %v5781
    %v6096 = vpack.c.bf16 %v5791, %v5791
    %v6097 = vpack.c.bf16 %v4036, %v4036
    %6098 = vmatprep.subr.bf16.mxu0 0
    %6099 = vmatpush1.bf16.xpose.msra.mxu0 %v6097
    %6100 = vmatprep.subr.bf16.mxu0 0
    %6101 = vmatpush1.bf16.xpose.msra.mxu0 0
    %6102 = vmatprep.subr.bf16.mxu0 0
    %6103 = vmatpush1.bf16.xpose.msra.mxu0 0
    %6104 = vmatprep.subr.bf16.mxu0 0
    %6105 = vmatpush1.bf16.xpose.msra.mxu0 0
    %6106 = vmatprep.subr.bf16.mxu0 0
    %6107 = vmatpush1.bf16.xpose.msra.mxu0 0
    %6108 = vmatprep.subr.bf16.mxu0 0
    %6109 = vmatpush1.bf16.xpose.msra.mxu0 0
    %6110 = vmatprep.subr.bf16.mxu0 0
    %6111 = vmatpush1.bf16.xpose.msra.mxu0 0
    %6112 = vmatprep.subr.bf16.mxu0 0
    %6113 = vmatpush1.bf16.xpose.msra.mxu0 0
    %6114 = vmatprep.subr.bf16.mxu0 0
    %6115 = vmatpush1.bf16.xpose.msra.mxu0 0
    %6116 = vmatprep.subr.bf16.mxu0 0
    %6117 = vmatpush1.bf16.xpose.msra.mxu0 0
    %6118 = vmatprep.subr.bf16.mxu0 0
    %6119 = vmatpush1.bf16.xpose.msra.mxu0 0
    %6120 = vmatprep.subr.bf16.mxu0 0
    %6121 = vmatpush1.bf16.xpose.msra.mxu0 0
    %6122 = vmatprep.subr.bf16.mxu0 0
    %6123 = vmatpush1.bf16.xpose.msra.mxu0 0
    %6124 = vmatprep.subr.bf16.mxu0 0
    %6125 = vmatpush1.bf16.xpose.msra.mxu0 0
    %6126 = vmatprep.subr.bf16.mxu0 0
    %6127 = vmatpush1.bf16.xpose.msra.mxu0 0
    %6128 = vmatprep.subr.bf16.mxu0 0
    %6129 = vmatpush1.bf16.xpose.msra.mxu0 0
    %6130 = vmatprep.mubr.bf16.mxu0 0
    %6131 = vmatmul.mubr.bf16.gmra.mrb[0].mxu0 %v6095
    %v6132 = vpop.f32.mrb[0].mxu0
    %v6133 = vadd.f32 0.0, %v6132
    %v6134 = vpop.f32.mrb[0].mxu0
    %v6135 = vpop.f32.mrb[0].mxu0
    %v6136 = vadd.f32 0.0, %v6135
    %v6137 = vpop.f32.mrb[0].mxu0
    %6138 = vmatprep.mubr.bf16.mxu0 0
    %6139 = vmatmul.mubr.bf16.gmra.mrb[0].mxu0 %v6096
    %v6140 = vpop.f32.mrb[0].mxu0
    %v6141 = vadd.f32 0.0, %v6140
    %v6142 = vpop.f32.mrb[0].mxu0
    %v6143 = vpop.f32.mrb[0].mxu0
    %v6144 = vpop.f32.mrb[0].mxu0
    %6145 = vdwg.mxu0
    %v6146 = vmul.f32 %v6133, 0.088388346
    %v6147 = vmul.f32 %v6136, 0.088388346
    %v6148 = vmul.f32 %v6141, 0.088388346
    %v6149 = vsel %vm4858, %v6146, -3.4028235e+38
    %v6150 = vsel %vm4858, %v6147, -3.4028235e+38
    %v6151 = vsel %vm4858, %v6148, -3.4028235e+38
    %v6152 = vsel %vm3882, %v6149, -inf
    %6153 = vmax.xlane.f32.xlu0 %v6152
    %v6154 = vpop.xlane.xlu0 %6153
    %v6155 = vsel %vm3882, %v6150, -inf
    %6156 = vmax.xlane.f32.xlu0 %v6155
    %v6157 = vpop.xlane.xlu0 %6156
    %v6158 = vsel %vm3882, %v6151, -inf
    %6159 = vmax.xlane.f32.xlu0 %v6158
    %v6160 = vpop.xlane.xlu0 %6159
    %v6161 = vsub.f32 %v6149, %v6154
    %v6162 = vsub.f32 %v6150, %v6157
    %v6163 = vsub.f32 %v6151, %v6160
    %v6164 = vmul.f32 %v6161, 1.442695
    %v6165 = vpow.pop %v6164
    %v6166 = vmul.f32 %v6162, 1.442695
    %v6167 = vpow.pop %v6166
    %v6168 = vmul.f32 %v6163, 1.442695
    %v6169 = vpow.pop %v6168
    %v6170 = vsel %vm3882, %v6165, 0.0
    %6171 = vadd.xlane.f32.xlu0 %v6170
    %v6172 = vpop.xlane.xlu0 %6171
    %v6173 = vsel %vm3882, %v6167, 0.0
    %6174 = vadd.xlane.f32.xlu0 %v6173
    %v6175 = vpop.xlane.xlu0 %6174
    %v6176 = vsel %vm3882, %v6169, 0.0
    %6177 = vadd.xlane.f32.xlu0 %v6176
    %v6178 = vpop.xlane.xlu0 %6177
    %v6179 = vrcp.pop %v6172
    %v6180 = vmul.f32 %v6165, %v6179
    %v6181 = vrcp.pop %v6175
    %v6182 = vmul.f32 %v6167, %v6181
    %v6183 = vrcp.pop %v6178
    %v6184 = vmul.f32 %v6169, %v6183
    %v6185 = vpack.c.bf16 %v6182, %v6180
    %v6186 = vpack.c.bf16 %v6184, %v6184
    %v6187 = vpack.c.bf16 %v4079, %v4079
    %v6189 = vsel %vm3882, %v6185, 0
    %v6192 = vsel %vm3882, %v6186, 0
    %v6195 = vsel %vm3886, %v6187, 0
    %6197 = vmatprep.subr.bf16.mxu0 0
    %6198 = vmatpush1.bf16.msra.mxu0 %v6195
    %6199 = vmatprep.subr.bf16.mxu0 0
    %6200 = vmatpush1.bf16.msra.mxu0 0
    %6201 = vmatprep.subr.bf16.mxu0 0
    %6202 = vmatpush1.bf16.msra.mxu0 0
    %6203 = vmatprep.subr.bf16.mxu0 0
    %6204 = vmatpush1.bf16.msra.mxu0 0
    %6205 = vmatprep.subr.bf16.mxu0 0
    %6206 = vmatpush1.bf16.msra.mxu0 0
    %6207 = vmatprep.subr.bf16.mxu0 0
    %6208 = vmatpush1.bf16.msra.mxu0 0
    %6209 = vmatprep.subr.bf16.mxu0 0
    %6210 = vmatpush1.bf16.msra.mxu0 0
    %6211 = vmatprep.subr.bf16.mxu0 0
    %6212 = vmatpush1.bf16.msra.mxu0 0
    %6213 = vmatprep.subr.bf16.mxu0 0
    %6214 = vmatpush1.bf16.msra.mxu0 0
    %6215 = vmatprep.subr.bf16.mxu0 0
    %6216 = vmatpush1.bf16.msra.mxu0 0
    %6217 = vmatprep.subr.bf16.mxu0 0
    %6218 = vmatpush1.bf16.msra.mxu0 0
    %6219 = vmatprep.subr.bf16.mxu0 0
    %6220 = vmatpush1.bf16.msra.mxu0 0
    %6221 = vmatprep.subr.bf16.mxu0 0
    %6222 = vmatpush1.bf16.msra.mxu0 0
    %6223 = vmatprep.subr.bf16.mxu0 0
    %6224 = vmatpush1.bf16.msra.mxu0 0
    %6225 = vmatprep.subr.bf16.mxu0 0
    %6226 = vmatpush1.bf16.msra.mxu0 0
    %6227 = vmatprep.subr.bf16.mxu0 0
    %6228 = vmatpush1.bf16.msra.mxu0 0
    %6229 = vmatprep.mubr.bf16.mxu0 0
    %6230 = vmatmul.mubr.bf16.gmra.mrb[0].mxu0 %v6189
    %v6231 = vpop.f32.mrb[0].mxu0
    %v6232 = vadd.f32 0.0, %v6231
    %v6233 = vpop.f32.mrb[0].mxu0
    %v6234 = vpop.f32.mrb[0].mxu0
    %v6235 = vadd.f32 0.0, %v6234
    %v6236 = vpop.f32.mrb[0].mxu0
    %6237 = vmatprep.mubr.bf16.mxu0 0
    %6238 = vmatmul.mubr.bf16.gmra.mrb[0].mxu0 %v6192
    %v6239 = vpop.f32.mrb[0].mxu0
    %v6240 = vadd.f32 0.0, %v6239
    %v6241 = vpop.f32.mrb[0].mxu0
    %v6242 = vpop.f32.mrb[0].mxu0
    %v6243 = vpop.f32.mrb[0].mxu0
    %6244 = vdwg.mxu0
    %v6245 = vpack.c.bf16 %v5789, %v5783
    %v6246 = vpack.c.bf16 %v5793, %v5793
    %v6247 = vpack.c.bf16 %v4038, %v4038
    %6248 = vmatprep.subr.bf16.mxu0 0
    %6249 = vmatpush1.bf16.xpose.msra.mxu0 %v6247
    %6250 = vmatprep.subr.bf16.mxu0 0
    %6251 = vmatpush1.bf16.xpose.msra.mxu0 0
    %6252 = vmatprep.subr.bf16.mxu0 0
    %6253 = vmatpush1.bf16.xpose.msra.mxu0 0
    %6254 = vmatprep.subr.bf16.mxu0 0
    %6255 = vmatpush1.bf16.xpose.msra.mxu0 0
    %6256 = vmatprep.subr.bf16.mxu0 0
    %6257 = vmatpush1.bf16.xpose.msra.mxu0 0
    %6258 = vmatprep.subr.bf16.mxu0 0
    %6259 = vmatpush1.bf16.xpose.msra.mxu0 0
    %6260 = vmatprep.subr.bf16.mxu0 0
    %6261 = vmatpush1.bf16.xpose.msra.mxu0 0
    %6262 = vmatprep.subr.bf16.mxu0 0
    %6263 = vmatpush1.bf16.xpose.msra.mxu0 0
    %6264 = vmatprep.subr.bf16.mxu0 0
    %6265 = vmatpush1.bf16.xpose.msra.mxu0 0
    %6266 = vmatprep.subr.bf16.mxu0 0
    %6267 = vmatpush1.bf16.xpose.msra.mxu0 0
    %6268 = vmatprep.subr.bf16.mxu0 0
    %6269 = vmatpush1.bf16.xpose.msra.mxu0 0
    %6270 = vmatprep.subr.bf16.mxu0 0
    %6271 = vmatpush1.bf16.xpose.msra.mxu0 0
    %6272 = vmatprep.subr.bf16.mxu0 0
    %6273 = vmatpush1.bf16.xpose.msra.mxu0 0
    %6274 = vmatprep.subr.bf16.mxu0 0
    %6275 = vmatpush1.bf16.xpose.msra.mxu0 0
    %6276 = vmatprep.subr.bf16.mxu0 0
    %6277 = vmatpush1.bf16.xpose.msra.mxu0 0
    %6278 = vmatprep.subr.bf16.mxu0 0
    %6279 = vmatpush1.bf16.xpose.msra.mxu0 0
    %6280 = vmatprep.mubr.bf16.mxu0 0
    %6281 = vmatmul.mubr.bf16.gmra.mrb[0].mxu0 %v6245
    %v6282 = vpop.f32.mrb[0].mxu0
    %v6283 = vadd.f32 0.0, %v6282
    %v6284 = vpop.f32.mrb[0].mxu0
    %v6285 = vpop.f32.mrb[0].mxu0
    %v6286 = vadd.f32 0.0, %v6285
    %v6287 = vpop.f32.mrb[0].mxu0
    %6288 = vmatprep.mubr.bf16.mxu0 0
    %6289 = vmatmul.mubr.bf16.gmra.mrb[0].mxu0 %v6246
    %v6290 = vpop.f32.mrb[0].mxu0
    %v6291 = vadd.f32 0.0, %v6290
    %v6292 = vpop.f32.mrb[0].mxu0
    %v6293 = vpop.f32.mrb[0].mxu0
    %v6294 = vpop.f32.mrb[0].mxu0
    %6295 = vdwg.mxu0
    %v6296 = vmul.f32 %v6283, 0.088388346
    %v6297 = vmul.f32 %v6286, 0.088388346
    %v6298 = vmul.f32 %v6291, 0.088388346
    %v6299 = vsel %vm4858, %v6296, -3.4028235e+38
    %v6300 = vsel %vm4858, %v6297, -3.4028235e+38
    %v6301 = vsel %vm4858, %v6298, -3.4028235e+38
    %v6302 = vsel %vm3882, %v6299, -inf
    %6303 = vmax.xlane.f32.xlu0 %v6302
    %v6304 = vpop.xlane.xlu0 %6303
    %v6305 = vsel %vm3882, %v6300, -inf
    %6306 = vmax.xlane.f32.xlu0 %v6305
    %v6307 = vpop.xlane.xlu0 %6306
    %v6308 = vsel %vm3882, %v6301, -inf
    %6309 = vmax.xlane.f32.xlu0 %v6308
    %v6310 = vpop.xlane.xlu0 %6309
    %v6311 = vsub.f32 %v6299, %v6304
    %v6312 = vsub.f32 %v6300, %v6307
    %v6313 = vsub.f32 %v6301, %v6310
    %v6314 = vmul.f32 %v6311, 1.442695
    %v6315 = vpow.pop %v6314
    %v6316 = vmul.f32 %v6312, 1.442695
    %v6317 = vpow.pop %v6316
    %v6318 = vmul.f32 %v6313, 1.442695
    %v6319 = vpow.pop %v6318
    %v6320 = vsel %vm3882, %v6315, 0.0
    %6321 = vadd.xlane.f32.xlu0 %v6320
    %v6322 = vpop.xlane.xlu0 %6321
    %v6323 = vsel %vm3882, %v6317, 0.0
    %6324 = vadd.xlane.f32.xlu0 %v6323
    %v6325 = vpop.xlane.xlu0 %6324
    %v6326 = vsel %vm3882, %v6319, 0.0
    %6327 = vadd.xlane.f32.xlu0 %v6326
    %v6328 = vpop.xlane.xlu0 %6327
    %v6329 = vrcp.pop %v6322
    %v6330 = vmul.f32 %v6315, %v6329
    %v6331 = vrcp.pop %v6325
    %v6332 = vmul.f32 %v6317, %v6331
    %v6333 = vrcp.pop %v6328
    %v6334 = vmul.f32 %v6319, %v6333
    %v6335 = vpack.c.bf16 %v6332, %v6330
    %v6336 = vpack.c.bf16 %v6334, %v6334
    %v6337 = vpack.c.bf16 %v4081, %v4081
    %v6339 = vsel %vm3882, %v6335, 0
    %v6342 = vsel %vm3882, %v6336, 0
    %v6345 = vsel %vm3886, %v6337, 0
    %6347 = vmatprep.subr.bf16.mxu0 0
    %6348 = vmatpush1.bf16.msra.mxu0 %v6345
    %6349 = vmatprep.subr.bf16.mxu0 0
    %6350 = vmatpush1.bf16.msra.mxu0 0
    %6351 = vmatprep.subr.bf16.mxu0 0
    %6352 = vmatpush1.bf16.msra.mxu0 0
    %6353 = vmatprep.subr.bf16.mxu0 0
    %6354 = vmatpush1.bf16.msra.mxu0 0
    %6355 = vmatprep.subr.bf16.mxu0 0
    %6356 = vmatpush1.bf16.msra.mxu0 0
    %6357 = vmatprep.subr.bf16.mxu0 0
    %6358 = vmatpush1.bf16.msra.mxu0 0
    %6359 = vmatprep.subr.bf16.mxu0 0
    %6360 = vmatpush1.bf16.msra.mxu0 0
    %6361 = vmatprep.subr.bf16.mxu0 0
    %6362 = vmatpush1.bf16.msra.mxu0 0
    %6363 = vmatprep.subr.bf16.mxu0 0
    %6364 = vmatpush1.bf16.msra.mxu0 0
    %6365 = vmatprep.subr.bf16.mxu0 0
    %6366 = vmatpush1.bf16.msra.mxu0 0
    %6367 = vmatprep.subr.bf16.mxu0 0
    %6368 = vmatpush1.bf16.msra.mxu0 0
    %6369 = vmatprep.subr.bf16.mxu0 0
    %6370 = vmatpush1.bf16.msra.mxu0 0
    %6371 = vmatprep.subr.bf16.mxu0 0
    %6372 = vmatpush1.bf16.msra.mxu0 0
    %6373 = vmatprep.subr.bf16.mxu0 0
    %6374 = vmatpush1.bf16.msra.mxu0 0
    %6375 = vmatprep.subr.bf16.mxu0 0
    %6376 = vmatpush1.bf16.msra.mxu0 0
    %6377 = vmatprep.subr.bf16.mxu0 0
    %6378 = vmatpush1.bf16.msra.mxu0 0
    %6379 = vmatprep.mubr.bf16.mxu0 0
    %6380 = vmatmul.mubr.bf16.gmra.mrb[0].mxu0 %v6339
    %v6381 = vpop.f32.mrb[0].mxu0
    %v6382 = vadd.f32 0.0, %v6381
    %v6383 = vpop.f32.mrb[0].mxu0
    %v6384 = vpop.f32.mrb[0].mxu0
    %v6385 = vadd.f32 0.0, %v6384
    %v6386 = vpop.f32.mrb[0].mxu0
    %6387 = vmatprep.mubr.bf16.mxu0 0
    %6388 = vmatmul.mubr.bf16.gmra.mrb[0].mxu0 %v6342
    %v6389 = vpop.f32.mrb[0].mxu0
    %v6390 = vadd.f32 0.0, %v6389
    %v6391 = vpop.f32.mrb[0].mxu0
    %v6392 = vpop.f32.mrb[0].mxu0
    %v6393 = vpop.f32.mrb[0].mxu0
    %6394 = vdwg.mxu0
    %v6395 = vpack.c.bf16 %v5935, %v5932
    %v6396 = vpack.c.bf16 %v6085, %v6082
    %v6397 = vpack.c.bf16 %v6232, %v5940
    %v6398 = vpack.c.bf16 %v6382, %v6090
    %v6399 = vpack.c.bf16 %v6240, %v6235
    %v6400 = vpack.c.bf16 %v6390, %v6385
    %v6401 = vld [vmem:[#allocation25] sm:$0xff]
    %v6402 = vld [vmem:[#allocation25 + $0x8] sm:$0xff]
    %v6403 = vld [vmem:[#allocation25 + $0x10] sm:$0xff]
    %v6404 = vld [vmem:[#allocation25 + $0x18] sm:$0xff]
    %v6405 = vld [vmem:[#allocation25 + $0x20] sm:$0xff]
    %v6406 = vld [vmem:[#allocation25 + $0x28] sm:$0xff]
    %v6407 = vld [vmem:[#allocation25 + $0x30] sm:$0xff]
    %v6408 = vld [vmem:[#allocation25 + $0x38] sm:$0xff]
    %v6409 = vld [vmem:[#allocation25 + $0x40] sm:$0xff]
    %v6410 = vld [vmem:[#allocation25 + $0x48] sm:$0xff]
    %v6411 = vld [vmem:[#allocation25 + $0x50] sm:$0xff]
    %v6412 = vld [vmem:[#allocation25 + $0x58] sm:$0xff]
    %v6413 = vld [vmem:[#allocation25 + $0x60] sm:$0xff]
    %v6414 = vld [vmem:[#allocation25 + $0x68] sm:$0xff]
    %v6415 = vld [vmem:[#allocation25 + $0x70] sm:$0xff]
    %v6416 = vld [vmem:[#allocation25 + $0x78] sm:$0xff]
    %v6417 = vld [vmem:[#allocation25 + $0x80] sm:$0xff]
    %v6418 = vld [vmem:[#allocation25 + $0x88] sm:$0xff]
    %v6419 = vld [vmem:[#allocation25 + $0x90] sm:$0xff]
    %v6420 = vld [vmem:[#allocation25 + $0x98] sm:$0xff]
    %v6421 = vld [vmem:[#allocation25 + $0xa0] sm:$0xff]
    %v6422 = vld [vmem:[#allocation25 + $0xa8] sm:$0xff]
    %v6423 = vld [vmem:[#allocation25 + $0xb0] sm:$0xff]
    %v6424 = vld [vmem:[#allocation25 + $0xb8] sm:$0xff]
    %v6425 = vld [vmem:[#allocation25 + $0xc0] sm:$0xff]
    %v6426 = vld [vmem:[#allocation25 + $0xc8] sm:$0xff]
    %v6427 = vld [vmem:[#allocation25 + $0xd0] sm:$0xff]
    %v6428 = vld [vmem:[#allocation25 + $0xd8] sm:$0xff]
    %v6429 = vld [vmem:[#allocation25 + $0xe0] sm:$0xff]
    %v6430 = vld [vmem:[#allocation25 + $0xe8] sm:$0xff]
    %v6431 = vld [vmem:[#allocation25 + $0xf0] sm:$0xff]
    %v6432 = vld [vmem:[#allocation25 + $0xf8] sm:$0xff]
    %v6433 = vld [vmem:[#allocation27] sm:$0x3]
    %v6435 = vlaneseq
    %v6436 = vshrl.u32 %v6435, 7
    %v6437 = vsub.s32 0, %v6436
    %v6438 = vrot.slane %v6433, %v6437
    %v6439 = vlaneseq
    %v6440 = vshrl.u32 %v6439, 7
    %v6441 = vsub.s32 1, %v6440
    %v6442 = vrot.slane %v6433, %v6441
    %v6477 = vunpack.c.l.b16 %v6401
    %v6478 = vunpack.c.h.b16 %v6401
    %v6479 = vunpack.c.l.b16 %v6402
    %v6480 = vunpack.c.h.b16 %v6402
    %v6481 = vunpack.c.l.b16 %v6403
    %v6482 = vunpack.c.h.b16 %v6403
    %v6483 = vunpack.c.l.b16 %v6404
    %v6484 = vunpack.c.h.b16 %v6404
    %v6485 = vunpack.c.l.b16 %v6405
    %v6486 = vunpack.c.h.b16 %v6405
    %v6487 = vunpack.c.l.b16 %v6406
    %v6488 = vunpack.c.h.b16 %v6406
    %v6489 = vunpack.c.l.b16 %v6407
    %v6490 = vunpack.c.h.b16 %v6407
    %v6491 = vunpack.c.l.b16 %v6408
    %v6492 = vunpack.c.h.b16 %v6408
    %v6493 = vunpack.c.l.b16 %v6409
    %v6494 = vunpack.c.h.b16 %v6409
    %v6495 = vunpack.c.l.b16 %v6410
    %v6496 = vunpack.c.h.b16 %v6410
    %v6497 = vunpack.c.l.b16 %v6411
    %v6498 = vunpack.c.h.b16 %v6411
    %v6499 = vunpack.c.l.b16 %v6412
    %v6500 = vunpack.c.h.b16 %v6412
    %v6501 = vunpack.c.l.b16 %v6413
    %v6502 = vunpack.c.h.b16 %v6413
    %v6503 = vunpack.c.l.b16 %v6414
    %v6504 = vunpack.c.h.b16 %v6414
    %v6505 = vunpack.c.l.b16 %v6415
    %v6506 = vunpack.c.h.b16 %v6415
    %v6507 = vunpack.c.l.b16 %v6416
    %v6508 = vunpack.c.h.b16 %v6416
    %v6509 = vunpack.c.l.b16 %v6417
    %v6510 = vunpack.c.h.b16 %v6417
    %v6511 = vunpack.c.l.b16 %v6418
    %v6512 = vunpack.c.h.b16 %v6418
    %v6513 = vunpack.c.l.b16 %v6419
    %v6514 = vunpack.c.h.b16 %v6419
    %v6515 = vunpack.c.l.b16 %v6420
    %v6516 = vunpack.c.h.b16 %v6420
    %v6517 = vunpack.c.l.b16 %v6421
    %v6518 = vunpack.c.h.b16 %v6421
    %v6519 = vunpack.c.l.b16 %v6422
    %v6520 = vunpack.c.h.b16 %v6422
    %v6521 = vunpack.c.l.b16 %v6423
    %v6522 = vunpack.c.h.b16 %v6423
    %v6523 = vunpack.c.l.b16 %v6424
    %v6524 = vunpack.c.h.b16 %v6424
    %v6525 = vunpack.c.l.b16 %v6425
    %v6526 = vunpack.c.h.b16 %v6425
    %v6527 = vunpack.c.l.b16 %v6426
    %v6528 = vunpack.c.h.b16 %v6426
    %v6529 = vunpack.c.l.b16 %v6427
    %v6530 = vunpack.c.h.b16 %v6427
    %v6531 = vunpack.c.l.b16 %v6428
    %v6532 = vunpack.c.h.b16 %v6428
    %v6533 = vunpack.c.l.b16 %v6429
    %v6534 = vunpack.c.h.b16 %v6429
    %v6535 = vunpack.c.l.b16 %v6430
    %v6536 = vunpack.c.h.b16 %v6430
    %v6537 = vunpack.c.l.b16 %v6431
    %v6538 = vunpack.c.h.b16 %v6431
    %v6539 = vunpack.c.l.b16 %v6432
    %v6540 = vunpack.c.h.b16 %v6432
    %v6541 = vpack.c.b16 %v6479, %v6477
    %v6542 = vpack.c.b16 %v6480, %v6478
    %v6543 = vpack.c.b16 %v6483, %v6481
    %v6544 = vpack.c.b16 %v6484, %v6482
    %v6545 = vpack.c.b16 %v6487, %v6485
    %v6546 = vpack.c.b16 %v6488, %v6486
    %v6547 = vpack.c.b16 %v6491, %v6489
    %v6548 = vpack.c.b16 %v6492, %v6490
    %v6549 = vpack.c.b16 %v6495, %v6493
    %v6550 = vpack.c.b16 %v6496, %v6494
    %v6551 = vpack.c.b16 %v6499, %v6497
    %v6552 = vpack.c.b16 %v6500, %v6498
    %v6553 = vpack.c.b16 %v6503, %v6501
    %v6554 = vpack.c.b16 %v6504, %v6502
    %v6555 = vpack.c.b16 %v6507, %v6505
    %v6556 = vpack.c.b16 %v6508, %v6506
    %v6557 = vpack.c.b16 %v6511, %v6509
    %v6558 = vpack.c.b16 %v6512, %v6510
    %v6559 = vpack.c.b16 %v6515, %v6513
    %v6560 = vpack.c.b16 %v6516, %v6514
    %v6561 = vpack.c.b16 %v6519, %v6517
    %v6562 = vpack.c.b16 %v6520, %v6518
    %v6563 = vpack.c.b16 %v6523, %v6521
    %v6564 = vpack.c.b16 %v6524, %v6522
    %v6565 = vpack.c.b16 %v6527, %v6525
    %v6566 = vpack.c.b16 %v6528, %v6526
    %v6567 = vpack.c.b16 %v6531, %v6529
    %v6568 = vpack.c.b16 %v6532, %v6530
    %v6569 = vpack.c.b16 %v6535, %v6533
    %v6570 = vpack.c.b16 %v6536, %v6534
    %v6571 = vpack.c.b16 %v6539, %v6537
    %v6572 = vpack.c.b16 %v6540, %v6538
    %6605 = vmatprep.subr.bf16.mxu0 %v6542
    %6606 = vmatpush1.bf16.msra.mxu0 %v6541
    %6607 = vmatprep.subr.bf16.mxu0 %v6544
    %6608 = vmatpush1.bf16.msra.mxu0 %v6543
    %6609 = vmatprep.subr.bf16.mxu0 %v6546
    %6610 = vmatpush1.bf16.msra.mxu0 %v6545
    %6611 = vmatprep.subr.bf16.mxu0 %v6548
    %6612 = vmatpush1.bf16.msra.mxu0 %v6547
    %6613 = vmatprep.subr.bf16.mxu0 %v6550
    %6614 = vmatpush1.bf16.msra.mxu0 %v6549
    %6615 = vmatprep.subr.bf16.mxu0 %v6552
    %6616 = vmatpush1.bf16.msra.mxu0 %v6551
    %6617 = vmatprep.subr.bf16.mxu0 %v6554
    %6618 = vmatpush1.bf16.msra.mxu0 %v6553
    %6619 = vmatprep.subr.bf16.mxu0 %v6556
    %6620 = vmatpush1.bf16.msra.mxu0 %v6555
    %6621 = vmatprep.subr.bf16.mxu0 %v6558
    %6622 = vmatpush1.bf16.msra.mxu0 %v6557
    %6623 = vmatprep.subr.bf16.mxu0 %v6560
    %6624 = vmatpush1.bf16.msra.mxu0 %v6559
    %6625 = vmatprep.subr.bf16.mxu0 %v6562
    %6626 = vmatpush1.bf16.msra.mxu0 %v6561
    %6627 = vmatprep.subr.bf16.mxu0 %v6564
    %6628 = vmatpush1.bf16.msra.mxu0 %v6563
    %6629 = vmatprep.subr.bf16.mxu0 %v6566
    %6630 = vmatpush1.bf16.msra.mxu0 %v6565
    %6631 = vmatprep.subr.bf16.mxu0 %v6568
    %6632 = vmatpush1.bf16.msra.mxu0 %v6567
    %6633 = vmatprep.subr.bf16.mxu0 %v6570
    %6634 = vmatpush1.bf16.msra.mxu0 %v6569
    %6635 = vmatprep.subr.bf16.mxu0 %v6572
    %6636 = vmatpush1.bf16.msra.mxu0 %v6571
    %6637 = vmatprep.mubr.bf16.mxu0 %v6396
    %6638 = vmatmul.mubr.bf16.gmra.mrb[0].mxu0 %v6395
    %v6639 = vpop.f32.mrb[0].mxu0
    %v6640 = vadd.f32 %v6438, %v6639
    %v6641 = vpop.f32.mrb[0].mxu0
    %v6642 = vadd.f32 %v6442, %v6641
    %v6643 = vpop.f32.mrb[0].mxu0
    %v6644 = vadd.f32 %v6438, %v6643
    %v6645 = vpop.f32.mrb[0].mxu0
    %v6646 = vadd.f32 %v6442, %v6645
    %6647 = vmatprep.mubr.bf16.mxu0 %v6398
    %6648 = vmatmul.mubr.bf16.gmra.mrb[0].mxu0 %v6397
    %v6649 = vpop.f32.mrb[0].mxu0
    %v6650 = vadd.f32 %v6438, %v6649
    %v6651 = vpop.f32.mrb[0].mxu0
    %v6652 = vadd.f32 %v6442, %v6651
    %v6653 = vpop.f32.mrb[0].mxu0
    %v6654 = vadd.f32 %v6438, %v6653
    %v6655 = vpop.f32.mrb[0].mxu0
    %v6656 = vadd.f32 %v6442, %v6655
    %6657 = vmatprep.mubr.bf16.mxu0 %v6400
    %6658 = vmatmul.mubr.bf16.gmra.mrb[0].mxu0 %v6399
    %v6659 = vpop.f32.mrb[0].mxu0
    %v6660 = vadd.f32 %v6438, %v6659
    %v6661 = vpop.f32.mrb[0].mxu0
    %v6662 = vadd.f32 %v6442, %v6661
    %v6663 = vpop.f32.mrb[0].mxu0
    %v6664 = vadd.f32 %v6438, %v6663
    %v6665 = vpop.f32.mrb[0].mxu0
    %v6666 = vadd.f32 %v6442, %v6665
    %6667 = vdwg.mxu0
    %v6668 = vadd.f32 %v6640, %v5378
    %v6669 = vadd.f32 %v6642, %v5379
    %v6670 = vadd.f32 %v6644, %v5380
    %v6671 = vadd.f32 %v6646, %v5381
    %v6672 = vadd.f32 %v6650, %v5382
    %v6673 = vadd.f32 %v6652, %v5383
    %v6674 = vadd.f32 %v6654, %v5384
    %v6675 = vadd.f32 %v6656, %v5385
    %v6676 = vadd.f32 %v6660, %v5386
    %v6677 = vadd.f32 %v6662, %v5387
    %v6678 = vadd.f32 %v6664, %v5388
    %v6679 = vadd.f32 %v6666, %v5389
    %v6680 = vadd.f32 %v6668, %v6669
    %6681 = vadd.xlane.f32.xlu0 %v6680
    %v6682 = vpop.xlane.xlu0 %6681
    %v6683 = vadd.f32 %v6670, %v6671
    %6684 = vadd.xlane.f32.xlu0 %v6683
    %v6685 = vpop.xlane.xlu0 %6684
    %v6686 = vadd.f32 %v6672, %v6673
    %6687 = vadd.xlane.f32.xlu0 %v6686
    %v6688 = vpop.xlane.xlu0 %6687
    %v6689 = vadd.f32 %v6674, %v6675
    %6690 = vadd.xlane.f32.xlu0 %v6689
    %v6691 = vpop.xlane.xlu0 %6690
    %v6692 = vadd.f32 %v6676, %v6677
    %6693 = vadd.xlane.f32.xlu0 %v6692
    %v6694 = vpop.xlane.xlu0 %6693
    %v6695 = vadd.f32 %v6678, %v6679
    %6696 = vadd.xlane.f32.xlu0 %v6695
    %v6697 = vpop.xlane.xlu0 %6696
    %v6698 = vmul.f32 %v6682, %v3727
    %v6699 = vmul.f32 %v6685, %v3727
    %v6700 = vmul.f32 %v6688, %v3727
    %v6701 = vmul.f32 %v6691, %v3727
    %v6702 = vmul.f32 %v6694, %v3727
    %v6703 = vmul.f32 %v6697, %v3727
    %v6704 = vsub.f32 %v6668, %v6698
    %v6705 = vsub.f32 %v6669, %v6698
    %v6706 = vsub.f32 %v6670, %v6699
    %v6707 = vsub.f32 %v6671, %v6699
    %v6708 = vsub.f32 %v6672, %v6700
    %v6709 = vsub.f32 %v6673, %v6700
    %v6710 = vsub.f32 %v6674, %v6701
    %v6711 = vsub.f32 %v6675, %v6701
    %v6712 = vsub.f32 %v6676, %v6702
    %v6713 = vsub.f32 %v6677, %v6702
    %v6714 = vsub.f32 %v6678, %v6703
    %v6715 = vsub.f32 %v6679, %v6703
    %v6716 = vmul.f32 %v6704, %v6704
    %v6717 = vmul.f32 %v6705, %v6705
    %v6718 = vmul.f32 %v6706, %v6706
    %v6719 = vmul.f32 %v6707, %v6707
    %v6720 = vmul.f32 %v6708, %v6708
    %v6721 = vmul.f32 %v6709, %v6709
    %v6722 = vmul.f32 %v6710, %v6710
    %v6723 = vmul.f32 %v6711, %v6711
    %v6724 = vmul.f32 %v6712, %v6712
    %v6725 = vmul.f32 %v6713, %v6713
    %v6726 = vmul.f32 %v6714, %v6714
    %v6727 = vmul.f32 %v6715, %v6715
    %v6728 = vadd.f32 %v6716, %v6717
    %6729 = vadd.xlane.f32.xlu0 %v6728
    %v6730 = vpop.xlane.xlu0 %6729
    %v6731 = vadd.f32 %v6718, %v6719
    %6732 = vadd.xlane.f32.xlu0 %v6731
    %v6733 = vpop.xlane.xlu0 %6732
    %v6734 = vadd.f32 %v6720, %v6721
    %6735 = vadd.xlane.f32.xlu0 %v6734
    %v6736 = vpop.xlane.xlu0 %6735
    %v6737 = vadd.f32 %v6722, %v6723
    %6738 = vadd.xlane.f32.xlu0 %v6737
    %v6739 = vpop.xlane.xlu0 %6738
    %v6740 = vadd.f32 %v6724, %v6725
    %6741 = vadd.xlane.f32.xlu0 %v6740
    %v6742 = vpop.xlane.xlu0 %6741
    %v6743 = vadd.f32 %v6726, %v6727
    %6744 = vadd.xlane.f32.xlu0 %v6743
    %v6745 = vpop.xlane.xlu0 %6744
    %v6746 = vmul.f32 %v6730, %v3727
    %v6747 = vmul.f32 %v6733, %v3727
    %v6748 = vmul.f32 %v6736, %v3727
    %v6749 = vmul.f32 %v6739, %v3727
    %v6750 = vmul.f32 %v6742, %v3727
    %v6751 = vmul.f32 %v6745, %v3727
    %v6752 = vadd.f32 %v6746, 1e-05
    %v6753 = vadd.f32 %v6747, 1e-05
    %v6754 = vadd.f32 %v6748, 1e-05
    %v6755 = vadd.f32 %v6749, 1e-05
    %v6756 = vadd.f32 %v6750, 1e-05
    %v6757 = vadd.f32 %v6751, 1e-05
    %v6758 = vrsqrt.pop %v6752
    %v6759 = vrsqrt.pop %v6753
    %v6760 = vrsqrt.pop %v6754
    %v6761 = vrsqrt.pop %v6755
    %v6762 = vrsqrt.pop %v6756
    %v6763 = vrsqrt.pop %v6757
    %v6764 = vmul.f32 %v6704, %v6758
    %v6765 = vmul.f32 %v6705, %v6758
    %v6766 = vmul.f32 %v6706, %v6759
    %v6767 = vmul.f32 %v6707, %v6759
    %v6768 = vmul.f32 %v6708, %v6760
    %v6769 = vmul.f32 %v6709, %v6760
    %v6770 = vmul.f32 %v6710, %v6761
    %v6771 = vmul.f32 %v6711, %v6761
    %v6772 = vmul.f32 %v6712, %v6762
    %v6773 = vmul.f32 %v6713, %v6762
    %v6774 = vmul.f32 %v6714, %v6763
    %v6775 = vmul.f32 %v6715, %v6763
    %v6776 = vld [vmem:[#allocation28] sm:$0x3]
    %v6778 = vlaneseq
    %v6779 = vshrl.u32 %v6778, 7
    %v6780 = vsub.s32 0, %v6779
    %v6781 = vrot.slane %v6776, %v6780
    %v6782 = vlaneseq
    %v6783 = vshrl.u32 %v6782, 7
    %v6784 = vsub.s32 1, %v6783
    %v6785 = vrot.slane %v6776, %v6784
    %v6788 = vmul.f32 %v6764, %v6781
    %v6789 = vmul.f32 %v6765, %v6785
    %v6790 = vmul.f32 %v6766, %v6781
    %v6791 = vmul.f32 %v6767, %v6785
    %v6792 = vmul.f32 %v6768, %v6781
    %v6793 = vmul.f32 %v6769, %v6785
    %v6794 = vmul.f32 %v6770, %v6781
    %v6795 = vmul.f32 %v6771, %v6785
    %v6796 = vmul.f32 %v6772, %v6781
    %v6797 = vmul.f32 %v6773, %v6785
    %v6798 = vmul.f32 %v6774, %v6781
    %v6799 = vmul.f32 %v6775, %v6785
    %v6800 = vld [vmem:[#allocation30] sm:$0x3]
    %v6802 = vlaneseq
    %v6803 = vshrl.u32 %v6802, 7
    %v6804 = vsub.s32 0, %v6803
    %v6805 = vrot.slane %v6800, %v6804
    %v6806 = vlaneseq
    %v6807 = vshrl.u32 %v6806, 7
    %v6808 = vsub.s32 1, %v6807
    %v6809 = vrot.slane %v6800, %v6808
    %v6812 = vadd.f32 %v6788, %v6805
    %v6813 = vadd.f32 %v6789, %v6809
    %v6814 = vadd.f32 %v6790, %v6805
    %v6815 = vadd.f32 %v6791, %v6809
    %v6816 = vadd.f32 %v6792, %v6805
    %v6817 = vadd.f32 %v6793, %v6809
    %v6818 = vadd.f32 %v6794, %v6805
    %v6819 = vadd.f32 %v6795, %v6809
    %v6820 = vadd.f32 %v6796, %v6805
    %v6821 = vadd.f32 %v6797, %v6809
    %v6822 = vadd.f32 %v6798, %v6805
    %v6823 = vadd.f32 %v6799, %v6809
    %v6824 = vpack.c.bf16 %v6814, %v6812
    %v6825 = vpack.c.bf16 %v6815, %v6813
    %v6826 = vpack.c.bf16 %v6818, %v6816
    %v6827 = vpack.c.bf16 %v6819, %v6817
    %v6828 = vpack.c.bf16 %v6822, %v6820
    %v6829 = vpack.c.bf16 %v6823, %v6821
    %v6830 = vld [vmem:[#allocation31] sm:$0xff]
    %v6831 = vld [vmem:[#allocation31 + $0x8] sm:$0xff]
    %v6832 = vld [vmem:[#allocation31 + $0x10] sm:$0xff]
    %v6833 = vld [vmem:[#allocation31 + $0x18] sm:$0xff]
    %v6834 = vld [vmem:[#allocation31 + $0x40] sm:$0xff]
    %v6835 = vld [vmem:[#allocation31 + $0x48] sm:$0xff]
    %v6836 = vld [vmem:[#allocation31 + $0x50] sm:$0xff]
    %v6837 = vld [vmem:[#allocation31 + $0x58] sm:$0xff]
    %v6838 = vld [vmem:[#allocation31 + $0x80] sm:$0xff]
    %v6839 = vld [vmem:[#allocation31 + $0x88] sm:$0xff]
    %v6840 = vld [vmem:[#allocation31 + $0x90] sm:$0xff]
    %v6841 = vld [vmem:[#allocation31 + $0x98] sm:$0xff]
    %v6842 = vld [vmem:[#allocation31 + $0xc0] sm:$0xff]
    %v6843 = vld [vmem:[#allocation31 + $0xc8] sm:$0xff]
    %v6844 = vld [vmem:[#allocation31 + $0xd0] sm:$0xff]
    %v6845 = vld [vmem:[#allocation31 + $0xd8] sm:$0xff]
    %v6846 = vld [vmem:[#allocation31 + $0x100] sm:$0xff]
    %v6847 = vld [vmem:[#allocation31 + $0x108] sm:$0xff]
    %v6848 = vld [vmem:[#allocation31 + $0x110] sm:$0xff]
    %v6849 = vld [vmem:[#allocation31 + $0x118] sm:$0xff]
    %v6850 = vld [vmem:[#allocation31 + $0x140] sm:$0xff]
    %v6851 = vld [vmem:[#allocation31 + $0x148] sm:$0xff]
    %v6852 = vld [vmem:[#allocation31 + $0x150] sm:$0xff]
    %v6853 = vld [vmem:[#allocation31 + $0x158] sm:$0xff]
    %v6854 = vld [vmem:[#allocation31 + $0x180] sm:$0xff]
    %v6855 = vld [vmem:[#allocation31 + $0x188] sm:$0xff]
    %v6856 = vld [vmem:[#allocation31 + $0x190] sm:$0xff]
    %v6857 = vld [vmem:[#allocation31 + $0x198] sm:$0xff]
    %v6858 = vld [vmem:[#allocation31 + $0x1c0] sm:$0xff]
    %v6859 = vld [vmem:[#allocation31 + $0x1c8] sm:$0xff]
    %v6860 = vld [vmem:[#allocation31 + $0x1d0] sm:$0xff]
    %v6861 = vld [vmem:[#allocation31 + $0x1d8] sm:$0xff]
    %v6862 = vld [vmem:[#allocation31 + $0x200] sm:$0xff]
    %v6863 = vld [vmem:[#allocation31 + $0x208] sm:$0xff]
    %v6864 = vld [vmem:[#allocation31 + $0x210] sm:$0xff]
    %v6865 = vld [vmem:[#allocation31 + $0x218] sm:$0xff]
    %v6866 = vld [vmem:[#allocation31 + $0x240] sm:$0xff]
    %v6867 = vld [vmem:[#allocation31 + $0x248] sm:$0xff]
    %v6868 = vld [vmem:[#allocation31 + $0x250] sm:$0xff]
    %v6869 = vld [vmem:[#allocation31 + $0x258] sm:$0xff]
    %v6870 = vld [vmem:[#allocation31 + $0x280] sm:$0xff]
    %v6871 = vld [vmem:[#allocation31 + $0x288] sm:$0xff]
    %v6872 = vld [vmem:[#allocation31 + $0x290] sm:$0xff]
    %v6873 = vld [vmem:[#allocation31 + $0x298] sm:$0xff]
    %v6874 = vld [vmem:[#allocation31 + $0x2c0] sm:$0xff]
    %v6875 = vld [vmem:[#allocation31 + $0x2c8] sm:$0xff]
    %v6876 = vld [vmem:[#allocation31 + $0x2d0] sm:$0xff]
    %v6877 = vld [vmem:[#allocation31 + $0x2d8] sm:$0xff]
    %v6878 = vld [vmem:[#allocation31 + $0x300] sm:$0xff]
    %v6879 = vld [vmem:[#allocation31 + $0x308] sm:$0xff]
    %v6880 = vld [vmem:[#allocation31 + $0x310] sm:$0xff]
    %v6881 = vld [vmem:[#allocation31 + $0x318] sm:$0xff]
    %v6882 = vld [vmem:[#allocation31 + $0x340] sm:$0xff]
    %v6883 = vld [vmem:[#allocation31 + $0x348] sm:$0xff]
    %v6884 = vld [vmem:[#allocation31 + $0x350] sm:$0xff]
    %v6885 = vld [vmem:[#allocation31 + $0x358] sm:$0xff]
    %v6886 = vld [vmem:[#allocation31 + $0x380] sm:$0xff]
    %v6887 = vld [vmem:[#allocation31 + $0x388] sm:$0xff]
    %v6888 = vld [vmem:[#allocation31 + $0x390] sm:$0xff]
    %v6889 = vld [vmem:[#allocation31 + $0x398] sm:$0xff]
    %v6890 = vld [vmem:[#allocation31 + $0x3c0] sm:$0xff]
    %v6891 = vld [vmem:[#allocation31 + $0x3c8] sm:$0xff]
    %v6892 = vld [vmem:[#allocation31 + $0x3d0] sm:$0xff]
    %v6893 = vld [vmem:[#allocation31 + $0x3d8] sm:$0xff]
    %v6894 = vld [vmem:[#allocation31 + $0x400] sm:$0xff]
    %v6895 = vld [vmem:[#allocation31 + $0x408] sm:$0xff]
    %v6896 = vld [vmem:[#allocation31 + $0x410] sm:$0xff]
    %v6897 = vld [vmem:[#allocation31 + $0x418] sm:$0xff]
    %v6898 = vld [vmem:[#allocation31 + $0x440] sm:$0xff]
    %v6899 = vld [vmem:[#allocation31 + $0x448] sm:$0xff]
    %v6900 = vld [vmem:[#allocation31 + $0x450] sm:$0xff]
    %v6901 = vld [vmem:[#allocation31 + $0x458] sm:$0xff]
    %v6902 = vld [vmem:[#allocation31 + $0x480] sm:$0xff]
    %v6903 = vld [vmem:[#allocation31 + $0x488] sm:$0xff]
    %v6904 = vld [vmem:[#allocation31 + $0x490] sm:$0xff]
    %v6905 = vld [vmem:[#allocation31 + $0x498] sm:$0xff]
    %v6906 = vld [vmem:[#allocation31 + $0x4c0] sm:$0xff]
    %v6907 = vld [vmem:[#allocation31 + $0x4c8] sm:$0xff]
    %v6908 = vld [vmem:[#allocation31 + $0x4d0] sm:$0xff]
    %v6909 = vld [vmem:[#allocation31 + $0x4d8] sm:$0xff]
    %v6910 = vld [vmem:[#allocation31 + $0x500] sm:$0xff]
    %v6911 = vld [vmem:[#allocation31 + $0x508] sm:$0xff]
    %v6912 = vld [vmem:[#allocation31 + $0x510] sm:$0xff]
    %v6913 = vld [vmem:[#allocation31 + $0x518] sm:$0xff]
    %v6914 = vld [vmem:[#allocation31 + $0x540] sm:$0xff]
    %v6915 = vld [vmem:[#allocation31 + $0x548] sm:$0xff]
    %v6916 = vld [vmem:[#allocation31 + $0x550] sm:$0xff]
    %v6917 = vld [vmem:[#allocation31 + $0x558] sm:$0xff]
    %v6918 = vld [vmem:[#allocation31 + $0x580] sm:$0xff]
    %v6919 = vld [vmem:[#allocation31 + $0x588] sm:$0xff]
    %v6920 = vld [vmem:[#allocation31 + $0x590] sm:$0xff]
    %v6921 = vld [vmem:[#allocation31 + $0x598] sm:$0xff]
    %v6922 = vld [vmem:[#allocation31 + $0x5c0] sm:$0xff]
    %v6923 = vld [vmem:[#allocation31 + $0x5c8] sm:$0xff]
    %v6924 = vld [vmem:[#allocation31 + $0x5d0] sm:$0xff]
    %v6925 = vld [vmem:[#allocation31 + $0x5d8] sm:$0xff]
    %v6926 = vld [vmem:[#allocation31 + $0x600] sm:$0xff]
    %v6927 = vld [vmem:[#allocation31 + $0x608] sm:$0xff]
    %v6928 = vld [vmem:[#allocation31 + $0x610] sm:$0xff]
    %v6929 = vld [vmem:[#allocation31 + $0x618] sm:$0xff]
    %v6930 = vld [vmem:[#allocation31 + $0x640] sm:$0xff]
    %v6931 = vld [vmem:[#allocation31 + $0x648] sm:$0xff]
    %v6932 = vld [vmem:[#allocation31 + $0x650] sm:$0xff]
    %v6933 = vld [vmem:[#allocation31 + $0x658] sm:$0xff]
    %v6934 = vld [vmem:[#allocation31 + $0x680] sm:$0xff]
    %v6935 = vld [vmem:[#allocation31 + $0x688] sm:$0xff]
    %v6936 = vld [vmem:[#allocation31 + $0x690] sm:$0xff]
    %v6937 = vld [vmem:[#allocation31 + $0x698] sm:$0xff]
    %v6938 = vld [vmem:[#allocation31 + $0x6c0] sm:$0xff]
    %v6939 = vld [vmem:[#allocation31 + $0x6c8] sm:$0xff]
    %v6940 = vld [vmem:[#allocation31 + $0x6d0] sm:$0xff]
    %v6941 = vld [vmem:[#allocation31 + $0x6d8] sm:$0xff]
    %v6942 = vld [vmem:[#allocation31 + $0x700] sm:$0xff]
    %v6943 = vld [vmem:[#allocation31 + $0x708] sm:$0xff]
    %v6944 = vld [vmem:[#allocation31 + $0x710] sm:$0xff]
    %v6945 = vld [vmem:[#allocation31 + $0x718] sm:$0xff]
    %v6946 = vld [vmem:[#allocation31 + $0x740] sm:$0xff]
    %v6947 = vld [vmem:[#allocation31 + $0x748] sm:$0xff]
    %v6948 = vld [vmem:[#allocation31 + $0x750] sm:$0xff]
    %v6949 = vld [vmem:[#allocation31 + $0x758] sm:$0xff]
    %v6950 = vld [vmem:[#allocation31 + $0x780] sm:$0xff]
    %v6951 = vld [vmem:[#allocation31 + $0x788] sm:$0xff]
    %v6952 = vld [vmem:[#allocation31 + $0x790] sm:$0xff]
    %v6953 = vld [vmem:[#allocation31 + $0x798] sm:$0xff]
    %v6954 = vld [vmem:[#allocation31 + $0x7c0] sm:$0xff]
    %v6955 = vld [vmem:[#allocation31 + $0x7c8] sm:$0xff]
    %v6956 = vld [vmem:[#allocation31 + $0x7d0] sm:$0xff]
    %v6957 = vld [vmem:[#allocation31 + $0x7d8] sm:$0xff]
    %v6958 = vld [vmem:[%s53] sm:$0xff]
    %v6960 = vlaneseq
    %v6961 = vshrl.u32 %v6960, 7
    %v6962 = vsub.s32 0, %v6961
    %v6963 = vrot.slane %v6958, %v6962
    %v6964 = vlaneseq
    %v6965 = vshrl.u32 %v6964, 7
    %v6966 = vsub.s32 1, %v6965
    %v6967 = vrot.slane %v6958, %v6966
    %v6968 = vlaneseq
    %v6969 = vshrl.u32 %v6968, 7
    %v6970 = vsub.s32 2, %v6969
    %v6971 = vrot.slane %v6958, %v6970
    %v6972 = vlaneseq
    %v6973 = vshrl.u32 %v6972, 7
    %v6974 = vsub.s32 3, %v6973
    %v6975 = vrot.slane %v6958, %v6974
    %v6976 = vlaneseq
    %v6977 = vshrl.u32 %v6976, 7
    %v6978 = vsub.s32 4, %v6977
    %v6979 = vrot.slane %v6958, %v6978
    %v6980 = vlaneseq
    %v6981 = vshrl.u32 %v6980, 7
    %v6982 = vsub.s32 5, %v6981
    %v6983 = vrot.slane %v6958, %v6982
    %v6984 = vlaneseq
    %v6985 = vshrl.u32 %v6984, 7
    %v6986 = vsub.s32 6, %v6985
    %v6987 = vrot.slane %v6958, %v6986
    %v6988 = vlaneseq
    %v6989 = vshrl.u32 %v6988, 7
    %v6990 = vsub.s32 7, %v6989
    %v6991 = vrot.slane %v6958, %v6990
    %v7128 = vunpack.c.l.b16 %v6830
    %v7129 = vunpack.c.h.b16 %v6830
    %v7130 = vunpack.c.l.b16 %v6831
    %v7131 = vunpack.c.h.b16 %v6831
    %v7132 = vunpack.c.l.b16 %v6832
    %v7133 = vunpack.c.h.b16 %v6832
    %v7134 = vunpack.c.l.b16 %v6833
    %v7135 = vunpack.c.h.b16 %v6833
    %v7136 = vunpack.c.l.b16 %v6834
    %v7137 = vunpack.c.h.b16 %v6834
    %v7138 = vunpack.c.l.b16 %v6835
    %v7139 = vunpack.c.h.b16 %v6835
    %v7140 = vunpack.c.l.b16 %v6836
    %v7141 = vunpack.c.h.b16 %v6836
    %v7142 = vunpack.c.l.b16 %v6837
    %v7143 = vunpack.c.h.b16 %v6837
    %v7144 = vunpack.c.l.b16 %v6838
    %v7145 = vunpack.c.h.b16 %v6838
    %v7146 = vunpack.c.l.b16 %v6839
    %v7147 = vunpack.c.h.b16 %v6839
    %v7148 = vunpack.c.l.b16 %v6840
    %v7149 = vunpack.c.h.b16 %v6840
    %v7150 = vunpack.c.l.b16 %v6841
    %v7151 = vunpack.c.h.b16 %v6841
    %v7152 = vunpack.c.l.b16 %v6842
    %v7153 = vunpack.c.h.b16 %v6842
    %v7154 = vunpack.c.l.b16 %v6843
    %v7155 = vunpack.c.h.b16 %v6843
    %v7156 = vunpack.c.l.b16 %v6844
    %v7157 = vunpack.c.h.b16 %v6844
    %v7158 = vunpack.c.l.b16 %v6845
    %v7159 = vunpack.c.h.b16 %v6845
    %v7160 = vunpack.c.l.b16 %v6846
    %v7161 = vunpack.c.h.b16 %v6846
    %v7162 = vunpack.c.l.b16 %v6847
    %v7163 = vunpack.c.h.b16 %v6847
    %v7164 = vunpack.c.l.b16 %v6848
    %v7165 = vunpack.c.h.b16 %v6848
    %v7166 = vunpack.c.l.b16 %v6849
    %v7167 = vunpack.c.h.b16 %v6849
    %v7168 = vunpack.c.l.b16 %v6850
    %v7169 = vunpack.c.h.b16 %v6850
    %v7170 = vunpack.c.l.b16 %v6851
    %v7171 = vunpack.c.h.b16 %v6851
    %v7172 = vunpack.c.l.b16 %v6852
    %v7173 = vunpack.c.h.b16 %v6852
    %v7174 = vunpack.c.l.b16 %v6853
    %v7175 = vunpack.c.h.b16 %v6853
    %v7176 = vunpack.c.l.b16 %v6854
    %v7177 = vunpack.c.h.b16 %v6854
    %v7178 = vunpack.c.l.b16 %v6855
    %v7179 = vunpack.c.h.b16 %v6855
    %v7180 = vunpack.c.l.b16 %v6856
    %v7181 = vunpack.c.h.b16 %v6856
    %v7182 = vunpack.c.l.b16 %v6857
    %v7183 = vunpack.c.h.b16 %v6857
    %v7184 = vunpack.c.l.b16 %v6858
    %v7185 = vunpack.c.h.b16 %v6858
    %v7186 = vunpack.c.l.b16 %v6859
    %v7187 = vunpack.c.h.b16 %v6859
    %v7188 = vunpack.c.l.b16 %v6860
    %v7189 = vunpack.c.h.b16 %v6860
    %v7190 = vunpack.c.l.b16 %v6861
    %v7191 = vunpack.c.h.b16 %v6861
    %v7192 = vunpack.c.l.b16 %v6862
    %v7193 = vunpack.c.h.b16 %v6862
    %v7194 = vunpack.c.l.b16 %v6863
    %v7195 = vunpack.c.h.b16 %v6863
    %v7196 = vunpack.c.l.b16 %v6864
    %v7197 = vunpack.c.h.b16 %v6864
    %v7198 = vunpack.c.l.b16 %v6865
    %v7199 = vunpack.c.h.b16 %v6865
    %v7200 = vunpack.c.l.b16 %v6866
    %v7201 = vunpack.c.h.b16 %v6866
    %v7202 = vunpack.c.l.b16 %v6867
    %v7203 = vunpack.c.h.b16 %v6867
    %v7204 = vunpack.c.l.b16 %v6868
    %v7205 = vunpack.c.h.b16 %v6868
    %v7206 = vunpack.c.l.b16 %v6869
    %v7207 = vunpack.c.h.b16 %v6869
    %v7208 = vunpack.c.l.b16 %v6870
    %v7209 = vunpack.c.h.b16 %v6870
    %v7210 = vunpack.c.l.b16 %v6871
    %v7211 = vunpack.c.h.b16 %v6871
    %v7212 = vunpack.c.l.b16 %v6872
    %v7213 = vunpack.c.h.b16 %v6872
    %v7214 = vunpack.c.l.b16 %v6873
    %v7215 = vunpack.c.h.b16 %v6873
    %v7216 = vunpack.c.l.b16 %v6874
    %v7217 = vunpack.c.h.b16 %v6874
    %v7218 = vunpack.c.l.b16 %v6875
    %v7219 = vunpack.c.h.b16 %v6875
    %v7220 = vunpack.c.l.b16 %v6876
    %v7221 = vunpack.c.h.b16 %v6876
    %v7222 = vunpack.c.l.b16 %v6877
    %v7223 = vunpack.c.h.b16 %v6877
    %v7224 = vunpack.c.l.b16 %v6878
    %v7225 = vunpack.c.h.b16 %v6878
    %v7226 = vunpack.c.l.b16 %v6879
    %v7227 = vunpack.c.h.b16 %v6879
    %v7228 = vunpack.c.l.b16 %v6880
    %v7229 = vunpack.c.h.b16 %v6880
    %v7230 = vunpack.c.l.b16 %v6881
    %v7231 = vunpack.c.h.b16 %v6881
    %v7232 = vunpack.c.l.b16 %v6882
    %v7233 = vunpack.c.h.b16 %v6882
    %v7234 = vunpack.c.l.b16 %v6883
    %v7235 = vunpack.c.h.b16 %v6883
    %v7236 = vunpack.c.l.b16 %v6884
    %v7237 = vunpack.c.h.b16 %v6884
    %v7238 = vunpack.c.l.b16 %v6885
    %v7239 = vunpack.c.h.b16 %v6885
    %v7240 = vunpack.c.l.b16 %v6886
    %v7241 = vunpack.c.h.b16 %v6886
    %v7242 = vunpack.c.l.b16 %v6887
    %v7243 = vunpack.c.h.b16 %v6887
    %v7244 = vunpack.c.l.b16 %v6888
    %v7245 = vunpack.c.h.b16 %v6888
    %v7246 = vunpack.c.l.b16 %v6889
    %v7247 = vunpack.c.h.b16 %v6889
    %v7248 = vunpack.c.l.b16 %v6890
    %v7249 = vunpack.c.h.b16 %v6890
    %v7250 = vunpack.c.l.b16 %v6891
    %v7251 = vunpack.c.h.b16 %v6891
    %v7252 = vunpack.c.l.b16 %v6892
    %v7253 = vunpack.c.h.b16 %v6892
    %v7254 = vunpack.c.l.b16 %v6893
    %v7255 = vunpack.c.h.b16 %v6893
    %v7256 = vunpack.c.l.b16 %v6894
    %v7257 = vunpack.c.h.b16 %v6894
    %v7258 = vunpack.c.l.b16 %v6895
    %v7259 = vunpack.c.h.b16 %v6895
    %v7260 = vunpack.c.l.b16 %v6896
    %v7261 = vunpack.c.h.b16 %v6896
    %v7262 = vunpack.c.l.b16 %v6897
    %v7263 = vunpack.c.h.b16 %v6897
    %v7264 = vunpack.c.l.b16 %v6898
    %v7265 = vunpack.c.h.b16 %v6898
    %v7266 = vunpack.c.l.b16 %v6899
    %v7267 = vunpack.c.h.b16 %v6899
    %v7268 = vunpack.c.l.b16 %v6900
    %v7269 = vunpack.c.h.b16 %v6900
    %v7270 = vunpack.c.l.b16 %v6901
    %v7271 = vunpack.c.h.b16 %v6901
    %v7272 = vunpack.c.l.b16 %v6902
    %v7273 = vunpack.c.h.b16 %v6902
    %v7274 = vunpack.c.l.b16 %v6903
    %v7275 = vunpack.c.h.b16 %v6903
    %v7276 = vunpack.c.l.b16 %v6904
    %v7277 = vunpack.c.h.b16 %v6904
    %v7278 = vunpack.c.l.b16 %v6905
    %v7279 = vunpack.c.h.b16 %v6905
    %v7280 = vunpack.c.l.b16 %v6906
    %v7281 = vunpack.c.h.b16 %v6906
    %v7282 = vunpack.c.l.b16 %v6907
    %v7283 = vunpack.c.h.b16 %v6907
    %v7284 = vunpack.c.l.b16 %v6908
    %v7285 = vunpack.c.h.b16 %v6908
    %v7286 = vunpack.c.l.b16 %v6909
    %v7287 = vunpack.c.h.b16 %v6909
    %v7288 = vunpack.c.l.b16 %v6910
    %v7289 = vunpack.c.h.b16 %v6910
    %v7290 = vunpack.c.l.b16 %v6911
    %v7291 = vunpack.c.h.b16 %v6911
    %v7292 = vunpack.c.l.b16 %v6912
    %v7293 = vunpack.c.h.b16 %v6912
    %v7294 = vunpack.c.l.b16 %v6913
    %v7295 = vunpack.c.h.b16 %v6913
    %v7296 = vunpack.c.l.b16 %v6914
    %v7297 = vunpack.c.h.b16 %v6914
    %v7298 = vunpack.c.l.b16 %v6915
    %v7299 = vunpack.c.h.b16 %v6915
    %v7300 = vunpack.c.l.b16 %v6916
    %v7301 = vunpack.c.h.b16 %v6916
    %v7302 = vunpack.c.l.b16 %v6917
    %v7303 = vunpack.c.h.b16 %v6917
    %v7304 = vunpack.c.l.b16 %v6918
    %v7305 = vunpack.c.h.b16 %v6918
    %v7306 = vunpack.c.l.b16 %v6919
    %v7307 = vunpack.c.h.b16 %v6919
    %v7308 = vunpack.c.l.b16 %v6920
    %v7309 = vunpack.c.h.b16 %v6920
    %v7310 = vunpack.c.l.b16 %v6921
    %v7311 = vunpack.c.h.b16 %v6921
    %v7312 = vunpack.c.l.b16 %v6922
    %v7313 = vunpack.c.h.b16 %v6922
    %v7314 = vunpack.c.l.b16 %v6923
    %v7315 = vunpack.c.h.b16 %v6923
    %v7316 = vunpack.c.l.b16 %v6924
    %v7317 = vunpack.c.h.b16 %v6924
    %v7318 = vunpack.c.l.b16 %v6925
    %v7319 = vunpack.c.h.b16 %v6925
    %v7320 = vunpack.c.l.b16 %v6926
    %v7321 = vunpack.c.h.b16 %v6926
    %v7322 = vunpack.c.l.b16 %v6927
    %v7323 = vunpack.c.h.b16 %v6927
    %v7324 = vunpack.c.l.b16 %v6928
    %v7325 = vunpack.c.h.b16 %v6928
    %v7326 = vunpack.c.l.b16 %v6929
    %v7327 = vunpack.c.h.b16 %v6929
    %v7328 = vunpack.c.l.b16 %v6930
    %v7329 = vunpack.c.h.b16 %v6930
    %v7330 = vunpack.c.l.b16 %v6931
    %v7331 = vunpack.c.h.b16 %v6931
    %v7332 = vunpack.c.l.b16 %v6932
    %v7333 = vunpack.c.h.b16 %v6932
    %v7334 = vunpack.c.l.b16 %v6933
    %v7335 = vunpack.c.h.b16 %v6933
    %v7336 = vunpack.c.l.b16 %v6934
    %v7337 = vunpack.c.h.b16 %v6934
    %v7338 = vunpack.c.l.b16 %v6935
    %v7339 = vunpack.c.h.b16 %v6935
    %v7340 = vunpack.c.l.b16 %v6936
    %v7341 = vunpack.c.h.b16 %v6936
    %v7342 = vunpack.c.l.b16 %v6937
    %v7343 = vunpack.c.h.b16 %v6937
    %v7344 = vunpack.c.l.b16 %v6938
    %v7345 = vunpack.c.h.b16 %v6938
    %v7346 = vunpack.c.l.b16 %v6939
    %v7347 = vunpack.c.h.b16 %v6939
    %v7348 = vunpack.c.l.b16 %v6940
    %v7349 = vunpack.c.h.b16 %v6940
    %v7350 = vunpack.c.l.b16 %v6941
    %v7351 = vunpack.c.h.b16 %v6941
    %v7352 = vunpack.c.l.b16 %v6942
    %v7353 = vunpack.c.h.b16 %v6942
    %v7354 = vunpack.c.l.b16 %v6943
    %v7355 = vunpack.c.h.b16 %v6943
    %v7356 = vunpack.c.l.b16 %v6944
    %v7357 = vunpack.c.h.b16 %v6944
    %v7358 = vunpack.c.l.b16 %v6945
    %v7359 = vunpack.c.h.b16 %v6945
    %v7360 = vunpack.c.l.b16 %v6946
    %v7361 = vunpack.c.h.b16 %v6946
    %v7362 = vunpack.c.l.b16 %v6947
    %v7363 = vunpack.c.h.b16 %v6947
    %v7364 = vunpack.c.l.b16 %v6948
    %v7365 = vunpack.c.h.b16 %v6948
    %v7366 = vunpack.c.l.b16 %v6949
    %v7367 = vunpack.c.h.b16 %v6949
    %v7368 = vunpack.c.l.b16 %v6950
    %v7369 = vunpack.c.h.b16 %v6950
    %v7370 = vunpack.c.l.b16 %v6951
    %v7371 = vunpack.c.h.b16 %v6951
    %v7372 = vunpack.c.l.b16 %v6952
    %v7373 = vunpack.c.h.b16 %v6952
    %v7374 = vunpack.c.l.b16 %v6953
    %v7375 = vunpack.c.h.b16 %v6953
    %v7376 = vunpack.c.l.b16 %v6954
    %v7377 = vunpack.c.h.b16 %v6954
    %v7378 = vunpack.c.l.b16 %v6955
    %v7379 = vunpack.c.h.b16 %v6955
    %v7380 = vunpack.c.l.b16 %v6956
    %v7381 = vunpack.c.h.b16 %v6956
    %v7382 = vunpack.c.l.b16 %v6957
    %v7383 = vunpack.c.h.b16 %v6957
    %v7384 = vpack.c.b16 %v7136, %v7128
    %v7385 = vpack.c.b16 %v7137, %v7129
    %v7386 = vpack.c.b16 %v7138, %v7130
    %v7387 = vpack.c.b16 %v7139, %v7131
    %v7388 = vpack.c.b16 %v7140, %v7132
    %v7389 = vpack.c.b16 %v7141, %v7133
    %v7390 = vpack.c.b16 %v7142, %v7134
    %v7391 = vpack.c.b16 %v7143, %v7135
    %v7392 = vpack.c.b16 %v7152, %v7144
    %v7393 = vpack.c.b16 %v7153, %v7145
    %v7394 = vpack.c.b16 %v7154, %v7146
    %v7395 = vpack.c.b16 %v7155, %v7147
    %v7396 = vpack.c.b16 %v7156, %v7148
    %v7397 = vpack.c.b16 %v7157, %v7149
    %v7398 = vpack.c.b16 %v7158, %v7150
    %v7399 = vpack.c.b16 %v7159, %v7151
    %v7400 = vpack.c.b16 %v7168, %v7160
    %v7401 = vpack.c.b16 %v7169, %v7161
    %v7402 = vpack.c.b16 %v7170, %v7162
    %v7403 = vpack.c.b16 %v7171, %v7163
    %v7404 = vpack.c.b16 %v7172, %v7164
    %v7405 = vpack.c.b16 %v7173, %v7165
    %v7406 = vpack.c.b16 %v7174, %v7166
    %v7407 = vpack.c.b16 %v7175, %v7167
    %v7408 = vpack.c.b16 %v7184, %v7176
    %v7409 = vpack.c.b16 %v7185, %v7177
    %v7410 = vpack.c.b16 %v7186, %v7178
    %v7411 = vpack.c.b16 %v7187, %v7179
    %v7412 = vpack.c.b16 %v7188, %v7180
    %v7413 = vpack.c.b16 %v7189, %v7181
    %v7414 = vpack.c.b16 %v7190, %v7182
    %v7415 = vpack.c.b16 %v7191, %v7183
    %v7416 = vpack.c.b16 %v7200, %v7192
    %v7417 = vpack.c.b16 %v7201, %v7193
    %v7418 = vpack.c.b16 %v7202, %v7194
    %v7419 = vpack.c.b16 %v7203, %v7195
    %v7420 = vpack.c.b16 %v7204, %v7196
    %v7421 = vpack.c.b16 %v7205, %v7197
    %v7422 = vpack.c.b16 %v7206, %v7198
    %v7423 = vpack.c.b16 %v7207, %v7199
    %v7424 = vpack.c.b16 %v7216, %v7208
    %v7425 = vpack.c.b16 %v7217, %v7209
    %v7426 = vpack.c.b16 %v7218, %v7210
    %v7427 = vpack.c.b16 %v7219, %v7211
    %v7428 = vpack.c.b16 %v7220, %v7212
    %v7429 = vpack.c.b16 %v7221, %v7213
    %v7430 = vpack.c.b16 %v7222, %v7214
    %v7431 = vpack.c.b16 %v7223, %v7215
    %v7432 = vpack.c.b16 %v7232, %v7224
    %v7433 = vpack.c.b16 %v7233, %v7225
    %v7434 = vpack.c.b16 %v7234, %v7226
    %v7435 = vpack.c.b16 %v7235, %v7227
    %v7436 = vpack.c.b16 %v7236, %v7228
    %v7437 = vpack.c.b16 %v7237, %v7229
    %v7438 = vpack.c.b16 %v7238, %v7230
    %v7439 = vpack.c.b16 %v7239, %v7231
    %v7440 = vpack.c.b16 %v7248, %v7240
    %v7441 = vpack.c.b16 %v7249, %v7241
    %v7442 = vpack.c.b16 %v7250, %v7242
    %v7443 = vpack.c.b16 %v7251, %v7243
    %v7444 = vpack.c.b16 %v7252, %v7244
    %v7445 = vpack.c.b16 %v7253, %v7245
    %v7446 = vpack.c.b16 %v7254, %v7246
    %v7447 = vpack.c.b16 %v7255, %v7247
    %v7448 = vpack.c.b16 %v7264, %v7256
    %v7449 = vpack.c.b16 %v7265, %v7257
    %v7450 = vpack.c.b16 %v7266, %v7258
    %v7451 = vpack.c.b16 %v7267, %v7259
    %v7452 = vpack.c.b16 %v7268, %v7260
    %v7453 = vpack.c.b16 %v7269, %v7261
    %v7454 = vpack.c.b16 %v7270, %v7262
    %v7455 = vpack.c.b16 %v7271, %v7263
    %v7456 = vpack.c.b16 %v7280, %v7272
    %v7457 = vpack.c.b16 %v7281, %v7273
    %v7458 = vpack.c.b16 %v7282, %v7274
    %v7459 = vpack.c.b16 %v7283, %v7275
    %v7460 = vpack.c.b16 %v7284, %v7276
    %v7461 = vpack.c.b16 %v7285, %v7277
    %v7462 = vpack.c.b16 %v7286, %v7278
    %v7463 = vpack.c.b16 %v7287, %v7279
    %v7464 = vpack.c.b16 %v7296, %v7288
    %v7465 = vpack.c.b16 %v7297, %v7289
    %v7466 = vpack.c.b16 %v7298, %v7290
    %v7467 = vpack.c.b16 %v7299, %v7291
    %v7468 = vpack.c.b16 %v7300, %v7292
    %v7469 = vpack.c.b16 %v7301, %v7293
    %v7470 = vpack.c.b16 %v7302, %v7294
    %v7471 = vpack.c.b16 %v7303, %v7295
    %v7472 = vpack.c.b16 %v7312, %v7304
    %v7473 = vpack.c.b16 %v7313, %v7305
    %v7474 = vpack.c.b16 %v7314, %v7306
    %v7475 = vpack.c.b16 %v7315, %v7307
    %v7476 = vpack.c.b16 %v7316, %v7308
    %v7477 = vpack.c.b16 %v7317, %v7309
    %v7478 = vpack.c.b16 %v7318, %v7310
    %v7479 = vpack.c.b16 %v7319, %v7311
    %v7480 = vpack.c.b16 %v7328, %v7320
    %v7481 = vpack.c.b16 %v7329, %v7321
    %v7482 = vpack.c.b16 %v7330, %v7322
    %v7483 = vpack.c.b16 %v7331, %v7323
    %v7484 = vpack.c.b16 %v7332, %v7324
    %v7485 = vpack.c.b16 %v7333, %v7325
    %v7486 = vpack.c.b16 %v7334, %v7326
    %v7487 = vpack.c.b16 %v7335, %v7327
    %v7488 = vpack.c.b16 %v7344, %v7336
    %v7489 = vpack.c.b16 %v7345, %v7337
    %v7490 = vpack.c.b16 %v7346, %v7338
    %v7491 = vpack.c.b16 %v7347, %v7339
    %v7492 = vpack.c.b16 %v7348, %v7340
    %v7493 = vpack.c.b16 %v7349, %v7341
    %v7494 = vpack.c.b16 %v7350, %v7342
    %v7495 = vpack.c.b16 %v7351, %v7343
    %v7496 = vpack.c.b16 %v7360, %v7352
    %v7497 = vpack.c.b16 %v7361, %v7353
    %v7498 = vpack.c.b16 %v7362, %v7354
    %v7499 = vpack.c.b16 %v7363, %v7355
    %v7500 = vpack.c.b16 %v7364, %v7356
    %v7501 = vpack.c.b16 %v7365, %v7357
    %v7502 = vpack.c.b16 %v7366, %v7358
    %v7503 = vpack.c.b16 %v7367, %v7359
    %v7504 = vpack.c.b16 %v7376, %v7368
    %v7505 = vpack.c.b16 %v7377, %v7369
    %v7506 = vpack.c.b16 %v7378, %v7370
    %v7507 = vpack.c.b16 %v7379, %v7371
    %v7508 = vpack.c.b16 %v7380, %v7372
    %v7509 = vpack.c.b16 %v7381, %v7373
    %v7510 = vpack.c.b16 %v7382, %v7374
    %v7511 = vpack.c.b16 %v7383, %v7375
    %7640 = vmatprep.subr.bf16.mxu0 %v7385
    %7641 = vmatpush1.bf16.msra.mxu0 %v7384
    %7642 = vmatprep.subr.bf16.mxu0 %v7393
    %7643 = vmatpush1.bf16.msra.mxu0 %v7392
    %7644 = vmatprep.subr.bf16.mxu0 %v7401
    %7645 = vmatpush1.bf16.msra.mxu0 %v7400
    %7646 = vmatprep.subr.bf16.mxu0 %v7409
    %7647 = vmatpush1.bf16.msra.mxu0 %v7408
    %7648 = vmatprep.subr.bf16.mxu0 %v7417
    %7649 = vmatpush1.bf16.msra.mxu0 %v7416
    %7650 = vmatprep.subr.bf16.mxu0 %v7425
    %7651 = vmatpush1.bf16.msra.mxu0 %v7424
    %7652 = vmatprep.subr.bf16.mxu0 %v7433
    %7653 = vmatpush1.bf16.msra.mxu0 %v7432
    %7654 = vmatprep.subr.bf16.mxu0 %v7441
    %7655 = vmatpush1.bf16.msra.mxu0 %v7440
    %7656 = vmatprep.subr.bf16.mxu0 %v7449
    %7657 = vmatpush1.bf16.msra.mxu0 %v7448
    %7658 = vmatprep.subr.bf16.mxu0 %v7457
    %7659 = vmatpush1.bf16.msra.mxu0 %v7456
    %7660 = vmatprep.subr.bf16.mxu0 %v7465
    %7661 = vmatpush1.bf16.msra.mxu0 %v7464
    %7662 = vmatprep.subr.bf16.mxu0 %v7473
    %7663 = vmatpush1.bf16.msra.mxu0 %v7472
    %7664 = vmatprep.subr.bf16.mxu0 %v7481
    %7665 = vmatpush1.bf16.msra.mxu0 %v7480
    %7666 = vmatprep.subr.bf16.mxu0 %v7489
    %7667 = vmatpush1.bf16.msra.mxu0 %v7488
    %7668 = vmatprep.subr.bf16.mxu0 %v7497
    %7669 = vmatpush1.bf16.msra.mxu0 %v7496
    %7670 = vmatprep.subr.bf16.mxu0 %v7505
    %7671 = vmatpush1.bf16.msra.mxu0 %v7504
    %7672 = vmatprep.mubr.bf16.mxu0 %v6825
    %7673 = vmatmul.mubr.bf16.gmra.mrb[0].mxu0 %v6824
    %v7674 = vpop.f32.mrb[0].mxu0
    %v7675 = vadd.f32 %v6963, %v7674
    %v7676 = vpop.f32.mrb[0].mxu0
    %v7677 = vadd.f32 %v6967, %v7676
    %v7678 = vpop.f32.mrb[0].mxu0
    %v7679 = vadd.f32 %v6963, %v7678
    %v7680 = vpop.f32.mrb[0].mxu0
    %v7681 = vadd.f32 %v6967, %v7680
    %7682 = vmatprep.mubr.bf16.mxu0 %v6827
    %7683 = vmatmul.mubr.bf16.gmra.mrb[0].mxu0 %v6826
    %v7684 = vpop.f32.mrb[0].mxu0
    %v7685 = vadd.f32 %v6963, %v7684
    %v7686 = vpop.f32.mrb[0].mxu0
    %v7687 = vadd.f32 %v6967, %v7686
    %v7688 = vpop.f32.mrb[0].mxu0
    %v7689 = vadd.f32 %v6963, %v7688
    %v7690 = vpop.f32.mrb[0].mxu0
    %v7691 = vadd.f32 %v6967, %v7690
    %7692 = vmatprep.mubr.bf16.mxu0 %v6829
    %7693 = vmatmul.mubr.bf16.gmra.mrb[0].mxu0 %v6828
    %v7694 = vpop.f32.mrb[0].mxu0
    %v7695 = vadd.f32 %v6963, %v7694
    %v7696 = vpop.f32.mrb[0].mxu0
    %v7697 = vadd.f32 %v6967, %v7696
    %v7698 = vpop.f32.mrb[0].mxu0
    %v7699 = vadd.f32 %v6963, %v7698
    %v7700 = vpop.f32.mrb[0].mxu0
    %v7701 = vadd.f32 %v6967, %v7700
    %7702 = vdwg.mxu0
    %7703 = vmatprep.subr.bf16.mxu0 %v7387
    %7704 = vmatpush1.bf16.msra.mxu0 %v7386
    %7705 = vmatprep.subr.bf16.mxu0 %v7395
    %7706 = vmatpush1.bf16.msra.mxu0 %v7394
    %7707 = vmatprep.subr.bf16.mxu0 %v7403
    %7708 = vmatpush1.bf16.msra.mxu0 %v7402
    %7709 = vmatprep.subr.bf16.mxu0 %v7411
    %7710 = vmatpush1.bf16.msra.mxu0 %v7410
    %7711 = vmatprep.subr.bf16.mxu0 %v7419
    %7712 = vmatpush1.bf16.msra.mxu0 %v7418
    %7713 = vmatprep.subr.bf16.mxu0 %v7427
    %7714 = vmatpush1.bf16.msra.mxu0 %v7426
    %7715 = vmatprep.subr.bf16.mxu0 %v7435
    %7716 = vmatpush1.bf16.msra.mxu0 %v7434
    %7717 = vmatprep.subr.bf16.mxu0 %v7443
    %7718 = vmatpush1.bf16.msra.mxu0 %v7442
    %7719 = vmatprep.subr.bf16.mxu0 %v7451
    %7720 = vmatpush1.bf16.msra.mxu0 %v7450
    %7721 = vmatprep.subr.bf16.mxu0 %v7459
    %7722 = vmatpush1.bf16.msra.mxu0 %v7458
    %7723 = vmatprep.subr.bf16.mxu0 %v7467
    %7724 = vmatpush1.bf16.msra.mxu0 %v7466
    %7725 = vmatprep.subr.bf16.mxu0 %v7475
    %7726 = vmatpush1.bf16.msra.mxu0 %v7474
    %7727 = vmatprep.subr.bf16.mxu0 %v7483
    %7728 = vmatpush1.bf16.msra.mxu0 %v7482
    %7729 = vmatprep.subr.bf16.mxu0 %v7491
    %7730 = vmatpush1.bf16.msra.mxu0 %v7490
    %7731 = vmatprep.subr.bf16.mxu0 %v7499
    %7732 = vmatpush1.bf16.msra.mxu0 %v7498
    %7733 = vmatprep.subr.bf16.mxu0 %v7507
    %7734 = vmatpush1.bf16.msra.mxu0 %v7506
    %7735 = vmatprep.mubr.bf16.mxu0 %v6825
    %7736 = vmatmul.mubr.bf16.gmra.mrb[0].mxu0 %v6824
    %v7737 = vpop.f32.mrb[0].mxu0
    %v7738 = vadd.f32 %v6971, %v7737
    %v7739 = vpop.f32.mrb[0].mxu0
    %v7740 = vadd.f32 %v6975, %v7739
    %v7741 = vpop.f32.mrb[0].mxu0
    %v7742 = vadd.f32 %v6971, %v7741
    %v7743 = vpop.f32.mrb[0].mxu0
    %v7744 = vadd.f32 %v6975, %v7743
    %7745 = vmatprep.mubr.bf16.mxu0 %v6827
    %7746 = vmatmul.mubr.bf16.gmra.mrb[0].mxu0 %v6826
    %v7747 = vpop.f32.mrb[0].mxu0
    %v7748 = vadd.f32 %v6971, %v7747
    %v7749 = vpop.f32.mrb[0].mxu0
    %v7750 = vadd.f32 %v6975, %v7749
    %v7751 = vpop.f32.mrb[0].mxu0
    %v7752 = vadd.f32 %v6971, %v7751
    %v7753 = vpop.f32.mrb[0].mxu0
    %v7754 = vadd.f32 %v6975, %v7753
    %7755 = vmatprep.mubr.bf16.mxu0 %v6829
    %7756 = vmatmul.mubr.bf16.gmra.mrb[0].mxu0 %v6828
    %v7757 = vpop.f32.mrb[0].mxu0
    %v7758 = vadd.f32 %v6971, %v7757
    %v7759 = vpop.f32.mrb[0].mxu0
    %v7760 = vadd.f32 %v6975, %v7759
    %v7761 = vpop.f32.mrb[0].mxu0
    %v7762 = vadd.f32 %v6971, %v7761
    %v7763 = vpop.f32.mrb[0].mxu0
    %v7764 = vadd.f32 %v6975, %v7763
    %7765 = vdwg.mxu0
    %7766 = vmatprep.subr.bf16.mxu0 %v7389
    %7767 = vmatpush1.bf16.msra.mxu0 %v7388
    %7768 = vmatprep.subr.bf16.mxu0 %v7397
    %7769 = vmatpush1.bf16.msra.mxu0 %v7396
    %7770 = vmatprep.subr.bf16.mxu0 %v7405
    %7771 = vmatpush1.bf16.msra.mxu0 %v7404
    %7772 = vmatprep.subr.bf16.mxu0 %v7413
    %7773 = vmatpush1.bf16.msra.mxu0 %v7412
    %7774 = vmatprep.subr.bf16.mxu0 %v7421
    %7775 = vmatpush1.bf16.msra.mxu0 %v7420
    %7776 = vmatprep.subr.bf16.mxu0 %v7429
    %7777 = vmatpush1.bf16.msra.mxu0 %v7428
    %7778 = vmatprep.subr.bf16.mxu0 %v7437
    %7779 = vmatpush1.bf16.msra.mxu0 %v7436
    %7780 = vmatprep.subr.bf16.mxu0 %v7445
    %7781 = vmatpush1.bf16.msra.mxu0 %v7444
    %7782 = vmatprep.subr.bf16.mxu0 %v7453
    %7783 = vmatpush1.bf16.msra.mxu0 %v7452
    %7784 = vmatprep.subr.bf16.mxu0 %v7461
    %7785 = vmatpush1.bf16.msra.mxu0 %v7460
    %7786 = vmatprep.subr.bf16.mxu0 %v7469
    %7787 = vmatpush1.bf16.msra.mxu0 %v7468
    %7788 = vmatprep.subr.bf16.mxu0 %v7477
    %7789 = vmatpush1.bf16.msra.mxu0 %v7476
    %7790 = vmatprep.subr.bf16.mxu0 %v7485
    %7791 = vmatpush1.bf16.msra.mxu0 %v7484
    %7792 = vmatprep.subr.bf16.mxu0 %v7493
    %7793 = vmatpush1.bf16.msra.mxu0 %v7492
    %7794 = vmatprep.subr.bf16.mxu0 %v7501
    %7795 = vmatpush1.bf16.msra.mxu0 %v7500
    %7796 = vmatprep.subr.bf16.mxu0 %v7509
    %7797 = vmatpush1.bf16.msra.mxu0 %v7508
    %7798 = vmatprep.mubr.bf16.mxu0 %v6825
    %7799 = vmatmul.mubr.bf16.gmra.mrb[0].mxu0 %v6824
    %v7800 = vpop.f32.mrb[0].mxu0
    %v7801 = vadd.f32 %v6979, %v7800
    %v7802 = vpop.f32.mrb[0].mxu0
    %v7803 = vadd.f32 %v6983, %v7802
    %v7804 = vpop.f32.mrb[0].mxu0
    %v7805 = vadd.f32 %v6979, %v7804
    %v7806 = vpop.f32.mrb[0].mxu0
    %v7807 = vadd.f32 %v6983, %v7806
    %7808 = vmatprep.mubr.bf16.mxu0 %v6827
    %7809 = vmatmul.mubr.bf16.gmra.mrb[0].mxu0 %v6826
    %v7810 = vpop.f32.mrb[0].mxu0
    %v7811 = vadd.f32 %v6979, %v7810
    %v7812 = vpop.f32.mrb[0].mxu0
    %v7813 = vadd.f32 %v6983, %v7812
    %v7814 = vpop.f32.mrb[0].mxu0
    %v7815 = vadd.f32 %v6979, %v7814
    %v7816 = vpop.f32.mrb[0].mxu0
    %v7817 = vadd.f32 %v6983, %v7816
    %7818 = vmatprep.mubr.bf16.mxu0 %v6829
    %7819 = vmatmul.mubr.bf16.gmra.mrb[0].mxu0 %v6828
    %v7820 = vpop.f32.mrb[0].mxu0
    %v7821 = vadd.f32 %v6979, %v7820
    %v7822 = vpop.f32.mrb[0].mxu0
    %v7823 = vadd.f32 %v6983, %v7822
    %v7824 = vpop.f32.mrb[0].mxu0
    %v7825 = vadd.f32 %v6979, %v7824
    %v7826 = vpop.f32.mrb[0].mxu0
    %v7827 = vadd.f32 %v6983, %v7826
    %7828 = vdwg.mxu0
    %7829 = vmatprep.subr.bf16.mxu0 %v7391
    %7830 = vmatpush1.bf16.msra.mxu0 %v7390
    %7831 = vmatprep.subr.bf16.mxu0 %v7399
    %7832 = vmatpush1.bf16.msra.mxu0 %v7398
    %7833 = vmatprep.subr.bf16.mxu0 %v7407
    %7834 = vmatpush1.bf16.msra.mxu0 %v7406
    %7835 = vmatprep.subr.bf16.mxu0 %v7415
    %7836 = vmatpush1.bf16.msra.mxu0 %v7414
    %7837 = vmatprep.subr.bf16.mxu0 %v7423
    %7838 = vmatpush1.bf16.msra.mxu0 %v7422
    %7839 = vmatprep.subr.bf16.mxu0 %v7431
    %7840 = vmatpush1.bf16.msra.mxu0 %v7430
    %7841 = vmatprep.subr.bf16.mxu0 %v7439
    %7842 = vmatpush1.bf16.msra.mxu0 %v7438
    %7843 = vmatprep.subr.bf16.mxu0 %v7447
    %7844 = vmatpush1.bf16.msra.mxu0 %v7446
    %7845 = vmatprep.subr.bf16.mxu0 %v7455
    %7846 = vmatpush1.bf16.msra.mxu0 %v7454
    %7847 = vmatprep.subr.bf16.mxu0 %v7463
    %7848 = vmatpush1.bf16.msra.mxu0 %v7462
    %7849 = vmatprep.subr.bf16.mxu0 %v7471
    %7850 = vmatpush1.bf16.msra.mxu0 %v7470
    %7851 = vmatprep.subr.bf16.mxu0 %v7479
    %7852 = vmatpush1.bf16.msra.mxu0 %v7478
    %7853 = vmatprep.subr.bf16.mxu0 %v7487
    %7854 = vmatpush1.bf16.msra.mxu0 %v7486
    %7855 = vmatprep.subr.bf16.mxu0 %v7495
    %7856 = vmatpush1.bf16.msra.mxu0 %v7494
    %7857 = vmatprep.subr.bf16.mxu0 %v7503
    %7858 = vmatpush1.bf16.msra.mxu0 %v7502
    %7859 = vmatprep.subr.bf16.mxu0 %v7511
    %7860 = vmatpush1.bf16.msra.mxu0 %v7510
    %7861 = vmatprep.mubr.bf16.mxu0 %v6825
    %7862 = vmatmul.mubr.bf16.gmra.mrb[0].mxu0 %v6824
    %v7863 = vpop.f32.mrb[0].mxu0
    %v7864 = vadd.f32 %v6987, %v7863
    %v7865 = vpop.f32.mrb[0].mxu0
    %v7866 = vadd.f32 %v6991, %v7865
    %v7867 = vpop.f32.mrb[0].mxu0
    %v7868 = vadd.f32 %v6987, %v7867
    %v7869 = vpop.f32.mrb[0].mxu0
    %v7870 = vadd.f32 %v6991, %v7869
    %7871 = vmatprep.mubr.bf16.mxu0 %v6827
    %7872 = vmatmul.mubr.bf16.gmra.mrb[0].mxu0 %v6826
    %v7873 = vpop.f32.mrb[0].mxu0
    %v7874 = vadd.f32 %v6987, %v7873
    %v7875 = vpop.f32.mrb[0].mxu0
    %v7876 = vadd.f32 %v6991, %v7875
    %v7877 = vpop.f32.mrb[0].mxu0
    %v7878 = vadd.f32 %v6987, %v7877
    %v7879 = vpop.f32.mrb[0].mxu0
    %v7880 = vadd.f32 %v6991, %v7879
    %7881 = vmatprep.mubr.bf16.mxu0 %v6829
    %7882 = vmatmul.mubr.bf16.gmra.mrb[0].mxu0 %v6828
    %v7883 = vpop.f32.mrb[0].mxu0
    %v7884 = vadd.f32 %v6987, %v7883
    %v7885 = vpop.f32.mrb[0].mxu0
    %v7886 = vadd.f32 %v6991, %v7885
    %v7887 = vpop.f32.mrb[0].mxu0
    %v7888 = vadd.f32 %v6987, %v7887
    %v7889 = vpop.f32.mrb[0].mxu0
    %v7890 = vadd.f32 %v6991, %v7889
    %7891 = vdwg.mxu0
    %v7892 = vld [vmem:[#allocation31 + $0x20] sm:$0xff]
    %v7893 = vld [vmem:[#allocation31 + $0x28] sm:$0xff]
    %v7894 = vld [vmem:[#allocation31 + $0x30] sm:$0xff]
    %v7895 = vld [vmem:[#allocation31 + $0x38] sm:$0xff]
    %v7896 = vld [vmem:[#allocation31 + $0x60] sm:$0xff]
    %v7897 = vld [vmem:[#allocation31 + $0x68] sm:$0xff]
    %v7898 = vld [vmem:[#allocation31 + $0x70] sm:$0xff]
    %v7899 = vld [vmem:[#allocation31 + $0x78] sm:$0xff]
    %v7900 = vld [vmem:[#allocation31 + $0xa0] sm:$0xff]
    %v7901 = vld [vmem:[#allocation31 + $0xa8] sm:$0xff]
    %v7902 = vld [vmem:[#allocation31 + $0xb0] sm:$0xff]
    %v7903 = vld [vmem:[#allocation31 + $0xb8] sm:$0xff]
    %v7904 = vld [vmem:[#allocation31 + $0xe0] sm:$0xff]
    %v7905 = vld [vmem:[#allocation31 + $0xe8] sm:$0xff]
    %v7906 = vld [vmem:[#allocation31 + $0xf0] sm:$0xff]
    %v7907 = vld [vmem:[#allocation31 + $0xf8] sm:$0xff]
    %v7908 = vld [vmem:[#allocation31 + $0x120] sm:$0xff]
    %v7909 = vld [vmem:[#allocation31 + $0x128] sm:$0xff]
    %v7910 = vld [vmem:[#allocation31 + $0x130] sm:$0xff]
    %v7911 = vld [vmem:[#allocation31 + $0x138] sm:$0xff]
    %v7912 = vld [vmem:[#allocation31 + $0x160] sm:$0xff]
    %v7913 = vld [vmem:[#allocation31 + $0x168] sm:$0xff]
    %v7914 = vld [vmem:[#allocation31 + $0x170] sm:$0xff]
    %v7915 = vld [vmem:[#allocation31 + $0x178] sm:$0xff]
    %v7916 = vld [vmem:[#allocation31 + $0x1a0] sm:$0xff]
    %v7917 = vld [vmem:[#allocation31 + $0x1a8] sm:$0xff]
    %v7918 = vld [vmem:[#allocation31 + $0x1b0] sm:$0xff]
    %v7919 = vld [vmem:[#allocation31 + $0x1b8] sm:$0xff]
    %v7920 = vld [vmem:[#allocation31 + $0x1e0] sm:$0xff]
    %v7921 = vld [vmem:[#allocation31 + $0x1e8] sm:$0xff]
    %v7922 = vld [vmem:[#allocation31 + $0x1f0] sm:$0xff]
    %v7923 = vld [vmem:[#allocation31 + $0x1f8] sm:$0xff]
    %v7924 = vld [vmem:[#allocation31 + $0x220] sm:$0xff]
    %v7925 = vld [vmem:[#allocation31 + $0x228] sm:$0xff]
    %v7926 = vld [vmem:[#allocation31 + $0x230] sm:$0xff]
    %v7927 = vld [vmem:[#allocation31 + $0x238] sm:$0xff]
    %v7928 = vld [vmem:[#allocation31 + $0x260] sm:$0xff]
    %v7929 = vld [vmem:[#allocation31 + $0x268] sm:$0xff]
    %v7930 = vld [vmem:[#allocation31 + $0x270] sm:$0xff]
    %v7931 = vld [vmem:[#allocation31 + $0x278] sm:$0xff]
    %v7932 = vld [vmem:[#allocation31 + $0x2a0] sm:$0xff]
    %v7933 = vld [vmem:[#allocation31 + $0x2a8] sm:$0xff]
    %v7934 = vld [vmem:[#allocation31 + $0x2b0] sm:$0xff]
    %v7935 = vld [vmem:[#allocation31 + $0x2b8] sm:$0xff]
    %v7936 = vld [vmem:[#allocation31 + $0x2e0] sm:$0xff]
    %v7937 = vld [vmem:[#allocation31 + $0x2e8] sm:$0xff]
    %v7938 = vld [vmem:[#allocation31 + $0x2f0] sm:$0xff]
    %v7939 = vld [vmem:[#allocation31 + $0x2f8] sm:$0xff]
    %v7940 = vld [vmem:[#allocation31 + $0x320] sm:$0xff]
    %v7941 = vld [vmem:[#allocation31 + $0x328] sm:$0xff]
    %v7942 = vld [vmem:[#allocation31 + $0x330] sm:$0xff]
    %v7943 = vld [vmem:[#allocation31 + $0x338] sm:$0xff]
    %v7944 = vld [vmem:[#allocation31 + $0x360] sm:$0xff]
    %v7945 = vld [vmem:[#allocation31 + $0x368] sm:$0xff]
    %v7946 = vld [vmem:[#allocation31 + $0x370] sm:$0xff]
    %v7947 = vld [vmem:[#allocation31 + $0x378] sm:$0xff]
    %v7948 = vld [vmem:[#allocation31 + $0x3a0] sm:$0xff]
    %v7949 = vld [vmem:[#allocation31 + $0x3a8] sm:$0xff]
    %v7950 = vld [vmem:[#allocation31 + $0x3b0] sm:$0xff]
    %v7951 = vld [vmem:[#allocation31 + $0x3b8] sm:$0xff]
    %v7952 = vld [vmem:[#allocation31 + $0x3e0] sm:$0xff]
    %v7953 = vld [vmem:[#allocation31 + $0x3e8] sm:$0xff]
    %v7954 = vld [vmem:[#allocation31 + $0x3f0] sm:$0xff]
    %v7955 = vld [vmem:[#allocation31 + $0x3f8] sm:$0xff]
    %v7956 = vld [vmem:[#allocation31 + $0x420] sm:$0xff]
    %v7957 = vld [vmem:[#allocation31 + $0x428] sm:$0xff]
    %v7958 = vld [vmem:[#allocation31 + $0x430] sm:$0xff]
    %v7959 = vld [vmem:[#allocation31 + $0x438] sm:$0xff]
    %v7960 = vld [vmem:[#allocation31 + $0x460] sm:$0xff]
    %v7961 = vld [vmem:[#allocation31 + $0x468] sm:$0xff]
    %v7962 = vld [vmem:[#allocation31 + $0x470] sm:$0xff]
    %v7963 = vld [vmem:[#allocation31 + $0x478] sm:$0xff]
    %v7964 = vld [vmem:[#allocation31 + $0x4a0] sm:$0xff]
    %v7965 = vld [vmem:[#allocation31 + $0x4a8] sm:$0xff]
    %v7966 = vld [vmem:[#allocation31 + $0x4b0] sm:$0xff]
    %v7967 = vld [vmem:[#allocation31 + $0x4b8] sm:$0xff]
    %v7968 = vld [vmem:[#allocation31 + $0x4e0] sm:$0xff]
    %v7969 = vld [vmem:[#allocation31 + $0x4e8] sm:$0xff]
    %v7970 = vld [vmem:[#allocation31 + $0x4f0] sm:$0xff]
    %v7971 = vld [vmem:[#allocation31 + $0x4f8] sm:$0xff]
    %v7972 = vld [vmem:[#allocation31 + $0x520] sm:$0xff]
    %v7973 = vld [vmem:[#allocation31 + $0x528] sm:$0xff]
    %v7974 = vld [vmem:[#allocation31 + $0x530] sm:$0xff]
    %v7975 = vld [vmem:[#allocation31 + $0x538] sm:$0xff]
    %v7976 = vld [vmem:[#allocation31 + $0x560] sm:$0xff]
    %v7977 = vld [vmem:[#allocation31 + $0x568] sm:$0xff]
    %v7978 = vld [vmem:[#allocation31 + $0x570] sm:$0xff]
    %v7979 = vld [vmem:[#allocation31 + $0x578] sm:$0xff]
    %v7980 = vld [vmem:[#allocation31 + $0x5a0] sm:$0xff]
    %v7981 = vld [vmem:[#allocation31 + $0x5a8] sm:$0xff]
    %v7982 = vld [vmem:[#allocation31 + $0x5b0] sm:$0xff]
    %v7983 = vld [vmem:[#allocation31 + $0x5b8] sm:$0xff]
    %v7984 = vld [vmem:[#allocation31 + $0x5e0] sm:$0xff]
    %v7985 = vld [vmem:[#allocation31 + $0x5e8] sm:$0xff]
    %v7986 = vld [vmem:[#allocation31 + $0x5f0] sm:$0xff]
    %v7987 = vld [vmem:[#allocation31 + $0x5f8] sm:$0xff]
    %v7988 = vld [vmem:[#allocation31 + $0x620] sm:$0xff]
    %v7989 = vld [vmem:[#allocation31 + $0x628] sm:$0xff]
    %v7990 = vld [vmem:[#allocation31 + $0x630] sm:$0xff]
    %v7991 = vld [vmem:[#allocation31 + $0x638] sm:$0xff]
    %v7992 = vld [vmem:[#allocation31 + $0x660] sm:$0xff]
    %v7993 = vld [vmem:[#allocation31 + $0x668] sm:$0xff]
    %v7994 = vld [vmem:[#allocation31 + $0x670] sm:$0xff]
    %v7995 = vld [vmem:[#allocation31 + $0x678] sm:$0xff]
    %v7996 = vld [vmem:[#allocation31 + $0x6a0] sm:$0xff]
    %v7997 = vld [vmem:[#allocation31 + $0x6a8] sm:$0xff]
    %v7998 = vld [vmem:[#allocation31 + $0x6b0] sm:$0xff]
    %v7999 = vld [vmem:[#allocation31 + $0x6b8] sm:$0xff]
    %v8000 = vld [vmem:[#allocation31 + $0x6e0] sm:$0xff]
    %v8001 = vld [vmem:[#allocation31 + $0x6e8] sm:$0xff]
    %v8002 = vld [vmem:[#allocation31 + $0x6f0] sm:$0xff]
    %v8003 = vld [vmem:[#allocation31 + $0x6f8] sm:$0xff]
    %v8004 = vld [vmem:[#allocation31 + $0x720] sm:$0xff]
    %v8005 = vld [vmem:[#allocation31 + $0x728] sm:$0xff]
    %v8006 = vld [vmem:[#allocation31 + $0x730] sm:$0xff]
    %v8007 = vld [vmem:[#allocation31 + $0x738] sm:$0xff]
    %v8008 = vld [vmem:[#allocation31 + $0x760] sm:$0xff]
    %v8009 = vld [vmem:[#allocation31 + $0x768] sm:$0xff]
    %v8010 = vld [vmem:[#allocation31 + $0x770] sm:$0xff]
    %v8011 = vld [vmem:[#allocation31 + $0x778] sm:$0xff]
    %v8012 = vld [vmem:[#allocation31 + $0x7a0] sm:$0xff]
    %v8013 = vld [vmem:[#allocation31 + $0x7a8] sm:$0xff]
    %v8014 = vld [vmem:[#allocation31 + $0x7b0] sm:$0xff]
    %v8015 = vld [vmem:[#allocation31 + $0x7b8] sm:$0xff]
    %v8016 = vld [vmem:[#allocation31 + $0x7e0] sm:$0xff]
    %v8017 = vld [vmem:[#allocation31 + $0x7e8] sm:$0xff]
    %v8018 = vld [vmem:[#allocation31 + $0x7f0] sm:$0xff]
    %v8019 = vld [vmem:[#allocation31 + $0x7f8] sm:$0xff]
    %v8020 = vld [vmem:[%s53 + $0x8] sm:$0xff]
    %v8022 = vlaneseq
    %v8023 = vshrl.u32 %v8022, 7
    %v8024 = vsub.s32 0, %v8023
    %v8025 = vrot.slane %v8020, %v8024
    %v8026 = vlaneseq
    %v8027 = vshrl.u32 %v8026, 7
    %v8028 = vsub.s32 1, %v8027
    %v8029 = vrot.slane %v8020, %v8028
    %v8030 = vlaneseq
    %v8031 = vshrl.u32 %v8030, 7
    %v8032 = vsub.s32 2, %v8031
    %v8033 = vrot.slane %v8020, %v8032
    %v8034 = vlaneseq
    %v8035 = vshrl.u32 %v8034, 7
    %v8036 = vsub.s32 3, %v8035
    %v8037 = vrot.slane %v8020, %v8036
    %v8038 = vlaneseq
    %v8039 = vshrl.u32 %v8038, 7
    %v8040 = vsub.s32 4, %v8039
    %v8041 = vrot.slane %v8020, %v8040
    %v8042 = vlaneseq
    %v8043 = vshrl.u32 %v8042, 7
    %v8044 = vsub.s32 5, %v8043
    %v8045 = vrot.slane %v8020, %v8044
    %v8046 = vlaneseq
    %v8047 = vshrl.u32 %v8046, 7
    %v8048 = vsub.s32 6, %v8047
    %v8049 = vrot.slane %v8020, %v8048
    %v8050 = vlaneseq
    %v8051 = vshrl.u32 %v8050, 7
    %v8052 = vsub.s32 7, %v8051
    %v8053 = vrot.slane %v8020, %v8052
    %v8190 = vunpack.c.l.b16 %v7892
    %v8191 = vunpack.c.h.b16 %v7892
    %v8192 = vunpack.c.l.b16 %v7893
    %v8193 = vunpack.c.h.b16 %v7893
    %v8194 = vunpack.c.l.b16 %v7894
    %v8195 = vunpack.c.h.b16 %v7894
    %v8196 = vunpack.c.l.b16 %v7895
    %v8197 = vunpack.c.h.b16 %v7895
    %v8198 = vunpack.c.l.b16 %v7896
    %v8199 = vunpack.c.h.b16 %v7896
    %v8200 = vunpack.c.l.b16 %v7897
    %v8201 = vunpack.c.h.b16 %v7897
    %v8202 = vunpack.c.l.b16 %v7898
    %v8203 = vunpack.c.h.b16 %v7898
    %v8204 = vunpack.c.l.b16 %v7899
    %v8205 = vunpack.c.h.b16 %v7899
    %v8206 = vunpack.c.l.b16 %v7900
    %v8207 = vunpack.c.h.b16 %v7900
    %v8208 = vunpack.c.l.b16 %v7901
    %v8209 = vunpack.c.h.b16 %v7901
    %v8210 = vunpack.c.l.b16 %v7902
    %v8211 = vunpack.c.h.b16 %v7902
    %v8212 = vunpack.c.l.b16 %v7903
    %v8213 = vunpack.c.h.b16 %v7903
    %v8214 = vunpack.c.l.b16 %v7904
    %v8215 = vunpack.c.h.b16 %v7904
    %v8216 = vunpack.c.l.b16 %v7905
    %v8217 = vunpack.c.h.b16 %v7905
    %v8218 = vunpack.c.l.b16 %v7906
    %v8219 = vunpack.c.h.b16 %v7906
    %v8220 = vunpack.c.l.b16 %v7907
    %v8221 = vunpack.c.h.b16 %v7907
    %v8222 = vunpack.c.l.b16 %v7908
    %v8223 = vunpack.c.h.b16 %v7908
    %v8224 = vunpack.c.l.b16 %v7909
    %v8225 = vunpack.c.h.b16 %v7909
    %v8226 = vunpack.c.l.b16 %v7910
    %v8227 = vunpack.c.h.b16 %v7910
    %v8228 = vunpack.c.l.b16 %v7911
    %v8229 = vunpack.c.h.b16 %v7911
    %v8230 = vunpack.c.l.b16 %v7912
    %v8231 = vunpack.c.h.b16 %v7912
    %v8232 = vunpack.c.l.b16 %v7913
    %v8233 = vunpack.c.h.b16 %v7913
    %v8234 = vunpack.c.l.b16 %v7914
    %v8235 = vunpack.c.h.b16 %v7914
    %v8236 = vunpack.c.l.b16 %v7915
    %v8237 = vunpack.c.h.b16 %v7915
    %v8238 = vunpack.c.l.b16 %v7916
    %v8239 = vunpack.c.h.b16 %v7916
    %v8240 = vunpack.c.l.b16 %v7917
    %v8241 = vunpack.c.h.b16 %v7917
    %v8242 = vunpack.c.l.b16 %v7918
    %v8243 = vunpack.c.h.b16 %v7918
    %v8244 = vunpack.c.l.b16 %v7919
    %v8245 = vunpack.c.h.b16 %v7919
    %v8246 = vunpack.c.l.b16 %v7920
    %v8247 = vunpack.c.h.b16 %v7920
    %v8248 = vunpack.c.l.b16 %v7921
    %v8249 = vunpack.c.h.b16 %v7921
    %v8250 = vunpack.c.l.b16 %v7922
    %v8251 = vunpack.c.h.b16 %v7922
    %v8252 = vunpack.c.l.b16 %v7923
    %v8253 = vunpack.c.h.b16 %v7923
    %v8254 = vunpack.c.l.b16 %v7924
    %v8255 = vunpack.c.h.b16 %v7924
    %v8256 = vunpack.c.l.b16 %v7925
    %v8257 = vunpack.c.h.b16 %v7925
    %v8258 = vunpack.c.l.b16 %v7926
    %v8259 = vunpack.c.h.b16 %v7926
    %v8260 = vunpack.c.l.b16 %v7927
    %v8261 = vunpack.c.h.b16 %v7927
    %v8262 = vunpack.c.l.b16 %v7928
    %v8263 = vunpack.c.h.b16 %v7928
    %v8264 = vunpack.c.l.b16 %v7929
    %v8265 = vunpack.c.h.b16 %v7929
    %v8266 = vunpack.c.l.b16 %v7930
    %v8267 = vunpack.c.h.b16 %v7930
    %v8268 = vunpack.c.l.b16 %v7931
    %v8269 = vunpack.c.h.b16 %v7931
    %v8270 = vunpack.c.l.b16 %v7932
    %v8271 = vunpack.c.h.b16 %v7932
    %v8272 = vunpack.c.l.b16 %v7933
    %v8273 = vunpack.c.h.b16 %v7933
    %v8274 = vunpack.c.l.b16 %v7934
    %v8275 = vunpack.c.h.b16 %v7934
    %v8276 = vunpack.c.l.b16 %v7935
    %v8277 = vunpack.c.h.b16 %v7935
    %v8278 = vunpack.c.l.b16 %v7936
    %v8279 = vunpack.c.h.b16 %v7936
    %v8280 = vunpack.c.l.b16 %v7937
    %v8281 = vunpack.c.h.b16 %v7937
    %v8282 = vunpack.c.l.b16 %v7938
    %v8283 = vunpack.c.h.b16 %v7938
    %v8284 = vunpack.c.l.b16 %v7939
    %v8285 = vunpack.c.h.b16 %v7939
    %v8286 = vunpack.c.l.b16 %v7940
    %v8287 = vunpack.c.h.b16 %v7940
    %v8288 = vunpack.c.l.b16 %v7941
    %v8289 = vunpack.c.h.b16 %v7941
    %v8290 = vunpack.c.l.b16 %v7942
    %v8291 = vunpack.c.h.b16 %v7942
    %v8292 = vunpack.c.l.b16 %v7943
    %v8293 = vunpack.c.h.b16 %v7943
    %v8294 = vunpack.c.l.b16 %v7944
    %v8295 = vunpack.c.h.b16 %v7944
    %v8296 = vunpack.c.l.b16 %v7945
    %v8297 = vunpack.c.h.b16 %v7945
    %v8298 = vunpack.c.l.b16 %v7946
    %v8299 = vunpack.c.h.b16 %v7946
    %v8300 = vunpack.c.l.b16 %v7947
    %v8301 = vunpack.c.h.b16 %v7947
    %v8302 = vunpack.c.l.b16 %v7948
    %v8303 = vunpack.c.h.b16 %v7948
    %v8304 = vunpack.c.l.b16 %v7949
    %v8305 = vunpack.c.h.b16 %v7949
    %v8306 = vunpack.c.l.b16 %v7950
    %v8307 = vunpack.c.h.b16 %v7950
    %v8308 = vunpack.c.l.b16 %v7951
    %v8309 = vunpack.c.h.b16 %v7951
    %v8310 = vunpack.c.l.b16 %v7952
    %v8311 = vunpack.c.h.b16 %v7952
    %v8312 = vunpack.c.l.b16 %v7953
    %v8313 = vunpack.c.h.b16 %v7953
    %v8314 = vunpack.c.l.b16 %v7954
    %v8315 = vunpack.c.h.b16 %v7954
    %v8316 = vunpack.c.l.b16 %v7955
    %v8317 = vunpack.c.h.b16 %v7955
    %v8318 = vunpack.c.l.b16 %v7956
    %v8319 = vunpack.c.h.b16 %v7956
    %v8320 = vunpack.c.l.b16 %v7957
    %v8321 = vunpack.c.h.b16 %v7957
    %v8322 = vunpack.c.l.b16 %v7958
    %v8323 = vunpack.c.h.b16 %v7958
    %v8324 = vunpack.c.l.b16 %v7959
    %v8325 = vunpack.c.h.b16 %v7959
    %v8326 = vunpack.c.l.b16 %v7960
    %v8327 = vunpack.c.h.b16 %v7960
    %v8328 = vunpack.c.l.b16 %v7961
    %v8329 = vunpack.c.h.b16 %v7961
    %v8330 = vunpack.c.l.b16 %v7962
    %v8331 = vunpack.c.h.b16 %v7962
    %v8332 = vunpack.c.l.b16 %v7963
    %v8333 = vunpack.c.h.b16 %v7963
    %v8334 = vunpack.c.l.b16 %v7964
    %v8335 = vunpack.c.h.b16 %v7964
    %v8336 = vunpack.c.l.b16 %v7965
    %v8337 = vunpack.c.h.b16 %v7965
    %v8338 = vunpack.c.l.b16 %v7966
    %v8339 = vunpack.c.h.b16 %v7966
    %v8340 = vunpack.c.l.b16 %v7967
    %v8341 = vunpack.c.h.b16 %v7967
    %v8342 = vunpack.c.l.b16 %v7968
    %v8343 = vunpack.c.h.b16 %v7968
    %v8344 = vunpack.c.l.b16 %v7969
    %v8345 = vunpack.c.h.b16 %v7969
    %v8346 = vunpack.c.l.b16 %v7970
    %v8347 = vunpack.c.h.b16 %v7970
    %v8348 = vunpack.c.l.b16 %v7971
    %v8349 = vunpack.c.h.b16 %v7971
    %v8350 = vunpack.c.l.b16 %v7972
    %v8351 = vunpack.c.h.b16 %v7972
    %v8352 = vunpack.c.l.b16 %v7973
    %v8353 = vunpack.c.h.b16 %v7973
    %v8354 = vunpack.c.l.b16 %v7974
    %v8355 = vunpack.c.h.b16 %v7974
    %v8356 = vunpack.c.l.b16 %v7975
    %v8357 = vunpack.c.h.b16 %v7975
    %v8358 = vunpack.c.l.b16 %v7976
    %v8359 = vunpack.c.h.b16 %v7976
    %v8360 = vunpack.c.l.b16 %v7977
    %v8361 = vunpack.c.h.b16 %v7977
    %v8362 = vunpack.c.l.b16 %v7978
    %v8363 = vunpack.c.h.b16 %v7978
    %v8364 = vunpack.c.l.b16 %v7979
    %v8365 = vunpack.c.h.b16 %v7979
    %v8366 = vunpack.c.l.b16 %v7980
    %v8367 = vunpack.c.h.b16 %v7980
    %v8368 = vunpack.c.l.b16 %v7981
    %v8369 = vunpack.c.h.b16 %v7981
    %v8370 = vunpack.c.l.b16 %v7982
    %v8371 = vunpack.c.h.b16 %v7982
    %v8372 = vunpack.c.l.b16 %v7983
    %v8373 = vunpack.c.h.b16 %v7983
    %v8374 = vunpack.c.l.b16 %v7984
    %v8375 = vunpack.c.h.b16 %v7984
    %v8376 = vunpack.c.l.b16 %v7985
    %v8377 = vunpack.c.h.b16 %v7985
    %v8378 = vunpack.c.l.b16 %v7986
    %v8379 = vunpack.c.h.b16 %v7986
    %v8380 = vunpack.c.l.b16 %v7987
    %v8381 = vunpack.c.h.b16 %v7987
    %v8382 = vunpack.c.l.b16 %v7988
    %v8383 = vunpack.c.h.b16 %v7988
    %v8384 = vunpack.c.l.b16 %v7989
    %v8385 = vunpack.c.h.b16 %v7989
    %v8386 = vunpack.c.l.b16 %v7990
    %v8387 = vunpack.c.h.b16 %v7990
    %v8388 = vunpack.c.l.b16 %v7991
    %v8389 = vunpack.c.h.b16 %v7991
    %v8390 = vunpack.c.l.b16 %v7992
    %v8391 = vunpack.c.h.b16 %v7992
    %v8392 = vunpack.c.l.b16 %v7993
    %v8393 = vunpack.c.h.b16 %v7993
    %v8394 = vunpack.c.l.b16 %v7994
    %v8395 = vunpack.c.h.b16 %v7994
    %v8396 = vunpack.c.l.b16 %v7995
    %v8397 = vunpack.c.h.b16 %v7995
    %v8398 = vunpack.c.l.b16 %v7996
    %v8399 = vunpack.c.h.b16 %v7996
    %v8400 = vunpack.c.l.b16 %v7997
    %v8401 = vunpack.c.h.b16 %v7997
    %v8402 = vunpack.c.l.b16 %v7998
    %v8403 = vunpack.c.h.b16 %v7998
    %v8404 = vunpack.c.l.b16 %v7999
    %v8405 = vunpack.c.h.b16 %v7999
    %v8406 = vunpack.c.l.b16 %v8000
    %v8407 = vunpack.c.h.b16 %v8000
    %v8408 = vunpack.c.l.b16 %v8001
    %v8409 = vunpack.c.h.b16 %v8001
    %v8410 = vunpack.c.l.b16 %v8002
    %v8411 = vunpack.c.h.b16 %v8002
    %v8412 = vunpack.c.l.b16 %v8003
    %v8413 = vunpack.c.h.b16 %v8003
    %v8414 = vunpack.c.l.b16 %v8004
    %v8415 = vunpack.c.h.b16 %v8004
    %v8416 = vunpack.c.l.b16 %v8005
    %v8417 = vunpack.c.h.b16 %v8005
    %v8418 = vunpack.c.l.b16 %v8006
    %v8419 = vunpack.c.h.b16 %v8006
    %v8420 = vunpack.c.l.b16 %v8007
    %v8421 = vunpack.c.h.b16 %v8007
    %v8422 = vunpack.c.l.b16 %v8008
    %v8423 = vunpack.c.h.b16 %v8008
    %v8424 = vunpack.c.l.b16 %v8009
    %v8425 = vunpack.c.h.b16 %v8009
    %v8426 = vunpack.c.l.b16 %v8010
    %v8427 = vunpack.c.h.b16 %v8010
    %v8428 = vunpack.c.l.b16 %v8011
    %v8429 = vunpack.c.h.b16 %v8011
    %v8430 = vunpack.c.l.b16 %v8012
    %v8431 = vunpack.c.h.b16 %v8012
    %v8432 = vunpack.c.l.b16 %v8013
    %v8433 = vunpack.c.h.b16 %v8013
    %v8434 = vunpack.c.l.b16 %v8014
    %v8435 = vunpack.c.h.b16 %v8014
    %v8436 = vunpack.c.l.b16 %v8015
    %v8437 = vunpack.c.h.b16 %v8015
    %v8438 = vunpack.c.l.b16 %v8016
    %v8439 = vunpack.c.h.b16 %v8016
    %v8440 = vunpack.c.l.b16 %v8017
    %v8441 = vunpack.c.h.b16 %v8017
    %v8442 = vunpack.c.l.b16 %v8018
    %v8443 = vunpack.c.h.b16 %v8018
    %v8444 = vunpack.c.l.b16 %v8019
    %v8445 = vunpack.c.h.b16 %v8019
    %v8446 = vpack.c.b16 %v8198, %v8190
    %v8447 = vpack.c.b16 %v8199, %v8191
    %v8448 = vpack.c.b16 %v8200, %v8192
    %v8449 = vpack.c.b16 %v8201, %v8193
    %v8450 = vpack.c.b16 %v8202, %v8194
    %v8451 = vpack.c.b16 %v8203, %v8195
    %v8452 = vpack.c.b16 %v8204, %v8196
    %v8453 = vpack.c.b16 %v8205, %v8197
    %v8454 = vpack.c.b16 %v8214, %v8206
    %v8455 = vpack.c.b16 %v8215, %v8207
    %v8456 = vpack.c.b16 %v8216, %v8208
    %v8457 = vpack.c.b16 %v8217, %v8209
    %v8458 = vpack.c.b16 %v8218, %v8210
    %v8459 = vpack.c.b16 %v8219, %v8211
    %v8460 = vpack.c.b16 %v8220, %v8212
    %v8461 = vpack.c.b16 %v8221, %v8213
    %v8462 = vpack.c.b16 %v8230, %v8222
    %v8463 = vpack.c.b16 %v8231, %v8223
    %v8464 = vpack.c.b16 %v8232, %v8224
    %v8465 = vpack.c.b16 %v8233, %v8225
    %v8466 = vpack.c.b16 %v8234, %v8226
    %v8467 = vpack.c.b16 %v8235, %v8227
    %v8468 = vpack.c.b16 %v8236, %v8228
    %v8469 = vpack.c.b16 %v8237, %v8229
    %v8470 = vpack.c.b16 %v8246, %v8238
    %v8471 = vpack.c.b16 %v8247, %v8239
    %v8472 = vpack.c.b16 %v8248, %v8240
    %v8473 = vpack.c.b16 %v8249, %v8241
    %v8474 = vpack.c.b16 %v8250, %v8242
    %v8475 = vpack.c.b16 %v8251, %v8243
    %v8476 = vpack.c.b16 %v8252, %v8244
    %v8477 = vpack.c.b16 %v8253, %v8245
    %v8478 = vpack.c.b16 %v8262, %v8254
    %v8479 = vpack.c.b16 %v8263, %v8255
    %v8480 = vpack.c.b16 %v8264, %v8256
    %v8481 = vpack.c.b16 %v8265, %v8257
    %v8482 = vpack.c.b16 %v8266, %v8258
    %v8483 = vpack.c.b16 %v8267, %v8259
    %v8484 = vpack.c.b16 %v8268, %v8260
    %v8485 = vpack.c.b16 %v8269, %v8261
    %v8486 = vpack.c.b16 %v8278, %v8270
    %v8487 = vpack.c.b16 %v8279, %v8271
    %v8488 = vpack.c.b16 %v8280, %v8272
    %v8489 = vpack.c.b16 %v8281, %v8273
    %v8490 = vpack.c.b16 %v8282, %v8274
    %v8491 = vpack.c.b16 %v8283, %v8275
    %v8492 = vpack.c.b16 %v8284, %v8276
    %v8493 = vpack.c.b16 %v8285, %v8277
    %v8494 = vpack.c.b16 %v8294, %v8286
    %v8495 = vpack.c.b16 %v8295, %v8287
    %v8496 = vpack.c.b16 %v8296, %v8288
    %v8497 = vpack.c.b16 %v8297, %v8289
    %v8498 = vpack.c.b16 %v8298, %v8290
    %v8499 = vpack.c.b16 %v8299, %v8291
    %v8500 = vpack.c.b16 %v8300, %v8292
    %v8501 = vpack.c.b16 %v8301, %v8293
    %v8502 = vpack.c.b16 %v8310, %v8302
    %v8503 = vpack.c.b16 %v8311, %v8303
    %v8504 = vpack.c.b16 %v8312, %v8304
    %v8505 = vpack.c.b16 %v8313, %v8305
    %v8506 = vpack.c.b16 %v8314, %v8306
    %v8507 = vpack.c.b16 %v8315, %v8307
    %v8508 = vpack.c.b16 %v8316, %v8308
    %v8509 = vpack.c.b16 %v8317, %v8309
    %v8510 = vpack.c.b16 %v8326, %v8318
    %v8511 = vpack.c.b16 %v8327, %v8319
    %v8512 = vpack.c.b16 %v8328, %v8320
    %v8513 = vpack.c.b16 %v8329, %v8321
    %v8514 = vpack.c.b16 %v8330, %v8322
    %v8515 = vpack.c.b16 %v8331, %v8323
    %v8516 = vpack.c.b16 %v8332, %v8324
    %v8517 = vpack.c.b16 %v8333, %v8325
    %v8518 = vpack.c.b16 %v8342, %v8334
    %v8519 = vpack.c.b16 %v8343, %v8335
    %v8520 = vpack.c.b16 %v8344, %v8336
    %v8521 = vpack.c.b16 %v8345, %v8337
    %v8522 = vpack.c.b16 %v8346, %v8338
    %v8523 = vpack.c.b16 %v8347, %v8339
    %v8524 = vpack.c.b16 %v8348, %v8340
    %v8525 = vpack.c.b16 %v8349, %v8341
    %v8526 = vpack.c.b16 %v8358, %v8350
    %v8527 = vpack.c.b16 %v8359, %v8351
    %v8528 = vpack.c.b16 %v8360, %v8352
    %v8529 = vpack.c.b16 %v8361, %v8353
    %v8530 = vpack.c.b16 %v8362, %v8354
    %v8531 = vpack.c.b16 %v8363, %v8355
    %v8532 = vpack.c.b16 %v8364, %v8356
    %v8533 = vpack.c.b16 %v8365, %v8357
    %v8534 = vpack.c.b16 %v8374, %v8366
    %v8535 = vpack.c.b16 %v8375, %v8367
    %v8536 = vpack.c.b16 %v8376, %v8368
    %v8537 = vpack.c.b16 %v8377, %v8369
    %v8538 = vpack.c.b16 %v8378, %v8370
    %v8539 = vpack.c.b16 %v8379, %v8371
    %v8540 = vpack.c.b16 %v8380, %v8372
    %v8541 = vpack.c.b16 %v8381, %v8373
    %v8542 = vpack.c.b16 %v8390, %v8382
    %v8543 = vpack.c.b16 %v8391, %v8383
    %v8544 = vpack.c.b16 %v8392, %v8384
    %v8545 = vpack.c.b16 %v8393, %v8385
    %v8546 = vpack.c.b16 %v8394, %v8386
    %v8547 = vpack.c.b16 %v8395, %v8387
    %v8548 = vpack.c.b16 %v8396, %v8388
    %v8549 = vpack.c.b16 %v8397, %v8389
    %v8550 = vpack.c.b16 %v8406, %v8398
    %v8551 = vpack.c.b16 %v8407, %v8399
    %v8552 = vpack.c.b16 %v8408, %v8400
    %v8553 = vpack.c.b16 %v8409, %v8401
    %v8554 = vpack.c.b16 %v8410, %v8402
    %v8555 = vpack.c.b16 %v8411, %v8403
    %v8556 = vpack.c.b16 %v8412, %v8404
    %v8557 = vpack.c.b16 %v8413, %v8405
    %v8558 = vpack.c.b16 %v8422, %v8414
    %v8559 = vpack.c.b16 %v8423, %v8415
    %v8560 = vpack.c.b16 %v8424, %v8416
    %v8561 = vpack.c.b16 %v8425, %v8417
    %v8562 = vpack.c.b16 %v8426, %v8418
    %v8563 = vpack.c.b16 %v8427, %v8419
    %v8564 = vpack.c.b16 %v8428, %v8420
    %v8565 = vpack.c.b16 %v8429, %v8421
    %v8566 = vpack.c.b16 %v8438, %v8430
    %v8567 = vpack.c.b16 %v8439, %v8431
    %v8568 = vpack.c.b16 %v8440, %v8432
    %v8569 = vpack.c.b16 %v8441, %v8433
    %v8570 = vpack.c.b16 %v8442, %v8434
    %v8571 = vpack.c.b16 %v8443, %v8435
    %v8572 = vpack.c.b16 %v8444, %v8436
    %v8573 = vpack.c.b16 %v8445, %v8437
    %8702 = vmatprep.subr.bf16.mxu0 %v8447
    %8703 = vmatpush1.bf16.msra.mxu0 %v8446
    %8704 = vmatprep.subr.bf16.mxu0 %v8455
    %8705 = vmatpush1.bf16.msra.mxu0 %v8454
    %8706 = vmatprep.subr.bf16.mxu0 %v8463
    %8707 = vmatpush1.bf16.msra.mxu0 %v8462
    %8708 = vmatprep.subr.bf16.mxu0 %v8471
    %8709 = vmatpush1.bf16.msra.mxu0 %v8470
    %8710 = vmatprep.subr.bf16.mxu0 %v8479
    %8711 = vmatpush1.bf16.msra.mxu0 %v8478
    %8712 = vmatprep.subr.bf16.mxu0 %v8487
    %8713 = vmatpush1.bf16.msra.mxu0 %v8486
    %8714 = vmatprep.subr.bf16.mxu0 %v8495
    %8715 = vmatpush1.bf16.msra.mxu0 %v8494
    %8716 = vmatprep.subr.bf16.mxu0 %v8503
    %8717 = vmatpush1.bf16.msra.mxu0 %v8502
    %8718 = vmatprep.subr.bf16.mxu0 %v8511
    %8719 = vmatpush1.bf16.msra.mxu0 %v8510
    %8720 = vmatprep.subr.bf16.mxu0 %v8519
    %8721 = vmatpush1.bf16.msra.mxu0 %v8518
    %8722 = vmatprep.subr.bf16.mxu0 %v8527
    %8723 = vmatpush1.bf16.msra.mxu0 %v8526
    %8724 = vmatprep.subr.bf16.mxu0 %v8535
    %8725 = vmatpush1.bf16.msra.mxu0 %v8534
    %8726 = vmatprep.subr.bf16.mxu0 %v8543
    %8727 = vmatpush1.bf16.msra.mxu0 %v8542
    %8728 = vmatprep.subr.bf16.mxu0 %v8551
    %8729 = vmatpush1.bf16.msra.mxu0 %v8550
    %8730 = vmatprep.subr.bf16.mxu0 %v8559
    %8731 = vmatpush1.bf16.msra.mxu0 %v8558
    %8732 = vmatprep.subr.bf16.mxu0 %v8567
    %8733 = vmatpush1.bf16.msra.mxu0 %v8566
    %8734 = vmatprep.mubr.bf16.mxu0 %v6825
    %8735 = vmatmul.mubr.bf16.gmra.mrb[0].mxu0 %v6824
    %v8736 = vpop.f32.mrb[0].mxu0
    %v8737 = vadd.f32 %v8025, %v8736
    %v8738 = vpop.f32.mrb[0].mxu0
    %v8739 = vadd.f32 %v8029, %v8738
    %v8740 = vpop.f32.mrb[0].mxu0
    %v8741 = vadd.f32 %v8025, %v8740
    %v8742 = vpop.f32.mrb[0].mxu0
    %v8743 = vadd.f32 %v8029, %v8742
    %8744 = vmatprep.mubr.bf16.mxu0 %v6827
    %8745 = vmatmul.mubr.bf16.gmra.mrb[0].mxu0 %v6826
    %v8746 = vpop.f32.mrb[0].mxu0
    %v8747 = vadd.f32 %v8025, %v8746
    %v8748 = vpop.f32.mrb[0].mxu0
    %v8749 = vadd.f32 %v8029, %v8748
    %v8750 = vpop.f32.mrb[0].mxu0
    %v8751 = vadd.f32 %v8025, %v8750
    %v8752 = vpop.f32.mrb[0].mxu0
    %v8753 = vadd.f32 %v8029, %v8752
    %8754 = vmatprep.mubr.bf16.mxu0 %v6829
    %8755 = vmatmul.mubr.bf16.gmra.mrb[0].mxu0 %v6828
    %v8756 = vpop.f32.mrb[0].mxu0
    %v8757 = vadd.f32 %v8025, %v8756
    %v8758 = vpop.f32.mrb[0].mxu0
    %v8759 = vadd.f32 %v8029, %v8758
    %v8760 = vpop.f32.mrb[0].mxu0
    %v8761 = vadd.f32 %v8025, %v8760
    %v8762 = vpop.f32.mrb[0].mxu0
    %v8763 = vadd.f32 %v8029, %v8762
    %8764 = vdwg.mxu0
    %8765 = vmatprep.subr.bf16.mxu0 %v8449
    %8766 = vmatpush1.bf16.msra.mxu0 %v8448
    %8767 = vmatprep.subr.bf16.mxu0 %v8457
    %8768 = vmatpush1.bf16.msra.mxu0 %v8456
    %8769 = vmatprep.subr.bf16.mxu0 %v8465
    %8770 = vmatpush1.bf16.msra.mxu0 %v8464
    %8771 = vmatprep.subr.bf16.mxu0 %v8473
    %8772 = vmatpush1.bf16.msra.mxu0 %v8472
    %8773 = vmatprep.subr.bf16.mxu0 %v8481
    %8774 = vmatpush1.bf16.msra.mxu0 %v8480
    %8775 = vmatprep.subr.bf16.mxu0 %v8489
    %8776 = vmatpush1.bf16.msra.mxu0 %v8488
    %8777 = vmatprep.subr.bf16.mxu0 %v8497
    %8778 = vmatpush1.bf16.msra.mxu0 %v8496
    %8779 = vmatprep.subr.bf16.mxu0 %v8505
    %8780 = vmatpush1.bf16.msra.mxu0 %v8504
    %8781 = vmatprep.subr.bf16.mxu0 %v8513
    %8782 = vmatpush1.bf16.msra.mxu0 %v8512
    %8783 = vmatprep.subr.bf16.mxu0 %v8521
    %8784 = vmatpush1.bf16.msra.mxu0 %v8520
    %8785 = vmatprep.subr.bf16.mxu0 %v8529
    %8786 = vmatpush1.bf16.msra.mxu0 %v8528
    %8787 = vmatprep.subr.bf16.mxu0 %v8537
    %8788 = vmatpush1.bf16.msra.mxu0 %v8536
    %8789 = vmatprep.subr.bf16.mxu0 %v8545
    %8790 = vmatpush1.bf16.msra.mxu0 %v8544
    %8791 = vmatprep.subr.bf16.mxu0 %v8553
    %8792 = vmatpush1.bf16.msra.mxu0 %v8552
    %8793 = vmatprep.subr.bf16.mxu0 %v8561
    %8794 = vmatpush1.bf16.msra.mxu0 %v8560
    %8795 = vmatprep.subr.bf16.mxu0 %v8569
    %8796 = vmatpush1.bf16.msra.mxu0 %v8568
    %8797 = vmatprep.mubr.bf16.mxu0 %v6825
    %8798 = vmatmul.mubr.bf16.gmra.mrb[0].mxu0 %v6824
    %v8799 = vpop.f32.mrb[0].mxu0
    %v8800 = vadd.f32 %v8033, %v8799
    %v8801 = vpop.f32.mrb[0].mxu0
    %v8802 = vadd.f32 %v8037, %v8801
    %v8803 = vpop.f32.mrb[0].mxu0
    %v8804 = vadd.f32 %v8033, %v8803
    %v8805 = vpop.f32.mrb[0].mxu0
    %v8806 = vadd.f32 %v8037, %v8805
    %8807 = vmatprep.mubr.bf16.mxu0 %v6827
    %8808 = vmatmul.mubr.bf16.gmra.mrb[0].mxu0 %v6826
    %v8809 = vpop.f32.mrb[0].mxu0
    %v8810 = vadd.f32 %v8033, %v8809
    %v8811 = vpop.f32.mrb[0].mxu0
    %v8812 = vadd.f32 %v8037, %v8811
    %v8813 = vpop.f32.mrb[0].mxu0
    %v8814 = vadd.f32 %v8033, %v8813
    %v8815 = vpop.f32.mrb[0].mxu0
    %v8816 = vadd.f32 %v8037, %v8815
    %8817 = vmatprep.mubr.bf16.mxu0 %v6829
    %8818 = vmatmul.mubr.bf16.gmra.mrb[0].mxu0 %v6828
    %v8819 = vpop.f32.mrb[0].mxu0
    %v8820 = vadd.f32 %v8033, %v8819
    %v8821 = vpop.f32.mrb[0].mxu0
    %v8822 = vadd.f32 %v8037, %v8821
    %v8823 = vpop.f32.mrb[0].mxu0
    %v8824 = vadd.f32 %v8033, %v8823
    %v8825 = vpop.f32.mrb[0].mxu0
    %v8826 = vadd.f32 %v8037, %v8825
    %8827 = vdwg.mxu0
    %8828 = vmatprep.subr.bf16.mxu0 %v8451
    %8829 = vmatpush1.bf16.msra.mxu0 %v8450
    %8830 = vmatprep.subr.bf16.mxu0 %v8459
    %8831 = vmatpush1.bf16.msra.mxu0 %v8458
    %8832 = vmatprep.subr.bf16.mxu0 %v8467
    %8833 = vmatpush1.bf16.msra.mxu0 %v8466
    %8834 = vmatprep.subr.bf16.mxu0 %v8475
    %8835 = vmatpush1.bf16.msra.mxu0 %v8474
    %8836 = vmatprep.subr.bf16.mxu0 %v8483
    %8837 = vmatpush1.bf16.msra.mxu0 %v8482
    %8838 = vmatprep.subr.bf16.mxu0 %v8491
    %8839 = vmatpush1.bf16.msra.mxu0 %v8490
    %8840 = vmatprep.subr.bf16.mxu0 %v8499
    %8841 = vmatpush1.bf16.msra.mxu0 %v8498
    %8842 = vmatprep.subr.bf16.mxu0 %v8507
    %8843 = vmatpush1.bf16.msra.mxu0 %v8506
    %8844 = vmatprep.subr.bf16.mxu0 %v8515
    %8845 = vmatpush1.bf16.msra.mxu0 %v8514
    %8846 = vmatprep.subr.bf16.mxu0 %v8523
    %8847 = vmatpush1.bf16.msra.mxu0 %v8522
    %8848 = vmatprep.subr.bf16.mxu0 %v8531
    %8849 = vmatpush1.bf16.msra.mxu0 %v8530
    %8850 = vmatprep.subr.bf16.mxu0 %v8539
    %8851 = vmatpush1.bf16.msra.mxu0 %v8538
    %8852 = vmatprep.subr.bf16.mxu0 %v8547
    %8853 = vmatpush1.bf16.msra.mxu0 %v8546
    %8854 = vmatprep.subr.bf16.mxu0 %v8555
    %8855 = vmatpush1.bf16.msra.mxu0 %v8554
    %8856 = vmatprep.subr.bf16.mxu0 %v8563
    %8857 = vmatpush1.bf16.msra.mxu0 %v8562
    %8858 = vmatprep.subr.bf16.mxu0 %v8571
    %8859 = vmatpush1.bf16.msra.mxu0 %v8570
    %8860 = vmatprep.mubr.bf16.mxu0 %v6825
    %8861 = vmatmul.mubr.bf16.gmra.mrb[0].mxu0 %v6824
    %v8862 = vpop.f32.mrb[0].mxu0
    %v8863 = vadd.f32 %v8041, %v8862
    %v8864 = vpop.f32.mrb[0].mxu0
    %v8865 = vadd.f32 %v8045, %v8864
    %v8866 = vpop.f32.mrb[0].mxu0
    %v8867 = vadd.f32 %v8041, %v8866
    %v8868 = vpop.f32.mrb[0].mxu0
    %v8869 = vadd.f32 %v8045, %v8868
    %8870 = vmatprep.mubr.bf16.mxu0 %v6827
    %8871 = vmatmul.mubr.bf16.gmra.mrb[0].mxu0 %v6826
    %v8872 = vpop.f32.mrb[0].mxu0
    %v8873 = vadd.f32 %v8041, %v8872
    %v8874 = vpop.f32.mrb[0].mxu0
    %v8875 = vadd.f32 %v8045, %v8874
    %v8876 = vpop.f32.mrb[0].mxu0
    %v8877 = vadd.f32 %v8041, %v8876
    %v8878 = vpop.f32.mrb[0].mxu0
    %v8879 = vadd.f32 %v8045, %v8878
    %8880 = vmatprep.mubr.bf16.mxu0 %v6829
    %8881 = vmatmul.mubr.bf16.gmra.mrb[0].mxu0 %v6828
    %v8882 = vpop.f32.mrb[0].mxu0
    %v8883 = vadd.f32 %v8041, %v8882
    %v8884 = vpop.f32.mrb[0].mxu0
    %v8885 = vadd.f32 %v8045, %v8884
    %v8886 = vpop.f32.mrb[0].mxu0
    %v8887 = vadd.f32 %v8041, %v8886
    %v8888 = vpop.f32.mrb[0].mxu0
    %v8889 = vadd.f32 %v8045, %v8888
    %8890 = vdwg.mxu0
    %8891 = vmatprep.subr.bf16.mxu0 %v8453
    %8892 = vmatpush1.bf16.msra.mxu0 %v8452
    %8893 = vmatprep.subr.bf16.mxu0 %v8461
    %8894 = vmatpush1.bf16.msra.mxu0 %v8460
    %8895 = vmatprep.subr.bf16.mxu0 %v8469
    %8896 = vmatpush1.bf16.msra.mxu0 %v8468
    %8897 = vmatprep.subr.bf16.mxu0 %v8477
    %8898 = vmatpush1.bf16.msra.mxu0 %v8476
    %8899 = vmatprep.subr.bf16.mxu0 %v8485
    %8900 = vmatpush1.bf16.msra.mxu0 %v8484
    %8901 = vmatprep.subr.bf16.mxu0 %v8493
    %8902 = vmatpush1.bf16.msra.mxu0 %v8492
    %8903 = vmatprep.subr.bf16.mxu0 %v8501
    %8904 = vmatpush1.bf16.msra.mxu0 %v8500
    %8905 = vmatprep.subr.bf16.mxu0 %v8509
    %8906 = vmatpush1.bf16.msra.mxu0 %v8508
    %8907 = vmatprep.subr.bf16.mxu0 %v8517
    %8908 = vmatpush1.bf16.msra.mxu0 %v8516
    %8909 = vmatprep.subr.bf16.mxu0 %v8525
    %8910 = vmatpush1.bf16.msra.mxu0 %v8524
    %8911 = vmatprep.subr.bf16.mxu0 %v8533
    %8912 = vmatpush1.bf16.msra.mxu0 %v8532
    %8913 = vmatprep.subr.bf16.mxu0 %v8541
    %8914 = vmatpush1.bf16.msra.mxu0 %v8540
    %8915 = vmatprep.subr.bf16.mxu0 %v8549
    %8916 = vmatpush1.bf16.msra.mxu0 %v8548
    %8917 = vmatprep.subr.bf16.mxu0 %v8557
    %8918 = vmatpush1.bf16.msra.mxu0 %v8556
    %8919 = vmatprep.subr.bf16.mxu0 %v8565
    %8920 = vmatpush1.bf16.msra.mxu0 %v8564
    %8921 = vmatprep.subr.bf16.mxu0 %v8573
    %8922 = vmatpush1.bf16.msra.mxu0 %v8572
    %8923 = vmatprep.mubr.bf16.mxu0 %v6825
    %8924 = vmatmul.mubr.bf16.gmra.mrb[0].mxu0 %v6824
    %v8925 = vpop.f32.mrb[0].mxu0
    %v8926 = vadd.f32 %v8049, %v8925
    %v8927 = vpop.f32.mrb[0].mxu0
    %v8928 = vadd.f32 %v8053, %v8927
    %v8929 = vpop.f32.mrb[0].mxu0
    %v8930 = vadd.f32 %v8049, %v8929
    %v8931 = vpop.f32.mrb[0].mxu0
    %v8932 = vadd.f32 %v8053, %v8931
    %8933 = vmatprep.mubr.bf16.mxu0 %v6827
    %8934 = vmatmul.mubr.bf16.gmra.mrb[0].mxu0 %v6826
    %v8935 = vpop.f32.mrb[0].mxu0
    %v8936 = vadd.f32 %v8049, %v8935
    %v8937 = vpop.f32.mrb[0].mxu0
    %v8938 = vadd.f32 %v8053, %v8937
    %v8939 = vpop.f32.mrb[0].mxu0
    %v8940 = vadd.f32 %v8049, %v8939
    %v8941 = vpop.f32.mrb[0].mxu0
    %v8942 = vadd.f32 %v8053, %v8941
    %8943 = vmatprep.mubr.bf16.mxu0 %v6829
    %8944 = vmatmul.mubr.bf16.gmra.mrb[0].mxu0 %v6828
    %v8945 = vpop.f32.mrb[0].mxu0
    %v8946 = vadd.f32 %v8049, %v8945
    %v8947 = vpop.f32.mrb[0].mxu0
    %v8948 = vadd.f32 %v8053, %v8947
    %v8949 = vpop.f32.mrb[0].mxu0
    %v8950 = vadd.f32 %v8049, %v8949
    %v8951 = vpop.f32.mrb[0].mxu0
    %v8952 = vadd.f32 %v8053, %v8951
    %8953 = vdwg.mxu0
    %v8954 = vmul.f32 %v8737, 0.5
    %v8955 = vmul.f32 %v8739, 0.5
    %v8956 = vmul.f32 %v8800, 0.5
    %v8957 = vmul.f32 %v8802, 0.5
    %v8958 = vmul.f32 %v8863, 0.5
    %v8959 = vmul.f32 %v8865, 0.5
    %v8960 = vmul.f32 %v8926, 0.5
    %v8961 = vmul.f32 %v8928, 0.5
    %v8962 = vmul.f32 %v8741, 0.5
    %v8963 = vmul.f32 %v8743, 0.5
    %v8964 = vmul.f32 %v8804, 0.5
    %v8965 = vmul.f32 %v8806, 0.5
    %v8966 = vmul.f32 %v8867, 0.5
    %v8967 = vmul.f32 %v8869, 0.5
    %v8968 = vmul.f32 %v8930, 0.5
    %v8969 = vmul.f32 %v8932, 0.5
    %v8970 = vmul.f32 %v8747, 0.5
    %v8971 = vmul.f32 %v8749, 0.5
    %v8972 = vmul.f32 %v8810, 0.5
    %v8973 = vmul.f32 %v8812, 0.5
    %v8974 = vmul.f32 %v8873, 0.5
    %v8975 = vmul.f32 %v8875, 0.5
    %v8976 = vmul.f32 %v8936, 0.5
    %v8977 = vmul.f32 %v8938, 0.5
    %v8978 = vmul.f32 %v8751, 0.5
    %v8979 = vmul.f32 %v8753, 0.5
    %v8980 = vmul.f32 %v8814, 0.5
    %v8981 = vmul.f32 %v8816, 0.5
    %v8982 = vmul.f32 %v8877, 0.5
    %v8983 = vmul.f32 %v8879, 0.5
    %v8984 = vmul.f32 %v8940, 0.5
    %v8985 = vmul.f32 %v8942, 0.5
    %v8986 = vmul.f32 %v8757, 0.5
    %v8987 = vmul.f32 %v8759, 0.5
    %v8988 = vmul.f32 %v8820, 0.5
    %v8989 = vmul.f32 %v8822, 0.5
    %v8990 = vmul.f32 %v8883, 0.5
    %v8991 = vmul.f32 %v8885, 0.5
    %v8992 = vmul.f32 %v8946, 0.5
    %v8993 = vmul.f32 %v8948, 0.5
    %v8994 = vmul.f32 %v8761, 0.5
    %v8995 = vmul.f32 %v8763, 0.5
    %v8996 = vmul.f32 %v8824, 0.5
    %v8997 = vmul.f32 %v8826, 0.5
    %v8998 = vmul.f32 %v8887, 0.5
    %v8999 = vmul.f32 %v8889, 0.5
    %v9000 = vmul.f32 %v8950, 0.5
    %v9001 = vmul.f32 %v8952, 0.5
    %v9002 = vmul.f32 %v8737, 0.70710677
    %v9003 = vmul.f32 %v8739, 0.70710677
    %v9004 = vmul.f32 %v8800, 0.70710677
    %v9005 = vmul.f32 %v8802, 0.70710677
    %v9006 = vmul.f32 %v8863, 0.70710677
    %v9007 = vmul.f32 %v8865, 0.70710677
    %v9008 = vmul.f32 %v8926, 0.70710677
    %v9009 = vmul.f32 %v8928, 0.70710677
    %v9010 = vmul.f32 %v8741, 0.70710677
    %v9011 = vmul.f32 %v8743, 0.70710677
    %v9012 = vmul.f32 %v8804, 0.70710677
    %v9013 = vmul.f32 %v8806, 0.70710677
    %v9014 = vmul.f32 %v8867, 0.70710677
    %v9015 = vmul.f32 %v8869, 0.70710677
    %v9016 = vmul.f32 %v8930, 0.70710677
    %v9017 = vmul.f32 %v8932, 0.70710677
    %v9018 = vmul.f32 %v8747, 0.70710677
    %v9019 = vmul.f32 %v8749, 0.70710677
    %v9020 = vmul.f32 %v8810, 0.70710677
    %v9021 = vmul.f32 %v8812, 0.70710677
    %v9022 = vmul.f32 %v8873, 0.70710677
    %v9023 = vmul.f32 %v8875, 0.70710677
    %v9024 = vmul.f32 %v8936, 0.70710677
    %v9025 = vmul.f32 %v8938, 0.70710677
    %v9026 = vmul.f32 %v8751, 0.70710677
    %v9027 = vmul.f32 %v8753, 0.70710677
    %v9028 = vmul.f32 %v8814, 0.70710677
    %v9029 = vmul.f32 %v8816, 0.70710677
    %v9030 = vmul.f32 %v8877, 0.70710677
    %v9031 = vmul.f32 %v8879, 0.70710677
    %v9032 = vmul.f32 %v8940, 0.70710677
    %v9033 = vmul.f32 %v8942, 0.70710677
    %v9034 = vmul.f32 %v8757, 0.70710677
    %v9035 = vmul.f32 %v8759, 0.70710677
    %v9036 = vmul.f32 %v8820, 0.70710677
    %v9037 = vmul.f32 %v8822, 0.70710677
    %v9038 = vmul.f32 %v8883, 0.70710677
    %v9039 = vmul.f32 %v8885, 0.70710677
    %v9040 = vmul.f32 %v8946, 0.70710677
    %v9041 = vmul.f32 %v8948, 0.70710677
    %v9042 = vmul.f32 %v8761, 0.70710677
    %v9043 = vmul.f32 %v8763, 0.70710677
    %v9044 = vmul.f32 %v8824, 0.70710677
    %v9045 = vmul.f32 %v8826, 0.70710677
    %v9046 = vmul.f32 %v8887, 0.70710677
    %v9047 = vmul.f32 %v8889, 0.70710677
    %v9048 = vmul.f32 %v8950, 0.70710677
    %v9049 = vmul.f32 %v8952, 0.70710677
    %vm9050 = vcmp.ge.f32.partialorder %v9002, 0.0
    %vm9051 = vcmp.ge.f32.partialorder %v9003, 0.0
    %vm9052 = vcmp.ge.f32.partialorder %v9004, 0.0
    %vm9053 = vcmp.ge.f32.partialorder %v9005, 0.0
    %vm9054 = vcmp.ge.f32.partialorder %v9006, 0.0
    %vm9055 = vcmp.ge.f32.partialorder %v9007, 0.0
    %vm9056 = vcmp.ge.f32.partialorder %v9008, 0.0
    %vm9057 = vcmp.ge.f32.partialorder %v9009, 0.0
    %vm9058 = vcmp.ge.f32.partialorder %v9010, 0.0
    %vm9059 = vcmp.ge.f32.partialorder %v9011, 0.0
    %vm9060 = vcmp.ge.f32.partialorder %v9012, 0.0
    %vm9061 = vcmp.ge.f32.partialorder %v9013, 0.0
    %vm9062 = vcmp.ge.f32.partialorder %v9014, 0.0
    %vm9063 = vcmp.ge.f32.partialorder %v9015, 0.0
    %vm9064 = vcmp.ge.f32.partialorder %v9016, 0.0
    %vm9065 = vcmp.ge.f32.partialorder %v9017, 0.0
    %vm9066 = vcmp.ge.f32.partialorder %v9018, 0.0
    %vm9067 = vcmp.ge.f32.partialorder %v9019, 0.0
    %vm9068 = vcmp.ge.f32.partialorder %v9020, 0.0
    %vm9069 = vcmp.ge.f32.partialorder %v9021, 0.0
    %vm9070 = vcmp.ge.f32.partialorder %v9022, 0.0
    %vm9071 = vcmp.ge.f32.partialorder %v9023, 0.0
    %vm9072 = vcmp.ge.f32.partialorder %v9024, 0.0
    %vm9073 = vcmp.ge.f32.partialorder %v9025, 0.0
    %vm9074 = vcmp.ge.f32.partialorder %v9026, 0.0
    %vm9075 = vcmp.ge.f32.partialorder %v9027, 0.0
    %vm9076 = vcmp.ge.f32.partialorder %v9028, 0.0
    %vm9077 = vcmp.ge.f32.partialorder %v9029, 0.0
    %vm9078 = vcmp.ge.f32.partialorder %v9030, 0.0
    %vm9079 = vcmp.ge.f32.partialorder %v9031, 0.0
    %vm9080 = vcmp.ge.f32.partialorder %v9032, 0.0
    %vm9081 = vcmp.ge.f32.partialorder %v9033, 0.0
    %vm9082 = vcmp.ge.f32.partialorder %v9034, 0.0
    %vm9083 = vcmp.ge.f32.partialorder %v9035, 0.0
    %vm9084 = vcmp.ge.f32.partialorder %v9036, 0.0
    %vm9085 = vcmp.ge.f32.partialorder %v9037, 0.0
    %vm9086 = vcmp.ge.f32.partialorder %v9038, 0.0
    %vm9087 = vcmp.ge.f32.partialorder %v9039, 0.0
    %vm9088 = vcmp.ge.f32.partialorder %v9040, 0.0
    %vm9089 = vcmp.ge.f32.partialorder %v9041, 0.0
    %vm9090 = vcmp.ge.f32.partialorder %v9042, 0.0
    %vm9091 = vcmp.ge.f32.partialorder %v9043, 0.0
    %vm9092 = vcmp.ge.f32.partialorder %v9044, 0.0
    %vm9093 = vcmp.ge.f32.partialorder %v9045, 0.0
    %vm9094 = vcmp.ge.f32.partialorder %v9046, 0.0
    %vm9095 = vcmp.ge.f32.partialorder %v9047, 0.0
    %vm9096 = vcmp.ge.f32.partialorder %v9048, 0.0
    %vm9097 = vcmp.ge.f32.partialorder %v9049, 0.0
    %v9098 = vsel %vm9050, 1.0, -1.0
    %v9099 = vsel %vm9051, 1.0, -1.0
    %v9100 = vsel %vm9052, 1.0, -1.0
    %v9101 = vsel %vm9053, 1.0, -1.0
    %v9102 = vsel %vm9054, 1.0, -1.0
    %v9103 = vsel %vm9055, 1.0, -1.0
    %v9104 = vsel %vm9056, 1.0, -1.0
    %v9105 = vsel %vm9057, 1.0, -1.0
    %v9106 = vsel %vm9058, 1.0, -1.0
    %v9107 = vsel %vm9059, 1.0, -1.0
    %v9108 = vsel %vm9060, 1.0, -1.0
    %v9109 = vsel %vm9061, 1.0, -1.0
    %v9110 = vsel %vm9062, 1.0, -1.0
    %v9111 = vsel %vm9063, 1.0, -1.0
    %v9112 = vsel %vm9064, 1.0, -1.0
    %v9113 = vsel %vm9065, 1.0, -1.0
    %v9114 = vsel %vm9066, 1.0, -1.0
    %v9115 = vsel %vm9067, 1.0, -1.0
    %v9116 = vsel %vm9068, 1.0, -1.0
    %v9117 = vsel %vm9069, 1.0, -1.0
    %v9118 = vsel %vm9070, 1.0, -1.0
    %v9119 = vsel %vm9071, 1.0, -1.0
    %v9120 = vsel %vm9072, 1.0, -1.0
    %v9121 = vsel %vm9073, 1.0, -1.0
    %v9122 = vsel %vm9074, 1.0, -1.0
    %v9123 = vsel %vm9075, 1.0, -1.0
    %v9124 = vsel %vm9076, 1.0, -1.0
    %v9125 = vsel %vm9077, 1.0, -1.0
    %v9126 = vsel %vm9078, 1.0, -1.0
    %v9127 = vsel %vm9079, 1.0, -1.0
    %v9128 = vsel %vm9080, 1.0, -1.0
    %v9129 = vsel %vm9081, 1.0, -1.0
    %v9130 = vsel %vm9082, 1.0, -1.0
    %v9131 = vsel %vm9083, 1.0, -1.0
    %v9132 = vsel %vm9084, 1.0, -1.0
    %v9133 = vsel %vm9085, 1.0, -1.0
    %v9134 = vsel %vm9086, 1.0, -1.0
    %v9135 = vsel %vm9087, 1.0, -1.0
    %v9136 = vsel %vm9088, 1.0, -1.0
    %v9137 = vsel %vm9089, 1.0, -1.0
    %v9138 = vsel %vm9090, 1.0, -1.0
    %v9139 = vsel %vm9091, 1.0, -1.0
    %v9140 = vsel %vm9092, 1.0, -1.0
    %v9141 = vsel %vm9093, 1.0, -1.0
    %v9142 = vsel %vm9094, 1.0, -1.0
    %v9143 = vsel %vm9095, 1.0, -1.0
    %v9144 = vsel %vm9096, 1.0, -1.0
    %v9145 = vsel %vm9097, 1.0, -1.0
    %v9146 = vand.u32 2147483647, %v9002
    %v9147 = vand.u32 2147483647, %v9003
    %v9148 = vand.u32 2147483647, %v9004
    %v9149 = vand.u32 2147483647, %v9005
    %v9150 = vand.u32 2147483647, %v9006
    %v9151 = vand.u32 2147483647, %v9007
    %v9152 = vand.u32 2147483647, %v9008
    %v9153 = vand.u32 2147483647, %v9009
    %v9154 = vand.u32 2147483647, %v9010
    %v9155 = vand.u32 2147483647, %v9011
    %v9156 = vand.u32 2147483647, %v9012
    %v9157 = vand.u32 2147483647, %v9013
    %v9158 = vand.u32 2147483647, %v9014
    %v9159 = vand.u32 2147483647, %v9015
    %v9160 = vand.u32 2147483647, %v9016
    %v9161 = vand.u32 2147483647, %v9017
    %v9162 = vand.u32 2147483647, %v9018
    %v9163 = vand.u32 2147483647, %v9019
    %v9164 = vand.u32 2147483647, %v9020
    %v9165 = vand.u32 2147483647, %v9021
    %v9166 = vand.u32 2147483647, %v9022
    %v9167 = vand.u32 2147483647, %v9023
    %v9168 = vand.u32 2147483647, %v9024
    %v9169 = vand.u32 2147483647, %v9025
    %v9170 = vand.u32 2147483647, %v9026
    %v9171 = vand.u32 2147483647, %v9027
    %v9172 = vand.u32 2147483647, %v9028
    %v9173 = vand.u32 2147483647, %v9029
    %v9174 = vand.u32 2147483647, %v9030
    %v9175 = vand.u32 2147483647, %v9031
    %v9176 = vand.u32 2147483647, %v9032
    %v9177 = vand.u32 2147483647, %v9033
    %v9178 = vand.u32 2147483647, %v9034
    %v9179 = vand.u32 2147483647, %v9035
    %v9180 = vand.u32 2147483647, %v9036
    %v9181 = vand.u32 2147483647, %v9037
    %v9182 = vand.u32 2147483647, %v9038
    %v9183 = vand.u32 2147483647, %v9039
    %v9184 = vand.u32 2147483647, %v9040
    %v9185 = vand.u32 2147483647, %v9041
    %v9186 = vand.u32 2147483647, %v9042
    %v9187 = vand.u32 2147483647, %v9043
    %v9188 = vand.u32 2147483647, %v9044
    %v9189 = vand.u32 2147483647, %v9045
    %v9190 = vand.u32 2147483647, %v9046
    %v9191 = vand.u32 2147483647, %v9047
    %v9192 = vand.u32 2147483647, %v9048
    %v9193 = vand.u32 2147483647, %v9049
    %v9194 = vmul.f32 %v9146, 0.3275911
    %v9195 = vmul.f32 %v9147, 0.3275911
    %v9196 = vmul.f32 %v9148, 0.3275911
    %v9197 = vmul.f32 %v9149, 0.3275911
    %v9198 = vmul.f32 %v9150, 0.3275911
    %v9199 = vmul.f32 %v9151, 0.3275911
    %v9200 = vmul.f32 %v9152, 0.3275911
    %v9201 = vmul.f32 %v9153, 0.3275911
    %v9202 = vmul.f32 %v9154, 0.3275911
    %v9203 = vmul.f32 %v9155, 0.3275911
    %v9204 = vmul.f32 %v9156, 0.3275911
    %v9205 = vmul.f32 %v9157, 0.3275911
    %v9206 = vmul.f32 %v9158, 0.3275911
    %v9207 = vmul.f32 %v9159, 0.3275911
    %v9208 = vmul.f32 %v9160, 0.3275911
    %v9209 = vmul.f32 %v9161, 0.3275911
    %v9210 = vmul.f32 %v9162, 0.3275911
    %v9211 = vmul.f32 %v9163, 0.3275911
    %v9212 = vmul.f32 %v9164, 0.3275911
    %v9213 = vmul.f32 %v9165, 0.3275911
    %v9214 = vmul.f32 %v9166, 0.3275911
    %v9215 = vmul.f32 %v9167, 0.3275911
    %v9216 = vmul.f32 %v9168, 0.3275911
    %v9217 = vmul.f32 %v9169, 0.3275911
    %v9218 = vmul.f32 %v9170, 0.3275911
    %v9219 = vmul.f32 %v9171, 0.3275911
    %v9220 = vmul.f32 %v9172, 0.3275911
    %v9221 = vmul.f32 %v9173, 0.3275911
    %v9222 = vmul.f32 %v9174, 0.3275911
    %v9223 = vmul.f32 %v9175, 0.3275911
    %v9224 = vmul.f32 %v9176, 0.3275911
    %v9225 = vmul.f32 %v9177, 0.3275911
    %v9226 = vmul.f32 %v9178, 0.3275911
    %v9227 = vmul.f32 %v9179, 0.3275911
    %v9228 = vmul.f32 %v9180, 0.3275911
    %v9229 = vmul.f32 %v9181, 0.3275911
    %v9230 = vmul.f32 %v9182, 0.3275911
    %v9231 = vmul.f32 %v9183, 0.3275911
    %v9232 = vmul.f32 %v9184, 0.3275911
    %v9233 = vmul.f32 %v9185, 0.3275911
    %v9234 = vmul.f32 %v9186, 0.3275911
    %v9235 = vmul.f32 %v9187, 0.3275911
    %v9236 = vmul.f32 %v9188, 0.3275911
    %v9237 = vmul.f32 %v9189, 0.3275911
    %v9238 = vmul.f32 %v9190, 0.3275911
    %v9239 = vmul.f32 %v9191, 0.3275911
    %v9240 = vmul.f32 %v9192, 0.3275911
    %v9241 = vmul.f32 %v9193, 0.3275911
    %v9242 = vadd.f32 %v9194, 1.0
    %v9243 = vadd.f32 %v9195, 1.0
    %v9244 = vadd.f32 %v9196, 1.0
    %v9245 = vadd.f32 %v9197, 1.0
    %v9246 = vadd.f32 %v9198, 1.0
    %v9247 = vadd.f32 %v9199, 1.0
    %v9248 = vadd.f32 %v9200, 1.0
    %v9249 = vadd.f32 %v9201, 1.0
    %v9250 = vadd.f32 %v9202, 1.0
    %v9251 = vadd.f32 %v9203, 1.0
    %v9252 = vadd.f32 %v9204, 1.0
    %v9253 = vadd.f32 %v9205, 1.0
    %v9254 = vadd.f32 %v9206, 1.0
    %v9255 = vadd.f32 %v9207, 1.0
    %v9256 = vadd.f32 %v9208, 1.0
    %v9257 = vadd.f32 %v9209, 1.0
    %v9258 = vadd.f32 %v9210, 1.0
    %v9259 = vadd.f32 %v9211, 1.0
    %v9260 = vadd.f32 %v9212, 1.0
    %v9261 = vadd.f32 %v9213, 1.0
    %v9262 = vadd.f32 %v9214, 1.0
    %v9263 = vadd.f32 %v9215, 1.0
    %v9264 = vadd.f32 %v9216, 1.0
    %v9265 = vadd.f32 %v9217, 1.0
    %v9266 = vadd.f32 %v9218, 1.0
    %v9267 = vadd.f32 %v9219, 1.0
    %v9268 = vadd.f32 %v9220, 1.0
    %v9269 = vadd.f32 %v9221, 1.0
    %v9270 = vadd.f32 %v9222, 1.0
    %v9271 = vadd.f32 %v9223, 1.0
    %v9272 = vadd.f32 %v9224, 1.0
    %v9273 = vadd.f32 %v9225, 1.0
    %v9274 = vadd.f32 %v9226, 1.0
    %v9275 = vadd.f32 %v9227, 1.0
    %v9276 = vadd.f32 %v9228, 1.0
    %v9277 = vadd.f32 %v9229, 1.0
    %v9278 = vadd.f32 %v9230, 1.0
    %v9279 = vadd.f32 %v9231, 1.0
    %v9280 = vadd.f32 %v9232, 1.0
    %v9281 = vadd.f32 %v9233, 1.0
    %v9282 = vadd.f32 %v9234, 1.0
    %v9283 = vadd.f32 %v9235, 1.0
    %v9284 = vadd.f32 %v9236, 1.0
    %v9285 = vadd.f32 %v9237, 1.0
    %v9286 = vadd.f32 %v9238, 1.0
    %v9287 = vadd.f32 %v9239, 1.0
    %v9288 = vadd.f32 %v9240, 1.0
    %v9289 = vadd.f32 %v9241, 1.0
    %v9290 = vrcp.pop %v9242
    %v9291 = vmul.f32 1.0, %v9290
    %v9292 = vrcp.pop %v9243
    %v9293 = vmul.f32 1.0, %v9292
    %v9294 = vrcp.pop %v9244
    %v9295 = vmul.f32 1.0, %v9294
    %v9296 = vrcp.pop %v9245
    %v9297 = vmul.f32 1.0, %v9296
    %v9298 = vrcp.pop %v9246
    %v9299 = vmul.f32 1.0, %v9298
    %v9300 = vrcp.pop %v9247
    %v9301 = vmul.f32 1.0, %v9300
    %v9302 = vrcp.pop %v9248
    %v9303 = vmul.f32 1.0, %v9302
    %v9304 = vrcp.pop %v9249
    %v9305 = vmul.f32 1.0, %v9304
    %v9306 = vrcp.pop %v9250
    %v9307 = vmul.f32 1.0, %v9306
    %v9308 = vrcp.pop %v9251
    %v9309 = vmul.f32 1.0, %v9308
    %v9310 = vrcp.pop %v9252
    %v9311 = vmul.f32 1.0, %v9310
    %v9312 = vrcp.pop %v9253
    %v9313 = vmul.f32 1.0, %v9312
    %v9314 = vrcp.pop %v9254
    %v9315 = vmul.f32 1.0, %v9314
    %v9316 = vrcp.pop %v9255
    %v9317 = vmul.f32 1.0, %v9316
    %v9318 = vrcp.pop %v9256
    %v9319 = vmul.f32 1.0, %v9318
    %v9320 = vrcp.pop %v9257
    %v9321 = vmul.f32 1.0, %v9320
    %v9322 = vrcp.pop %v9258
    %v9323 = vmul.f32 1.0, %v9322
    %v9324 = vrcp.pop %v9259
    %v9325 = vmul.f32 1.0, %v9324
    %v9326 = vrcp.pop %v9260
    %v9327 = vmul.f32 1.0, %v9326
    %v9328 = vrcp.pop %v9261
    %v9329 = vmul.f32 1.0, %v9328
    %v9330 = vrcp.pop %v9262
    %v9331 = vmul.f32 1.0, %v9330
    %v9332 = vrcp.pop %v9263
    %v9333 = vmul.f32 1.0, %v9332
    %v9334 = vrcp.pop %v9264
    %v9335 = vmul.f32 1.0, %v9334
    %v9336 = vrcp.pop %v9265
    %v9337 = vmul.f32 1.0, %v9336
    %v9338 = vrcp.pop %v9266
    %v9339 = vmul.f32 1.0, %v9338
    %v9340 = vrcp.pop %v9267
    %v9341 = vmul.f32 1.0, %v9340
    %v9342 = vrcp.pop %v9268
    %v9343 = vmul.f32 1.0, %v9342
    %v9344 = vrcp.pop %v9269
    %v9345 = vmul.f32 1.0, %v9344
    %v9346 = vrcp.pop %v9270
    %v9347 = vmul.f32 1.0, %v9346
    %v9348 = vrcp.pop %v9271
    %v9349 = vmul.f32 1.0, %v9348
    %v9350 = vrcp.pop %v9272
    %v9351 = vmul.f32 1.0, %v9350
    %v9352 = vrcp.pop %v9273
    %v9353 = vmul.f32 1.0, %v9352
    %v9354 = vrcp.pop %v9274
    %v9355 = vmul.f32 1.0, %v9354
    %v9356 = vrcp.pop %v9275
    %v9357 = vmul.f32 1.0, %v9356
    %v9358 = vrcp.pop %v9276
    %v9359 = vmul.f32 1.0, %v9358
    %v9360 = vrcp.pop %v9277
    %v9361 = vmul.f32 1.0, %v9360
    %v9362 = vrcp.pop %v9278
    %v9363 = vmul.f32 1.0, %v9362
    %v9364 = vrcp.pop %v9279
    %v9365 = vmul.f32 1.0, %v9364
    %v9366 = vrcp.pop %v9280
    %v9367 = vmul.f32 1.0, %v9366
    %v9368 = vrcp.pop %v9281
    %v9369 = vmul.f32 1.0, %v9368
    %v9370 = vrcp.pop %v9282
    %v9371 = vmul.f32 1.0, %v9370
    %v9372 = vrcp.pop %v9283
    %v9373 = vmul.f32 1.0, %v9372
    %v9374 = vrcp.pop %v9284
    %v9375 = vmul.f32 1.0, %v9374
    %v9376 = vrcp.pop %v9285
    %v9377 = vmul.f32 1.0, %v9376
    %v9378 = vrcp.pop %v9286
    %v9379 = vmul.f32 1.0, %v9378
    %v9380 = vrcp.pop %v9287
    %v9381 = vmul.f32 1.0, %v9380
    %v9382 = vrcp.pop %v9288
    %v9383 = vmul.f32 1.0, %v9382
    %v9384 = vrcp.pop %v9289
    %v9385 = vmul.f32 1.0, %v9384
    %v9386 = vmul.f32 %v9291, 1.0614054
    %v9387 = vmul.f32 %v9293, 1.0614054
    %v9388 = vmul.f32 %v9295, 1.0614054
    %v9389 = vmul.f32 %v9297, 1.0614054
    %v9390 = vmul.f32 %v9299, 1.0614054
    %v9391 = vmul.f32 %v9301, 1.0614054
    %v9392 = vmul.f32 %v9303, 1.0614054
    %v9393 = vmul.f32 %v9305, 1.0614054
    %v9394 = vmul.f32 %v9307, 1.0614054
    %v9395 = vmul.f32 %v9309, 1.0614054
    %v9396 = vmul.f32 %v9311, 1.0614054
    %v9397 = vmul.f32 %v9313, 1.0614054
    %v9398 = vmul.f32 %v9315, 1.0614054
    %v9399 = vmul.f32 %v9317, 1.0614054
    %v9400 = vmul.f32 %v9319, 1.0614054
    %v9401 = vmul.f32 %v9321, 1.0614054
    %v9402 = vmul.f32 %v9323, 1.0614054
    %v9403 = vmul.f32 %v9325, 1.0614054
    %v9404 = vmul.f32 %v9327, 1.0614054
    %v9405 = vmul.f32 %v9329, 1.0614054
    %v9406 = vmul.f32 %v9331, 1.0614054
    %v9407 = vmul.f32 %v9333, 1.0614054
    %v9408 = vmul.f32 %v9335, 1.0614054
    %v9409 = vmul.f32 %v9337, 1.0614054
    %v9410 = vmul.f32 %v9339, 1.0614054
    %v9411 = vmul.f32 %v9341, 1.0614054
    %v9412 = vmul.f32 %v9343, 1.0614054
    %v9413 = vmul.f32 %v9345, 1.0614054
    %v9414 = vmul.f32 %v9347, 1.0614054
    %v9415 = vmul.f32 %v9349, 1.0614054
    %v9416 = vmul.f32 %v9351, 1.0614054
    %v9417 = vmul.f32 %v9353, 1.0614054
    %v9418 = vmul.f32 %v9355, 1.0614054
    %v9419 = vmul.f32 %v9357, 1.0614054
    %v9420 = vmul.f32 %v9359, 1.0614054
    %v9421 = vmul.f32 %v9361, 1.0614054
    %v9422 = vmul.f32 %v9363, 1.0614054
    %v9423 = vmul.f32 %v9365, 1.0614054
    %v9424 = vmul.f32 %v9367, 1.0614054
    %v9425 = vmul.f32 %v9369, 1.0614054
    %v9426 = vmul.f32 %v9371, 1.0614054
    %v9427 = vmul.f32 %v9373, 1.0614054
    %v9428 = vmul.f32 %v9375, 1.0614054
    %v9429 = vmul.f32 %v9377, 1.0614054
    %v9430 = vmul.f32 %v9379, 1.0614054
    %v9431 = vmul.f32 %v9381, 1.0614054
    %v9432 = vmul.f32 %v9383, 1.0614054
    %v9433 = vmul.f32 %v9385, 1.0614054
    %v9434 = vadd.f32 %v9386, -1.4531521
    %v9435 = vadd.f32 %v9387, -1.4531521
    %v9436 = vadd.f32 %v9388, -1.4531521
    %v9437 = vadd.f32 %v9389, -1.4531521
    %v9438 = vadd.f32 %v9390, -1.4531521
    %v9439 = vadd.f32 %v9391, -1.4531521
    %v9440 = vadd.f32 %v9392, -1.4531521
    %v9441 = vadd.f32 %v9393, -1.4531521
    %v9442 = vadd.f32 %v9394, -1.4531521
    %v9443 = vadd.f32 %v9395, -1.4531521
    %v9444 = vadd.f32 %v9396, -1.4531521
    %v9445 = vadd.f32 %v9397, -1.4531521
    %v9446 = vadd.f32 %v9398, -1.4531521
    %v9447 = vadd.f32 %v9399, -1.4531521
    %v9448 = vadd.f32 %v9400, -1.4531521
    %v9449 = vadd.f32 %v9401, -1.4531521
    %v9450 = vadd.f32 %v9402, -1.4531521
    %v9451 = vadd.f32 %v9403, -1.4531521
    %v9452 = vadd.f32 %v9404, -1.4531521
    %v9453 = vadd.f32 %v9405, -1.4531521
    %v9454 = vadd.f32 %v9406, -1.4531521
    %v9455 = vadd.f32 %v9407, -1.4531521
    %v9456 = vadd.f32 %v9408, -1.4531521
    %v9457 = vadd.f32 %v9409, -1.4531521
    %v9458 = vadd.f32 %v9410, -1.4531521
    %v9459 = vadd.f32 %v9411, -1.4531521
    %v9460 = vadd.f32 %v9412, -1.4531521
    %v9461 = vadd.f32 %v9413, -1.4531521
    %v9462 = vadd.f32 %v9414, -1.4531521
    %v9463 = vadd.f32 %v9415, -1.4531521
    %v9464 = vadd.f32 %v9416, -1.4531521
    %v9465 = vadd.f32 %v9417, -1.4531521
    %v9466 = vadd.f32 %v9418, -1.4531521
    %v9467 = vadd.f32 %v9419, -1.4531521
    %v9468 = vadd.f32 %v9420, -1.4531521
    %v9469 = vadd.f32 %v9421, -1.4531521
    %v9470 = vadd.f32 %v9422, -1.4531521
    %v9471 = vadd.f32 %v9423, -1.4531521
    %v9472 = vadd.f32 %v9424, -1.4531521
    %v9473 = vadd.f32 %v9425, -1.4531521
    %v9474 = vadd.f32 %v9426, -1.4531521
    %v9475 = vadd.f32 %v9427, -1.4531521
    %v9476 = vadd.f32 %v9428, -1.4531521
    %v9477 = vadd.f32 %v9429, -1.4531521
    %v9478 = vadd.f32 %v9430, -1.4531521
    %v9479 = vadd.f32 %v9431, -1.4531521
    %v9480 = vadd.f32 %v9432, -1.4531521
    %v9481 = vadd.f32 %v9433, -1.4531521
    %v9482 = vmul.f32 %v9434, %v9291
    %v9483 = vmul.f32 %v9435, %v9293
    %v9484 = vmul.f32 %v9436, %v9295
    %v9485 = vmul.f32 %v9437, %v9297
    %v9486 = vmul.f32 %v9438, %v9299
    %v9487 = vmul.f32 %v9439, %v9301
    %v9488 = vmul.f32 %v9440, %v9303
    %v9489 = vmul.f32 %v9441, %v9305
    %v9490 = vmul.f32 %v9442, %v9307
    %v9491 = vmul.f32 %v9443, %v9309
    %v9492 = vmul.f32 %v9444, %v9311
    %v9493 = vmul.f32 %v9445, %v9313
    %v9494 = vmul.f32 %v9446, %v9315
    %v9495 = vmul.f32 %v9447, %v9317
    %v9496 = vmul.f32 %v9448, %v9319
    %v9497 = vmul.f32 %v9449, %v9321
    %v9498 = vmul.f32 %v9450, %v9323
    %v9499 = vmul.f32 %v9451, %v9325
    %v9500 = vmul.f32 %v9452, %v9327
    %v9501 = vmul.f32 %v9453, %v9329
    %v9502 = vmul.f32 %v9454, %v9331
    %v9503 = vmul.f32 %v9455, %v9333
    %v9504 = vmul.f32 %v9456, %v9335
    %v9505 = vmul.f32 %v9457, %v9337
    %v9506 = vmul.f32 %v9458, %v9339
    %v9507 = vmul.f32 %v9459, %v9341
    %v9508 = vmul.f32 %v9460, %v9343
    %v9509 = vmul.f32 %v9461, %v9345
    %v9510 = vmul.f32 %v9462, %v9347
    %v9511 = vmul.f32 %v9463, %v9349
    %v9512 = vmul.f32 %v9464, %v9351
    %v9513 = vmul.f32 %v9465, %v9353
    %v9514 = vmul.f32 %v9466, %v9355
    %v9515 = vmul.f32 %v9467, %v9357
    %v9516 = vmul.f32 %v9468, %v9359
    %v9517 = vmul.f32 %v9469, %v9361
    %v9518 = vmul.f32 %v9470, %v9363
    %v9519 = vmul.f32 %v9471, %v9365
    %v9520 = vmul.f32 %v9472, %v9367
    %v9521 = vmul.f32 %v9473, %v9369
    %v9522 = vmul.f32 %v9474, %v9371
    %v9523 = vmul.f32 %v9475, %v9373
    %v9524 = vmul.f32 %v9476, %v9375
    %v9525 = vmul.f32 %v9477, %v9377
    %v9526 = vmul.f32 %v9478, %v9379
    %v9527 = vmul.f32 %v9479, %v9381
    %v9528 = vmul.f32 %v9480, %v9383
    %v9529 = vmul.f32 %v9481, %v9385
    %v9530 = vadd.f32 %v9482, 1.4214138
    %v9531 = vadd.f32 %v9483, 1.4214138
    %v9532 = vadd.f32 %v9484, 1.4214138
    %v9533 = vadd.f32 %v9485, 1.4214138
    %v9534 = vadd.f32 %v9486, 1.4214138
    %v9535 = vadd.f32 %v9487, 1.4214138
    %v9536 = vadd.f32 %v9488, 1.4214138
    %v9537 = vadd.f32 %v9489, 1.4214138
    %v9538 = vadd.f32 %v9490, 1.4214138
    %v9539 = vadd.f32 %v9491, 1.4214138
    %v9540 = vadd.f32 %v9492, 1.4214138
    %v9541 = vadd.f32 %v9493, 1.4214138
    %v9542 = vadd.f32 %v9494, 1.4214138
    %v9543 = vadd.f32 %v9495, 1.4214138
    %v9544 = vadd.f32 %v9496, 1.4214138
    %v9545 = vadd.f32 %v9497, 1.4214138
    %v9546 = vadd.f32 %v9498, 1.4214138
    %v9547 = vadd.f32 %v9499, 1.4214138
    %v9548 = vadd.f32 %v9500, 1.4214138
    %v9549 = vadd.f32 %v9501, 1.4214138
    %v9550 = vadd.f32 %v9502, 1.4214138
    %v9551 = vadd.f32 %v9503, 1.4214138
    %v9552 = vadd.f32 %v9504, 1.4214138
    %v9553 = vadd.f32 %v9505, 1.4214138
    %v9554 = vadd.f32 %v9506, 1.4214138
    %v9555 = vadd.f32 %v9507, 1.4214138
    %v9556 = vadd.f32 %v9508, 1.4214138
    %v9557 = vadd.f32 %v9509, 1.4214138
    %v9558 = vadd.f32 %v9510, 1.4214138
    %v9559 = vadd.f32 %v9511, 1.4214138
    %v9560 = vadd.f32 %v9512, 1.4214138
    %v9561 = vadd.f32 %v9513, 1.4214138
    %v9562 = vadd.f32 %v9514, 1.4214138
    %v9563 = vadd.f32 %v9515, 1.4214138
    %v9564 = vadd.f32 %v9516, 1.4214138
    %v9565 = vadd.f32 %v9517, 1.4214138
    %v9566 = vadd.f32 %v9518, 1.4214138
    %v9567 = vadd.f32 %v9519, 1.4214138
    %v9568 = vadd.f32 %v9520, 1.4214138
    %v9569 = vadd.f32 %v9521, 1.4214138
    %v9570 = vadd.f32 %v9522, 1.4214138
    %v9571 = vadd.f32 %v9523, 1.4214138
    %v9572 = vadd.f32 %v9524, 1.4214138
    %v9573 = vadd.f32 %v9525, 1.4214138
    %v9574 = vadd.f32 %v9526, 1.4214138
    %v9575 = vadd.f32 %v9527, 1.4214138
    %v9576 = vadd.f32 %v9528, 1.4214138
    %v9577 = vadd.f32 %v9529, 1.4214138
    %v9578 = vmul.f32 %v9530, %v9291
    %v9579 = vmul.f32 %v9531, %v9293
    %v9580 = vmul.f32 %v9532, %v9295
    %v9581 = vmul.f32 %v9533, %v9297
    %v9582 = vmul.f32 %v9534, %v9299
    %v9583 = vmul.f32 %v9535, %v9301
    %v9584 = vmul.f32 %v9536, %v9303
    %v9585 = vmul.f32 %v9537, %v9305
    %v9586 = vmul.f32 %v9538, %v9307
    %v9587 = vmul.f32 %v9539, %v9309
    %v9588 = vmul.f32 %v9540, %v9311
    %v9589 = vmul.f32 %v9541, %v9313
    %v9590 = vmul.f32 %v9542, %v9315
    %v9591 = vmul.f32 %v9543, %v9317
    %v9592 = vmul.f32 %v9544, %v9319
    %v9593 = vmul.f32 %v9545, %v9321
    %v9594 = vmul.f32 %v9546, %v9323
    %v9595 = vmul.f32 %v9547, %v9325
    %v9596 = vmul.f32 %v9548, %v9327
    %v9597 = vmul.f32 %v9549, %v9329
    %v9598 = vmul.f32 %v9550, %v9331
    %v9599 = vmul.f32 %v9551, %v9333
    %v9600 = vmul.f32 %v9552, %v9335
    %v9601 = vmul.f32 %v9553, %v9337
    %v9602 = vmul.f32 %v9554, %v9339
    %v9603 = vmul.f32 %v9555, %v9341
    %v9604 = vmul.f32 %v9556, %v9343
    %v9605 = vmul.f32 %v9557, %v9345
    %v9606 = vmul.f32 %v9558, %v9347
    %v9607 = vmul.f32 %v9559, %v9349
    %v9608 = vmul.f32 %v9560, %v9351
    %v9609 = vmul.f32 %v9561, %v9353
    %v9610 = vmul.f32 %v9562, %v9355
    %v9611 = vmul.f32 %v9563, %v9357
    %v9612 = vmul.f32 %v9564, %v9359
    %v9613 = vmul.f32 %v9565, %v9361
    %v9614 = vmul.f32 %v9566, %v9363
    %v9615 = vmul.f32 %v9567, %v9365
    %v9616 = vmul.f32 %v9568, %v9367
    %v9617 = vmul.f32 %v9569, %v9369
    %v9618 = vmul.f32 %v9570, %v9371
    %v9619 = vmul.f32 %v9571, %v9373
    %v9620 = vmul.f32 %v9572, %v9375
    %v9621 = vmul.f32 %v9573, %v9377
    %v9622 = vmul.f32 %v9574, %v9379
    %v9623 = vmul.f32 %v9575, %v9381
    %v9624 = vmul.f32 %v9576, %v9383
    %v9625 = vmul.f32 %v9577, %v9385
    %v9626 = vadd.f32 %v9578, -0.28449672
    %v9627 = vadd.f32 %v9579, -0.28449672
    %v9628 = vadd.f32 %v9580, -0.28449672
    %v9629 = vadd.f32 %v9581, -0.28449672
    %v9630 = vadd.f32 %v9582, -0.28449672
    %v9631 = vadd.f32 %v9583, -0.28449672
    %v9632 = vadd.f32 %v9584, -0.28449672
    %v9633 = vadd.f32 %v9585, -0.28449672
    %v9634 = vadd.f32 %v9586, -0.28449672
    %v9635 = vadd.f32 %v9587, -0.28449672
    %v9636 = vadd.f32 %v9588, -0.28449672
    %v9637 = vadd.f32 %v9589, -0.28449672
    %v9638 = vadd.f32 %v9590, -0.28449672
    %v9639 = vadd.f32 %v9591, -0.28449672
    %v9640 = vadd.f32 %v9592, -0.28449672
    %v9641 = vadd.f32 %v9593, -0.28449672
    %v9642 = vadd.f32 %v9594, -0.28449672
    %v9643 = vadd.f32 %v9595, -0.28449672
    %v9644 = vadd.f32 %v9596, -0.28449672
    %v9645 = vadd.f32 %v9597, -0.28449672
    %v9646 = vadd.f32 %v9598, -0.28449672
    %v9647 = vadd.f32 %v9599, -0.28449672
    %v9648 = vadd.f32 %v9600, -0.28449672
    %v9649 = vadd.f32 %v9601, -0.28449672
    %v9650 = vadd.f32 %v9602, -0.28449672
    %v9651 = vadd.f32 %v9603, -0.28449672
    %v9652 = vadd.f32 %v9604, -0.28449672
    %v9653 = vadd.f32 %v9605, -0.28449672
    %v9654 = vadd.f32 %v9606, -0.28449672
    %v9655 = vadd.f32 %v9607, -0.28449672
    %v9656 = vadd.f32 %v9608, -0.28449672
    %v9657 = vadd.f32 %v9609, -0.28449672
    %v9658 = vadd.f32 %v9610, -0.28449672
    %v9659 = vadd.f32 %v9611, -0.28449672
    %v9660 = vadd.f32 %v9612, -0.28449672
    %v9661 = vadd.f32 %v9613, -0.28449672
    %v9662 = vadd.f32 %v9614, -0.28449672
    %v9663 = vadd.f32 %v9615, -0.28449672
    %v9664 = vadd.f32 %v9616, -0.28449672
    %v9665 = vadd.f32 %v9617, -0.28449672
    %v9666 = vadd.f32 %v9618, -0.28449672
    %v9667 = vadd.f32 %v9619, -0.28449672
    %v9668 = vadd.f32 %v9620, -0.28449672
    %v9669 = vadd.f32 %v9621, -0.28449672
    %v9670 = vadd.f32 %v9622, -0.28449672
    %v9671 = vadd.f32 %v9623, -0.28449672
    %v9672 = vadd.f32 %v9624, -0.28449672
    %v9673 = vadd.f32 %v9625, -0.28449672
    %v9674 = vmul.f32 %v9626, %v9291
    %v9675 = vmul.f32 %v9627, %v9293
    %v9676 = vmul.f32 %v9628, %v9295
    %v9677 = vmul.f32 %v9629, %v9297
    %v9678 = vmul.f32 %v9630, %v9299
    %v9679 = vmul.f32 %v9631, %v9301
    %v9680 = vmul.f32 %v9632, %v9303
    %v9681 = vmul.f32 %v9633, %v9305
    %v9682 = vmul.f32 %v9634, %v9307
    %v9683 = vmul.f32 %v9635, %v9309
    %v9684 = vmul.f32 %v9636, %v9311
    %v9685 = vmul.f32 %v9637, %v9313
    %v9686 = vmul.f32 %v9638, %v9315
    %v9687 = vmul.f32 %v9639, %v9317
    %v9688 = vmul.f32 %v9640, %v9319
    %v9689 = vmul.f32 %v9641, %v9321
    %v9690 = vmul.f32 %v9642, %v9323
    %v9691 = vmul.f32 %v9643, %v9325
    %v9692 = vmul.f32 %v9644, %v9327
    %v9693 = vmul.f32 %v9645, %v9329
    %v9694 = vmul.f32 %v9646, %v9331
    %v9695 = vmul.f32 %v9647, %v9333
    %v9696 = vmul.f32 %v9648, %v9335
    %v9697 = vmul.f32 %v9649, %v9337
    %v9698 = vmul.f32 %v9650, %v9339
    %v9699 = vmul.f32 %v9651, %v9341
    %v9700 = vmul.f32 %v9652, %v9343
    %v9701 = vmul.f32 %v9653, %v9345
    %v9702 = vmul.f32 %v9654, %v9347
    %v9703 = vmul.f32 %v9655, %v9349
    %v9704 = vmul.f32 %v9656, %v9351
    %v9705 = vmul.f32 %v9657, %v9353
    %v9706 = vmul.f32 %v9658, %v9355
    %v9707 = vmul.f32 %v9659, %v9357
    %v9708 = vmul.f32 %v9660, %v9359
    %v9709 = vmul.f32 %v9661, %v9361
    %v9710 = vmul.f32 %v9662, %v9363
    %v9711 = vmul.f32 %v9663, %v9365
    %v9712 = vmul.f32 %v9664, %v9367
    %v9713 = vmul.f32 %v9665, %v9369
    %v9714 = vmul.f32 %v9666, %v9371
    %v9715 = vmul.f32 %v9667, %v9373
    %v9716 = vmul.f32 %v9668, %v9375
    %v9717 = vmul.f32 %v9669, %v9377
    %v9718 = vmul.f32 %v9670, %v9379
    %v9719 = vmul.f32 %v9671, %v9381
    %v9720 = vmul.f32 %v9672, %v9383
    %v9721 = vmul.f32 %v9673, %v9385
    %v9722 = vadd.f32 %v9674, 0.2548296
    %v9723 = vadd.f32 %v9675, 0.2548296
    %v9724 = vadd.f32 %v9676, 0.2548296
    %v9725 = vadd.f32 %v9677, 0.2548296
    %v9726 = vadd.f32 %v9678, 0.2548296
    %v9727 = vadd.f32 %v9679, 0.2548296
    %v9728 = vadd.f32 %v9680, 0.2548296
    %v9729 = vadd.f32 %v9681, 0.2548296
    %v9730 = vadd.f32 %v9682, 0.2548296
    %v9731 = vadd.f32 %v9683, 0.2548296
    %v9732 = vadd.f32 %v9684, 0.2548296
    %v9733 = vadd.f32 %v9685, 0.2548296
    %v9734 = vadd.f32 %v9686, 0.2548296
    %v9735 = vadd.f32 %v9687, 0.2548296
    %v9736 = vadd.f32 %v9688, 0.2548296
    %v9737 = vadd.f32 %v9689, 0.2548296
    %v9738 = vadd.f32 %v9690, 0.2548296
    %v9739 = vadd.f32 %v9691, 0.2548296
    %v9740 = vadd.f32 %v9692, 0.2548296
    %v9741 = vadd.f32 %v9693, 0.2548296
    %v9742 = vadd.f32 %v9694, 0.2548296
    %v9743 = vadd.f32 %v9695, 0.2548296
    %v9744 = vadd.f32 %v9696, 0.2548296
    %v9745 = vadd.f32 %v9697, 0.2548296
    %v9746 = vadd.f32 %v9698, 0.2548296
    %v9747 = vadd.f32 %v9699, 0.2548296
    %v9748 = vadd.f32 %v9700, 0.2548296
    %v9749 = vadd.f32 %v9701, 0.2548296
    %v9750 = vadd.f32 %v9702, 0.2548296
    %v9751 = vadd.f32 %v9703, 0.2548296
    %v9752 = vadd.f32 %v9704, 0.2548296
    %v9753 = vadd.f32 %v9705, 0.2548296
    %v9754 = vadd.f32 %v9706, 0.2548296
    %v9755 = vadd.f32 %v9707, 0.2548296
    %v9756 = vadd.f32 %v9708, 0.2548296
    %v9757 = vadd.f32 %v9709, 0.2548296
    %v9758 = vadd.f32 %v9710, 0.2548296
    %v9759 = vadd.f32 %v9711, 0.2548296
    %v9760 = vadd.f32 %v9712, 0.2548296
    %v9761 = vadd.f32 %v9713, 0.2548296
    %v9762 = vadd.f32 %v9714, 0.2548296
    %v9763 = vadd.f32 %v9715, 0.2548296
    %v9764 = vadd.f32 %v9716, 0.2548296
    %v9765 = vadd.f32 %v9717, 0.2548296
    %v9766 = vadd.f32 %v9718, 0.2548296
    %v9767 = vadd.f32 %v9719, 0.2548296
    %v9768 = vadd.f32 %v9720, 0.2548296
    %v9769 = vadd.f32 %v9721, 0.2548296
    %v9770 = vmul.f32 %v9722, %v9291
    %v9771 = vmul.f32 %v9723, %v9293
    %v9772 = vmul.f32 %v9724, %v9295
    %v9773 = vmul.f32 %v9725, %v9297
    %v9774 = vmul.f32 %v9726, %v9299
    %v9775 = vmul.f32 %v9727, %v9301
    %v9776 = vmul.f32 %v9728, %v9303
    %v9777 = vmul.f32 %v9729, %v9305
    %v9778 = vmul.f32 %v9730, %v9307
    %v9779 = vmul.f32 %v9731, %v9309
    %v9780 = vmul.f32 %v9732, %v9311
    %v9781 = vmul.f32 %v9733, %v9313
    %v9782 = vmul.f32 %v9734, %v9315
    %v9783 = vmul.f32 %v9735, %v9317
    %v9784 = vmul.f32 %v9736, %v9319
    %v9785 = vmul.f32 %v9737, %v9321
    %v9786 = vmul.f32 %v9738, %v9323
    %v9787 = vmul.f32 %v9739, %v9325
    %v9788 = vmul.f32 %v9740, %v9327
    %v9789 = vmul.f32 %v9741, %v9329
    %v9790 = vmul.f32 %v9742, %v9331
    %v9791 = vmul.f32 %v9743, %v9333
    %v9792 = vmul.f32 %v9744, %v9335
    %v9793 = vmul.f32 %v9745, %v9337
    %v9794 = vmul.f32 %v9746, %v9339
    %v9795 = vmul.f32 %v9747, %v9341
    %v9796 = vmul.f32 %v9748, %v9343
    %v9797 = vmul.f32 %v9749, %v9345
    %v9798 = vmul.f32 %v9750, %v9347
    %v9799 = vmul.f32 %v9751, %v9349
    %v9800 = vmul.f32 %v9752, %v9351
    %v9801 = vmul.f32 %v9753, %v9353
    %v9802 = vmul.f32 %v9754, %v9355
    %v9803 = vmul.f32 %v9755, %v9357
    %v9804 = vmul.f32 %v9756, %v9359
    %v9805 = vmul.f32 %v9757, %v9361
    %v9806 = vmul.f32 %v9758, %v9363
    %v9807 = vmul.f32 %v9759, %v9365
    %v9808 = vmul.f32 %v9760, %v9367
    %v9809 = vmul.f32 %v9761, %v9369
    %v9810 = vmul.f32 %v9762, %v9371
    %v9811 = vmul.f32 %v9763, %v9373
    %v9812 = vmul.f32 %v9764, %v9375
    %v9813 = vmul.f32 %v9765, %v9377
    %v9814 = vmul.f32 %v9766, %v9379
    %v9815 = vmul.f32 %v9767, %v9381
    %v9816 = vmul.f32 %v9768, %v9383
    %v9817 = vmul.f32 %v9769, %v9385
    %v9818 = vsub.f32 0.0, %v9146
    %v9819 = vsub.f32 0.0, %v9147
    %v9820 = vsub.f32 0.0, %v9148
    %v9821 = vsub.f32 0.0, %v9149
    %v9822 = vsub.f32 0.0, %v9150
    %v9823 = vsub.f32 0.0, %v9151
    %v9824 = vsub.f32 0.0, %v9152
    %v9825 = vsub.f32 0.0, %v9153
    %v9826 = vsub.f32 0.0, %v9154
    %v9827 = vsub.f32 0.0, %v9155
    %v9828 = vsub.f32 0.0, %v9156
    %v9829 = vsub.f32 0.0, %v9157
    %v9830 = vsub.f32 0.0, %v9158
    %v9831 = vsub.f32 0.0, %v9159
    %v9832 = vsub.f32 0.0, %v9160
    %v9833 = vsub.f32 0.0, %v9161
    %v9834 = vsub.f32 0.0, %v9162
    %v9835 = vsub.f32 0.0, %v9163
    %v9836 = vsub.f32 0.0, %v9164
    %v9837 = vsub.f32 0.0, %v9165
    %v9838 = vsub.f32 0.0, %v9166
    %v9839 = vsub.f32 0.0, %v9167
    %v9840 = vsub.f32 0.0, %v9168
    %v9841 = vsub.f32 0.0, %v9169
    %v9842 = vsub.f32 0.0, %v9170
    %v9843 = vsub.f32 0.0, %v9171
    %v9844 = vsub.f32 0.0, %v9172
    %v9845 = vsub.f32 0.0, %v9173
    %v9846 = vsub.f32 0.0, %v9174
    %v9847 = vsub.f32 0.0, %v9175
    %v9848 = vsub.f32 0.0, %v9176
    %v9849 = vsub.f32 0.0, %v9177
    %v9850 = vsub.f32 0.0, %v9178
    %v9851 = vsub.f32 0.0, %v9179
    %v9852 = vsub.f32 0.0, %v9180
    %v9853 = vsub.f32 0.0, %v9181
    %v9854 = vsub.f32 0.0, %v9182
    %v9855 = vsub.f32 0.0, %v9183
    %v9856 = vsub.f32 0.0, %v9184
    %v9857 = vsub.f32 0.0, %v9185
    %v9858 = vsub.f32 0.0, %v9186
    %v9859 = vsub.f32 0.0, %v9187
    %v9860 = vsub.f32 0.0, %v9188
    %v9861 = vsub.f32 0.0, %v9189
    %v9862 = vsub.f32 0.0, %v9190
    %v9863 = vsub.f32 0.0, %v9191
    %v9864 = vsub.f32 0.0, %v9192
    %v9865 = vsub.f32 0.0, %v9193
    %v9866 = vmul.f32 %v9818, %v9146
    %v9867 = vmul.f32 %v9819, %v9147
    %v9868 = vmul.f32 %v9820, %v9148
    %v9869 = vmul.f32 %v9821, %v9149
    %v9870 = vmul.f32 %v9822, %v9150
    %v9871 = vmul.f32 %v9823, %v9151
    %v9872 = vmul.f32 %v9824, %v9152
    %v9873 = vmul.f32 %v9825, %v9153
    %v9874 = vmul.f32 %v9826, %v9154
    %v9875 = vmul.f32 %v9827, %v9155
    %v9876 = vmul.f32 %v9828, %v9156
    %v9877 = vmul.f32 %v9829, %v9157
    %v9878 = vmul.f32 %v9830, %v9158
    %v9879 = vmul.f32 %v9831, %v9159
    %v9880 = vmul.f32 %v9832, %v9160
    %v9881 = vmul.f32 %v9833, %v9161
    %v9882 = vmul.f32 %v9834, %v9162
    %v9883 = vmul.f32 %v9835, %v9163
    %v9884 = vmul.f32 %v9836, %v9164
    %v9885 = vmul.f32 %v9837, %v9165
    %v9886 = vmul.f32 %v9838, %v9166
    %v9887 = vmul.f32 %v9839, %v9167
    %v9888 = vmul.f32 %v9840, %v9168
    %v9889 = vmul.f32 %v9841, %v9169
    %v9890 = vmul.f32 %v9842, %v9170
    %v9891 = vmul.f32 %v9843, %v9171
    %v9892 = vmul.f32 %v9844, %v9172
    %v9893 = vmul.f32 %v9845, %v9173
    %v9894 = vmul.f32 %v9846, %v9174
    %v9895 = vmul.f32 %v9847, %v9175
    %v9896 = vmul.f32 %v9848, %v9176
    %v9897 = vmul.f32 %v9849, %v9177
    %v9898 = vmul.f32 %v9850, %v9178
    %v9899 = vmul.f32 %v9851, %v9179
    %v9900 = vmul.f32 %v9852, %v9180
    %v9901 = vmul.f32 %v9853, %v9181
    %v9902 = vmul.f32 %v9854, %v9182
    %v9903 = vmul.f32 %v9855, %v9183
    %v9904 = vmul.f32 %v9856, %v9184
    %v9905 = vmul.f32 %v9857, %v9185
    %v9906 = vmul.f32 %v9858, %v9186
    %v9907 = vmul.f32 %v9859, %v9187
    %v9908 = vmul.f32 %v9860, %v9188
    %v9909 = vmul.f32 %v9861, %v9189
    %v9910 = vmul.f32 %v9862, %v9190
    %v9911 = vmul.f32 %v9863, %v9191
    %v9912 = vmul.f32 %v9864, %v9192
    %v9913 = vmul.f32 %v9865, %v9193
    %v9914 = vmul.f32 %v9866, 1.442695
    %v9915 = vpow.pop %v9914
    %v9916 = vmul.f32 %v9867, 1.442695
    %v9917 = vpow.pop %v9916
    %v9918 = vmul.f32 %v9868, 1.442695
    %v9919 = vpow.pop %v9918
    %v9920 = vmul.f32 %v9869, 1.442695
    %v9921 = vpow.pop %v9920
    %v9922 = vmul.f32 %v9870, 1.442695
    %v9923 = vpow.pop %v9922
    %v9924 = vmul.f32 %v9871, 1.442695
    %v9925 = vpow.pop %v9924
    %v9926 = vmul.f32 %v9872, 1.442695
    %v9927 = vpow.pop %v9926
    %v9928 = vmul.f32 %v9873, 1.442695
    %v9929 = vpow.pop %v9928
    %v9930 = vmul.f32 %v9874, 1.442695
    %v9931 = vpow.pop %v9930
    %v9932 = vmul.f32 %v9875, 1.442695
    %v9933 = vpow.pop %v9932
    %v9934 = vmul.f32 %v9876, 1.442695
    %v9935 = vpow.pop %v9934
    %v9936 = vmul.f32 %v9877, 1.442695
    %v9937 = vpow.pop %v9936
    %v9938 = vmul.f32 %v9878, 1.442695
    %v9939 = vpow.pop %v9938
    %v9940 = vmul.f32 %v9879, 1.442695
    %v9941 = vpow.pop %v9940
    %v9942 = vmul.f32 %v9880, 1.442695
    %v9943 = vpow.pop %v9942
    %v9944 = vmul.f32 %v9881, 1.442695
    %v9945 = vpow.pop %v9944
    %v9946 = vmul.f32 %v9882, 1.442695
    %v9947 = vpow.pop %v9946
    %v9948 = vmul.f32 %v9883, 1.442695
    %v9949 = vpow.pop %v9948
    %v9950 = vmul.f32 %v9884, 1.442695
    %v9951 = vpow.pop %v9950
    %v9952 = vmul.f32 %v9885, 1.442695
    %v9953 = vpow.pop %v9952
    %v9954 = vmul.f32 %v9886, 1.442695
    %v9955 = vpow.pop %v9954
    %v9956 = vmul.f32 %v9887, 1.442695
    %v9957 = vpow.pop %v9956
    %v9958 = vmul.f32 %v9888, 1.442695
    %v9959 = vpow.pop %v9958
    %v9960 = vmul.f32 %v9889, 1.442695
    %v9961 = vpow.pop %v9960
    %v9962 = vmul.f32 %v9890, 1.442695
    %v9963 = vpow.pop %v9962
    %v9964 = vmul.f32 %v9891, 1.442695
    %v9965 = vpow.pop %v9964
    %v9966 = vmul.f32 %v9892, 1.442695
    %v9967 = vpow.pop %v9966
    %v9968 = vmul.f32 %v9893, 1.442695
    %v9969 = vpow.pop %v9968
    %v9970 = vmul.f32 %v9894, 1.442695
    %v9971 = vpow.pop %v9970
    %v9972 = vmul.f32 %v9895, 1.442695
    %v9973 = vpow.pop %v9972
    %v9974 = vmul.f32 %v9896, 1.442695
    %v9975 = vpow.pop %v9974
    %v9976 = vmul.f32 %v9897, 1.442695
    %v9977 = vpow.pop %v9976
    %v9978 = vmul.f32 %v9898, 1.442695
    %v9979 = vpow.pop %v9978
    %v9980 = vmul.f32 %v9899, 1.442695
    %v9981 = vpow.pop %v9980
    %v9982 = vmul.f32 %v9900, 1.442695
    %v9983 = vpow.pop %v9982
    %v9984 = vmul.f32 %v9901, 1.442695
    %v9985 = vpow.pop %v9984
    %v9986 = vmul.f32 %v9902, 1.442695
    %v9987 = vpow.pop %v9986
    %v9988 = vmul.f32 %v9903, 1.442695
    %v9989 = vpow.pop %v9988
    %v9990 = vmul.f32 %v9904, 1.442695
    %v9991 = vpow.pop %v9990
    %v9992 = vmul.f32 %v9905, 1.442695
    %v9993 = vpow.pop %v9992
    %v9994 = vmul.f32 %v9906, 1.442695
    %v9995 = vpow.pop %v9994
    %v9996 = vmul.f32 %v9907, 1.442695
    %v9997 = vpow.pop %v9996
    %v9998 = vmul.f32 %v9908, 1.442695
    %v9999 = vpow.pop %v9998
    %v10000 = vmul.f32 %v9909, 1.442695
    %v10001 = vpow.pop %v10000
    %v10002 = vmul.f32 %v9910, 1.442695
    %v10003 = vpow.pop %v10002
    %v10004 = vmul.f32 %v9911, 1.442695
    %v10005 = vpow.pop %v10004
    %v10006 = vmul.f32 %v9912, 1.442695
    %v10007 = vpow.pop %v10006
    %v10008 = vmul.f32 %v9913, 1.442695
    %v10009 = vpow.pop %v10008
    %v10010 = vmul.f32 %v9770, %v9915
    %v10011 = vmul.f32 %v9771, %v9917
    %v10012 = vmul.f32 %v9772, %v9919
    %v10013 = vmul.f32 %v9773, %v9921
    %v10014 = vmul.f32 %v9774, %v9923
    %v10015 = vmul.f32 %v9775, %v9925
    %v10016 = vmul.f32 %v9776, %v9927
    %v10017 = vmul.f32 %v9777, %v9929
    %v10018 = vmul.f32 %v9778, %v9931
    %v10019 = vmul.f32 %v9779, %v9933
    %v10020 = vmul.f32 %v9780, %v9935
    %v10021 = vmul.f32 %v9781, %v9937
    %v10022 = vmul.f32 %v9782, %v9939
    %v10023 = vmul.f32 %v9783, %v9941
    %v10024 = vmul.f32 %v9784, %v9943
    %v10025 = vmul.f32 %v9785, %v9945
    %v10026 = vmul.f32 %v9786, %v9947
    %v10027 = vmul.f32 %v9787, %v9949
    %v10028 = vmul.f32 %v9788, %v9951
    %v10029 = vmul.f32 %v9789, %v9953
    %v10030 = vmul.f32 %v9790, %v9955
    %v10031 = vmul.f32 %v9791, %v9957
    %v10032 = vmul.f32 %v9792, %v9959
    %v10033 = vmul.f32 %v9793, %v9961
    %v10034 = vmul.f32 %v9794, %v9963
    %v10035 = vmul.f32 %v9795, %v9965
    %v10036 = vmul.f32 %v9796, %v9967
    %v10037 = vmul.f32 %v9797, %v9969
    %v10038 = vmul.f32 %v9798, %v9971
    %v10039 = vmul.f32 %v9799, %v9973
    %v10040 = vmul.f32 %v9800, %v9975
    %v10041 = vmul.f32 %v9801, %v9977
    %v10042 = vmul.f32 %v9802, %v9979
    %v10043 = vmul.f32 %v9803, %v9981
    %v10044 = vmul.f32 %v9804, %v9983
    %v10045 = vmul.f32 %v9805, %v9985
    %v10046 = vmul.f32 %v9806, %v9987
    %v10047 = vmul.f32 %v9807, %v9989
    %v10048 = vmul.f32 %v9808, %v9991
    %v10049 = vmul.f32 %v9809, %v9993
    %v10050 = vmul.f32 %v9810, %v9995
    %v10051 = vmul.f32 %v9811, %v9997
    %v10052 = vmul.f32 %v9812, %v9999
    %v10053 = vmul.f32 %v9813, %v10001
    %v10054 = vmul.f32 %v9814, %v10003
    %v10055 = vmul.f32 %v9815, %v10005
    %v10056 = vmul.f32 %v9816, %v10007
    %v10057 = vmul.f32 %v9817, %v10009
    %v10058 = vsub.f32 1.0, %v10010
    %v10059 = vsub.f32 1.0, %v10011
    %v10060 = vsub.f32 1.0, %v10012
    %v10061 = vsub.f32 1.0, %v10013
    %v10062 = vsub.f32 1.0, %v10014
    %v10063 = vsub.f32 1.0, %v10015
    %v10064 = vsub.f32 1.0, %v10016
    %v10065 = vsub.f32 1.0, %v10017
    %v10066 = vsub.f32 1.0, %v10018
    %v10067 = vsub.f32 1.0, %v10019
    %v10068 = vsub.f32 1.0, %v10020
    %v10069 = vsub.f32 1.0, %v10021
    %v10070 = vsub.f32 1.0, %v10022
    %v10071 = vsub.f32 1.0, %v10023
    %v10072 = vsub.f32 1.0, %v10024
    %v10073 = vsub.f32 1.0, %v10025
    %v10074 = vsub.f32 1.0, %v10026
    %v10075 = vsub.f32 1.0, %v10027
    %v10076 = vsub.f32 1.0, %v10028
    %v10077 = vsub.f32 1.0, %v10029
    %v10078 = vsub.f32 1.0, %v10030
    %v10079 = vsub.f32 1.0, %v10031
    %v10080 = vsub.f32 1.0, %v10032
    %v10081 = vsub.f32 1.0, %v10033
    %v10082 = vsub.f32 1.0, %v10034
    %v10083 = vsub.f32 1.0, %v10035
    %v10084 = vsub.f32 1.0, %v10036
    %v10085 = vsub.f32 1.0, %v10037
    %v10086 = vsub.f32 1.0, %v10038
    %v10087 = vsub.f32 1.0, %v10039
    %v10088 = vsub.f32 1.0, %v10040
    %v10089 = vsub.f32 1.0, %v10041
    %v10090 = vsub.f32 1.0, %v10042
    %v10091 = vsub.f32 1.0, %v10043
    %v10092 = vsub.f32 1.0, %v10044
    %v10093 = vsub.f32 1.0, %v10045
    %v10094 = vsub.f32 1.0, %v10046
    %v10095 = vsub.f32 1.0, %v10047
    %v10096 = vsub.f32 1.0, %v10048
    %v10097 = vsub.f32 1.0, %v10049
    %v10098 = vsub.f32 1.0, %v10050
    %v10099 = vsub.f32 1.0, %v10051
    %v10100 = vsub.f32 1.0, %v10052
    %v10101 = vsub.f32 1.0, %v10053
    %v10102 = vsub.f32 1.0, %v10054
    %v10103 = vsub.f32 1.0, %v10055
    %v10104 = vsub.f32 1.0, %v10056
    %v10105 = vsub.f32 1.0, %v10057
    %v10106 = vmul.f32 %v9098, %v10058
    %v10107 = vmul.f32 %v9099, %v10059
    %v10108 = vmul.f32 %v9100, %v10060
    %v10109 = vmul.f32 %v9101, %v10061
    %v10110 = vmul.f32 %v9102, %v10062
    %v10111 = vmul.f32 %v9103, %v10063
    %v10112 = vmul.f32 %v9104, %v10064
    %v10113 = vmul.f32 %v9105, %v10065
    %v10114 = vmul.f32 %v9106, %v10066
    %v10115 = vmul.f32 %v9107, %v10067
    %v10116 = vmul.f32 %v9108, %v10068
    %v10117 = vmul.f32 %v9109, %v10069
    %v10118 = vmul.f32 %v9110, %v10070
    %v10119 = vmul.f32 %v9111, %v10071
    %v10120 = vmul.f32 %v9112, %v10072
    %v10121 = vmul.f32 %v9113, %v10073
    %v10122 = vmul.f32 %v9114, %v10074
    %v10123 = vmul.f32 %v9115, %v10075
    %v10124 = vmul.f32 %v9116, %v10076
    %v10125 = vmul.f32 %v9117, %v10077
    %v10126 = vmul.f32 %v9118, %v10078
    %v10127 = vmul.f32 %v9119, %v10079
    %v10128 = vmul.f32 %v9120, %v10080
    %v10129 = vmul.f32 %v9121, %v10081
    %v10130 = vmul.f32 %v9122, %v10082
    %v10131 = vmul.f32 %v9123, %v10083
    %v10132 = vmul.f32 %v9124, %v10084
    %v10133 = vmul.f32 %v9125, %v10085
    %v10134 = vmul.f32 %v9126, %v10086
    %v10135 = vmul.f32 %v9127, %v10087
    %v10136 = vmul.f32 %v9128, %v10088
    %v10137 = vmul.f32 %v9129, %v10089
    %v10138 = vmul.f32 %v9130, %v10090
    %v10139 = vmul.f32 %v9131, %v10091
    %v10140 = vmul.f32 %v9132, %v10092
    %v10141 = vmul.f32 %v9133, %v10093
    %v10142 = vmul.f32 %v9134, %v10094
    %v10143 = vmul.f32 %v9135, %v10095
    %v10144 = vmul.f32 %v9136, %v10096
    %v10145 = vmul.f32 %v9137, %v10097
    %v10146 = vmul.f32 %v9138, %v10098
    %v10147 = vmul.f32 %v9139, %v10099
    %v10148 = vmul.f32 %v9140, %v10100
    %v10149 = vmul.f32 %v9141, %v10101
    %v10150 = vmul.f32 %v9142, %v10102
    %v10151 = vmul.f32 %v9143, %v10103
    %v10152 = vmul.f32 %v9144, %v10104
    %v10153 = vmul.f32 %v9145, %v10105
    %v10154 = vadd.f32 %v10106, 1.0
    %v10155 = vadd.f32 %v10107, 1.0
    %v10156 = vadd.f32 %v10108, 1.0
    %v10157 = vadd.f32 %v10109, 1.0
    %v10158 = vadd.f32 %v10110, 1.0
    %v10159 = vadd.f32 %v10111, 1.0
    %v10160 = vadd.f32 %v10112, 1.0
    %v10161 = vadd.f32 %v10113, 1.0
    %v10162 = vadd.f32 %v10114, 1.0
    %v10163 = vadd.f32 %v10115, 1.0
    %v10164 = vadd.f32 %v10116, 1.0
    %v10165 = vadd.f32 %v10117, 1.0
    %v10166 = vadd.f32 %v10118, 1.0
    %v10167 = vadd.f32 %v10119, 1.0
    %v10168 = vadd.f32 %v10120, 1.0
    %v10169 = vadd.f32 %v10121, 1.0
    %v10170 = vadd.f32 %v10122, 1.0
    %v10171 = vadd.f32 %v10123, 1.0
    %v10172 = vadd.f32 %v10124, 1.0
    %v10173 = vadd.f32 %v10125, 1.0
    %v10174 = vadd.f32 %v10126, 1.0
    %v10175 = vadd.f32 %v10127, 1.0
    %v10176 = vadd.f32 %v10128, 1.0
    %v10177 = vadd.f32 %v10129, 1.0
    %v10178 = vadd.f32 %v10130, 1.0
    %v10179 = vadd.f32 %v10131, 1.0
    %v10180 = vadd.f32 %v10132, 1.0
    %v10181 = vadd.f32 %v10133, 1.0
    %v10182 = vadd.f32 %v10134, 1.0
    %v10183 = vadd.f32 %v10135, 1.0
    %v10184 = vadd.f32 %v10136, 1.0
    %v10185 = vadd.f32 %v10137, 1.0
    %v10186 = vadd.f32 %v10138, 1.0
    %v10187 = vadd.f32 %v10139, 1.0
    %v10188 = vadd.f32 %v10140, 1.0
    %v10189 = vadd.f32 %v10141, 1.0
    %v10190 = vadd.f32 %v10142, 1.0
    %v10191 = vadd.f32 %v10143, 1.0
    %v10192 = vadd.f32 %v10144, 1.0
    %v10193 = vadd.f32 %v10145, 1.0
    %v10194 = vadd.f32 %v10146, 1.0
    %v10195 = vadd.f32 %v10147, 1.0
    %v10196 = vadd.f32 %v10148, 1.0
    %v10197 = vadd.f32 %v10149, 1.0
    %v10198 = vadd.f32 %v10150, 1.0
    %v10199 = vadd.f32 %v10151, 1.0
    %v10200 = vadd.f32 %v10152, 1.0
    %v10201 = vadd.f32 %v10153, 1.0
    %v10202 = vmul.f32 %v8954, %v10154
    %v10203 = vmul.f32 %v8955, %v10155
    %v10204 = vmul.f32 %v8956, %v10156
    %v10205 = vmul.f32 %v8957, %v10157
    %v10206 = vmul.f32 %v8958, %v10158
    %v10207 = vmul.f32 %v8959, %v10159
    %v10208 = vmul.f32 %v8960, %v10160
    %v10209 = vmul.f32 %v8961, %v10161
    %v10210 = vmul.f32 %v8962, %v10162
    %v10211 = vmul.f32 %v8963, %v10163
    %v10212 = vmul.f32 %v8964, %v10164
    %v10213 = vmul.f32 %v8965, %v10165
    %v10214 = vmul.f32 %v8966, %v10166
    %v10215 = vmul.f32 %v8967, %v10167
    %v10216 = vmul.f32 %v8968, %v10168
    %v10217 = vmul.f32 %v8969, %v10169
    %v10218 = vmul.f32 %v8970, %v10170
    %v10219 = vmul.f32 %v8971, %v10171
    %v10220 = vmul.f32 %v8972, %v10172
    %v10221 = vmul.f32 %v8973, %v10173
    %v10222 = vmul.f32 %v8974, %v10174
    %v10223 = vmul.f32 %v8975, %v10175
    %v10224 = vmul.f32 %v8976, %v10176
    %v10225 = vmul.f32 %v8977, %v10177
    %v10226 = vmul.f32 %v8978, %v10178
    %v10227 = vmul.f32 %v8979, %v10179
    %v10228 = vmul.f32 %v8980, %v10180
    %v10229 = vmul.f32 %v8981, %v10181
    %v10230 = vmul.f32 %v8982, %v10182
    %v10231 = vmul.f32 %v8983, %v10183
    %v10232 = vmul.f32 %v8984, %v10184
    %v10233 = vmul.f32 %v8985, %v10185
    %v10234 = vmul.f32 %v8986, %v10186
    %v10235 = vmul.f32 %v8987, %v10187
    %v10236 = vmul.f32 %v8988, %v10188
    %v10237 = vmul.f32 %v8989, %v10189
    %v10238 = vmul.f32 %v8990, %v10190
    %v10239 = vmul.f32 %v8991, %v10191
    %v10240 = vmul.f32 %v8992, %v10192
    %v10241 = vmul.f32 %v8993, %v10193
    %v10242 = vmul.f32 %v8994, %v10194
    %v10243 = vmul.f32 %v8995, %v10195
    %v10244 = vmul.f32 %v8996, %v10196
    %v10245 = vmul.f32 %v8997, %v10197
    %v10246 = vmul.f32 %v8998, %v10198
    %v10247 = vmul.f32 %v8999, %v10199
    %v10248 = vmul.f32 %v9000, %v10200
    %v10249 = vmul.f32 %v9001, %v10201
    %v10250 = vmul.f32 %v7675, %v10202
    %v10251 = vmul.f32 %v7677, %v10203
    %v10252 = vmul.f32 %v7738, %v10204
    %v10253 = vmul.f32 %v7740, %v10205
    %v10254 = vmul.f32 %v7801, %v10206
    %v10255 = vmul.f32 %v7803, %v10207
    %v10256 = vmul.f32 %v7864, %v10208
    %v10257 = vmul.f32 %v7866, %v10209
    %v10258 = vmul.f32 %v7679, %v10210
    %v10259 = vmul.f32 %v7681, %v10211
    %v10260 = vmul.f32 %v7742, %v10212
    %v10261 = vmul.f32 %v7744, %v10213
    %v10262 = vmul.f32 %v7805, %v10214
    %v10263 = vmul.f32 %v7807, %v10215
    %v10264 = vmul.f32 %v7868, %v10216
    %v10265 = vmul.f32 %v7870, %v10217
    %v10266 = vmul.f32 %v7685, %v10218
    %v10267 = vmul.f32 %v7687, %v10219
    %v10268 = vmul.f32 %v7748, %v10220
    %v10269 = vmul.f32 %v7750, %v10221
    %v10270 = vmul.f32 %v7811, %v10222
    %v10271 = vmul.f32 %v7813, %v10223
    %v10272 = vmul.f32 %v7874, %v10224
    %v10273 = vmul.f32 %v7876, %v10225
    %v10274 = vmul.f32 %v7689, %v10226
    %v10275 = vmul.f32 %v7691, %v10227
    %v10276 = vmul.f32 %v7752, %v10228
    %v10277 = vmul.f32 %v7754, %v10229
    %v10278 = vmul.f32 %v7815, %v10230
    %v10279 = vmul.f32 %v7817, %v10231
    %v10280 = vmul.f32 %v7878, %v10232
    %v10281 = vmul.f32 %v7880, %v10233
    %v10282 = vmul.f32 %v7695, %v10234
    %v10283 = vmul.f32 %v7697, %v10235
    %v10284 = vmul.f32 %v7758, %v10236
    %v10285 = vmul.f32 %v7760, %v10237
    %v10286 = vmul.f32 %v7821, %v10238
    %v10287 = vmul.f32 %v7823, %v10239
    %v10288 = vmul.f32 %v7884, %v10240
    %v10289 = vmul.f32 %v7886, %v10241
    %v10290 = vmul.f32 %v7699, %v10242
    %v10291 = vmul.f32 %v7701, %v10243
    %v10292 = vmul.f32 %v7762, %v10244
    %v10293 = vmul.f32 %v7764, %v10245
    %v10294 = vmul.f32 %v7825, %v10246
    %v10295 = vmul.f32 %v7827, %v10247
    %v10296 = vmul.f32 %v7888, %v10248
    %v10297 = vmul.f32 %v7890, %v10249
    %v10298 = vpack.c.bf16 %v10258, %v10250
    %v10299 = vpack.c.bf16 %v10259, %v10251
    %v10300 = vpack.c.bf16 %v10260, %v10252
    %v10301 = vpack.c.bf16 %v10261, %v10253
    %v10302 = vpack.c.bf16 %v10262, %v10254
    %v10303 = vpack.c.bf16 %v10263, %v10255
    %v10304 = vpack.c.bf16 %v10264, %v10256
    %v10305 = vpack.c.bf16 %v10265, %v10257
    %v10306 = vpack.c.bf16 %v10274, %v10266
    %v10307 = vpack.c.bf16 %v10275, %v10267
    %v10308 = vpack.c.bf16 %v10276, %v10268
    %v10309 = vpack.c.bf16 %v10277, %v10269
    %v10310 = vpack.c.bf16 %v10278, %v10270
    %v10311 = vpack.c.bf16 %v10279, %v10271
    %v10312 = vpack.c.bf16 %v10280, %v10272
    %v10313 = vpack.c.bf16 %v10281, %v10273
    %v10314 = vpack.c.bf16 %v10290, %v10282
    %v10315 = vpack.c.bf16 %v10291, %v10283
    %v10316 = vpack.c.bf16 %v10292, %v10284
    %v10317 = vpack.c.bf16 %v10293, %v10285
    %v10318 = vpack.c.bf16 %v10294, %v10286
    %v10319 = vpack.c.bf16 %v10295, %v10287
    %v10320 = vpack.c.bf16 %v10296, %v10288
    %v10321 = vpack.c.bf16 %v10297, %v10289
    %v10322 = vld [vmem:[#allocation33] sm:$0xff]
    %v10323 = vld [vmem:[#allocation33 + $0x8] sm:$0xff]
    %v10324 = vld [vmem:[#allocation33 + $0x10] sm:$0xff]
    %v10325 = vld [vmem:[#allocation33 + $0x18] sm:$0xff]
    %v10326 = vld [vmem:[#allocation33 + $0x20] sm:$0xff]
    %v10327 = vld [vmem:[#allocation33 + $0x28] sm:$0xff]
    %v10328 = vld [vmem:[#allocation33 + $0x30] sm:$0xff]
    %v10329 = vld [vmem:[#allocation33 + $0x38] sm:$0xff]
    %v10330 = vld [vmem:[#allocation33 + $0x40] sm:$0xff]
    %v10331 = vld [vmem:[#allocation33 + $0x48] sm:$0xff]
    %v10332 = vld [vmem:[#allocation33 + $0x50] sm:$0xff]
    %v10333 = vld [vmem:[#allocation33 + $0x58] sm:$0xff]
    %v10334 = vld [vmem:[#allocation33 + $0x60] sm:$0xff]
    %v10335 = vld [vmem:[#allocation33 + $0x68] sm:$0xff]
    %v10336 = vld [vmem:[#allocation33 + $0x70] sm:$0xff]
    %v10337 = vld [vmem:[#allocation33 + $0x78] sm:$0xff]
    %v10338 = vld [vmem:[#allocation33 + $0x80] sm:$0xff]
    %v10339 = vld [vmem:[#allocation33 + $0x88] sm:$0xff]
    %v10340 = vld [vmem:[#allocation33 + $0x90] sm:$0xff]
    %v10341 = vld [vmem:[#allocation33 + $0x98] sm:$0xff]
    %v10342 = vld [vmem:[#allocation33 + $0xa0] sm:$0xff]
    %v10343 = vld [vmem:[#allocation33 + $0xa8] sm:$0xff]
    %v10344 = vld [vmem:[#allocation33 + $0xb0] sm:$0xff]
    %v10345 = vld [vmem:[#allocation33 + $0xb8] sm:$0xff]
    %v10346 = vld [vmem:[#allocation33 + $0xc0] sm:$0xff]
    %v10347 = vld [vmem:[#allocation33 + $0xc8] sm:$0xff]
    %v10348 = vld [vmem:[#allocation33 + $0xd0] sm:$0xff]
    %v10349 = vld [vmem:[#allocation33 + $0xd8] sm:$0xff]
    %v10350 = vld [vmem:[#allocation33 + $0xe0] sm:$0xff]
    %v10351 = vld [vmem:[#allocation33 + $0xe8] sm:$0xff]
    %v10352 = vld [vmem:[#allocation33 + $0xf0] sm:$0xff]
    %v10353 = vld [vmem:[#allocation33 + $0xf8] sm:$0xff]
    %v10354 = vld [vmem:[#allocation33 + $0x100] sm:$0xff]
    %v10355 = vld [vmem:[#allocation33 + $0x108] sm:$0xff]
    %v10356 = vld [vmem:[#allocation33 + $0x110] sm:$0xff]
    %v10357 = vld [vmem:[#allocation33 + $0x118] sm:$0xff]
    %v10358 = vld [vmem:[#allocation33 + $0x120] sm:$0xff]
    %v10359 = vld [vmem:[#allocation33 + $0x128] sm:$0xff]
    %v10360 = vld [vmem:[#allocation33 + $0x130] sm:$0xff]
    %v10361 = vld [vmem:[#allocation33 + $0x138] sm:$0xff]
    %v10362 = vld [vmem:[#allocation33 + $0x140] sm:$0xff]
    %v10363 = vld [vmem:[#allocation33 + $0x148] sm:$0xff]
    %v10364 = vld [vmem:[#allocation33 + $0x150] sm:$0xff]
    %v10365 = vld [vmem:[#allocation33 + $0x158] sm:$0xff]
    %v10366 = vld [vmem:[#allocation33 + $0x160] sm:$0xff]
    %v10367 = vld [vmem:[#allocation33 + $0x168] sm:$0xff]
    %v10368 = vld [vmem:[#allocation33 + $0x170] sm:$0xff]
    %v10369 = vld [vmem:[#allocation33 + $0x178] sm:$0xff]
    %v10370 = vld [vmem:[#allocation33 + $0x180] sm:$0xff]
    %v10371 = vld [vmem:[#allocation33 + $0x188] sm:$0xff]
    %v10372 = vld [vmem:[#allocation33 + $0x190] sm:$0xff]
    %v10373 = vld [vmem:[#allocation33 + $0x198] sm:$0xff]
    %v10374 = vld [vmem:[#allocation33 + $0x1a0] sm:$0xff]
    %v10375 = vld [vmem:[#allocation33 + $0x1a8] sm:$0xff]
    %v10376 = vld [vmem:[#allocation33 + $0x1b0] sm:$0xff]
    %v10377 = vld [vmem:[#allocation33 + $0x1b8] sm:$0xff]
    %v10378 = vld [vmem:[#allocation33 + $0x1c0] sm:$0xff]
    %v10379 = vld [vmem:[#allocation33 + $0x1c8] sm:$0xff]
    %v10380 = vld [vmem:[#allocation33 + $0x1d0] sm:$0xff]
    %v10381 = vld [vmem:[#allocation33 + $0x1d8] sm:$0xff]
    %v10382 = vld [vmem:[#allocation33 + $0x1e0] sm:$0xff]
    %v10383 = vld [vmem:[#allocation33 + $0x1e8] sm:$0xff]
    %v10384 = vld [vmem:[#allocation33 + $0x1f0] sm:$0xff]
    %v10385 = vld [vmem:[#allocation33 + $0x1f8] sm:$0xff]
    %v10386 = vld [vmem:[#allocation33 + $0x200] sm:$0xff]
    %v10387 = vld [vmem:[#allocation33 + $0x208] sm:$0xff]
    %v10388 = vld [vmem:[#allocation33 + $0x210] sm:$0xff]
    %v10389 = vld [vmem:[#allocation33 + $0x218] sm:$0xff]
    %v10390 = vld [vmem:[#allocation33 + $0x220] sm:$0xff]
    %v10391 = vld [vmem:[#allocation33 + $0x228] sm:$0xff]
    %v10392 = vld [vmem:[#allocation33 + $0x230] sm:$0xff]
    %v10393 = vld [vmem:[#allocation33 + $0x238] sm:$0xff]
    %v10394 = vld [vmem:[#allocation33 + $0x240] sm:$0xff]
    %v10395 = vld [vmem:[#allocation33 + $0x248] sm:$0xff]
    %v10396 = vld [vmem:[#allocation33 + $0x250] sm:$0xff]
    %v10397 = vld [vmem:[#allocation33 + $0x258] sm:$0xff]
    %v10398 = vld [vmem:[#allocation33 + $0x260] sm:$0xff]
    %v10399 = vld [vmem:[#allocation33 + $0x268] sm:$0xff]
    %v10400 = vld [vmem:[#allocation33 + $0x270] sm:$0xff]
    %v10401 = vld [vmem:[#allocation33 + $0x278] sm:$0xff]
    %v10402 = vld [vmem:[#allocation33 + $0x280] sm:$0xff]
    %v10403 = vld [vmem:[#allocation33 + $0x288] sm:$0xff]
    %v10404 = vld [vmem:[#allocation33 + $0x290] sm:$0xff]
    %v10405 = vld [vmem:[#allocation33 + $0x298] sm:$0xff]
    %v10406 = vld [vmem:[#allocation33 + $0x2a0] sm:$0xff]
    %v10407 = vld [vmem:[#allocation33 + $0x2a8] sm:$0xff]
    %v10408 = vld [vmem:[#allocation33 + $0x2b0] sm:$0xff]
    %v10409 = vld [vmem:[#allocation33 + $0x2b8] sm:$0xff]
    %v10410 = vld [vmem:[#allocation33 + $0x2c0] sm:$0xff]
    %v10411 = vld [vmem:[#allocation33 + $0x2c8] sm:$0xff]
    %v10412 = vld [vmem:[#allocation33 + $0x2d0] sm:$0xff]
    %v10413 = vld [vmem:[#allocation33 + $0x2d8] sm:$0xff]
    %v10414 = vld [vmem:[#allocation33 + $0x2e0] sm:$0xff]
    %v10415 = vld [vmem:[#allocation33 + $0x2e8] sm:$0xff]
    %v10416 = vld [vmem:[#allocation33 + $0x2f0] sm:$0xff]
    %v10417 = vld [vmem:[#allocation33 + $0x2f8] sm:$0xff]
    %v10418 = vld [vmem:[#allocation33 + $0x300] sm:$0xff]
    %v10419 = vld [vmem:[#allocation33 + $0x308] sm:$0xff]
    %v10420 = vld [vmem:[#allocation33 + $0x310] sm:$0xff]
    %v10421 = vld [vmem:[#allocation33 + $0x318] sm:$0xff]
    %v10422 = vld [vmem:[#allocation33 + $0x320] sm:$0xff]
    %v10423 = vld [vmem:[#allocation33 + $0x328] sm:$0xff]
    %v10424 = vld [vmem:[#allocation33 + $0x330] sm:$0xff]
    %v10425 = vld [vmem:[#allocation33 + $0x338] sm:$0xff]
    %v10426 = vld [vmem:[#allocation33 + $0x340] sm:$0xff]
    %v10427 = vld [vmem:[#allocation33 + $0x348] sm:$0xff]
    %v10428 = vld [vmem:[#allocation33 + $0x350] sm:$0xff]
    %v10429 = vld [vmem:[#allocation33 + $0x358] sm:$0xff]
    %v10430 = vld [vmem:[#allocation33 + $0x360] sm:$0xff]
    %v10431 = vld [vmem:[#allocation33 + $0x368] sm:$0xff]
    %v10432 = vld [vmem:[#allocation33 + $0x370] sm:$0xff]
    %v10433 = vld [vmem:[#allocation33 + $0x378] sm:$0xff]
    %v10434 = vld [vmem:[#allocation33 + $0x380] sm:$0xff]
    %v10435 = vld [vmem:[#allocation33 + $0x388] sm:$0xff]
    %v10436 = vld [vmem:[#allocation33 + $0x390] sm:$0xff]
    %v10437 = vld [vmem:[#allocation33 + $0x398] sm:$0xff]
    %v10438 = vld [vmem:[#allocation33 + $0x3a0] sm:$0xff]
    %v10439 = vld [vmem:[#allocation33 + $0x3a8] sm:$0xff]
    %v10440 = vld [vmem:[#allocation33 + $0x3b0] sm:$0xff]
    %v10441 = vld [vmem:[#allocation33 + $0x3b8] sm:$0xff]
    %v10442 = vld [vmem:[#allocation33 + $0x3c0] sm:$0xff]
    %v10443 = vld [vmem:[#allocation33 + $0x3c8] sm:$0xff]
    %v10444 = vld [vmem:[#allocation33 + $0x3d0] sm:$0xff]
    %v10445 = vld [vmem:[#allocation33 + $0x3d8] sm:$0xff]
    %v10446 = vld [vmem:[#allocation33 + $0x3e0] sm:$0xff]
    %v10447 = vld [vmem:[#allocation33 + $0x3e8] sm:$0xff]
    %v10448 = vld [vmem:[#allocation33 + $0x3f0] sm:$0xff]
    %v10449 = vld [vmem:[#allocation33 + $0x3f8] sm:$0xff]
    %v10450 = vld [vmem:[#allocation34] sm:$0x3]
    %v10452 = vlaneseq
    %v10453 = vshrl.u32 %v10452, 7
    %v10454 = vsub.s32 0, %v10453
    %v10455 = vrot.slane %v10450, %v10454
    %v10456 = vlaneseq
    %v10457 = vshrl.u32 %v10456, 7
    %v10458 = vsub.s32 1, %v10457
    %v10459 = vrot.slane %v10450, %v10458
    %v10590 = vunpack.c.l.b16 %v10322
    %v10591 = vunpack.c.h.b16 %v10322
    %v10592 = vunpack.c.l.b16 %v10323
    %v10593 = vunpack.c.h.b16 %v10323
    %v10594 = vunpack.c.l.b16 %v10324
    %v10595 = vunpack.c.h.b16 %v10324
    %v10596 = vunpack.c.l.b16 %v10325
    %v10597 = vunpack.c.h.b16 %v10325
    %v10598 = vunpack.c.l.b16 %v10326
    %v10599 = vunpack.c.h.b16 %v10326
    %v10600 = vunpack.c.l.b16 %v10327
    %v10601 = vunpack.c.h.b16 %v10327
    %v10602 = vunpack.c.l.b16 %v10328
    %v10603 = vunpack.c.h.b16 %v10328
    %v10604 = vunpack.c.l.b16 %v10329
    %v10605 = vunpack.c.h.b16 %v10329
    %v10606 = vunpack.c.l.b16 %v10330
    %v10607 = vunpack.c.h.b16 %v10330
    %v10608 = vunpack.c.l.b16 %v10331
    %v10609 = vunpack.c.h.b16 %v10331
    %v10610 = vunpack.c.l.b16 %v10332
    %v10611 = vunpack.c.h.b16 %v10332
    %v10612 = vunpack.c.l.b16 %v10333
    %v10613 = vunpack.c.h.b16 %v10333
    %v10614 = vunpack.c.l.b16 %v10334
    %v10615 = vunpack.c.h.b16 %v10334
    %v10616 = vunpack.c.l.b16 %v10335
    %v10617 = vunpack.c.h.b16 %v10335
    %v10618 = vunpack.c.l.b16 %v10336
    %v10619 = vunpack.c.h.b16 %v10336
    %v10620 = vunpack.c.l.b16 %v10337
    %v10621 = vunpack.c.h.b16 %v10337
    %v10622 = vunpack.c.l.b16 %v10338
    %v10623 = vunpack.c.h.b16 %v10338
    %v10624 = vunpack.c.l.b16 %v10339
    %v10625 = vunpack.c.h.b16 %v10339
    %v10626 = vunpack.c.l.b16 %v10340
    %v10627 = vunpack.c.h.b16 %v10340
    %v10628 = vunpack.c.l.b16 %v10341
    %v10629 = vunpack.c.h.b16 %v10341
    %v10630 = vunpack.c.l.b16 %v10342
    %v10631 = vunpack.c.h.b16 %v10342
    %v10632 = vunpack.c.l.b16 %v10343
    %v10633 = vunpack.c.h.b16 %v10343
    %v10634 = vunpack.c.l.b16 %v10344
    %v10635 = vunpack.c.h.b16 %v10344
    %v10636 = vunpack.c.l.b16 %v10345
    %v10637 = vunpack.c.h.b16 %v10345
    %v10638 = vunpack.c.l.b16 %v10346
    %v10639 = vunpack.c.h.b16 %v10346
    %v10640 = vunpack.c.l.b16 %v10347
    %v10641 = vunpack.c.h.b16 %v10347
    %v10642 = vunpack.c.l.b16 %v10348
    %v10643 = vunpack.c.h.b16 %v10348
    %v10644 = vunpack.c.l.b16 %v10349
    %v10645 = vunpack.c.h.b16 %v10349
    %v10646 = vunpack.c.l.b16 %v10350
    %v10647 = vunpack.c.h.b16 %v10350
    %v10648 = vunpack.c.l.b16 %v10351
    %v10649 = vunpack.c.h.b16 %v10351
    %v10650 = vunpack.c.l.b16 %v10352
    %v10651 = vunpack.c.h.b16 %v10352
    %v10652 = vunpack.c.l.b16 %v10353
    %v10653 = vunpack.c.h.b16 %v10353
    %v10654 = vunpack.c.l.b16 %v10354
    %v10655 = vunpack.c.h.b16 %v10354
    %v10656 = vunpack.c.l.b16 %v10355
    %v10657 = vunpack.c.h.b16 %v10355
    %v10658 = vunpack.c.l.b16 %v10356
    %v10659 = vunpack.c.h.b16 %v10356
    %v10660 = vunpack.c.l.b16 %v10357
    %v10661 = vunpack.c.h.b16 %v10357
    %v10662 = vunpack.c.l.b16 %v10358
    %v10663 = vunpack.c.h.b16 %v10358
    %v10664 = vunpack.c.l.b16 %v10359
    %v10665 = vunpack.c.h.b16 %v10359
    %v10666 = vunpack.c.l.b16 %v10360
    %v10667 = vunpack.c.h.b16 %v10360
    %v10668 = vunpack.c.l.b16 %v10361
    %v10669 = vunpack.c.h.b16 %v10361
    %v10670 = vunpack.c.l.b16 %v10362
    %v10671 = vunpack.c.h.b16 %v10362
    %v10672 = vunpack.c.l.b16 %v10363
    %v10673 = vunpack.c.h.b16 %v10363
    %v10674 = vunpack.c.l.b16 %v10364
    %v10675 = vunpack.c.h.b16 %v10364
    %v10676 = vunpack.c.l.b16 %v10365
    %v10677 = vunpack.c.h.b16 %v10365
    %v10678 = vunpack.c.l.b16 %v10366
    %v10679 = vunpack.c.h.b16 %v10366
    %v10680 = vunpack.c.l.b16 %v10367
    %v10681 = vunpack.c.h.b16 %v10367
    %v10682 = vunpack.c.l.b16 %v10368
    %v10683 = vunpack.c.h.b16 %v10368
    %v10684 = vunpack.c.l.b16 %v10369
    %v10685 = vunpack.c.h.b16 %v10369
    %v10686 = vunpack.c.l.b16 %v10370
    %v10687 = vunpack.c.h.b16 %v10370
    %v10688 = vunpack.c.l.b16 %v10371
    %v10689 = vunpack.c.h.b16 %v10371
    %v10690 = vunpack.c.l.b16 %v10372
    %v10691 = vunpack.c.h.b16 %v10372
    %v10692 = vunpack.c.l.b16 %v10373
    %v10693 = vunpack.c.h.b16 %v10373
    %v10694 = vunpack.c.l.b16 %v10374
    %v10695 = vunpack.c.h.b16 %v10374
    %v10696 = vunpack.c.l.b16 %v10375
    %v10697 = vunpack.c.h.b16 %v10375
    %v10698 = vunpack.c.l.b16 %v10376
    %v10699 = vunpack.c.h.b16 %v10376
    %v10700 = vunpack.c.l.b16 %v10377
    %v10701 = vunpack.c.h.b16 %v10377
    %v10702 = vunpack.c.l.b16 %v10378
    %v10703 = vunpack.c.h.b16 %v10378
    %v10704 = vunpack.c.l.b16 %v10379
    %v10705 = vunpack.c.h.b16 %v10379
    %v10706 = vunpack.c.l.b16 %v10380
    %v10707 = vunpack.c.h.b16 %v10380
    %v10708 = vunpack.c.l.b16 %v10381
    %v10709 = vunpack.c.h.b16 %v10381
    %v10710 = vunpack.c.l.b16 %v10382
    %v10711 = vunpack.c.h.b16 %v10382
    %v10712 = vunpack.c.l.b16 %v10383
    %v10713 = vunpack.c.h.b16 %v10383
    %v10714 = vunpack.c.l.b16 %v10384
    %v10715 = vunpack.c.h.b16 %v10384
    %v10716 = vunpack.c.l.b16 %v10385
    %v10717 = vunpack.c.h.b16 %v10385
    %v10718 = vunpack.c.l.b16 %v10386
    %v10719 = vunpack.c.h.b16 %v10386
    %v10720 = vunpack.c.l.b16 %v10387
    %v10721 = vunpack.c.h.b16 %v10387
    %v10722 = vunpack.c.l.b16 %v10388
    %v10723 = vunpack.c.h.b16 %v10388
    %v10724 = vunpack.c.l.b16 %v10389
    %v10725 = vunpack.c.h.b16 %v10389
    %v10726 = vunpack.c.l.b16 %v10390
    %v10727 = vunpack.c.h.b16 %v10390
    %v10728 = vunpack.c.l.b16 %v10391
    %v10729 = vunpack.c.h.b16 %v10391
    %v10730 = vunpack.c.l.b16 %v10392
    %v10731 = vunpack.c.h.b16 %v10392
    %v10732 = vunpack.c.l.b16 %v10393
    %v10733 = vunpack.c.h.b16 %v10393
    %v10734 = vunpack.c.l.b16 %v10394
    %v10735 = vunpack.c.h.b16 %v10394
    %v10736 = vunpack.c.l.b16 %v10395
    %v10737 = vunpack.c.h.b16 %v10395
    %v10738 = vunpack.c.l.b16 %v10396
    %v10739 = vunpack.c.h.b16 %v10396
    %v10740 = vunpack.c.l.b16 %v10397
    %v10741 = vunpack.c.h.b16 %v10397
    %v10742 = vunpack.c.l.b16 %v10398
    %v10743 = vunpack.c.h.b16 %v10398
    %v10744 = vunpack.c.l.b16 %v10399
    %v10745 = vunpack.c.h.b16 %v10399
    %v10746 = vunpack.c.l.b16 %v10400
    %v10747 = vunpack.c.h.b16 %v10400
    %v10748 = vunpack.c.l.b16 %v10401
    %v10749 = vunpack.c.h.b16 %v10401
    %v10750 = vunpack.c.l.b16 %v10402
    %v10751 = vunpack.c.h.b16 %v10402
    %v10752 = vunpack.c.l.b16 %v10403
    %v10753 = vunpack.c.h.b16 %v10403
    %v10754 = vunpack.c.l.b16 %v10404
    %v10755 = vunpack.c.h.b16 %v10404
    %v10756 = vunpack.c.l.b16 %v10405
    %v10757 = vunpack.c.h.b16 %v10405
    %v10758 = vunpack.c.l.b16 %v10406
    %v10759 = vunpack.c.h.b16 %v10406
    %v10760 = vunpack.c.l.b16 %v10407
    %v10761 = vunpack.c.h.b16 %v10407
    %v10762 = vunpack.c.l.b16 %v10408
    %v10763 = vunpack.c.h.b16 %v10408
    %v10764 = vunpack.c.l.b16 %v10409
    %v10765 = vunpack.c.h.b16 %v10409
    %v10766 = vunpack.c.l.b16 %v10410
    %v10767 = vunpack.c.h.b16 %v10410
    %v10768 = vunpack.c.l.b16 %v10411
    %v10769 = vunpack.c.h.b16 %v10411
    %v10770 = vunpack.c.l.b16 %v10412
    %v10771 = vunpack.c.h.b16 %v10412
    %v10772 = vunpack.c.l.b16 %v10413
    %v10773 = vunpack.c.h.b16 %v10413
    %v10774 = vunpack.c.l.b16 %v10414
    %v10775 = vunpack.c.h.b16 %v10414
    %v10776 = vunpack.c.l.b16 %v10415
    %v10777 = vunpack.c.h.b16 %v10415
    %v10778 = vunpack.c.l.b16 %v10416
    %v10779 = vunpack.c.h.b16 %v10416
    %v10780 = vunpack.c.l.b16 %v10417
    %v10781 = vunpack.c.h.b16 %v10417
    %v10782 = vunpack.c.l.b16 %v10418
    %v10783 = vunpack.c.h.b16 %v10418
    %v10784 = vunpack.c.l.b16 %v10419
    %v10785 = vunpack.c.h.b16 %v10419
    %v10786 = vunpack.c.l.b16 %v10420
    %v10787 = vunpack.c.h.b16 %v10420
    %v10788 = vunpack.c.l.b16 %v10421
    %v10789 = vunpack.c.h.b16 %v10421
    %v10790 = vunpack.c.l.b16 %v10422
    %v10791 = vunpack.c.h.b16 %v10422
    %v10792 = vunpack.c.l.b16 %v10423
    %v10793 = vunpack.c.h.b16 %v10423
    %v10794 = vunpack.c.l.b16 %v10424
    %v10795 = vunpack.c.h.b16 %v10424
    %v10796 = vunpack.c.l.b16 %v10425
    %v10797 = vunpack.c.h.b16 %v10425
    %v10798 = vunpack.c.l.b16 %v10426
    %v10799 = vunpack.c.h.b16 %v10426
    %v10800 = vunpack.c.l.b16 %v10427
    %v10801 = vunpack.c.h.b16 %v10427
    %v10802 = vunpack.c.l.b16 %v10428
    %v10803 = vunpack.c.h.b16 %v10428
    %v10804 = vunpack.c.l.b16 %v10429
    %v10805 = vunpack.c.h.b16 %v10429
    %v10806 = vunpack.c.l.b16 %v10430
    %v10807 = vunpack.c.h.b16 %v10430
    %v10808 = vunpack.c.l.b16 %v10431
    %v10809 = vunpack.c.h.b16 %v10431
    %v10810 = vunpack.c.l.b16 %v10432
    %v10811 = vunpack.c.h.b16 %v10432
    %v10812 = vunpack.c.l.b16 %v10433
    %v10813 = vunpack.c.h.b16 %v10433
    %v10814 = vunpack.c.l.b16 %v10434
    %v10815 = vunpack.c.h.b16 %v10434
    %v10816 = vunpack.c.l.b16 %v10435
    %v10817 = vunpack.c.h.b16 %v10435
    %v10818 = vunpack.c.l.b16 %v10436
    %v10819 = vunpack.c.h.b16 %v10436
    %v10820 = vunpack.c.l.b16 %v10437
    %v10821 = vunpack.c.h.b16 %v10437
    %v10822 = vunpack.c.l.b16 %v10438
    %v10823 = vunpack.c.h.b16 %v10438
    %v10824 = vunpack.c.l.b16 %v10439
    %v10825 = vunpack.c.h.b16 %v10439
    %v10826 = vunpack.c.l.b16 %v10440
    %v10827 = vunpack.c.h.b16 %v10440
    %v10828 = vunpack.c.l.b16 %v10441
    %v10829 = vunpack.c.h.b16 %v10441
    %v10830 = vunpack.c.l.b16 %v10442
    %v10831 = vunpack.c.h.b16 %v10442
    %v10832 = vunpack.c.l.b16 %v10443
    %v10833 = vunpack.c.h.b16 %v10443
    %v10834 = vunpack.c.l.b16 %v10444
    %v10835 = vunpack.c.h.b16 %v10444
    %v10836 = vunpack.c.l.b16 %v10445
    %v10837 = vunpack.c.h.b16 %v10445
    %v10838 = vunpack.c.l.b16 %v10446
    %v10839 = vunpack.c.h.b16 %v10446
    %v10840 = vunpack.c.l.b16 %v10447
    %v10841 = vunpack.c.h.b16 %v10447
    %v10842 = vunpack.c.l.b16 %v10448
    %v10843 = vunpack.c.h.b16 %v10448
    %v10844 = vunpack.c.l.b16 %v10449
    %v10845 = vunpack.c.h.b16 %v10449
    %v10846 = vpack.c.b16 %v10592, %v10590
    %v10847 = vpack.c.b16 %v10593, %v10591
    %v10848 = vpack.c.b16 %v10596, %v10594
    %v10849 = vpack.c.b16 %v10597, %v10595
    %v10850 = vpack.c.b16 %v10600, %v10598
    %v10851 = vpack.c.b16 %v10601, %v10599
    %v10852 = vpack.c.b16 %v10604, %v10602
    %v10853 = vpack.c.b16 %v10605, %v10603
    %v10854 = vpack.c.b16 %v10608, %v10606
    %v10855 = vpack.c.b16 %v10609, %v10607
    %v10856 = vpack.c.b16 %v10612, %v10610
    %v10857 = vpack.c.b16 %v10613, %v10611
    %v10858 = vpack.c.b16 %v10616, %v10614
    %v10859 = vpack.c.b16 %v10617, %v10615
    %v10860 = vpack.c.b16 %v10620, %v10618
    %v10861 = vpack.c.b16 %v10621, %v10619
    %v10862 = vpack.c.b16 %v10624, %v10622
    %v10863 = vpack.c.b16 %v10625, %v10623
    %v10864 = vpack.c.b16 %v10628, %v10626
    %v10865 = vpack.c.b16 %v10629, %v10627
    %v10866 = vpack.c.b16 %v10632, %v10630
    %v10867 = vpack.c.b16 %v10633, %v10631
    %v10868 = vpack.c.b16 %v10636, %v10634
    %v10869 = vpack.c.b16 %v10637, %v10635
    %v10870 = vpack.c.b16 %v10640, %v10638
    %v10871 = vpack.c.b16 %v10641, %v10639
    %v10872 = vpack.c.b16 %v10644, %v10642
    %v10873 = vpack.c.b16 %v10645, %v10643
    %v10874 = vpack.c.b16 %v10648, %v10646
    %v10875 = vpack.c.b16 %v10649, %v10647
    %v10876 = vpack.c.b16 %v10652, %v10650
    %v10877 = vpack.c.b16 %v10653, %v10651
    %v10878 = vpack.c.b16 %v10656, %v10654
    %v10879 = vpack.c.b16 %v10657, %v10655
    %v10880 = vpack.c.b16 %v10660, %v10658
    %v10881 = vpack.c.b16 %v10661, %v10659
    %v10882 = vpack.c.b16 %v10664, %v10662
    %v10883 = vpack.c.b16 %v10665, %v10663
    %v10884 = vpack.c.b16 %v10668, %v10666
    %v10885 = vpack.c.b16 %v10669, %v10667
    %v10886 = vpack.c.b16 %v10672, %v10670
    %v10887 = vpack.c.b16 %v10673, %v10671
    %v10888 = vpack.c.b16 %v10676, %v10674
    %v10889 = vpack.c.b16 %v10677, %v10675
    %v10890 = vpack.c.b16 %v10680, %v10678
    %v10891 = vpack.c.b16 %v10681, %v10679
    %v10892 = vpack.c.b16 %v10684, %v10682
    %v10893 = vpack.c.b16 %v10685, %v10683
    %v10894 = vpack.c.b16 %v10688, %v10686
    %v10895 = vpack.c.b16 %v10689, %v10687
    %v10896 = vpack.c.b16 %v10692, %v10690
    %v10897 = vpack.c.b16 %v10693, %v10691
    %v10898 = vpack.c.b16 %v10696, %v10694
    %v10899 = vpack.c.b16 %v10697, %v10695
    %v10900 = vpack.c.b16 %v10700, %v10698
    %v10901 = vpack.c.b16 %v10701, %v10699
    %v10902 = vpack.c.b16 %v10704, %v10702
    %v10903 = vpack.c.b16 %v10705, %v10703
    %v10904 = vpack.c.b16 %v10708, %v10706
    %v10905 = vpack.c.b16 %v10709, %v10707
    %v10906 = vpack.c.b16 %v10712, %v10710
    %v10907 = vpack.c.b16 %v10713, %v10711
    %v10908 = vpack.c.b16 %v10716, %v10714
    %v10909 = vpack.c.b16 %v10717, %v10715
    %v10910 = vpack.c.b16 %v10720, %v10718
    %v10911 = vpack.c.b16 %v10721, %v10719
    %v10912 = vpack.c.b16 %v10724, %v10722
    %v10913 = vpack.c.b16 %v10725, %v10723
    %v10914 = vpack.c.b16 %v10728, %v10726
    %v10915 = vpack.c.b16 %v10729, %v10727
    %v10916 = vpack.c.b16 %v10732, %v10730
    %v10917 = vpack.c.b16 %v10733, %v10731
    %v10918 = vpack.c.b16 %v10736, %v10734
    %v10919 = vpack.c.b16 %v10737, %v10735
    %v10920 = vpack.c.b16 %v10740, %v10738
    %v10921 = vpack.c.b16 %v10741, %v10739
    %v10922 = vpack.c.b16 %v10744, %v10742
    %v10923 = vpack.c.b16 %v10745, %v10743
    %v10924 = vpack.c.b16 %v10748, %v10746
    %v10925 = vpack.c.b16 %v10749, %v10747
    %v10926 = vpack.c.b16 %v10752, %v10750
    %v10927 = vpack.c.b16 %v10753, %v10751
    %v10928 = vpack.c.b16 %v10756, %v10754
    %v10929 = vpack.c.b16 %v10757, %v10755
    %v10930 = vpack.c.b16 %v10760, %v10758
    %v10931 = vpack.c.b16 %v10761, %v10759
    %v10932 = vpack.c.b16 %v10764, %v10762
    %v10933 = vpack.c.b16 %v10765, %v10763
    %v10934 = vpack.c.b16 %v10768, %v10766
    %v10935 = vpack.c.b16 %v10769, %v10767
    %v10936 = vpack.c.b16 %v10772, %v10770
    %v10937 = vpack.c.b16 %v10773, %v10771
    %v10938 = vpack.c.b16 %v10776, %v10774
    %v10939 = vpack.c.b16 %v10777, %v10775
    %v10940 = vpack.c.b16 %v10780, %v10778
    %v10941 = vpack.c.b16 %v10781, %v10779
    %v10942 = vpack.c.b16 %v10784, %v10782
    %v10943 = vpack.c.b16 %v10785, %v10783
    %v10944 = vpack.c.b16 %v10788, %v10786
    %v10945 = vpack.c.b16 %v10789, %v10787
    %v10946 = vpack.c.b16 %v10792, %v10790
    %v10947 = vpack.c.b16 %v10793, %v10791
    %v10948 = vpack.c.b16 %v10796, %v10794
    %v10949 = vpack.c.b16 %v10797, %v10795
    %v10950 = vpack.c.b16 %v10800, %v10798
    %v10951 = vpack.c.b16 %v10801, %v10799
    %v10952 = vpack.c.b16 %v10804, %v10802
    %v10953 = vpack.c.b16 %v10805, %v10803
    %v10954 = vpack.c.b16 %v10808, %v10806
    %v10955 = vpack.c.b16 %v10809, %v10807
    %v10956 = vpack.c.b16 %v10812, %v10810
    %v10957 = vpack.c.b16 %v10813, %v10811
    %v10958 = vpack.c.b16 %v10816, %v10814
    %v10959 = vpack.c.b16 %v10817, %v10815
    %v10960 = vpack.c.b16 %v10820, %v10818
    %v10961 = vpack.c.b16 %v10821, %v10819
    %v10962 = vpack.c.b16 %v10824, %v10822
    %v10963 = vpack.c.b16 %v10825, %v10823
    %v10964 = vpack.c.b16 %v10828, %v10826
    %v10965 = vpack.c.b16 %v10829, %v10827
    %v10966 = vpack.c.b16 %v10832, %v10830
    %v10967 = vpack.c.b16 %v10833, %v10831
    %v10968 = vpack.c.b16 %v10836, %v10834
    %v10969 = vpack.c.b16 %v10837, %v10835
    %v10970 = vpack.c.b16 %v10840, %v10838
    %v10971 = vpack.c.b16 %v10841, %v10839
    %v10972 = vpack.c.b16 %v10844, %v10842
    %v10973 = vpack.c.b16 %v10845, %v10843
    %11102 = vmatprep.subr.bf16.mxu0 %v10847
    %11103 = vmatpush1.bf16.msra.mxu0 %v10846
    %11104 = vmatprep.subr.bf16.mxu0 %v10849
    %11105 = vmatpush1.bf16.msra.mxu0 %v10848
    %11106 = vmatprep.subr.bf16.mxu0 %v10851
    %11107 = vmatpush1.bf16.msra.mxu0 %v10850
    %11108 = vmatprep.subr.bf16.mxu0 %v10853
    %11109 = vmatpush1.bf16.msra.mxu0 %v10852
    %11110 = vmatprep.subr.bf16.mxu0 %v10855
    %11111 = vmatpush1.bf16.msra.mxu0 %v10854
    %11112 = vmatprep.subr.bf16.mxu0 %v10857
    %11113 = vmatpush1.bf16.msra.mxu0 %v10856
    %11114 = vmatprep.subr.bf16.mxu0 %v10859
    %11115 = vmatpush1.bf16.msra.mxu0 %v10858
    %11116 = vmatprep.subr.bf16.mxu0 %v10861
    %11117 = vmatpush1.bf16.msra.mxu0 %v10860
    %11118 = vmatprep.subr.bf16.mxu0 %v10863
    %11119 = vmatpush1.bf16.msra.mxu0 %v10862
    %11120 = vmatprep.subr.bf16.mxu0 %v10865
    %11121 = vmatpush1.bf16.msra.mxu0 %v10864
    %11122 = vmatprep.subr.bf16.mxu0 %v10867
    %11123 = vmatpush1.bf16.msra.mxu0 %v10866
    %11124 = vmatprep.subr.bf16.mxu0 %v10869
    %11125 = vmatpush1.bf16.msra.mxu0 %v10868
    %11126 = vmatprep.subr.bf16.mxu0 %v10871
    %11127 = vmatpush1.bf16.msra.mxu0 %v10870
    %11128 = vmatprep.subr.bf16.mxu0 %v10873
    %11129 = vmatpush1.bf16.msra.mxu0 %v10872
    %11130 = vmatprep.subr.bf16.mxu0 %v10875
    %11131 = vmatpush1.bf16.msra.mxu0 %v10874
    %11132 = vmatprep.subr.bf16.mxu0 %v10877
    %11133 = vmatpush1.bf16.msra.mxu0 %v10876
    %11134 = vmatprep.mubr.bf16.mxu0 %v10299
    %11135 = vmatmul.mubr.bf16.gmra.mrb[0].mxu0 %v10298
    %v11136 = vpop.f32.mrb[0].mxu0
    %v11137 = vpop.f32.mrb[0].mxu0
    %v11138 = vpop.f32.mrb[0].mxu0
    %v11139 = vadd.f32 %v10455, %v11138
    %v11140 = vpop.f32.mrb[0].mxu0
    %v11141 = vadd.f32 %v10459, %v11140
    %11142 = vmatprep.mubr.bf16.mxu0 %v10307
    %11143 = vmatmul.mubr.bf16.gmra.mrb[0].mxu0 %v10306
    %v11144 = vpop.f32.mrb[0].mxu0
    %v11145 = vadd.f32 %v10455, %v11144
    %v11146 = vpop.f32.mrb[0].mxu0
    %v11147 = vadd.f32 %v10459, %v11146
    %v11148 = vpop.f32.mrb[0].mxu0
    %v11149 = vpop.f32.mrb[0].mxu0
    %11150 = vmatprep.mubr.bf16.mxu0 %v10315
    %11151 = vmatmul.mubr.bf16.gmra.mrb[0].mxu0 %v10314
    %v11152 = vpop.f32.mrb[0].mxu0
    %v11153 = vadd.f32 %v10455, %v11152
    %v11154 = vpop.f32.mrb[0].mxu0
    %v11155 = vadd.f32 %v10459, %v11154
    %v11156 = vpop.f32.mrb[0].mxu0
    %v11157 = vadd.f32 %v10455, %v11156
    %v11158 = vpop.f32.mrb[0].mxu0
    %v11159 = vadd.f32 %v10459, %v11158
    %11160 = vdwg.mxu0
    %11161 = vmatprep.subr.bf16.mxu0 %v10879
    %11162 = vmatpush1.bf16.msra.mxu0 %v10878
    %11163 = vmatprep.subr.bf16.mxu0 %v10881
    %11164 = vmatpush1.bf16.msra.mxu0 %v10880
    %11165 = vmatprep.subr.bf16.mxu0 %v10883
    %11166 = vmatpush1.bf16.msra.mxu0 %v10882
    %11167 = vmatprep.subr.bf16.mxu0 %v10885
    %11168 = vmatpush1.bf16.msra.mxu0 %v10884
    %11169 = vmatprep.subr.bf16.mxu0 %v10887
    %11170 = vmatpush1.bf16.msra.mxu0 %v10886
    %11171 = vmatprep.subr.bf16.mxu0 %v10889
    %11172 = vmatpush1.bf16.msra.mxu0 %v10888
    %11173 = vmatprep.subr.bf16.mxu0 %v10891
    %11174 = vmatpush1.bf16.msra.mxu0 %v10890
    %11175 = vmatprep.subr.bf16.mxu0 %v10893
    %11176 = vmatpush1.bf16.msra.mxu0 %v10892
    %11177 = vmatprep.subr.bf16.mxu0 %v10895
    %11178 = vmatpush1.bf16.msra.mxu0 %v10894
    %11179 = vmatprep.subr.bf16.mxu0 %v10897
    %11180 = vmatpush1.bf16.msra.mxu0 %v10896
    %11181 = vmatprep.subr.bf16.mxu0 %v10899
    %11182 = vmatpush1.bf16.msra.mxu0 %v10898
    %11183 = vmatprep.subr.bf16.mxu0 %v10901
    %11184 = vmatpush1.bf16.msra.mxu0 %v10900
    %11185 = vmatprep.subr.bf16.mxu0 %v10903
    %11186 = vmatpush1.bf16.msra.mxu0 %v10902
    %11187 = vmatprep.subr.bf16.mxu0 %v10905
    %11188 = vmatpush1.bf16.msra.mxu0 %v10904
    %11189 = vmatprep.subr.bf16.mxu0 %v10907
    %11190 = vmatpush1.bf16.msra.mxu0 %v10906
    %11191 = vmatprep.subr.bf16.mxu0 %v10909
    %11192 = vmatpush1.bf16.msra.mxu0 %v10908
    %11193 = vmatprep.mubr.bf16.mxu0 %v10301
    %11194 = vmatmul.mubr.bf16.gmra.mrb[0].mxu0 %v10300
    %v11195 = vpop.f32.mrb[0].mxu0
    %v11196 = vpop.f32.mrb[0].mxu0
    %v11197 = vpop.f32.mrb[0].mxu0
    %v11198 = vadd.f32 %v11139, %v11197
    %v11199 = vpop.f32.mrb[0].mxu0
    %v11200 = vadd.f32 %v11141, %v11199
    %11201 = vmatprep.mubr.bf16.mxu0 %v10309
    %11202 = vmatmul.mubr.bf16.gmra.mrb[0].mxu0 %v10308
    %v11203 = vpop.f32.mrb[0].mxu0
    %v11204 = vadd.f32 %v11145, %v11203
    %v11205 = vpop.f32.mrb[0].mxu0
    %v11206 = vadd.f32 %v11147, %v11205
    %v11207 = vpop.f32.mrb[0].mxu0
    %v11208 = vpop.f32.mrb[0].mxu0
    %11209 = vmatprep.mubr.bf16.mxu0 %v10317
    %11210 = vmatmul.mubr.bf16.gmra.mrb[0].mxu0 %v10316
    %v11211 = vpop.f32.mrb[0].mxu0
    %v11212 = vadd.f32 %v11153, %v11211
    %v11213 = vpop.f32.mrb[0].mxu0
    %v11214 = vadd.f32 %v11155, %v11213
    %v11215 = vpop.f32.mrb[0].mxu0
    %v11216 = vadd.f32 %v11157, %v11215
    %v11217 = vpop.f32.mrb[0].mxu0
    %v11218 = vadd.f32 %v11159, %v11217
    %11219 = vdwg.mxu0
    %11220 = vmatprep.subr.bf16.mxu0 %v10911
    %11221 = vmatpush1.bf16.msra.mxu0 %v10910
    %11222 = vmatprep.subr.bf16.mxu0 %v10913
    %11223 = vmatpush1.bf16.msra.mxu0 %v10912
    %11224 = vmatprep.subr.bf16.mxu0 %v10915
    %11225 = vmatpush1.bf16.msra.mxu0 %v10914
    %11226 = vmatprep.subr.bf16.mxu0 %v10917
    %11227 = vmatpush1.bf16.msra.mxu0 %v10916
    %11228 = vmatprep.subr.bf16.mxu0 %v10919
    %11229 = vmatpush1.bf16.msra.mxu0 %v10918
    %11230 = vmatprep.subr.bf16.mxu0 %v10921
    %11231 = vmatpush1.bf16.msra.mxu0 %v10920
    %11232 = vmatprep.subr.bf16.mxu0 %v10923
    %11233 = vmatpush1.bf16.msra.mxu0 %v10922
    %11234 = vmatprep.subr.bf16.mxu0 %v10925
    %11235 = vmatpush1.bf16.msra.mxu0 %v10924
    %11236 = vmatprep.subr.bf16.mxu0 %v10927
    %11237 = vmatpush1.bf16.msra.mxu0 %v10926
    %11238 = vmatprep.subr.bf16.mxu0 %v10929
    %11239 = vmatpush1.bf16.msra.mxu0 %v10928
    %11240 = vmatprep.subr.bf16.mxu0 %v10931
    %11241 = vmatpush1.bf16.msra.mxu0 %v10930
    %11242 = vmatprep.subr.bf16.mxu0 %v10933
    %11243 = vmatpush1.bf16.msra.mxu0 %v10932
    %11244 = vmatprep.subr.bf16.mxu0 %v10935
    %11245 = vmatpush1.bf16.msra.mxu0 %v10934
    %11246 = vmatprep.subr.bf16.mxu0 %v10937
    %11247 = vmatpush1.bf16.msra.mxu0 %v10936
    %11248 = vmatprep.subr.bf16.mxu0 %v10939
    %11249 = vmatpush1.bf16.msra.mxu0 %v10938
    %11250 = vmatprep.subr.bf16.mxu0 %v10941
    %11251 = vmatpush1.bf16.msra.mxu0 %v10940
    %11252 = vmatprep.mubr.bf16.mxu0 %v10303
    %11253 = vmatmul.mubr.bf16.gmra.mrb[0].mxu0 %v10302
    %v11254 = vpop.f32.mrb[0].mxu0
    %v11255 = vpop.f32.mrb[0].mxu0
    %v11256 = vpop.f32.mrb[0].mxu0
    %v11257 = vadd.f32 %v11198, %v11256
    %v11258 = vpop.f32.mrb[0].mxu0
    %v11259 = vadd.f32 %v11200, %v11258
    %11260 = vmatprep.mubr.bf16.mxu0 %v10311
    %11261 = vmatmul.mubr.bf16.gmra.mrb[0].mxu0 %v10310
    %v11262 = vpop.f32.mrb[0].mxu0
    %v11263 = vadd.f32 %v11204, %v11262
    %v11264 = vpop.f32.mrb[0].mxu0
    %v11265 = vadd.f32 %v11206, %v11264
    %v11266 = vpop.f32.mrb[0].mxu0
    %v11267 = vpop.f32.mrb[0].mxu0
    %11268 = vmatprep.mubr.bf16.mxu0 %v10319
    %11269 = vmatmul.mubr.bf16.gmra.mrb[0].mxu0 %v10318
    %v11270 = vpop.f32.mrb[0].mxu0
    %v11271 = vadd.f32 %v11212, %v11270
    %v11272 = vpop.f32.mrb[0].mxu0
    %v11273 = vadd.f32 %v11214, %v11272
    %v11274 = vpop.f32.mrb[0].mxu0
    %v11275 = vadd.f32 %v11216, %v11274
    %v11276 = vpop.f32.mrb[0].mxu0
    %v11277 = vadd.f32 %v11218, %v11276
    %11278 = vdwg.mxu0
    %11279 = vmatprep.subr.bf16.mxu0 %v10943
    %11280 = vmatpush1.bf16.msra.mxu0 %v10942
    %11281 = vmatprep.subr.bf16.mxu0 %v10945
    %11282 = vmatpush1.bf16.msra.mxu0 %v10944
    %11283 = vmatprep.subr.bf16.mxu0 %v10947
    %11284 = vmatpush1.bf16.msra.mxu0 %v10946
    %11285 = vmatprep.subr.bf16.mxu0 %v10949
    %11286 = vmatpush1.bf16.msra.mxu0 %v10948
    %11287 = vmatprep.subr.bf16.mxu0 %v10951
    %11288 = vmatpush1.bf16.msra.mxu0 %v10950
    %11289 = vmatprep.subr.bf16.mxu0 %v10953
    %11290 = vmatpush1.bf16.msra.mxu0 %v10952
    %11291 = vmatprep.subr.bf16.mxu0 %v10955
    %11292 = vmatpush1.bf16.msra.mxu0 %v10954
    %11293 = vmatprep.subr.bf16.mxu0 %v10957
    %11294 = vmatpush1.bf16.msra.mxu0 %v10956
    %11295 = vmatprep.subr.bf16.mxu0 %v10959
    %11296 = vmatpush1.bf16.msra.mxu0 %v10958
    %11297 = vmatprep.subr.bf16.mxu0 %v10961
    %11298 = vmatpush1.bf16.msra.mxu0 %v10960
    %11299 = vmatprep.subr.bf16.mxu0 %v10963
    %11300 = vmatpush1.bf16.msra.mxu0 %v10962
    %11301 = vmatprep.subr.bf16.mxu0 %v10965
    %11302 = vmatpush1.bf16.msra.mxu0 %v10964
    %11303 = vmatprep.subr.bf16.mxu0 %v10967
    %11304 = vmatpush1.bf16.msra.mxu0 %v10966
    %11305 = vmatprep.subr.bf16.mxu0 %v10969
    %11306 = vmatpush1.bf16.msra.mxu0 %v10968
    %11307 = vmatprep.subr.bf16.mxu0 %v10971
    %11308 = vmatpush1.bf16.msra.mxu0 %v10970
    %11309 = vmatprep.subr.bf16.mxu0 %v10973
    %11310 = vmatpush1.bf16.msra.mxu0 %v10972
    %11311 = vmatprep.mubr.bf16.mxu0 %v10305
    %11312 = vmatmul.mubr.bf16.gmra.mrb[0].mxu0 %v10304
    %v11313 = vpop.f32.mrb[0].mxu0
    %v11314 = vpop.f32.mrb[0].mxu0
    %v11315 = vpop.f32.mrb[0].mxu0
    %v11316 = vadd.f32 %v11257, %v11315
    %v11317 = vpop.f32.mrb[0].mxu0
    %v11318 = vadd.f32 %v11259, %v11317
    %11319 = vmatprep.mubr.bf16.mxu0 %v10313
    %11320 = vmatmul.mubr.bf16.gmra.mrb[0].mxu0 %v10312
    %v11321 = vpop.f32.mrb[0].mxu0
    %v11322 = vadd.f32 %v11263, %v11321
    %v11323 = vpop.f32.mrb[0].mxu0
    %v11324 = vadd.f32 %v11265, %v11323
    %v11325 = vpop.f32.mrb[0].mxu0
    %v11326 = vpop.f32.mrb[0].mxu0
    %11327 = vmatprep.mubr.bf16.mxu0 %v10321
    %11328 = vmatmul.mubr.bf16.gmra.mrb[0].mxu0 %v10320
    %v11329 = vpop.f32.mrb[0].mxu0
    %v11330 = vadd.f32 %v11271, %v11329
    %v11331 = vpop.f32.mrb[0].mxu0
    %v11332 = vadd.f32 %v11273, %v11331
    %v11333 = vpop.f32.mrb[0].mxu0
    %v11334 = vadd.f32 %v11275, %v11333
    %v11335 = vpop.f32.mrb[0].mxu0
    %v11336 = vadd.f32 %v11277, %v11335
    %11337 = vdwg.mxu0
    %v11338 = vadd.f32 %v11316, %v6670
    %v11339 = vadd.f32 %v11318, %v6671
    %v11340 = vadd.f32 %v11322, %v6672
    %v11341 = vadd.f32 %v11324, %v6673
    %v11342 = vadd.f32 %v11330, %v6676
    %v11343 = vadd.f32 %v11332, %v6677
    %v11344 = vadd.f32 %v11334, %v6678
    %v11345 = vadd.f32 %v11336, %v6679
    %v11346 = vadd.f32 %v11338, %v11339
    %11347 = vadd.xlane.f32.xlu0 %v11346
    %v11348 = vpop.xlane.xlu0 %11347
    %v11349 = vadd.f32 %v11340, %v11341
    %11350 = vadd.xlane.f32.xlu0 %v11349
    %v11351 = vpop.xlane.xlu0 %11350
    %v11352 = vadd.f32 %v11342, %v11343
    %11353 = vadd.xlane.f32.xlu0 %v11352
    %v11354 = vpop.xlane.xlu0 %11353
    %v11355 = vadd.f32 %v11344, %v11345
    %11356 = vadd.xlane.f32.xlu0 %v11355
    %v11357 = vpop.xlane.xlu0 %11356
    %v11358 = vmul.f32 %v11348, %v3727
    %v11359 = vmul.f32 %v11351, %v3727
    %v11360 = vmul.f32 %v11354, %v3727
    %v11361 = vmul.f32 %v11357, %v3727
    %v11362 = vsub.f32 %v11338, %v11358
    %v11363 = vsub.f32 %v11339, %v11358
    %v11364 = vsub.f32 %v11340, %v11359
    %v11365 = vsub.f32 %v11341, %v11359
    %v11366 = vsub.f32 %v11342, %v11360
    %v11367 = vsub.f32 %v11343, %v11360
    %v11368 = vsub.f32 %v11344, %v11361
    %v11369 = vsub.f32 %v11345, %v11361
    %v11370 = vmul.f32 %v11362, %v11362
    %v11371 = vmul.f32 %v11363, %v11363
    %v11372 = vmul.f32 %v11364, %v11364
    %v11373 = vmul.f32 %v11365, %v11365
    %v11374 = vmul.f32 %v11366, %v11366
    %v11375 = vmul.f32 %v11367, %v11367
    %v11376 = vmul.f32 %v11368, %v11368
    %v11377 = vmul.f32 %v11369, %v11369
    %v11378 = vadd.f32 %v11370, %v11371
    %11379 = vadd.xlane.f32.xlu0 %v11378
    %v11380 = vpop.xlane.xlu0 %11379
    %v11381 = vadd.f32 %v11372, %v11373
    %11382 = vadd.xlane.f32.xlu0 %v11381
    %v11383 = vpop.xlane.xlu0 %11382
    %v11384 = vadd.f32 %v11374, %v11375
    %11385 = vadd.xlane.f32.xlu0 %v11384
    %v11386 = vpop.xlane.xlu0 %11385
    %v11387 = vadd.f32 %v11376, %v11377
    %11388 = vadd.xlane.f32.xlu0 %v11387
    %v11389 = vpop.xlane.xlu0 %11388
    %v11390 = vmul.f32 %v11380, %v3727
    %v11391 = vmul.f32 %v11383, %v3727
    %v11392 = vmul.f32 %v11386, %v3727
    %v11393 = vmul.f32 %v11389, %v3727
    %v11394 = vadd.f32 %v11390, 1e-05
    %v11395 = vadd.f32 %v11391, 1e-05
    %v11396 = vadd.f32 %v11392, 1e-05
    %v11397 = vadd.f32 %v11393, 1e-05
    %v11398 = vrsqrt.pop %v11394
    %v11399 = vrsqrt.pop %v11395
    %v11400 = vrsqrt.pop %v11396
    %v11401 = vrsqrt.pop %v11397
    %v11402 = vmul.f32 %v11362, %v11398
    %v11403 = vmul.f32 %v11363, %v11398
    %v11404 = vmul.f32 %v11364, %v11399
    %v11405 = vmul.f32 %v11365, %v11399
    %v11406 = vmul.f32 %v11366, %v11400
    %v11407 = vmul.f32 %v11367, %v11400
    %v11408 = vmul.f32 %v11368, %v11401
    %v11409 = vmul.f32 %v11369, %v11401
    %v11410 = vld [vmem:[#allocation36] sm:$0x3]
    %v11412 = vlaneseq
    %v11413 = vshrl.u32 %v11412, 7
    %v11414 = vsub.s32 0, %v11413
    %v11415 = vrot.slane %v11410, %v11414
    %v11416 = vlaneseq
    %v11417 = vshrl.u32 %v11416, 7
    %v11418 = vsub.s32 1, %v11417
    %v11419 = vrot.slane %v11410, %v11418
    %v11422 = vmul.f32 %v11402, %v11415
    %v11423 = vmul.f32 %v11403, %v11419
    %v11424 = vmul.f32 %v11404, %v11415
    %v11425 = vmul.f32 %v11405, %v11419
    %v11426 = vmul.f32 %v11406, %v11415
    %v11427 = vmul.f32 %v11407, %v11419
    %v11428 = vmul.f32 %v11408, %v11415
    %v11429 = vmul.f32 %v11409, %v11419
    %v11430 = vld [vmem:[#allocation37] sm:$0x3]
    %v11432 = vlaneseq
    %v11433 = vshrl.u32 %v11432, 7
    %v11434 = vsub.s32 0, %v11433
    %v11435 = vrot.slane %v11430, %v11434
    %v11436 = vlaneseq
    %v11437 = vshrl.u32 %v11436, 7
    %v11438 = vsub.s32 1, %v11437
    %v11439 = vrot.slane %v11430, %v11438
    %v11442 = vadd.f32 %v11422, %v11435
    %v11443 = vadd.f32 %v11423, %v11439
    %v11444 = vadd.f32 %v11424, %v11435
    %v11445 = vadd.f32 %v11425, %v11439
    %v11446 = vadd.f32 %v11426, %v11435
    %v11447 = vadd.f32 %v11427, %v11439
    %v11448 = vadd.f32 %v11428, %v11435
    %v11449 = vadd.f32 %v11429, %v11439
    %v11450 = vpack.c.bf16 %v11444, %v11442
    %v11451 = vpack.c.bf16 %v11445, %v11443
    %v11452 = vpack.c.bf16 %v11448, %v11446
    %v11453 = vpack.c.bf16 %v11449, %v11447
    %v11454 = vld [vmem:[%s63] sm:$0xf]
    %v11455 = vld [vmem:[%s63 + $0x4] sm:$0xf]
    %v11456 = vld [vmem:[%s63 + $0x8] sm:$0xf]
    %v11457 = vld [vmem:[%s63 + $0xc] sm:$0xf]
    %v11458 = vld [vmem:[%s63 + $0x10] sm:$0xf]
    %v11459 = vld [vmem:[%s63 + $0x14] sm:$0xf]
    %v11460 = vld [vmem:[%s63 + $0x18] sm:$0xf]
    %v11461 = vld [vmem:[%s63 + $0x1c] sm:$0xf]
    %v11462 = vld [vmem:[%s63 + $0x20] sm:$0xf]
    %v11463 = vld [vmem:[%s63 + $0x24] sm:$0xf]
    %v11464 = vld [vmem:[%s63 + $0x28] sm:$0xf]
    %v11465 = vld [vmem:[%s63 + $0x2c] sm:$0xf]
    %v11466 = vld [vmem:[%s63 + $0x30] sm:$0xf]
    %v11467 = vld [vmem:[%s63 + $0x34] sm:$0xf]
    %v11468 = vld [vmem:[%s63 + $0x38] sm:$0xf]
    %v11469 = vld [vmem:[%s63 + $0x3c] sm:$0xf]
    %v11470 = vld [vmem:[%s63 + $0x40] sm:$0xf]
    %v11471 = vld [vmem:[%s63 + $0x44] sm:$0xf]
    %v11472 = vld [vmem:[%s63 + $0x48] sm:$0xf]
    %v11473 = vld [vmem:[%s63 + $0x4c] sm:$0xf]
    %v11474 = vld [vmem:[%s63 + $0x50] sm:$0xf]
    %v11475 = vld [vmem:[%s63 + $0x54] sm:$0xf]
    %v11476 = vld [vmem:[%s63 + $0x58] sm:$0xf]
    %v11477 = vld [vmem:[%s63 + $0x5c] sm:$0xf]
    %v11478 = vld [vmem:[%s63 + $0x60] sm:$0xf]
    %v11479 = vld [vmem:[%s63 + $0x64] sm:$0xf]
    %v11480 = vld [vmem:[%s63 + $0x68] sm:$0xf]
    %v11481 = vld [vmem:[%s63 + $0x6c] sm:$0xf]
    %v11482 = vld [vmem:[%s63 + $0x70] sm:$0xf]
    %v11483 = vld [vmem:[%s63 + $0x74] sm:$0xf]
    %v11484 = vld [vmem:[%s63 + $0x78] sm:$0xf]
    %v11485 = vld [vmem:[%s63 + $0x7c] sm:$0xf]
    %v11486 = vld [vmem:[#allocation39] sm:$0x1]
    %v11488 = vlaneseq
    %v11489 = vshrl.u32 %v11488, 7
    %v11490 = vsub.s32 0, %v11489
    %v11491 = vrot.slane %v11486, %v11490
    %v11525 = vunpack.c.l.b16 %v11454
    %v11526 = vunpack.c.l.b16 %v11455
    %v11527 = vunpack.c.l.b16 %v11456
    %v11528 = vunpack.c.l.b16 %v11457
    %v11529 = vunpack.c.l.b16 %v11458
    %v11530 = vunpack.c.l.b16 %v11459
    %v11531 = vunpack.c.l.b16 %v11460
    %v11532 = vunpack.c.l.b16 %v11461
    %v11533 = vunpack.c.l.b16 %v11462
    %v11534 = vunpack.c.l.b16 %v11463
    %v11535 = vunpack.c.l.b16 %v11464
    %v11536 = vunpack.c.l.b16 %v11465
    %v11537 = vunpack.c.l.b16 %v11466
    %v11538 = vunpack.c.l.b16 %v11467
    %v11539 = vunpack.c.l.b16 %v11468
    %v11540 = vunpack.c.l.b16 %v11469
    %v11541 = vunpack.c.l.b16 %v11470
    %v11542 = vunpack.c.l.b16 %v11471
    %v11543 = vunpack.c.l.b16 %v11472
    %v11544 = vunpack.c.l.b16 %v11473
    %v11545 = vunpack.c.l.b16 %v11474
    %v11546 = vunpack.c.l.b16 %v11475
    %v11547 = vunpack.c.l.b16 %v11476
    %v11548 = vunpack.c.l.b16 %v11477
    %v11549 = vunpack.c.l.b16 %v11478
    %v11550 = vunpack.c.l.b16 %v11479
    %v11551 = vunpack.c.l.b16 %v11480
    %v11552 = vunpack.c.l.b16 %v11481
    %v11553 = vunpack.c.l.b16 %v11482
    %v11554 = vunpack.c.l.b16 %v11483
    %v11555 = vunpack.c.l.b16 %v11484
    %v11556 = vunpack.c.l.b16 %v11485
    %v11557 = vpack.c.b16 %v11526, %v11525
    %v11558 = vpack.c.b16 %v11528, %v11527
    %v11559 = vpack.c.b16 %v11530, %v11529
    %v11560 = vpack.c.b16 %v11532, %v11531
    %v11561 = vpack.c.b16 %v11534, %v11533
    %v11562 = vpack.c.b16 %v11536, %v11535
    %v11563 = vpack.c.b16 %v11538, %v11537
    %v11564 = vpack.c.b16 %v11540, %v11539
    %v11565 = vpack.c.b16 %v11542, %v11541
    %v11566 = vpack.c.b16 %v11544, %v11543
    %v11567 = vpack.c.b16 %v11546, %v11545
    %v11568 = vpack.c.b16 %v11548, %v11547
    %v11569 = vpack.c.b16 %v11550, %v11549
    %v11570 = vpack.c.b16 %v11552, %v11551
    %v11571 = vpack.c.b16 %v11554, %v11553
    %v11572 = vpack.c.b16 %v11556, %v11555
    %11589 = vmatprep.subr.bf16.mxu0 0
    %11590 = vmatpush1.bf16.msra.mxu0 %v11557
    %11591 = vmatprep.subr.bf16.mxu0 0
    %11592 = vmatpush1.bf16.msra.mxu0 %v11558
    %11593 = vmatprep.subr.bf16.mxu0 0
    %11594 = vmatpush1.bf16.msra.mxu0 %v11559
    %11595 = vmatprep.subr.bf16.mxu0 0
    %11596 = vmatpush1.bf16.msra.mxu0 %v11560
    %11597 = vmatprep.subr.bf16.mxu0 0
    %11598 = vmatpush1.bf16.msra.mxu0 %v11561
    %11599 = vmatprep.subr.bf16.mxu0 0
    %11600 = vmatpush1.bf16.msra.mxu0 %v11562
    %11601 = vmatprep.subr.bf16.mxu0 0
    %11602 = vmatpush1.bf16.msra.mxu0 %v11563
    %11603 = vmatprep.subr.bf16.mxu0 0
    %11604 = vmatpush1.bf16.msra.mxu0 %v11564
    %11605 = vmatprep.subr.bf16.mxu0 0
    %11606 = vmatpush1.bf16.msra.mxu0 %v11565
    %11607 = vmatprep.subr.bf16.mxu0 0
    %11608 = vmatpush1.bf16.msra.mxu0 %v11566
    %11609 = vmatprep.subr.bf16.mxu0 0
    %11610 = vmatpush1.bf16.msra.mxu0 %v11567
    %11611 = vmatprep.subr.bf16.mxu0 0
    %11612 = vmatpush1.bf16.msra.mxu0 %v11568
    %11613 = vmatprep.subr.bf16.mxu0 0
    %11614 = vmatpush1.bf16.msra.mxu0 %v11569
    %11615 = vmatprep.subr.bf16.mxu0 0
    %11616 = vmatpush1.bf16.msra.mxu0 %v11570
    %11617 = vmatprep.subr.bf16.mxu0 0
    %11618 = vmatpush1.bf16.msra.mxu0 %v11571
    %11619 = vmatprep.subr.bf16.mxu0 0
    %11620 = vmatpush1.bf16.msra.mxu0 %v11572
    %11621 = vmatprep.mubr.bf16.mxu0 %v11451
    %11622 = vmatmul.mubr.bf16.gmra.mrb[0].mxu0 %v11450
    %v11623 = vpop.f32.mrb[0].mxu0
    %v11624 = vadd.f32 %v11491, %v11623
    %v11625 = vpop.f32.mrb[0].mxu0
    %v11626 = vpop.f32.mrb[0].mxu0
    %v11627 = vadd.f32 %v11491, %v11626
    %v11628 = vpop.f32.mrb[0].mxu0
    %11629 = vmatprep.mubr.bf16.mxu0 %v11453
    %11630 = vmatmul.mubr.bf16.gmra.mrb[0].mxu0 %v11452
    %v11631 = vpop.f32.mrb[0].mxu0
    %v11632 = vadd.f32 %v11491, %v11631
    %v11633 = vpop.f32.mrb[0].mxu0
    %v11634 = vpop.f32.mrb[0].mxu0
    %v11635 = vadd.f32 %v11491, %v11634
    %v11636 = vpop.f32.mrb[0].mxu0
    %11637 = vdwg.mxu0
    %11638 = vst [vmem:[%s67] sm:$0xff] %v11624
    %11639 = vst [vmem:[%s67 + $0x8] sm:$0xff] %v11627
    %11640 = vst [vmem:[%s67 + $0x10] sm:$0xff] %v11632
    %11641 = vst [vmem:[%s67 + $0x18] sm:$0xff] %v11635
    // Predicated region
    $region234: #{ldmnet_forward.1} parent=1 // pred_check
      _
    $region235: #{ldmnet_forward.1} parent=1 // pred_check_branch
      %11643 = sbr.rel (0) target = $region237
    $region236: #{ldmnet_forward.1} parent=1 // pred_region
      _
    $region237: #{ldmnet_forward.1} parent=1 // pred_fallthru
      _
    // Predicated region
    $region238: #{ldmnet_forward.1} parent=1 // pred_check
      _
    $region239: #{ldmnet_forward.1} parent=1 // pred_check_branch
      %11645 = sbr.rel (0) target = $region241
    $region240: #{ldmnet_forward.1} parent=1 // pred_region
      _
    $region241: #{ldmnet_forward.1} parent=1 // pred_fallthru
      _
    %11646 = vsyncpa [#allocation3], 1
    %11647 = vsyncpa [#allocation5], 1
    %11648 = vsyncpa [#allocation8], 1
    %11649 = vsyncpa [#allocation11], 1
    %11650 = vsyncpa [#allocation14], 1
    %11651 = vsyncpa [#allocation17], 1
    %11652 = vsyncpa [#allocation20], 1
    %11653 = vsyncpa [#allocation23], 1
    %11654 = vsyncpa [#allocation26], 1
    %11655 = vsyncpa [#allocation29], 1
    %11656 = vsyncpa [#allocation32], 1
    %11657 = vsyncpa [#allocation35], 1
    %11658 = vsyncpa [#allocation38], 1

</llo_original>
